<compile_context>
chip_gen: v6e
topology: v6e:2x2x1
jax: 0.10.0
libtpu: 0.0.40
codegen_flags: <defaults>
</compile_context>

<pallas_src>
import functools

import jax
import jax.numpy as jnp
from jax.experimental import pallas as pl
from jax.experimental.pallas import tpu as pltpu

LATENT_DIM = 64          # args.latent_dim (small, lane-friendly choice)
H1, H2, H3, H4 = 128, 256, 512, 1024
OUT_DIM = 784            # 28 * 28
OUT_PAD = 896            # 7 * 128 -> lane-dense output tile / unmasked stores
BN_EPS = 1e-5
NEG_SLOPE = 0.2


def _round_up(x, m):
    return ((x + m - 1) // m) * m


def _leaky_relu(x):
    # 0 < slope < 1  =>  LeakyReLU(x) == max(x, slope*x): mul + max on the VPU.
    return jnp.maximum(x, NEG_SLOPE * x)


def generator_kernel(z_ref,
                     w1_ref, b1_ref,
                     w2_ref, s2_ref, t2_ref,
                     w3_ref, s3_ref, t3_ref,
                     w4_ref, s4_ref, t4_ref,
                     w5_ref, b5_ref,
                     o_ref):
    # Layer 1: Linear + LeakyReLU   (Dropout == identity in eval mode)
    h = jnp.dot(z_ref[...], w1_ref[...], preferred_element_type=jnp.float32)
    h = _leaky_relu(h + b1_ref[...]).astype(jnp.bfloat16)

    # Layer 2: Linear + BatchNorm (folded into scale/shift) + LeakyReLU
    h = jnp.dot(h, w2_ref[...], preferred_element_type=jnp.float32)
    h = _leaky_relu(h * s2_ref[...] + t2_ref[...]).astype(jnp.bfloat16)

    # Layer 3
    h = jnp.dot(h, w3_ref[...], preferred_element_type=jnp.float32)
    h = _leaky_relu(h * s3_ref[...] + t3_ref[...]).astype(jnp.bfloat16)

    # Layer 4
    h = jnp.dot(h, w4_ref[...], preferred_element_type=jnp.float32)
    h = _leaky_relu(h * s4_ref[...] + t4_ref[...]).astype(jnp.bfloat16)

    # Layer 5: Linear + Tanh  (output padded to 896 lanes; wrapper slices to 784)
    h = jnp.dot(h, w5_ref[...], preferred_element_type=jnp.float32)
    o_ref[...] = jnp.tanh(h + b5_ref[...]).astype(o_ref.dtype)


def prepare_params(params):
    """One-time weight preparation (hoisted out of the per-call forward):
    bf16 casts, BN folding into per-feature scale/shift, 784->896 pad."""
    (w1, b1, w2, b2, g2, be2, m2, v2,
     w3, b3, g3, be3, m3, v3,
     w4, b4, g4, be4, m4, v4,
     w5, b5) = params

    def fold_bn(b, gamma, beta, mean, var):
        scale = gamma * jax.lax.rsqrt(var + BN_EPS)
        shift = (b - mean) * scale + beta
        return (scale.reshape(1, -1).astype(jnp.float32),
                shift.reshape(1, -1).astype(jnp.float32))

    s2, t2 = fold_bn(b2, g2, be2, m2, v2)
    s3, t3 = fold_bn(b3, g3, be3, m3, v3)
    s4, t4 = fold_bn(b4, g4, be4, m4, v4)

    w5p = jnp.zeros((H4, OUT_PAD), jnp.bfloat16).at[:, :OUT_DIM].set(
        w5.astype(jnp.bfloat16))
    b5p = jnp.zeros((1, OUT_PAD), jnp.float32).at[:, :OUT_DIM].set(
        b5.reshape(1, -1).astype(jnp.float32))

    return (w1.astype(jnp.bfloat16), b1.reshape(1, -1).astype(jnp.float32),
            w2.astype(jnp.bfloat16), s2, t2,
            w3.astype(jnp.bfloat16), s3, t3,
            w4.astype(jnp.bfloat16), s4, t4,
            w5p, b5p)


@functools.partial(jax.jit, static_argnames=("single_buffer",))
def generator_forward(z, prepared, single_buffer=True):
    """z: (B, LATENT_DIM) float32, prepared: output of prepare_params.
    Returns (B, 784) bfloat16."""
    B = z.shape[0]

    # Batch-tile selection:
    #   B >= 512      -> tm=256 (fills the 256-row MXU on v6e/v7x, >=2 tiles/core)
    #   128 <= B < 512-> tm=128
    #   small batches -> round up to the bf16 sublane multiple (16) only.
    if B >= 512:
        tm = 256
    elif B >= 128:
        tm = 128
    else:
        tm = max(16, _round_up(B, 16))
    Bp = _round_up(B, tm)
    grid = Bp // tm

    zb = z.astype(jnp.bfloat16)
    if Bp != B:
        zb = jnp.zeros((Bp, LATENT_DIM), jnp.bfloat16).at[:B].set(zb)

    in_arrays = (zb,) + tuple(prepared)

    def const_spec(shape):
        # Whole-array block, constant index_map -> fetched once, resident across
        # all batch tiles (Pallas skips re-DMA on an unchanged block index).
        idx_map = lambda i: (0,) * len(shape)
        if single_buffer:
            # Never re-DMA'd => the default second buffer is pure VMEM waste.
            return pl.BlockSpec(shape, idx_map,
                                pipeline_mode=pl.Buffered(buffer_count=1))
        return pl.BlockSpec(shape, idx_map)

    in_specs = [pl.BlockSpec((tm, LATENT_DIM), lambda i: (i, 0))] + \
               [const_spec(a.shape) for a in in_arrays[1:]]

    # Advisory cost estimate so XLA schedules/overlaps the custom call sensibly.
    flops = 2 * Bp * (LATENT_DIM * H1 + H1 * H2 + H2 * H3 + H3 * H4 + H4 * OUT_PAD)
    weight_bytes = sum(int(a.size) * a.dtype.itemsize for a in in_arrays[1:])
    bytes_accessed = weight_bytes + int(zb.size) * 2 + Bp * OUT_PAD * 2

    out = pl.pallas_call(
        generator_kernel,
        out_shape=jax.ShapeDtypeStruct((Bp, OUT_PAD), jnp.bfloat16),
        grid_spec=pltpu.PrefetchScalarGridSpec(
            num_scalar_prefetch=0,
            grid=(grid,),
            in_specs=in_specs,
            out_specs=pl.BlockSpec((tm, OUT_PAD), lambda i: (i, 0)),
        ),
        compiler_params=pltpu.CompilerParams(
            dimension_semantics=("parallel",) if grid >= 2 else ("arbitrary",),
            vmem_limit_bytes=32 << 20,
        ),
        cost_estimate=pl.CostEstimate(
            flops=flops,
            transcendentals=Bp * OUT_PAD,
            bytes_accessed=bytes_accessed),
    )(*in_arrays)

    return out[:B, :OUT_DIM]


def run_generator(z, prepared):
    try:
        return generator_forward(z, prepared, single_buffer=True)
    except Exception:
        # pipeline_mode=pl.Buffered(1) unsupported in this build; default
        # double buffering still fits easily in the 32 MiB VMEM limit.
        return generator_forward(z, prepared, single_buffer=False)


def init_params(key):
    """Deterministic synthetic parameters matching the module's shapes."""
    dims = [(LATENT_DIM, H1), (H1, H2), (H2, H3), (H3, H4), (H4, OUT_DIM)]
    keys = jax.random.split(key, 2 * len(dims) + 3 * 4)
    ki = iter(range(len(keys)))

    params = []
    for li, (fin, fout) in enumerate(dims):
        bound = 1.0 / jnp.sqrt(fin)
        w = jax.random.uniform(keys[next(ki)], (fin, fout), jnp.float32, -bound, bound)
        b = jax.random.uniform(keys[next(ki)], (fout,), jnp.float32, -bound, bound)
        params += [w, b]
        if li in (1, 2, 3):  # BatchNorm1d after layers 2, 3, 4
            fo = fout
            gamma = 1.0 + 0.1 * jax.random.normal(keys[next(ki)], (fo,), jnp.float32)
            beta = 0.1 * jax.random.normal(keys[next(ki)], (fo,), jnp.float32)
            mean = 0.05 * jax.random.normal(keys[next(ki)], (fo,), jnp.float32)
            var = jnp.abs(1.0 + 0.1 * jax.random.normal(jax.random.fold_in(key, 100 + li),
                                                        (fo,), jnp.float32))
            params += [gamma, beta, mean, var]
    return tuple(params)


def reference_forward(z, params):
    """Pure-JAX f32 reference matching PyTorch eval() semantics."""
    (w1, b1, w2, b2, g2, be2, m2, v2,
     w3, b3, g3, be3, m3, v3,
     w4, b4, g4, be4, m4, v4,
     w5, b5) = params

    def bn(x, g, be, m, v):
        return (x - m) * jax.lax.rsqrt(v + BN_EPS) * g + be

    h = _leaky_relu(z @ w1 + b1)
    h = _leaky_relu(bn(h @ w2 + b2, g2, be2, m2, v2))
    h = _leaky_relu(bn(h @ w3 + b3, g3, be3, m3, v3))
    h = _leaky_relu(bn(h @ w4 + b4, g4, be4, m4, v4))
    return jnp.tanh(h @ w5 + b5)


if __name__ == "__main__":
    key = jax.random.PRNGKey(0)
    k_p, k_z = jax.random.split(key)

    params = init_params(k_p)
    prepared = prepare_params(params)   # one-time weight prep, hoisted out of forward

    # Small-batch main case: B=16 -> single 16-row tile (no wasteful pad to 128).
    B = 16
    z = jax.random.normal(k_z, (B, LATENT_DIM), jnp.float32)
    out = jax.block_until_ready(run_generator(z, prepared))
    ref = reference_forward(z, params)
    assert out.shape == (B, OUT_DIM)
    # bf16 weights/activations/output (f32 accumulation) vs f32 ref -> loose tol.
    assert jnp.allclose(out.astype(jnp.float32), ref, atol=4e-2, rtol=4e-2), \
        "mismatch vs JAX reference (B=16)"

    # Non-multiple batch: pads 130 -> 256, tm=128, two parallel grid steps.
    B2 = 130
    z2 = jax.random.normal(jax.random.fold_in(k_z, 1), (B2, LATENT_DIM), jnp.float32)
    out2 = jax.block_until_ready(run_generator(z2, prepared))
    ref2 = reference_forward(z2, params)
    assert out2.shape == (B2, OUT_DIM)
    assert jnp.allclose(out2.astype(jnp.float32), ref2, atol=4e-2, rtol=4e-2), \
        "mismatch vs JAX reference (B=130)"

    print("KERNEL_OK")
</pallas_src>

<mosaic_0001>
module attributes {stable_mosaic.version = 11 : i64} {
  func.func @generator_kernel(%arg0: i32, %arg1: memref<16x64xbf16, #tpu.memory_space<vmem>>, %arg2: memref<64x128xbf16, #tpu.memory_space<vmem>>, %arg3: memref<1x128xf32, #tpu.memory_space<vmem>>, %arg4: memref<128x256xbf16, #tpu.memory_space<vmem>>, %arg5: memref<1x256xf32, #tpu.memory_space<vmem>>, %arg6: memref<1x256xf32, #tpu.memory_space<vmem>>, %arg7: memref<256x512xbf16, #tpu.memory_space<vmem>>, %arg8: memref<1x512xf32, #tpu.memory_space<vmem>>, %arg9: memref<1x512xf32, #tpu.memory_space<vmem>>, %arg10: memref<512x1024xbf16, #tpu.memory_space<vmem>>, %arg11: memref<1x1024xf32, #tpu.memory_space<vmem>>, %arg12: memref<1x1024xf32, #tpu.memory_space<vmem>>, %arg13: memref<1024x896xbf16, #tpu.memory_space<vmem>>, %arg14: memref<1x896xf32, #tpu.memory_space<vmem>>, %arg15: memref<16x896xbf16, #tpu.memory_space<vmem>>) attributes {dimension_semantics = [#tpu.dimension_semantics<arbitrary>], iteration_bounds = array<i64: 1>, scalar_prefetch = 0 : i64, scratch_operands = 0 : i64, tpu.core_type = #tpu.core_type<tc>, window_params = [{transform_indices = @transform_0, window_bounds = array<i64: 16, 64>}, {pipeline_mode = #tpu.pipeline_mode<synchronous>, transform_indices = @transform_1, window_bounds = array<i64: 64, 128>}, {pipeline_mode = #tpu.pipeline_mode<synchronous>, transform_indices = @transform_2, window_bounds = array<i64: 1, 128>}, {pipeline_mode = #tpu.pipeline_mode<synchronous>, transform_indices = @transform_3, window_bounds = array<i64: 128, 256>}, {pipeline_mode = #tpu.pipeline_mode<synchronous>, transform_indices = @transform_4, window_bounds = array<i64: 1, 256>}, {pipeline_mode = #tpu.pipeline_mode<synchronous>, transform_indices = @transform_5, window_bounds = array<i64: 1, 256>}, {pipeline_mode = #tpu.pipeline_mode<synchronous>, transform_indices = @transform_6, window_bounds = array<i64: 256, 512>}, {pipeline_mode = #tpu.pipeline_mode<synchronous>, transform_indices = @transform_7, window_bounds = array<i64: 1, 512>}, {pipeline_mode = #tpu.pipeline_mode<synchronous>, transform_indices = @transform_8, window_bounds = array<i64: 1, 512>}, {pipeline_mode = #tpu.pipeline_mode<synchronous>, transform_indices = @transform_9, window_bounds = array<i64: 512, 1024>}, {pipeline_mode = #tpu.pipeline_mode<synchronous>, transform_indices = @transform_10, window_bounds = array<i64: 1, 1024>}, {pipeline_mode = #tpu.pipeline_mode<synchronous>, transform_indices = @transform_11, window_bounds = array<i64: 1, 1024>}, {pipeline_mode = #tpu.pipeline_mode<synchronous>, transform_indices = @transform_12, window_bounds = array<i64: 1024, 896>}, {pipeline_mode = #tpu.pipeline_mode<synchronous>, transform_indices = @transform_13, window_bounds = array<i64: 1, 896>}, {transform_indices = @transform_14, window_bounds = array<i64: 16, 896>}]} {
    %c0 = arith.constant 0 : index
    %c0_0 = arith.constant 0 : index
    %0 = vector.load %arg1[%c0, %c0_0] : memref<16x64xbf16, #tpu.memory_space<vmem>>, vector<16x64xbf16>
    %c0_1 = arith.constant 0 : index
    %c0_2 = arith.constant 0 : index
    %1 = vector.load %arg2[%c0_1, %c0_2] : memref<64x128xbf16, #tpu.memory_space<vmem>>, vector<64x128xbf16>
    %cst = arith.constant dense<0.000000e+00> : vector<16x128xf32>
    %2 = tpu.matmul %0, %1, %cst {dimension_numbers = #tpu.dot_dimension_numbers<[1], [0], [0], [1], [0, 0, 1, 1], [], []>} : vector<16x64xbf16>, vector<64x128xbf16>, vector<16x128xf32> -> vector<16x128xf32>
    %c0_3 = arith.constant 0 : index
    %c0_4 = arith.constant 0 : index
    %3 = vector.load %arg3[%c0_3, %c0_4] : memref<1x128xf32, #tpu.memory_space<vmem>>, vector<1x128xf32>
    %4 = vector.broadcast %3 : vector<1x128xf32> to vector<16x128xf32>
    %5 = arith.addf %2, %4 : vector<16x128xf32>
    %cst_5 = arith.constant 2.000000e-01 : f32
    %6 = vector.broadcast %cst_5 : f32 to vector<16x128xf32>
    %7 = arith.mulf %6, %5 : vector<16x128xf32>
    %8 = arith.maximumf %5, %7 : vector<16x128xf32>
    %9 = arith.truncf %8 : vector<16x128xf32> to vector<16x128xbf16>
    %c0_6 = arith.constant 0 : index
    %c0_7 = arith.constant 0 : index
    %10 = vector.load %arg4[%c0_6, %c0_7] : memref<128x256xbf16, #tpu.memory_space<vmem>>, vector<128x256xbf16>
    %cst_8 = arith.constant dense<0.000000e+00> : vector<16x256xf32>
    %11 = tpu.matmul %9, %10, %cst_8 {dimension_numbers = #tpu.dot_dimension_numbers<[1], [0], [0], [1], [0, 0, 1, 1], [], []>} : vector<16x128xbf16>, vector<128x256xbf16>, vector<16x256xf32> -> vector<16x256xf32>
    %c0_9 = arith.constant 0 : index
    %c0_10 = arith.constant 0 : index
    %12 = vector.load %arg5[%c0_9, %c0_10] : memref<1x256xf32, #tpu.memory_space<vmem>>, vector<1x256xf32>
    %13 = vector.broadcast %12 : vector<1x256xf32> to vector<16x256xf32>
    %14 = arith.mulf %11, %13 : vector<16x256xf32>
    %c0_11 = arith.constant 0 : index
    %c0_12 = arith.constant 0 : index
    %15 = vector.load %arg6[%c0_11, %c0_12] : memref<1x256xf32, #tpu.memory_space<vmem>>, vector<1x256xf32>
    %16 = vector.broadcast %15 : vector<1x256xf32> to vector<16x256xf32>
    %17 = arith.addf %14, %16 : vector<16x256xf32>
    %cst_13 = arith.constant 2.000000e-01 : f32
    %18 = vector.broadcast %cst_13 : f32 to vector<16x256xf32>
    %19 = arith.mulf %18, %17 : vector<16x256xf32>
    %20 = arith.maximumf %17, %19 : vector<16x256xf32>
    %21 = arith.truncf %20 : vector<16x256xf32> to vector<16x256xbf16>
    %c0_14 = arith.constant 0 : index
    %c0_15 = arith.constant 0 : index
    %22 = vector.load %arg7[%c0_14, %c0_15] : memref<256x512xbf16, #tpu.memory_space<vmem>>, vector<256x512xbf16>
    %cst_16 = arith.constant dense<0.000000e+00> : vector<16x512xf32>
    %23 = tpu.matmul %21, %22, %cst_16 {dimension_numbers = #tpu.dot_dimension_numbers<[1], [0], [0], [1], [0, 0, 1, 1], [], []>} : vector<16x256xbf16>, vector<256x512xbf16>, vector<16x512xf32> -> vector<16x512xf32>
    %c0_17 = arith.constant 0 : index
    %c0_18 = arith.constant 0 : index
    %24 = vector.load %arg8[%c0_17, %c0_18] : memref<1x512xf32, #tpu.memory_space<vmem>>, vector<1x512xf32>
    %25 = vector.broadcast %24 : vector<1x512xf32> to vector<16x512xf32>
    %26 = arith.mulf %23, %25 : vector<16x512xf32>
    %c0_19 = arith.constant 0 : index
    %c0_20 = arith.constant 0 : index
    %27 = vector.load %arg9[%c0_19, %c0_20] : memref<1x512xf32, #tpu.memory_space<vmem>>, vector<1x512xf32>
    %28 = vector.broadcast %27 : vector<1x512xf32> to vector<16x512xf32>
    %29 = arith.addf %26, %28 : vector<16x512xf32>
    %cst_21 = arith.constant 2.000000e-01 : f32
    %30 = vector.broadcast %cst_21 : f32 to vector<16x512xf32>
    %31 = arith.mulf %30, %29 : vector<16x512xf32>
    %32 = arith.maximumf %29, %31 : vector<16x512xf32>
    %33 = arith.truncf %32 : vector<16x512xf32> to vector<16x512xbf16>
    %c0_22 = arith.constant 0 : index
    %c0_23 = arith.constant 0 : index
    %34 = vector.load %arg10[%c0_22, %c0_23] : memref<512x1024xbf16, #tpu.memory_space<vmem>>, vector<512x1024xbf16>
    %cst_24 = arith.constant dense<0.000000e+00> : vector<16x1024xf32>
    %35 = tpu.matmul %33, %34, %cst_24 {dimension_numbers = #tpu.dot_dimension_numbers<[1], [0], [0], [1], [0, 0, 1, 1], [], []>} : vector<16x512xbf16>, vector<512x1024xbf16>, vector<16x1024xf32> -> vector<16x1024xf32>
    %c0_25 = arith.constant 0 : index
    %c0_26 = arith.constant 0 : index
    %36 = vector.load %arg11[%c0_25, %c0_26] : memref<1x1024xf32, #tpu.memory_space<vmem>>, vector<1x1024xf32>
    %37 = vector.broadcast %36 : vector<1x1024xf32> to vector<16x1024xf32>
    %38 = arith.mulf %35, %37 : vector<16x1024xf32>
    %c0_27 = arith.constant 0 : index
    %c0_28 = arith.constant 0 : index
    %39 = vector.load %arg12[%c0_27, %c0_28] : memref<1x1024xf32, #tpu.memory_space<vmem>>, vector<1x1024xf32>
    %40 = vector.broadcast %39 : vector<1x1024xf32> to vector<16x1024xf32>
    %41 = arith.addf %38, %40 : vector<16x1024xf32>
    %cst_29 = arith.constant 2.000000e-01 : f32
    %42 = vector.broadcast %cst_29 : f32 to vector<16x1024xf32>
    %43 = arith.mulf %42, %41 : vector<16x1024xf32>
    %44 = arith.maximumf %41, %43 : vector<16x1024xf32>
    %45 = arith.truncf %44 : vector<16x1024xf32> to vector<16x1024xbf16>
    %c0_30 = arith.constant 0 : index
    %c0_31 = arith.constant 0 : index
    %46 = vector.load %arg13[%c0_30, %c0_31] : memref<1024x896xbf16, #tpu.memory_space<vmem>>, vector<1024x896xbf16>
    %cst_32 = arith.constant dense<0.000000e+00> : vector<16x896xf32>
    %47 = tpu.matmul %45, %46, %cst_32 {dimension_numbers = #tpu.dot_dimension_numbers<[1], [0], [0], [1], [0, 0, 1, 1], [], []>} : vector<16x1024xbf16>, vector<1024x896xbf16>, vector<16x896xf32> -> vector<16x896xf32>
    %c0_33 = arith.constant 0 : index
    %c0_34 = arith.constant 0 : index
    %48 = vector.load %arg14[%c0_33, %c0_34] : memref<1x896xf32, #tpu.memory_space<vmem>>, vector<1x896xf32>
    %49 = vector.broadcast %48 : vector<1x896xf32> to vector<16x896xf32>
    %50 = arith.addf %47, %49 : vector<16x896xf32>
    %51 = math.tanh %50 : vector<16x896xf32>
    %52 = arith.truncf %51 : vector<16x896xf32> to vector<16x896xbf16>
    %c0_35 = arith.constant 0 : index
    %c0_36 = arith.constant 0 : index
    %53 = vector.load %arg15[%c0_35, %c0_36] : memref<16x896xbf16, #tpu.memory_space<vmem>>, vector<16x896xbf16>
    tpu.vector_store %arg15[%c0_35, %c0_36], %52 {strides = array<i32>} : memref<16x896xbf16, #tpu.memory_space<vmem>>, vector<16x896xbf16>,
    return
  }
  func.func @transform_0(%arg0: i32) -> (i32, i32) {
    %c0_i32 = arith.constant 0 : i32
    %c0_i32_0 = arith.constant 0 : i32
    return %arg0, %c0_i32 : i32, i32
  }
  func.func @transform_1(%arg0: i32) -> (i32, i32) {
    %c0_i32 = arith.constant 0 : i32
    %c0_i32_0 = arith.constant 0 : i32
    %c0_i32_1 = arith.constant 0 : i32
    return %c0_i32, %c0_i32_0 : i32, i32
  }
  func.func @transform_2(%arg0: i32) -> (i32, i32) {
    %c0_i32 = arith.constant 0 : i32
    %c0_i32_0 = arith.constant 0 : i32
    %c0_i32_1 = arith.constant 0 : i32
    return %c0_i32, %c0_i32_0 : i32, i32
  }
  func.func @transform_3(%arg0: i32) -> (i32, i32) {
    %c0_i32 = arith.constant 0 : i32
    %c0_i32_0 = arith.constant 0 : i32
    %c0_i32_1 = arith.constant 0 : i32
    return %c0_i32, %c0_i32_0 : i32, i32
  }
  func.func @transform_4(%arg0: i32) -> (i32, i32) {
    %c0_i32 = arith.constant 0 : i32
    %c0_i32_0 = arith.constant 0 : i32
    %c0_i32_1 = arith.constant 0 : i32
    return %c0_i32, %c0_i32_0 : i32, i32
  }
  func.func @transform_5(%arg0: i32) -> (i32, i32) {
    %c0_i32 = arith.constant 0 : i32
    %c0_i32_0 = arith.constant 0 : i32
    %c0_i32_1 = arith.constant 0 : i32
    return %c0_i32, %c0_i32_0 : i32, i32
  }
  func.func @transform_6(%arg0: i32) -> (i32, i32) {
    %c0_i32 = arith.constant 0 : i32
    %c0_i32_0 = arith.constant 0 : i32
    %c0_i32_1 = arith.constant 0 : i32
    return %c0_i32, %c0_i32_0 : i32, i32
  }
  func.func @transform_7(%arg0: i32) -> (i32, i32) {
    %c0_i32 = arith.constant 0 : i32
    %c0_i32_0 = arith.constant 0 : i32
    %c0_i32_1 = arith.constant 0 : i32
    return %c0_i32, %c0_i32_0 : i32, i32
  }
  func.func @transform_8(%arg0: i32) -> (i32, i32) {
    %c0_i32 = arith.constant 0 : i32
    %c0_i32_0 = arith.constant 0 : i32
    %c0_i32_1 = arith.constant 0 : i32
    return %c0_i32, %c0_i32_0 : i32, i32
  }
  func.func @transform_9(%arg0: i32) -> (i32, i32) {
    %c0_i32 = arith.constant 0 : i32
    %c0_i32_0 = arith.constant 0 : i32
    %c0_i32_1 = arith.constant 0 : i32
    return %c0_i32, %c0_i32_0 : i32, i32
  }
  func.func @transform_10(%arg0: i32) -> (i32, i32) {
    %c0_i32 = arith.constant 0 : i32
    %c0_i32_0 = arith.constant 0 : i32
    %c0_i32_1 = arith.constant 0 : i32
    return %c0_i32, %c0_i32_0 : i32, i32
  }
  func.func @transform_11(%arg0: i32) -> (i32, i32) {
    %c0_i32 = arith.constant 0 : i32
    %c0_i32_0 = arith.constant 0 : i32
    %c0_i32_1 = arith.constant 0 : i32
    return %c0_i32, %c0_i32_0 : i32, i32
  }
  func.func @transform_12(%arg0: i32) -> (i32, i32) {
    %c0_i32 = arith.constant 0 : i32
    %c0_i32_0 = arith.constant 0 : i32
    %c0_i32_1 = arith.constant 0 : i32
    return %c0_i32, %c0_i32_0 : i32, i32
  }
  func.func @transform_13(%arg0: i32) -> (i32, i32) {
    %c0_i32 = arith.constant 0 : i32
    %c0_i32_0 = arith.constant 0 : i32
    %c0_i32_1 = arith.constant 0 : i32
    return %c0_i32, %c0_i32_0 : i32, i32
  }
  func.func @transform_14(%arg0: i32) -> (i32, i32) {
    %c0_i32 = arith.constant 0 : i32
    %c0_i32_0 = arith.constant 0 : i32
    return %arg0, %c0_i32 : i32, i32
  }
}

module attributes {stable_mosaic.version = 11 : i64} {
  func.func @generator_kernel(%arg0: i32, %arg1: memref<16x64xbf16, #tpu.memory_space<vmem>>, %arg2: memref<64x128xbf16, #tpu.memory_space<vmem>>, %arg3: memref<1x128xf32, #tpu.memory_space<vmem>>, %arg4: memref<128x256xbf16, #tpu.memory_space<vmem>>, %arg5: memref<1x256xf32, #tpu.memory_space<vmem>>, %arg6: memref<1x256xf32, #tpu.memory_space<vmem>>, %arg7: memref<256x512xbf16, #tpu.memory_space<vmem>>, %arg8: memref<1x512xf32, #tpu.memory_space<vmem>>, %arg9: memref<1x512xf32, #tpu.memory_space<vmem>>, %arg10: memref<512x1024xbf16, #tpu.memory_space<vmem>>, %arg11: memref<1x1024xf32, #tpu.memory_space<vmem>>, %arg12: memref<1x1024xf32, #tpu.memory_space<vmem>>, %arg13: memref<1024x896xbf16, #tpu.memory_space<vmem>>, %arg14: memref<1x896xf32, #tpu.memory_space<vmem>>, %arg15: memref<16x896xbf16, #tpu.memory_space<vmem>>) attributes {dimension_semantics = [#tpu.dimension_semantics<arbitrary>], iteration_bounds = array<i64: 1>, scalar_prefetch = 0 : i64, scratch_operands = 0 : i64, tpu.core_type = #tpu.core_type<tc>, window_params = [{transform_indices = @transform_0, window_bounds = array<i64: 16, 64>}, {pipeline_mode = #tpu.pipeline_mode<synchronous>, transform_indices = @transform_1, window_bounds = array<i64: 64, 128>}, {pipeline_mode = #tpu.pipeline_mode<synchronous>, transform_indices = @transform_2, window_bounds = array<i64: 1, 128>}, {pipeline_mode = #tpu.pipeline_mode<synchronous>, transform_indices = @transform_3, window_bounds = array<i64: 128, 256>}, {pipeline_mode = #tpu.pipeline_mode<synchronous>, transform_indices = @transform_4, window_bounds = array<i64: 1, 256>}, {pipeline_mode = #tpu.pipeline_mode<synchronous>, transform_indices = @transform_5, window_bounds = array<i64: 1, 256>}, {pipeline_mode = #tpu.pipeline_mode<synchronous>, transform_indices = @transform_6, window_bounds = array<i64: 256, 512>}, {pipeline_mode = #tpu.pipeline_mode<synchronous>, transform_indices = @transform_7, window_bounds = array<i64: 1, 512>}, {pipeline_mode = #tpu.pipeline_mode<synchronous>, transform_indices = @transform_8, window_bounds = array<i64: 1, 512>}, {pipeline_mode = #tpu.pipeline_mode<synchronous>, transform_indices = @transform_9, window_bounds = array<i64: 512, 1024>}, {pipeline_mode = #tpu.pipeline_mode<synchronous>, transform_indices = @transform_10, window_bounds = array<i64: 1, 1024>}, {pipeline_mode = #tpu.pipeline_mode<synchronous>, transform_indices = @transform_11, window_bounds = array<i64: 1, 1024>}, {pipeline_mode = #tpu.pipeline_mode<synchronous>, transform_indices = @transform_12, window_bounds = array<i64: 1024, 896>}, {pipeline_mode = #tpu.pipeline_mode<synchronous>, transform_indices = @transform_13, window_bounds = array<i64: 1, 896>}, {transform_indices = @transform_14, window_bounds = array<i64: 16, 896>}]} {
    %c0 = arith.constant 0 : index
    %c0_0 = arith.constant 0 : index
    %0 = vector.load %arg1[%c0, %c0_0] : memref<16x64xbf16, #tpu.memory_space<vmem>>, vector<16x64xbf16>
    %c0_1 = arith.constant 0 : index
    %c0_2 = arith.constant 0 : index
    %1 = vector.load %arg2[%c0_1, %c0_2] : memref<64x128xbf16, #tpu.memory_space<vmem>>, vector<64x128xbf16>
    %cst = arith.constant dense<0.000000e+00> : vector<16x128xf32>
    %2 = tpu.matmul %0, %1, %cst {dimension_numbers = #tpu.dot_dimension_numbers<[1], [0], [0], [1], [0, 0, 1, 1], [], []>} : vector<16x64xbf16>, vector<64x128xbf16>, vector<16x128xf32> -> vector<16x128xf32>
    %c0_3 = arith.constant 0 : index
    %c0_4 = arith.constant 0 : index
    %3 = vector.load %arg3[%c0_3, %c0_4] : memref<1x128xf32, #tpu.memory_space<vmem>>, vector<1x128xf32>
    %4 = vector.broadcast %3 : vector<1x128xf32> to vector<16x128xf32>
    %5 = arith.addf %2, %4 : vector<16x128xf32>
    %cst_5 = arith.constant 2.000000e-01 : f32
    %6 = vector.broadcast %cst_5 : f32 to vector<16x128xf32>
    %7 = arith.mulf %6, %5 : vector<16x128xf32>
    %8 = arith.maximumf %5, %7 : vector<16x128xf32>
    %9 = arith.truncf %8 : vector<16x128xf32> to vector<16x128xbf16>
    %c0_6 = arith.constant 0 : index
    %c0_7 = arith.constant 0 : index
    %10 = vector.load %arg4[%c0_6, %c0_7] : memref<128x256xbf16, #tpu.memory_space<vmem>>, vector<128x256xbf16>
    %cst_8 = arith.constant dense<0.000000e+00> : vector<16x256xf32>
    %11 = tpu.matmul %9, %10, %cst_8 {dimension_numbers = #tpu.dot_dimension_numbers<[1], [0], [0], [1], [0, 0, 1, 1], [], []>} : vector<16x128xbf16>, vector<128x256xbf16>, vector<16x256xf32> -> vector<16x256xf32>
    %c0_9 = arith.constant 0 : index
    %c0_10 = arith.constant 0 : index
    %12 = vector.load %arg5[%c0_9, %c0_10] : memref<1x256xf32, #tpu.memory_space<vmem>>, vector<1x256xf32>
    %13 = vector.broadcast %12 : vector<1x256xf32> to vector<16x256xf32>
    %14 = arith.mulf %11, %13 : vector<16x256xf32>
    %c0_11 = arith.constant 0 : index
    %c0_12 = arith.constant 0 : index
    %15 = vector.load %arg6[%c0_11, %c0_12] : memref<1x256xf32, #tpu.memory_space<vmem>>, vector<1x256xf32>
    %16 = vector.broadcast %15 : vector<1x256xf32> to vector<16x256xf32>
    %17 = arith.addf %14, %16 : vector<16x256xf32>
    %cst_13 = arith.constant 2.000000e-01 : f32
    %18 = vector.broadcast %cst_13 : f32 to vector<16x256xf32>
    %19 = arith.mulf %18, %17 : vector<16x256xf32>
    %20 = arith.maximumf %17, %19 : vector<16x256xf32>
    %21 = arith.truncf %20 : vector<16x256xf32> to vector<16x256xbf16>
    %c0_14 = arith.constant 0 : index
    %c0_15 = arith.constant 0 : index
    %22 = vector.load %arg7[%c0_14, %c0_15] : memref<256x512xbf16, #tpu.memory_space<vmem>>, vector<256x512xbf16>
    %cst_16 = arith.constant dense<0.000000e+00> : vector<16x512xf32>
    %23 = tpu.matmul %21, %22, %cst_16 {dimension_numbers = #tpu.dot_dimension_numbers<[1], [0], [0], [1], [0, 0, 1, 1], [], []>} : vector<16x256xbf16>, vector<256x512xbf16>, vector<16x512xf32> -> vector<16x512xf32>
    %c0_17 = arith.constant 0 : index
    %c0_18 = arith.constant 0 : index
    %24 = vector.load %arg8[%c0_17, %c0_18] : memref<1x512xf32, #tpu.memory_space<vmem>>, vector<1x512xf32>
    %25 = vector.broadcast %24 : vector<1x512xf32> to vector<16x512xf32>
    %26 = arith.mulf %23, %25 : vector<16x512xf32>
    %c0_19 = arith.constant 0 : index
    %c0_20 = arith.constant 0 : index
    %27 = vector.load %arg9[%c0_19, %c0_20] : memref<1x512xf32, #tpu.memory_space<vmem>>, vector<1x512xf32>
    %28 = vector.broadcast %27 : vector<1x512xf32> to vector<16x512xf32>
    %29 = arith.addf %26, %28 : vector<16x512xf32>
    %cst_21 = arith.constant 2.000000e-01 : f32
    %30 = vector.broadcast %cst_21 : f32 to vector<16x512xf32>
    %31 = arith.mulf %30, %29 : vector<16x512xf32>
    %32 = arith.maximumf %29, %31 : vector<16x512xf32>
    %33 = arith.truncf %32 : vector<16x512xf32> to vector<16x512xbf16>
    %c0_22 = arith.constant 0 : index
    %c0_23 = arith.constant 0 : index
    %34 = vector.load %arg10[%c0_22, %c0_23] : memref<512x1024xbf16, #tpu.memory_space<vmem>>, vector<512x1024xbf16>
    %cst_24 = arith.constant dense<0.000000e+00> : vector<16x1024xf32>
    %35 = tpu.matmul %33, %34, %cst_24 {dimension_numbers = #tpu.dot_dimension_numbers<[1], [0], [0], [1], [0, 0, 1, 1], [], []>} : vector<16x512xbf16>, vector<512x1024xbf16>, vector<16x1024xf32> -> vector<16x1024xf32>
    %c0_25 = arith.constant 0 : index
    %c0_26 = arith.constant 0 : index
    %36 = vector.load %arg11[%c0_25, %c0_26] : memref<1x1024xf32, #tpu.memory_space<vmem>>, vector<1x1024xf32>
    %37 = vector.broadcast %36 : vector<1x1024xf32> to vector<16x1024xf32>
    %38 = arith.mulf %35, %37 : vector<16x1024xf32>
    %c0_27 = arith.constant 0 : index
    %c0_28 = arith.constant 0 : index
    %39 = vector.load %arg12[%c0_27, %c0_28] : memref<1x1024xf32, #tpu.memory_space<vmem>>, vector<1x1024xf32>
    %40 = vector.broadcast %39 : vector<1x1024xf32> to vector<16x1024xf32>
    %41 = arith.addf %38, %40 : vector<16x1024xf32>
    %cst_29 = arith.constant 2.000000e-01 : f32
    %42 = vector.broadcast %cst_29 : f32 to vector<16x1024xf32>
    %43 = arith.mulf %42, %41 : vector<16x1024xf32>
    %44 = arith.maximumf %41, %43 : vector<16x1024xf32>
    %45 = arith.truncf %44 : vector<16x1024xf32> to vector<16x1024xbf16>
    %c0_30 = arith.constant 0 : index
    %c0_31 = arith.constant 0 : index
    %46 = vector.load %arg13[%c0_30, %c0_31] : memref<1024x896xbf16, #tpu.memory_space<vmem>>, vector<1024x896xbf16>
    %cst_32 = arith.constant dense<0.000000e+00> : vector<16x896xf32>
    %47 = tpu.matmul %45, %46, %cst_32 {dimension_numbers = #tpu.dot_dimension_numbers<[1], [0], [0], [1], [0, 0, 1, 1], [], []>} : vector<16x1024xbf16>, vector<1024x896xbf16>, vector<16x896xf32> -> vector<16x896xf32>
    %c0_33 = arith.constant 0 : index
    %c0_34 = arith.constant 0 : index
    %48 = vector.load %arg14[%c0_33, %c0_34] : memref<1x896xf32, #tpu.memory_space<vmem>>, vector<1x896xf32>
    %49 = vector.broadcast %48 : vector<1x896xf32> to vector<16x896xf32>
    %50 = arith.addf %47, %49 : vector<16x896xf32>
    %51 = math.tanh %50 : vector<16x896xf32>
    %52 = arith.truncf %51 : vector<16x896xf32> to vector<16x896xbf16>
    %c0_35 = arith.constant 0 : index
    %c0_36 = arith.constant 0 : index
    %53 = vector.load %arg15[%c0_35, %c0_36] : memref<16x896xbf16, #tpu.memory_space<vmem>>, vector<16x896xbf16>
    tpu.vector_store %arg15[%c0_35, %c0_36], %52 {strides = array<i32>} : memref<16x896xbf16, #tpu.memory_space<vmem>>, vector<16x896xbf16>,
    return
  }
  func.func @transform_0(%arg0: i32) -> (i32, i32) {
    %c0_i32 = arith.constant 0 : i32
    %c0_i32_0 = arith.constant 0 : i32
    return %arg0, %c0_i32 : i32, i32
  }
  func.func @transform_1(%arg0: i32) -> (i32, i32) {
    %c0_i32 = arith.constant 0 : i32
    %c0_i32_0 = arith.constant 0 : i32
    %c0_i32_1 = arith.constant 0 : i32
    return %c0_i32, %c0_i32_0 : i32, i32
  }
  func.func @transform_2(%arg0: i32) -> (i32, i32) {
    %c0_i32 = arith.constant 0 : i32
    %c0_i32_0 = arith.constant 0 : i32
    %c0_i32_1 = arith.constant 0 : i32
    return %c0_i32, %c0_i32_0 : i32, i32
  }
  func.func @transform_3(%arg0: i32) -> (i32, i32) {
    %c0_i32 = arith.constant 0 : i32
    %c0_i32_0 = arith.constant 0 : i32
    %c0_i32_1 = arith.constant 0 : i32
    return %c0_i32, %c0_i32_0 : i32, i32
  }
  func.func @transform_4(%arg0: i32) -> (i32, i32) {
    %c0_i32 = arith.constant 0 : i32
    %c0_i32_0 = arith.constant 0 : i32
    %c0_i32_1 = arith.constant 0 : i32
    return %c0_i32, %c0_i32_0 : i32, i32
  }
  func.func @transform_5(%arg0: i32) -> (i32, i32) {
    %c0_i32 = arith.constant 0 : i32
    %c0_i32_0 = arith.constant 0 : i32
    %c0_i32_1 = arith.constant 0 : i32
    return %c0_i32, %c0_i32_0 : i32, i32
  }
  func.func @transform_6(%arg0: i32) -> (i32, i32) {
    %c0_i32 = arith.constant 0 : i32
    %c0_i32_0 = arith.constant 0 : i32
    %c0_i32_1 = arith.constant 0 : i32
    return %c0_i32, %c0_i32_0 : i32, i32
  }
  func.func @transform_7(%arg0: i32) -> (i32, i32) {
    %c0_i32 = arith.constant 0 : i32
    %c0_i32_0 = arith.constant 0 : i32
    %c0_i32_1 = arith.constant 0 : i32
    return %c0_i32, %c0_i32_0 : i32, i32
  }
  func.func @transform_8(%arg0: i32) -> (i32, i32) {
    %c0_i32 = arith.constant 0 : i32
    %c0_i32_0 = arith.constant 0 : i32
    %c0_i32_1 = arith.constant 0 : i32
    return %c0_i32, %c0_i32_0 : i32, i32
  }
  func.func @transform_9(%arg0: i32) -> (i32, i32) {
    %c0_i32 = arith.constant 0 : i32
    %c0_i32_0 = arith.constant 0 : i32
    %c0_i32_1 = arith.constant 0 : i32
    return %c0_i32, %c0_i32_0 : i32, i32
  }
  func.func @transform_10(%arg0: i32) -> (i32, i32) {
    %c0_i32 = arith.constant 0 : i32
    %c0_i32_0 = arith.constant 0 : i32
    %c0_i32_1 = arith.constant 0 : i32
    return %c0_i32, %c0_i32_0 : i32, i32
  }
  func.func @transform_11(%arg0: i32) -> (i32, i32) {
    %c0_i32 = arith.constant 0 : i32
    %c0_i32_0 = arith.constant 0 : i32
    %c0_i32_1 = arith.constant 0 : i32
    return %c0_i32, %c0_i32_0 : i32, i32
  }
  func.func @transform_12(%arg0: i32) -> (i32, i32) {
    %c0_i32 = arith.constant 0 : i32
    %c0_i32_0 = arith.constant 0 : i32
    %c0_i32_1 = arith.constant 0 : i32
    return %c0_i32, %c0_i32_0 : i32, i32
  }
  func.func @transform_13(%arg0: i32) -> (i32, i32) {
    %c0_i32 = arith.constant 0 : i32
    %c0_i32_0 = arith.constant 0 : i32
    %c0_i32_1 = arith.constant 0 : i32
    return %c0_i32, %c0_i32_0 : i32, i32
  }
  func.func @transform_14(%arg0: i32) -> (i32, i32) {
    %c0_i32 = arith.constant 0 : i32
    %c0_i32_0 = arith.constant 0 : i32
    return %arg0, %c0_i32 : i32, i32
  }
}

</mosaic_0001>

<llo_original>
// kernel: generator_forward.1
$region0: #{generator_forward.1}
  #allocation0 [shape = 'u32[]', space=smem, size = 0x4, offset = 0x4, fixed_abs, tag = 'smem constant byte address 0x4 - core index']
  #allocation1 [shape = 'u32[144,128]{1,0:T(1,128)}', space=vmem, size = 0x12000, scoped, tag = 'internal scratch']
  %s0 = inlined_call_operand.vmem [shape: bf16[16,64], index: 0, kind: input, shape index: {}]
  %s1 = inlined_call_operand.hbm [shape: bf16[64,128], index: 1, kind: input, shape index: {}]
  %s2 = inlined_call_operand.hbm [shape: f32[1,128], index: 2, kind: input, shape index: {}]
  %s3 = inlined_call_operand.hbm [shape: bf16[128,256], index: 3, kind: input, shape index: {}]
  %s4 = inlined_call_operand.hbm [shape: f32[1,256], index: 4, kind: input, shape index: {}]
  %s5 = inlined_call_operand.hbm [shape: f32[1,256], index: 5, kind: input, shape index: {}]
  %s6 = inlined_call_operand.hbm [shape: bf16[256,512], index: 6, kind: input, shape index: {}]
  %s7 = inlined_call_operand.hbm [shape: f32[1,512], index: 7, kind: input, shape index: {}]
  %s8 = inlined_call_operand.hbm [shape: f32[1,512], index: 8, kind: input, shape index: {}]
  %s9 = inlined_call_operand.hbm [shape: bf16[512,1024], index: 9, kind: input, shape index: {}]
  %s10 = inlined_call_operand.hbm [shape: f32[1,1024], index: 10, kind: input, shape index: {}]
  %s11 = inlined_call_operand.hbm [shape: f32[1,1024], index: 11, kind: input, shape index: {}]
  %s12 = inlined_call_operand.hbm [shape: bf16[1024,896], index: 12, kind: input, shape index: {}]
  %s13 = inlined_call_operand.hbm [shape: f32[1,896], index: 13, kind: input, shape index: {}]
  %s14 = inlined_call_operand.hbm [shape: bf16[16,896], index: 14, kind: output, shape index: {}]
  %s15 = sld [smem:[#allocation0]]
  $region118: #{generator_forward.1} parent=0
    _
  %s17 = ssub.s32 1, %s15
  %s18 = scalar_select 0, %s17, %s15
  $region1: #{generator_forward.1} parent=0
    #allocation2 [shape = 'u8[16384]{0}', space=vmem, size = 0x4000, scoped, tag = 'input window, operand 1, single buffered']
    #allocation3 [shape = 's32[1]{0}', space=sflag, size = 0x4, scoped, tag = 'scoped memory for generator_forward.1']
    #allocation4 [shape = 's32[1]{0}', space=sflag, size = 0x4, scoped, tag = 'scoped memory for generator_forward.1']
    #allocation5 [shape = 'u8[512]{0}', space=vmem, size = 0x400, scoped, tag = 'input window, operand 2, single buffered']
    #allocation6 [shape = 's32[1]{0}', space=sflag, size = 0x4, scoped, tag = 'scoped memory for generator_forward.1']
    #allocation7 [shape = 'u8[65536]{0}', space=vmem, size = 0x10000, scoped, tag = 'input window, operand 3, single buffered']
    #allocation8 [shape = 'u8[1024]{0}', space=vmem, size = 0x400, scoped, tag = 'input window, operand 4, single buffered']
    #allocation9 [shape = 's32[1]{0}', space=sflag, size = 0x4, scoped, tag = 'scoped memory for generator_forward.1']
    #allocation10 [shape = 'u8[1024]{0}', space=vmem, size = 0x400, scoped, tag = 'input window, operand 5, single buffered']
    #allocation11 [shape = 'u8[262144]{0}', space=vmem, size = 0x40000, scoped, tag = 'input window, operand 6, single buffered']
    #allocation12 [shape = 's32[1]{0}', space=sflag, size = 0x4, scoped, tag = 'scoped memory for generator_forward.1']
    #allocation13 [shape = 'u8[2048]{0}', space=vmem, size = 0x800, scoped, tag = 'input window, operand 7, single buffered']
    #allocation14 [shape = 'u8[2048]{0}', space=vmem, size = 0x800, scoped, tag = 'input window, operand 8, single buffered']
    #allocation15 [shape = 's32[1]{0}', space=sflag, size = 0x4, scoped, tag = 'scoped memory for generator_forward.1']
    #allocation16 [shape = 'u8[1048576]{0}', space=vmem, size = 0x100000, scoped, tag = 'input window, operand 9, single buffered']
    #allocation17 [shape = 'u8[4096]{0}', space=vmem, size = 0x1000, scoped, tag = 'input window, operand 10, single buffered']
    #allocation18 [shape = 's32[1]{0}', space=sflag, size = 0x4, scoped, tag = 'scoped memory for generator_forward.1']
    #allocation19 [shape = 'u8[4096]{0}', space=vmem, size = 0x1000, scoped, tag = 'input window, operand 11, single buffered']
    #allocation20 [shape = 'u8[1835008]{0}', space=vmem, size = 0x1c0000, scoped, tag = 'input window, operand 12, single buffered']
    #allocation21 [shape = 's32[1]{0}', space=sflag, size = 0x4, scoped, tag = 'scoped memory for generator_forward.1']
    #allocation22 [shape = 'u8[3584]{0}', space=vmem, size = 0x1000, scoped, tag = 'input window, operand 13, single buffered']
    #allocation23 [shape = 'u8[28672]{0}', space=vmem, size = 0x7000, scoped, tag = 'output window, operand 0, single buffered']
    %19 = vsyncpa [#allocation3], 0
    %20 = vsyncpa [#allocation6], 0
    %21 = vsyncpa [#allocation9], 0
    %22 = vsyncpa [#allocation12], 0
    %23 = vsyncpa [#allocation15], 0
    %24 = vsyncpa [#allocation18], 0
    %25 = vsyncpa [#allocation21], 0
    %26 = vsyncpa [#allocation4], 0
    // Predicated region
    $region2: #{generator_forward.1} parent=1 // pred_check
      _
    $region3: #{generator_forward.1} parent=1 // pred_check_branch
      %28 = sbr.rel (0) target = $region5
    $region4: #{generator_forward.1} parent=1 // pred_region
      _
    $region5: #{generator_forward.1} parent=1 // pred_fallthru
      _
    // Predicated region
    $region6: #{generator_forward.1} parent=1 // pred_check
      _
    $region7: #{generator_forward.1} parent=1 // pred_check_branch
      %30 = sbr.rel (0) target = $region9
    $region8: #{generator_forward.1} parent=1 // pred_region
      %s32 = ssub.s32 512, 512
      %33 = vsyncadd [#allocation3], %s32
      %s34 = sshll.u32 [#allocation2], 4
      %s35 = int_to_ptr.vmem [resolvable:$true] %s34
      %40 = dma.hbm_to_vmem [thread:$0]  %s1, 512, %s35, [#allocation3], 64, 64, 4
    $region9: #{generator_forward.1} parent=1 // pred_fallthru
      _
    // Predicated region
    $region10: #{generator_forward.1} parent=1 // pred_check
      _
    $region11: #{generator_forward.1} parent=1 // pred_check_branch
      %42 = sbr.rel (0) target = $region13
    $region12: #{generator_forward.1} parent=1 // pred_region
      %s44 = ssub.s32 16, 16
      %45 = vsyncadd [#allocation6], %s44
      %s47 = sshll.u32 [#allocation5], 4
      %s48 = int_to_ptr.vmem [resolvable:$true] %s47
      %50 = dma.hbm_to_vmem [thread:$0]  %s2, 16, %s48, [#allocation6]
    $region13: #{generator_forward.1} parent=1 // pred_fallthru
      _
    // Predicated region
    $region14: #{generator_forward.1} parent=1 // pred_check
      _
    $region15: #{generator_forward.1} parent=1 // pred_check_branch
      %52 = sbr.rel (0) target = $region17
    $region16: #{generator_forward.1} parent=1 // pred_region
      %s54 = ssub.s32 2048, 2048
      %55 = vsyncadd [#allocation6], %s54
      %s56 = sshll.u32 [#allocation7], 4
      %s57 = int_to_ptr.vmem [resolvable:$true] %s56
      %62 = dma.hbm_to_vmem [thread:$0]  %s3, 2048, %s57, [#allocation6], 128, 128, 8
    $region17: #{generator_forward.1} parent=1 // pred_fallthru
      _
    // Predicated region
    $region18: #{generator_forward.1} parent=1 // pred_check
      _
    $region19: #{generator_forward.1} parent=1 // pred_check_branch
      %64 = sbr.rel (0) target = $region21
    $region20: #{generator_forward.1} parent=1 // pred_region
      %s66 = ssub.s32 32, 32
      %67 = vsyncadd [#allocation9], %s66
      %s69 = sshll.u32 [#allocation8], 4
      %s70 = int_to_ptr.vmem [resolvable:$true] %s69
      %72 = dma.hbm_to_vmem [thread:$0]  %s4, 32, %s70, [#allocation9]
    $region21: #{generator_forward.1} parent=1 // pred_fallthru
      _
    // Predicated region
    $region22: #{generator_forward.1} parent=1 // pred_check
      _
    $region23: #{generator_forward.1} parent=1 // pred_check_branch
      %74 = sbr.rel (0) target = $region25
    $region24: #{generator_forward.1} parent=1 // pred_region
      %s76 = ssub.s32 32, 32
      %77 = vsyncadd [#allocation9], %s76
      %s79 = sshll.u32 [#allocation10], 4
      %s80 = int_to_ptr.vmem [resolvable:$true] %s79
      %82 = dma.hbm_to_vmem [thread:$0]  %s5, 32, %s80, [#allocation9]
    $region25: #{generator_forward.1} parent=1 // pred_fallthru
      _
    // Predicated region
    $region26: #{generator_forward.1} parent=1 // pred_check
      _
    $region27: #{generator_forward.1} parent=1 // pred_check_branch
      %84 = sbr.rel (0) target = $region29
    $region28: #{generator_forward.1} parent=1 // pred_region
      %s86 = ssub.s32 8192, 8192
      %87 = vsyncadd [#allocation12], %s86
      %s88 = sshll.u32 [#allocation11], 4
      %s89 = int_to_ptr.vmem [resolvable:$true] %s88
      %94 = dma.hbm_to_vmem [thread:$0]  %s6, 8192, %s89, [#allocation12], 256, 256, 16
    $region29: #{generator_forward.1} parent=1 // pred_fallthru
      _
    // Predicated region
    $region30: #{generator_forward.1} parent=1 // pred_check
      _
    $region31: #{generator_forward.1} parent=1 // pred_check_branch
      %96 = sbr.rel (0) target = $region33
    $region32: #{generator_forward.1} parent=1 // pred_region
      %s98 = ssub.s32 64, 64
      %99 = vsyncadd [#allocation12], %s98
      %s101 = sshll.u32 [#allocation13], 4
      %s102 = int_to_ptr.vmem [resolvable:$true] %s101
      %104 = dma.hbm_to_vmem [thread:$0]  %s7, 64, %s102, [#allocation12]
    $region33: #{generator_forward.1} parent=1 // pred_fallthru
      _
    // Predicated region
    $region34: #{generator_forward.1} parent=1 // pred_check
      _
    $region35: #{generator_forward.1} parent=1 // pred_check_branch
      %106 = sbr.rel (0) target = $region37
    $region36: #{generator_forward.1} parent=1 // pred_region
      %s108 = ssub.s32 64, 64
      %109 = vsyncadd [#allocation15], %s108
      %s111 = sshll.u32 [#allocation14], 4
      %s112 = int_to_ptr.vmem [resolvable:$true] %s111
      %114 = dma.hbm_to_vmem [thread:$0]  %s8, 64, %s112, [#allocation15]
    $region37: #{generator_forward.1} parent=1 // pred_fallthru
      _
    // Predicated region
    $region38: #{generator_forward.1} parent=1 // pred_check
      _
    $region39: #{generator_forward.1} parent=1 // pred_check_branch
      %116 = sbr.rel (0) target = $region41
    $region40: #{generator_forward.1} parent=1 // pred_region
      %s118 = ssub.s32 32768, 32768
      %119 = vsyncadd [#allocation15], %s118
      %s120 = sshll.u32 [#allocation16], 4
      %s121 = int_to_ptr.vmem [resolvable:$true] %s120
      %126 = dma.hbm_to_vmem [thread:$0]  %s9, 32768, %s121, [#allocation15], 512, 512, 32
    $region41: #{generator_forward.1} parent=1 // pred_fallthru
      _
    // Predicated region
    $region42: #{generator_forward.1} parent=1 // pred_check
      _
    $region43: #{generator_forward.1} parent=1 // pred_check_branch
      %128 = sbr.rel (0) target = $region45
    $region44: #{generator_forward.1} parent=1 // pred_region
      %s130 = ssub.s32 128, 128
      %131 = vsyncadd [#allocation18], %s130
      %s133 = sshll.u32 [#allocation17], 4
      %s134 = int_to_ptr.vmem [resolvable:$true] %s133
      %136 = dma.hbm_to_vmem [thread:$0]  %s10, 128, %s134, [#allocation18]
    $region45: #{generator_forward.1} parent=1 // pred_fallthru
      _
    // Predicated region
    $region46: #{generator_forward.1} parent=1 // pred_check
      _
    $region47: #{generator_forward.1} parent=1 // pred_check_branch
      %138 = sbr.rel (0) target = $region49
    $region48: #{generator_forward.1} parent=1 // pred_region
      %s140 = ssub.s32 128, 128
      %141 = vsyncadd [#allocation18], %s140
      %s143 = sshll.u32 [#allocation19], 4
      %s144 = int_to_ptr.vmem [resolvable:$true] %s143
      %146 = dma.hbm_to_vmem [thread:$0]  %s11, 128, %s144, [#allocation18]
    $region49: #{generator_forward.1} parent=1 // pred_fallthru
      _
    // Predicated region
    $region50: #{generator_forward.1} parent=1 // pred_check
      _
    $region51: #{generator_forward.1} parent=1 // pred_check_branch
      %148 = sbr.rel (0) target = $region53
    $region52: #{generator_forward.1} parent=1 // pred_region
      %s150 = ssub.s32 57344, 57344
      %151 = vsyncadd [#allocation21], %s150
      %s152 = sshll.u32 [#allocation20], 4
      %s153 = int_to_ptr.vmem [resolvable:$true] %s152
      %158 = dma.hbm_to_vmem [thread:$0]  %s12, 57344, %s153, [#allocation21], 448, 448, 28
    $region53: #{generator_forward.1} parent=1 // pred_fallthru
      _
    // Predicated region
    $region54: #{generator_forward.1} parent=1 // pred_check
      _
    $region55: #{generator_forward.1} parent=1 // pred_check_branch
      %160 = sbr.rel (0) target = $region57
    $region56: #{generator_forward.1} parent=1 // pred_region
      %s162 = ssub.s32 112, 112
      %163 = vsyncadd [#allocation21], %s162
      %s165 = sshll.u32 [#allocation22], 4
      %s166 = int_to_ptr.vmem [resolvable:$true] %s165
      %168 = dma.hbm_to_vmem [thread:$0]  %s13, 112, %s166, [#allocation21]
    $region57: #{generator_forward.1} parent=1 // pred_fallthru
      _
    // Predicated region
    $region58: #{generator_forward.1} parent=1 // pred_check
      _
    $region59: #{generator_forward.1} parent=1 // pred_check_branch
      %170 = sbr.rel (0) target = $region61
    $region60: #{generator_forward.1} parent=1 // pred_region
      %171 = dma.done [#allocation3], 512
    $region61: #{generator_forward.1} parent=1 // pred_fallthru
      _
    // Predicated region
    $region62: #{generator_forward.1} parent=1 // pred_check
      _
    $region63: #{generator_forward.1} parent=1 // pred_check_branch
      %173 = sbr.rel (0) target = $region65
    $region64: #{generator_forward.1} parent=1 // pred_region
      %174 = dma.done [#allocation6], 16
    $region65: #{generator_forward.1} parent=1 // pred_fallthru
      _
    // Predicated region
    $region66: #{generator_forward.1} parent=1 // pred_check
      _
    $region67: #{generator_forward.1} parent=1 // pred_check_branch
      %176 = sbr.rel (0) target = $region69
    $region68: #{generator_forward.1} parent=1 // pred_region
      %177 = dma.done [#allocation6], 2048
    $region69: #{generator_forward.1} parent=1 // pred_fallthru
      _
    // Predicated region
    $region70: #{generator_forward.1} parent=1 // pred_check
      _
    $region71: #{generator_forward.1} parent=1 // pred_check_branch
      %179 = sbr.rel (0) target = $region73
    $region72: #{generator_forward.1} parent=1 // pred_region
      %180 = dma.done [#allocation9], 32
    $region73: #{generator_forward.1} parent=1 // pred_fallthru
      _
    // Predicated region
    $region74: #{generator_forward.1} parent=1 // pred_check
      _
    $region75: #{generator_forward.1} parent=1 // pred_check_branch
      %182 = sbr.rel (0) target = $region77
    $region76: #{generator_forward.1} parent=1 // pred_region
      %183 = dma.done [#allocation9], 32
    $region77: #{generator_forward.1} parent=1 // pred_fallthru
      _
    // Predicated region
    $region78: #{generator_forward.1} parent=1 // pred_check
      _
    $region79: #{generator_forward.1} parent=1 // pred_check_branch
      %185 = sbr.rel (0) target = $region81
    $region80: #{generator_forward.1} parent=1 // pred_region
      %186 = dma.done [#allocation12], 8192
    $region81: #{generator_forward.1} parent=1 // pred_fallthru
      _
    // Predicated region
    $region82: #{generator_forward.1} parent=1 // pred_check
      _
    $region83: #{generator_forward.1} parent=1 // pred_check_branch
      %188 = sbr.rel (0) target = $region85
    $region84: #{generator_forward.1} parent=1 // pred_region
      %189 = dma.done [#allocation12], 64
    $region85: #{generator_forward.1} parent=1 // pred_fallthru
      _
    // Predicated region
    $region86: #{generator_forward.1} parent=1 // pred_check
      _
    $region87: #{generator_forward.1} parent=1 // pred_check_branch
      %191 = sbr.rel (0) target = $region89
    $region88: #{generator_forward.1} parent=1 // pred_region
      %192 = dma.done [#allocation15], 64
    $region89: #{generator_forward.1} parent=1 // pred_fallthru
      _
    // Predicated region
    $region90: #{generator_forward.1} parent=1 // pred_check
      _
    $region91: #{generator_forward.1} parent=1 // pred_check_branch
      %194 = sbr.rel (0) target = $region93
    $region92: #{generator_forward.1} parent=1 // pred_region
      %195 = dma.done [#allocation15], 32768
    $region93: #{generator_forward.1} parent=1 // pred_fallthru
      _
    // Predicated region
    $region94: #{generator_forward.1} parent=1 // pred_check
      _
    $region95: #{generator_forward.1} parent=1 // pred_check_branch
      %197 = sbr.rel (0) target = $region97
    $region96: #{generator_forward.1} parent=1 // pred_region
      %198 = dma.done [#allocation18], 128
    $region97: #{generator_forward.1} parent=1 // pred_fallthru
      _
    // Predicated region
    $region98: #{generator_forward.1} parent=1 // pred_check
      _
    $region99: #{generator_forward.1} parent=1 // pred_check_branch
      %200 = sbr.rel (0) target = $region101
    $region100: #{generator_forward.1} parent=1 // pred_region
      %201 = dma.done [#allocation18], 128
    $region101: #{generator_forward.1} parent=1 // pred_fallthru
      _
    // Predicated region
    $region102: #{generator_forward.1} parent=1 // pred_check
      _
    $region103: #{generator_forward.1} parent=1 // pred_check_branch
      %203 = sbr.rel (0) target = $region105
    $region104: #{generator_forward.1} parent=1 // pred_region
      %204 = dma.done [#allocation21], 57344
    $region105: #{generator_forward.1} parent=1 // pred_fallthru
      _
    // Predicated region
    $region106: #{generator_forward.1} parent=1 // pred_check
      _
    $region107: #{generator_forward.1} parent=1 // pred_check_branch
      %206 = sbr.rel (0) target = $region109
    $region108: #{generator_forward.1} parent=1 // pred_region
      %207 = dma.done [#allocation21], 112
    $region109: #{generator_forward.1} parent=1 // pred_fallthru
      _
    %v209 = vld [vmem:[%s0] sm:$0xf]
    %v210 = vld [vmem:[%s0 + $0x4] sm:$0xf]
    %v211 = vld [vmem:[#allocation2] sm:$0xf]
    %v212 = vld [vmem:[#allocation2 + $0x4] sm:$0xf]
    %v213 = vld [vmem:[#allocation2 + $0x8] sm:$0xf]
    %v214 = vld [vmem:[#allocation2 + $0xc] sm:$0xf]
    %v215 = vld [vmem:[#allocation2 + $0x10] sm:$0xf]
    %v216 = vld [vmem:[#allocation2 + $0x14] sm:$0xf]
    %v217 = vld [vmem:[#allocation2 + $0x18] sm:$0xf]
    %v218 = vld [vmem:[#allocation2 + $0x1c] sm:$0xf]
    %v219 = vld [vmem:[#allocation5] sm:$0x1]
    %v221 = vlaneseq
    %v222 = vshrl.u32 %v221, 7
    %v223 = vsub.s32 0, %v222
    %v224 = vrot.slane %v219, %v223
    %v228 = vunpack.c.l.b16 %v209
    %v229 = vunpack.c.l.b16 %v210
    %v230 = vpack.c.b16 %v229, %v228
    %v239 = vunpack.c.l.b16 %v211
    %v240 = vunpack.c.l.b16 %v212
    %v241 = vunpack.c.l.b16 %v213
    %v242 = vunpack.c.l.b16 %v214
    %v243 = vunpack.c.l.b16 %v215
    %v244 = vunpack.c.l.b16 %v216
    %v245 = vunpack.c.l.b16 %v217
    %v246 = vunpack.c.l.b16 %v218
    %v247 = vpack.c.b16 %v240, %v239
    %v248 = vpack.c.b16 %v242, %v241
    %v249 = vpack.c.b16 %v244, %v243
    %v250 = vpack.c.b16 %v246, %v245
    %vm255 = vcmask 523264
    %v257 = vsel %vm255, %v230, 0
    %259 = vmatprep.subr.bf16.mxu0 0
    %260 = vmatpush1.bf16.msra.mxu0 0
    %261 = vmatprep.subr.bf16.mxu0 0
    %262 = vmatpush1.bf16.msra.mxu0 0
    %263 = vmatprep.subr.bf16.mxu0 0
    %264 = vmatpush1.bf16.msra.mxu0 0
    %265 = vmatprep.subr.bf16.mxu0 0
    %266 = vmatpush1.bf16.msra.mxu0 0
    %267 = vmatprep.subr.bf16.mxu0 0
    %268 = vmatpush1.bf16.msra.mxu0 %v250
    %269 = vmatprep.subr.bf16.mxu0 0
    %270 = vmatpush1.bf16.msra.mxu0 %v249
    %271 = vmatprep.subr.bf16.mxu0 0
    %272 = vmatpush1.bf16.msra.mxu0 %v248
    %273 = vmatprep.subr.bf16.mxu0 0
    %274 = vmatpush1.bf16.msra.mxu0 %v247
    %275 = vmatprep.subr.bf16.mxu0 0
    %276 = vmatpush2.bf16.msra.mxu0 0
    %277 = vmatprep.subr.bf16.mxu0 0
    %278 = vmatpush2.bf16.msra.mxu0 0
    %279 = vmatprep.subr.bf16.mxu0 0
    %280 = vmatpush2.bf16.msra.mxu0 0
    %281 = vmatprep.subr.bf16.mxu0 0
    %282 = vmatpush2.bf16.msra.mxu0 0
    %283 = vmatprep.subr.bf16.mxu0 0
    %284 = vmatpush2.bf16.msra.mxu0 0
    %285 = vmatprep.subr.bf16.mxu0 0
    %286 = vmatpush2.bf16.msra.mxu0 0
    %287 = vmatprep.subr.bf16.mxu0 0
    %288 = vmatpush2.bf16.msra.mxu0 0
    %289 = vmatprep.subr.bf16.mxu0 0
    %290 = vmatpush2.bf16.msra.mxu0 0
    %291 = vmatprep.mubr.bf16.mxu0 0
    %292 = vmatmul.mubr.bf16.gmra.mxu0 %v257
    %v293 = vpop.f32.mrf.mxu0
    %v294 = vadd.f32 %v224, %v293
    %v295 = vpop.f32.mrf.mxu0
    %v296 = vpop.f32.mrf.mxu0
    %v297 = vadd.f32 %v224, %v296
    %v298 = vpop.f32.mrf.mxu0
    %299 = vdwg.mxu0
    %v300 = vmul.f32 %v294, 0.2
    %v301 = vmul.f32 %v297, 0.2
    %v302 = vmax.f32 %v294, %v300
    %v303 = vmax.f32 %v297, %v301
    %v304 = vpack.c.bf16 %v303, %v302
    %v305 = vld [vmem:[#allocation7] sm:$0xff]
    %v306 = vld [vmem:[#allocation7 + $0x8] sm:$0xff]
    %v307 = vld [vmem:[#allocation7 + $0x10] sm:$0xff]
    %v308 = vld [vmem:[#allocation7 + $0x18] sm:$0xff]
    %v309 = vld [vmem:[#allocation7 + $0x20] sm:$0xff]
    %v310 = vld [vmem:[#allocation7 + $0x28] sm:$0xff]
    %v311 = vld [vmem:[#allocation7 + $0x30] sm:$0xff]
    %v312 = vld [vmem:[#allocation7 + $0x38] sm:$0xff]
    %v313 = vld [vmem:[#allocation7 + $0x40] sm:$0xff]
    %v314 = vld [vmem:[#allocation7 + $0x48] sm:$0xff]
    %v315 = vld [vmem:[#allocation7 + $0x50] sm:$0xff]
    %v316 = vld [vmem:[#allocation7 + $0x58] sm:$0xff]
    %v317 = vld [vmem:[#allocation7 + $0x60] sm:$0xff]
    %v318 = vld [vmem:[#allocation7 + $0x68] sm:$0xff]
    %v319 = vld [vmem:[#allocation7 + $0x70] sm:$0xff]
    %v320 = vld [vmem:[#allocation7 + $0x78] sm:$0xff]
    %v337 = vunpack.c.l.b16 %v305
    %v338 = vunpack.c.h.b16 %v305
    %v339 = vunpack.c.l.b16 %v306
    %v340 = vunpack.c.h.b16 %v306
    %v341 = vunpack.c.l.b16 %v307
    %v342 = vunpack.c.h.b16 %v307
    %v343 = vunpack.c.l.b16 %v308
    %v344 = vunpack.c.h.b16 %v308
    %v345 = vunpack.c.l.b16 %v309
    %v346 = vunpack.c.h.b16 %v309
    %v347 = vunpack.c.l.b16 %v310
    %v348 = vunpack.c.h.b16 %v310
    %v349 = vunpack.c.l.b16 %v311
    %v350 = vunpack.c.h.b16 %v311
    %v351 = vunpack.c.l.b16 %v312
    %v352 = vunpack.c.h.b16 %v312
    %v353 = vunpack.c.l.b16 %v313
    %v354 = vunpack.c.h.b16 %v313
    %v355 = vunpack.c.l.b16 %v314
    %v356 = vunpack.c.h.b16 %v314
    %v357 = vunpack.c.l.b16 %v315
    %v358 = vunpack.c.h.b16 %v315
    %v359 = vunpack.c.l.b16 %v316
    %v360 = vunpack.c.h.b16 %v316
    %v361 = vunpack.c.l.b16 %v317
    %v362 = vunpack.c.h.b16 %v317
    %v363 = vunpack.c.l.b16 %v318
    %v364 = vunpack.c.h.b16 %v318
    %v365 = vunpack.c.l.b16 %v319
    %v366 = vunpack.c.h.b16 %v319
    %v367 = vunpack.c.l.b16 %v320
    %v368 = vunpack.c.h.b16 %v320
    %v369 = vpack.c.b16 %v339, %v337
    %v370 = vpack.c.b16 %v340, %v338
    %v371 = vpack.c.b16 %v343, %v341
    %v372 = vpack.c.b16 %v344, %v342
    %v373 = vpack.c.b16 %v347, %v345
    %v374 = vpack.c.b16 %v348, %v346
    %v375 = vpack.c.b16 %v351, %v349
    %v376 = vpack.c.b16 %v352, %v350
    %v377 = vpack.c.b16 %v355, %v353
    %v378 = vpack.c.b16 %v356, %v354
    %v379 = vpack.c.b16 %v359, %v357
    %v380 = vpack.c.b16 %v360, %v358
    %v381 = vpack.c.b16 %v363, %v361
    %v382 = vpack.c.b16 %v364, %v362
    %v383 = vpack.c.b16 %v367, %v365
    %v384 = vpack.c.b16 %v368, %v366
    %401 = vmatprep.subr.bf16.mxu0 %v384
    %402 = vmatpush1.bf16.msra.mxu0 %v383
    %403 = vmatprep.subr.bf16.mxu0 %v382
    %404 = vmatpush1.bf16.msra.mxu0 %v381
    %405 = vmatprep.subr.bf16.mxu0 %v380
    %406 = vmatpush1.bf16.msra.mxu0 %v379
    %407 = vmatprep.subr.bf16.mxu0 %v378
    %408 = vmatpush1.bf16.msra.mxu0 %v377
    %409 = vmatprep.subr.bf16.mxu0 %v376
    %410 = vmatpush1.bf16.msra.mxu0 %v375
    %411 = vmatprep.subr.bf16.mxu0 %v374
    %412 = vmatpush1.bf16.msra.mxu0 %v373
    %413 = vmatprep.subr.bf16.mxu0 %v372
    %414 = vmatpush1.bf16.msra.mxu0 %v371
    %415 = vmatprep.subr.bf16.mxu0 %v370
    %416 = vmatpush1.bf16.msra.mxu0 %v369
    %417 = vmatprep.subr.bf16.mxu0 0
    %418 = vmatpush2.bf16.msra.mxu0 0
    %419 = vmatprep.subr.bf16.mxu0 0
    %420 = vmatpush2.bf16.msra.mxu0 0
    %421 = vmatprep.subr.bf16.mxu0 0
    %422 = vmatpush2.bf16.msra.mxu0 0
    %423 = vmatprep.subr.bf16.mxu0 0
    %424 = vmatpush2.bf16.msra.mxu0 0
    %425 = vmatprep.subr.bf16.mxu0 0
    %426 = vmatpush2.bf16.msra.mxu0 0
    %427 = vmatprep.subr.bf16.mxu0 0
    %428 = vmatpush2.bf16.msra.mxu0 0
    %429 = vmatprep.subr.bf16.mxu0 0
    %430 = vmatpush2.bf16.msra.mxu0 0
    %431 = vmatprep.subr.bf16.mxu0 0
    %432 = vmatpush2.bf16.msra.mxu0 0
    %433 = vmatprep.mubr.bf16.mxu0 0
    %434 = vmatmul.mubr.bf16.gmra.mxu0 %v304
    %v435 = vpop.f32.mrf.mxu0
    %v436 = vadd.f32 0.0, %v435
    %v437 = vpop.f32.mrf.mxu0
    %v438 = vadd.f32 0.0, %v437
    %v439 = vpop.f32.mrf.mxu0
    %v440 = vadd.f32 0.0, %v439
    %v441 = vpop.f32.mrf.mxu0
    %v442 = vadd.f32 0.0, %v441
    %443 = vdwg.mxu0
    %v444 = vld [vmem:[#allocation8] sm:$0x3]
    %v446 = vlaneseq
    %v447 = vshrl.u32 %v446, 7
    %v448 = vsub.s32 0, %v447
    %v449 = vrot.slane %v444, %v448
    %v450 = vlaneseq
    %v451 = vshrl.u32 %v450, 7
    %v452 = vsub.s32 1, %v451
    %v453 = vrot.slane %v444, %v452
    %v456 = vmul.f32 %v436, %v449
    %v457 = vmul.f32 %v438, %v453
    %v458 = vmul.f32 %v440, %v449
    %v459 = vmul.f32 %v442, %v453
    %v460 = vld [vmem:[#allocation10] sm:$0x3]
    %v462 = vlaneseq
    %v463 = vshrl.u32 %v462, 7
    %v464 = vsub.s32 0, %v463
    %v465 = vrot.slane %v460, %v464
    %v466 = vlaneseq
    %v467 = vshrl.u32 %v466, 7
    %v468 = vsub.s32 1, %v467
    %v469 = vrot.slane %v460, %v468
    %v472 = vadd.f32 %v456, %v465
    %v473 = vadd.f32 %v457, %v469
    %v474 = vadd.f32 %v458, %v465
    %v475 = vadd.f32 %v459, %v469
    %v476 = vmul.f32 %v472, 0.2
    %v477 = vmul.f32 %v473, 0.2
    %v478 = vmul.f32 %v474, 0.2
    %v479 = vmul.f32 %v475, 0.2
    %v480 = vmax.f32 %v472, %v476
    %v481 = vmax.f32 %v473, %v477
    %v482 = vmax.f32 %v474, %v478
    %v483 = vmax.f32 %v475, %v479
    %v484 = vpack.c.bf16 %v482, %v480
    %v485 = vpack.c.bf16 %v483, %v481
    %v486 = vld [vmem:[#allocation11] sm:$0xff]
    %v487 = vld [vmem:[#allocation11 + $0x8] sm:$0xff]
    %v488 = vld [vmem:[#allocation11 + $0x10] sm:$0xff]
    %v489 = vld [vmem:[#allocation11 + $0x18] sm:$0xff]
    %v490 = vld [vmem:[#allocation11 + $0x20] sm:$0xff]
    %v491 = vld [vmem:[#allocation11 + $0x28] sm:$0xff]
    %v492 = vld [vmem:[#allocation11 + $0x30] sm:$0xff]
    %v493 = vld [vmem:[#allocation11 + $0x38] sm:$0xff]
    %v494 = vld [vmem:[#allocation11 + $0x40] sm:$0xff]
    %v495 = vld [vmem:[#allocation11 + $0x48] sm:$0xff]
    %v496 = vld [vmem:[#allocation11 + $0x50] sm:$0xff]
    %v497 = vld [vmem:[#allocation11 + $0x58] sm:$0xff]
    %v498 = vld [vmem:[#allocation11 + $0x60] sm:$0xff]
    %v499 = vld [vmem:[#allocation11 + $0x68] sm:$0xff]
    %v500 = vld [vmem:[#allocation11 + $0x70] sm:$0xff]
    %v501 = vld [vmem:[#allocation11 + $0x78] sm:$0xff]
    %v502 = vld [vmem:[#allocation11 + $0x80] sm:$0xff]
    %v503 = vld [vmem:[#allocation11 + $0x88] sm:$0xff]
    %v504 = vld [vmem:[#allocation11 + $0x90] sm:$0xff]
    %v505 = vld [vmem:[#allocation11 + $0x98] sm:$0xff]
    %v506 = vld [vmem:[#allocation11 + $0xa0] sm:$0xff]
    %v507 = vld [vmem:[#allocation11 + $0xa8] sm:$0xff]
    %v508 = vld [vmem:[#allocation11 + $0xb0] sm:$0xff]
    %v509 = vld [vmem:[#allocation11 + $0xb8] sm:$0xff]
    %v510 = vld [vmem:[#allocation11 + $0xc0] sm:$0xff]
    %v511 = vld [vmem:[#allocation11 + $0xc8] sm:$0xff]
    %v512 = vld [vmem:[#allocation11 + $0xd0] sm:$0xff]
    %v513 = vld [vmem:[#allocation11 + $0xd8] sm:$0xff]
    %v514 = vld [vmem:[#allocation11 + $0xe0] sm:$0xff]
    %v515 = vld [vmem:[#allocation11 + $0xe8] sm:$0xff]
    %v516 = vld [vmem:[#allocation11 + $0xf0] sm:$0xff]
    %v517 = vld [vmem:[#allocation11 + $0xf8] sm:$0xff]
    %v518 = vld [vmem:[#allocation11 + $0x100] sm:$0xff]
    %v519 = vld [vmem:[#allocation11 + $0x108] sm:$0xff]
    %v520 = vld [vmem:[#allocation11 + $0x110] sm:$0xff]
    %v521 = vld [vmem:[#allocation11 + $0x118] sm:$0xff]
    %v522 = vld [vmem:[#allocation11 + $0x120] sm:$0xff]
    %v523 = vld [vmem:[#allocation11 + $0x128] sm:$0xff]
    %v524 = vld [vmem:[#allocation11 + $0x130] sm:$0xff]
    %v525 = vld [vmem:[#allocation11 + $0x138] sm:$0xff]
    %v526 = vld [vmem:[#allocation11 + $0x140] sm:$0xff]
    %v527 = vld [vmem:[#allocation11 + $0x148] sm:$0xff]
    %v528 = vld [vmem:[#allocation11 + $0x150] sm:$0xff]
    %v529 = vld [vmem:[#allocation11 + $0x158] sm:$0xff]
    %v530 = vld [vmem:[#allocation11 + $0x160] sm:$0xff]
    %v531 = vld [vmem:[#allocation11 + $0x168] sm:$0xff]
    %v532 = vld [vmem:[#allocation11 + $0x170] sm:$0xff]
    %v533 = vld [vmem:[#allocation11 + $0x178] sm:$0xff]
    %v534 = vld [vmem:[#allocation11 + $0x180] sm:$0xff]
    %v535 = vld [vmem:[#allocation11 + $0x188] sm:$0xff]
    %v536 = vld [vmem:[#allocation11 + $0x190] sm:$0xff]
    %v537 = vld [vmem:[#allocation11 + $0x198] sm:$0xff]
    %v538 = vld [vmem:[#allocation11 + $0x1a0] sm:$0xff]
    %v539 = vld [vmem:[#allocation11 + $0x1a8] sm:$0xff]
    %v540 = vld [vmem:[#allocation11 + $0x1b0] sm:$0xff]
    %v541 = vld [vmem:[#allocation11 + $0x1b8] sm:$0xff]
    %v542 = vld [vmem:[#allocation11 + $0x1c0] sm:$0xff]
    %v543 = vld [vmem:[#allocation11 + $0x1c8] sm:$0xff]
    %v544 = vld [vmem:[#allocation11 + $0x1d0] sm:$0xff]
    %v545 = vld [vmem:[#allocation11 + $0x1d8] sm:$0xff]
    %v546 = vld [vmem:[#allocation11 + $0x1e0] sm:$0xff]
    %v547 = vld [vmem:[#allocation11 + $0x1e8] sm:$0xff]
    %v548 = vld [vmem:[#allocation11 + $0x1f0] sm:$0xff]
    %v549 = vld [vmem:[#allocation11 + $0x1f8] sm:$0xff]
    %v614 = vunpack.c.l.b16 %v486
    %v615 = vunpack.c.h.b16 %v486
    %v616 = vunpack.c.l.b16 %v487
    %v617 = vunpack.c.h.b16 %v487
    %v618 = vunpack.c.l.b16 %v488
    %v619 = vunpack.c.h.b16 %v488
    %v620 = vunpack.c.l.b16 %v489
    %v621 = vunpack.c.h.b16 %v489
    %v622 = vunpack.c.l.b16 %v490
    %v623 = vunpack.c.h.b16 %v490
    %v624 = vunpack.c.l.b16 %v491
    %v625 = vunpack.c.h.b16 %v491
    %v626 = vunpack.c.l.b16 %v492
    %v627 = vunpack.c.h.b16 %v492
    %v628 = vunpack.c.l.b16 %v493
    %v629 = vunpack.c.h.b16 %v493
    %v630 = vunpack.c.l.b16 %v494
    %v631 = vunpack.c.h.b16 %v494
    %v632 = vunpack.c.l.b16 %v495
    %v633 = vunpack.c.h.b16 %v495
    %v634 = vunpack.c.l.b16 %v496
    %v635 = vunpack.c.h.b16 %v496
    %v636 = vunpack.c.l.b16 %v497
    %v637 = vunpack.c.h.b16 %v497
    %v638 = vunpack.c.l.b16 %v498
    %v639 = vunpack.c.h.b16 %v498
    %v640 = vunpack.c.l.b16 %v499
    %v641 = vunpack.c.h.b16 %v499
    %v642 = vunpack.c.l.b16 %v500
    %v643 = vunpack.c.h.b16 %v500
    %v644 = vunpack.c.l.b16 %v501
    %v645 = vunpack.c.h.b16 %v501
    %v646 = vunpack.c.l.b16 %v502
    %v647 = vunpack.c.h.b16 %v502
    %v648 = vunpack.c.l.b16 %v503
    %v649 = vunpack.c.h.b16 %v503
    %v650 = vunpack.c.l.b16 %v504
    %v651 = vunpack.c.h.b16 %v504
    %v652 = vunpack.c.l.b16 %v505
    %v653 = vunpack.c.h.b16 %v505
    %v654 = vunpack.c.l.b16 %v506
    %v655 = vunpack.c.h.b16 %v506
    %v656 = vunpack.c.l.b16 %v507
    %v657 = vunpack.c.h.b16 %v507
    %v658 = vunpack.c.l.b16 %v508
    %v659 = vunpack.c.h.b16 %v508
    %v660 = vunpack.c.l.b16 %v509
    %v661 = vunpack.c.h.b16 %v509
    %v662 = vunpack.c.l.b16 %v510
    %v663 = vunpack.c.h.b16 %v510
    %v664 = vunpack.c.l.b16 %v511
    %v665 = vunpack.c.h.b16 %v511
    %v666 = vunpack.c.l.b16 %v512
    %v667 = vunpack.c.h.b16 %v512
    %v668 = vunpack.c.l.b16 %v513
    %v669 = vunpack.c.h.b16 %v513
    %v670 = vunpack.c.l.b16 %v514
    %v671 = vunpack.c.h.b16 %v514
    %v672 = vunpack.c.l.b16 %v515
    %v673 = vunpack.c.h.b16 %v515
    %v674 = vunpack.c.l.b16 %v516
    %v675 = vunpack.c.h.b16 %v516
    %v676 = vunpack.c.l.b16 %v517
    %v677 = vunpack.c.h.b16 %v517
    %v678 = vunpack.c.l.b16 %v518
    %v679 = vunpack.c.h.b16 %v518
    %v680 = vunpack.c.l.b16 %v519
    %v681 = vunpack.c.h.b16 %v519
    %v682 = vunpack.c.l.b16 %v520
    %v683 = vunpack.c.h.b16 %v520
    %v684 = vunpack.c.l.b16 %v521
    %v685 = vunpack.c.h.b16 %v521
    %v686 = vunpack.c.l.b16 %v522
    %v687 = vunpack.c.h.b16 %v522
    %v688 = vunpack.c.l.b16 %v523
    %v689 = vunpack.c.h.b16 %v523
    %v690 = vunpack.c.l.b16 %v524
    %v691 = vunpack.c.h.b16 %v524
    %v692 = vunpack.c.l.b16 %v525
    %v693 = vunpack.c.h.b16 %v525
    %v694 = vunpack.c.l.b16 %v526
    %v695 = vunpack.c.h.b16 %v526
    %v696 = vunpack.c.l.b16 %v527
    %v697 = vunpack.c.h.b16 %v527
    %v698 = vunpack.c.l.b16 %v528
    %v699 = vunpack.c.h.b16 %v528
    %v700 = vunpack.c.l.b16 %v529
    %v701 = vunpack.c.h.b16 %v529
    %v702 = vunpack.c.l.b16 %v530
    %v703 = vunpack.c.h.b16 %v530
    %v704 = vunpack.c.l.b16 %v531
    %v705 = vunpack.c.h.b16 %v531
    %v706 = vunpack.c.l.b16 %v532
    %v707 = vunpack.c.h.b16 %v532
    %v708 = vunpack.c.l.b16 %v533
    %v709 = vunpack.c.h.b16 %v533
    %v710 = vunpack.c.l.b16 %v534
    %v711 = vunpack.c.h.b16 %v534
    %v712 = vunpack.c.l.b16 %v535
    %v713 = vunpack.c.h.b16 %v535
    %v714 = vunpack.c.l.b16 %v536
    %v715 = vunpack.c.h.b16 %v536
    %v716 = vunpack.c.l.b16 %v537
    %v717 = vunpack.c.h.b16 %v537
    %v718 = vunpack.c.l.b16 %v538
    %v719 = vunpack.c.h.b16 %v538
    %v720 = vunpack.c.l.b16 %v539
    %v721 = vunpack.c.h.b16 %v539
    %v722 = vunpack.c.l.b16 %v540
    %v723 = vunpack.c.h.b16 %v540
    %v724 = vunpack.c.l.b16 %v541
    %v725 = vunpack.c.h.b16 %v541
    %v726 = vunpack.c.l.b16 %v542
    %v727 = vunpack.c.h.b16 %v542
    %v728 = vunpack.c.l.b16 %v543
    %v729 = vunpack.c.h.b16 %v543
    %v730 = vunpack.c.l.b16 %v544
    %v731 = vunpack.c.h.b16 %v544
    %v732 = vunpack.c.l.b16 %v545
    %v733 = vunpack.c.h.b16 %v545
    %v734 = vunpack.c.l.b16 %v546
    %v735 = vunpack.c.h.b16 %v546
    %v736 = vunpack.c.l.b16 %v547
    %v737 = vunpack.c.h.b16 %v547
    %v738 = vunpack.c.l.b16 %v548
    %v739 = vunpack.c.h.b16 %v548
    %v740 = vunpack.c.l.b16 %v549
    %v741 = vunpack.c.h.b16 %v549
    %v742 = vpack.c.b16 %v618, %v614
    %v743 = vpack.c.b16 %v619, %v615
    %v744 = vpack.c.b16 %v620, %v616
    %v745 = vpack.c.b16 %v621, %v617
    %v746 = vpack.c.b16 %v626, %v622
    %v747 = vpack.c.b16 %v627, %v623
    %v748 = vpack.c.b16 %v628, %v624
    %v749 = vpack.c.b16 %v629, %v625
    %v750 = vpack.c.b16 %v634, %v630
    %v751 = vpack.c.b16 %v635, %v631
    %v752 = vpack.c.b16 %v636, %v632
    %v753 = vpack.c.b16 %v637, %v633
    %v754 = vpack.c.b16 %v642, %v638
    %v755 = vpack.c.b16 %v643, %v639
    %v756 = vpack.c.b16 %v644, %v640
    %v757 = vpack.c.b16 %v645, %v641
    %v758 = vpack.c.b16 %v650, %v646
    %v759 = vpack.c.b16 %v651, %v647
    %v760 = vpack.c.b16 %v652, %v648
    %v761 = vpack.c.b16 %v653, %v649
    %v762 = vpack.c.b16 %v658, %v654
    %v763 = vpack.c.b16 %v659, %v655
    %v764 = vpack.c.b16 %v660, %v656
    %v765 = vpack.c.b16 %v661, %v657
    %v766 = vpack.c.b16 %v666, %v662
    %v767 = vpack.c.b16 %v667, %v663
    %v768 = vpack.c.b16 %v668, %v664
    %v769 = vpack.c.b16 %v669, %v665
    %v770 = vpack.c.b16 %v674, %v670
    %v771 = vpack.c.b16 %v675, %v671
    %v772 = vpack.c.b16 %v676, %v672
    %v773 = vpack.c.b16 %v677, %v673
    %v774 = vpack.c.b16 %v682, %v678
    %v775 = vpack.c.b16 %v683, %v679
    %v776 = vpack.c.b16 %v684, %v680
    %v777 = vpack.c.b16 %v685, %v681
    %v778 = vpack.c.b16 %v690, %v686
    %v779 = vpack.c.b16 %v691, %v687
    %v780 = vpack.c.b16 %v692, %v688
    %v781 = vpack.c.b16 %v693, %v689
    %v782 = vpack.c.b16 %v698, %v694
    %v783 = vpack.c.b16 %v699, %v695
    %v784 = vpack.c.b16 %v700, %v696
    %v785 = vpack.c.b16 %v701, %v697
    %v786 = vpack.c.b16 %v706, %v702
    %v787 = vpack.c.b16 %v707, %v703
    %v788 = vpack.c.b16 %v708, %v704
    %v789 = vpack.c.b16 %v709, %v705
    %v790 = vpack.c.b16 %v714, %v710
    %v791 = vpack.c.b16 %v715, %v711
    %v792 = vpack.c.b16 %v716, %v712
    %v793 = vpack.c.b16 %v717, %v713
    %v794 = vpack.c.b16 %v722, %v718
    %v795 = vpack.c.b16 %v723, %v719
    %v796 = vpack.c.b16 %v724, %v720
    %v797 = vpack.c.b16 %v725, %v721
    %v798 = vpack.c.b16 %v730, %v726
    %v799 = vpack.c.b16 %v731, %v727
    %v800 = vpack.c.b16 %v732, %v728
    %v801 = vpack.c.b16 %v733, %v729
    %v802 = vpack.c.b16 %v738, %v734
    %v803 = vpack.c.b16 %v739, %v735
    %v804 = vpack.c.b16 %v740, %v736
    %v805 = vpack.c.b16 %v741, %v737
    %870 = vmatprep.subr.bf16.mxu0 %v771
    %871 = vmatpush1.bf16.msra.mxu0 %v770
    %872 = vmatprep.subr.bf16.mxu0 %v767
    %873 = vmatpush1.bf16.msra.mxu0 %v766
    %874 = vmatprep.subr.bf16.mxu0 %v763
    %875 = vmatpush1.bf16.msra.mxu0 %v762
    %876 = vmatprep.subr.bf16.mxu0 %v759
    %877 = vmatpush1.bf16.msra.mxu0 %v758
    %878 = vmatprep.subr.bf16.mxu0 %v755
    %879 = vmatpush1.bf16.msra.mxu0 %v754
    %880 = vmatprep.subr.bf16.mxu0 %v751
    %881 = vmatpush1.bf16.msra.mxu0 %v750
    %882 = vmatprep.subr.bf16.mxu0 %v747
    %883 = vmatpush1.bf16.msra.mxu0 %v746
    %884 = vmatprep.subr.bf16.mxu0 %v743
    %885 = vmatpush1.bf16.msra.mxu0 %v742
    %886 = vmatprep.subr.bf16.mxu0 %v803
    %887 = vmatpush2.bf16.msra.mxu0 %v802
    %888 = vmatprep.subr.bf16.mxu0 %v799
    %889 = vmatpush2.bf16.msra.mxu0 %v798
    %890 = vmatprep.subr.bf16.mxu0 %v795
    %891 = vmatpush2.bf16.msra.mxu0 %v794
    %892 = vmatprep.subr.bf16.mxu0 %v791
    %893 = vmatpush2.bf16.msra.mxu0 %v790
    %894 = vmatprep.subr.bf16.mxu0 %v787
    %895 = vmatpush2.bf16.msra.mxu0 %v786
    %896 = vmatprep.subr.bf16.mxu0 %v783
    %897 = vmatpush2.bf16.msra.mxu0 %v782
    %898 = vmatprep.subr.bf16.mxu0 %v779
    %899 = vmatpush2.bf16.msra.mxu0 %v778
    %900 = vmatprep.subr.bf16.mxu0 %v775
    %901 = vmatpush2.bf16.msra.mxu0 %v774
    %902 = vmatprep.mubr.bf16.mxu0 %v485
    %903 = vmatmul.mubr.bf16.gmra.mxu0 %v484
    %v904 = vpop.f32.mrf.mxu0
    %v905 = vadd.f32 0.0, %v904
    %v906 = vpop.f32.mrf.mxu0
    %v907 = vadd.f32 0.0, %v906
    %v908 = vpop.f32.mrf.mxu0
    %v909 = vadd.f32 0.0, %v908
    %v910 = vpop.f32.mrf.mxu0
    %v911 = vadd.f32 0.0, %v910
    %912 = vdwg.mxu0
    %913 = vmatprep.subr.bf16.mxu0 %v773
    %914 = vmatpush1.bf16.msra.mxu0 %v772
    %915 = vmatprep.subr.bf16.mxu0 %v769
    %916 = vmatpush1.bf16.msra.mxu0 %v768
    %917 = vmatprep.subr.bf16.mxu0 %v765
    %918 = vmatpush1.bf16.msra.mxu0 %v764
    %919 = vmatprep.subr.bf16.mxu0 %v761
    %920 = vmatpush1.bf16.msra.mxu0 %v760
    %921 = vmatprep.subr.bf16.mxu0 %v757
    %922 = vmatpush1.bf16.msra.mxu0 %v756
    %923 = vmatprep.subr.bf16.mxu0 %v753
    %924 = vmatpush1.bf16.msra.mxu0 %v752
    %925 = vmatprep.subr.bf16.mxu0 %v749
    %926 = vmatpush1.bf16.msra.mxu0 %v748
    %927 = vmatprep.subr.bf16.mxu0 %v745
    %928 = vmatpush1.bf16.msra.mxu0 %v744
    %929 = vmatprep.subr.bf16.mxu0 %v805
    %930 = vmatpush2.bf16.msra.mxu0 %v804
    %931 = vmatprep.subr.bf16.mxu0 %v801
    %932 = vmatpush2.bf16.msra.mxu0 %v800
    %933 = vmatprep.subr.bf16.mxu0 %v797
    %934 = vmatpush2.bf16.msra.mxu0 %v796
    %935 = vmatprep.subr.bf16.mxu0 %v793
    %936 = vmatpush2.bf16.msra.mxu0 %v792
    %937 = vmatprep.subr.bf16.mxu0 %v789
    %938 = vmatpush2.bf16.msra.mxu0 %v788
    %939 = vmatprep.subr.bf16.mxu0 %v785
    %940 = vmatpush2.bf16.msra.mxu0 %v784
    %941 = vmatprep.subr.bf16.mxu0 %v781
    %942 = vmatpush2.bf16.msra.mxu0 %v780
    %943 = vmatprep.subr.bf16.mxu0 %v777
    %944 = vmatpush2.bf16.msra.mxu0 %v776
    %945 = vmatprep.mubr.bf16.mxu0 %v485
    %946 = vmatmul.mubr.bf16.gmra.mxu0 %v484
    %v947 = vpop.f32.mrf.mxu0
    %v948 = vadd.f32 0.0, %v947
    %v949 = vpop.f32.mrf.mxu0
    %v950 = vadd.f32 0.0, %v949
    %v951 = vpop.f32.mrf.mxu0
    %v952 = vadd.f32 0.0, %v951
    %v953 = vpop.f32.mrf.mxu0
    %v954 = vadd.f32 0.0, %v953
    %955 = vdwg.mxu0
    %v956 = vld [vmem:[#allocation13] sm:$0xf]
    %v958 = vlaneseq
    %v959 = vshrl.u32 %v958, 7
    %v960 = vsub.s32 0, %v959
    %v961 = vrot.slane %v956, %v960
    %v962 = vlaneseq
    %v963 = vshrl.u32 %v962, 7
    %v964 = vsub.s32 1, %v963
    %v965 = vrot.slane %v956, %v964
    %v966 = vlaneseq
    %v967 = vshrl.u32 %v966, 7
    %v968 = vsub.s32 2, %v967
    %v969 = vrot.slane %v956, %v968
    %v970 = vlaneseq
    %v971 = vshrl.u32 %v970, 7
    %v972 = vsub.s32 3, %v971
    %v973 = vrot.slane %v956, %v972
    %v978 = vmul.f32 %v905, %v961
    %v979 = vmul.f32 %v907, %v965
    %v980 = vmul.f32 %v948, %v969
    %v981 = vmul.f32 %v950, %v973
    %v982 = vmul.f32 %v909, %v961
    %v983 = vmul.f32 %v911, %v965
    %v984 = vmul.f32 %v952, %v969
    %v985 = vmul.f32 %v954, %v973
    %v986 = vld [vmem:[#allocation14] sm:$0xf]
    %v988 = vlaneseq
    %v989 = vshrl.u32 %v988, 7
    %v990 = vsub.s32 0, %v989
    %v991 = vrot.slane %v986, %v990
    %v992 = vlaneseq
    %v993 = vshrl.u32 %v992, 7
    %v994 = vsub.s32 1, %v993
    %v995 = vrot.slane %v986, %v994
    %v996 = vlaneseq
    %v997 = vshrl.u32 %v996, 7
    %v998 = vsub.s32 2, %v997
    %v999 = vrot.slane %v986, %v998
    %v1000 = vlaneseq
    %v1001 = vshrl.u32 %v1000, 7
    %v1002 = vsub.s32 3, %v1001
    %v1003 = vrot.slane %v986, %v1002
    %v1008 = vadd.f32 %v978, %v991
    %v1009 = vadd.f32 %v979, %v995
    %v1010 = vadd.f32 %v980, %v999
    %v1011 = vadd.f32 %v981, %v1003
    %v1012 = vadd.f32 %v982, %v991
    %v1013 = vadd.f32 %v983, %v995
    %v1014 = vadd.f32 %v984, %v999
    %v1015 = vadd.f32 %v985, %v1003
    %v1016 = vmul.f32 %v1008, 0.2
    %v1017 = vmul.f32 %v1009, 0.2
    %v1018 = vmul.f32 %v1010, 0.2
    %v1019 = vmul.f32 %v1011, 0.2
    %v1020 = vmul.f32 %v1012, 0.2
    %v1021 = vmul.f32 %v1013, 0.2
    %v1022 = vmul.f32 %v1014, 0.2
    %v1023 = vmul.f32 %v1015, 0.2
    %v1024 = vmax.f32 %v1008, %v1016
    %v1025 = vmax.f32 %v1009, %v1017
    %v1026 = vmax.f32 %v1010, %v1018
    %v1027 = vmax.f32 %v1011, %v1019
    %v1028 = vmax.f32 %v1012, %v1020
    %v1029 = vmax.f32 %v1013, %v1021
    %v1030 = vmax.f32 %v1014, %v1022
    %v1031 = vmax.f32 %v1015, %v1023
    %v1032 = vpack.c.bf16 %v1028, %v1024
    %v1033 = vpack.c.bf16 %v1029, %v1025
    %v1034 = vpack.c.bf16 %v1030, %v1026
    %v1035 = vpack.c.bf16 %v1031, %v1027
    %v1036 = vld [vmem:[#allocation16] sm:$0xff]
    %v1037 = vld [vmem:[#allocation16 + $0x8] sm:$0xff]
    %v1038 = vld [vmem:[#allocation16 + $0x10] sm:$0xff]
    %v1039 = vld [vmem:[#allocation16 + $0x18] sm:$0xff]
    %v1040 = vld [vmem:[#allocation16 + $0x20] sm:$0xff]
    %v1041 = vld [vmem:[#allocation16 + $0x28] sm:$0xff]
    %v1042 = vld [vmem:[#allocation16 + $0x30] sm:$0xff]
    %v1043 = vld [vmem:[#allocation16 + $0x38] sm:$0xff]
    %v1044 = vld [vmem:[#allocation16 + $0x40] sm:$0xff]
    %v1045 = vld [vmem:[#allocation16 + $0x48] sm:$0xff]
    %v1046 = vld [vmem:[#allocation16 + $0x50] sm:$0xff]
    %v1047 = vld [vmem:[#allocation16 + $0x58] sm:$0xff]
    %v1048 = vld [vmem:[#allocation16 + $0x60] sm:$0xff]
    %v1049 = vld [vmem:[#allocation16 + $0x68] sm:$0xff]
    %v1050 = vld [vmem:[#allocation16 + $0x70] sm:$0xff]
    %v1051 = vld [vmem:[#allocation16 + $0x78] sm:$0xff]
    %v1052 = vld [vmem:[#allocation16 + $0x80] sm:$0xff]
    %v1053 = vld [vmem:[#allocation16 + $0x88] sm:$0xff]
    %v1054 = vld [vmem:[#allocation16 + $0x90] sm:$0xff]
    %v1055 = vld [vmem:[#allocation16 + $0x98] sm:$0xff]
    %v1056 = vld [vmem:[#allocation16 + $0xa0] sm:$0xff]
    %v1057 = vld [vmem:[#allocation16 + $0xa8] sm:$0xff]
    %v1058 = vld [vmem:[#allocation16 + $0xb0] sm:$0xff]
    %v1059 = vld [vmem:[#allocation16 + $0xb8] sm:$0xff]
    %v1060 = vld [vmem:[#allocation16 + $0xc0] sm:$0xff]
    %v1061 = vld [vmem:[#allocation16 + $0xc8] sm:$0xff]
    %v1062 = vld [vmem:[#allocation16 + $0xd0] sm:$0xff]
    %v1063 = vld [vmem:[#allocation16 + $0xd8] sm:$0xff]
    %v1064 = vld [vmem:[#allocation16 + $0xe0] sm:$0xff]
    %v1065 = vld [vmem:[#allocation16 + $0xe8] sm:$0xff]
    %v1066 = vld [vmem:[#allocation16 + $0xf0] sm:$0xff]
    %v1067 = vld [vmem:[#allocation16 + $0xf8] sm:$0xff]
    %v1068 = vld [vmem:[#allocation16 + $0x100] sm:$0xff]
    %v1069 = vld [vmem:[#allocation16 + $0x108] sm:$0xff]
    %v1070 = vld [vmem:[#allocation16 + $0x110] sm:$0xff]
    %v1071 = vld [vmem:[#allocation16 + $0x118] sm:$0xff]
    %v1072 = vld [vmem:[#allocation16 + $0x120] sm:$0xff]
    %v1073 = vld [vmem:[#allocation16 + $0x128] sm:$0xff]
    %v1074 = vld [vmem:[#allocation16 + $0x130] sm:$0xff]
    %v1075 = vld [vmem:[#allocation16 + $0x138] sm:$0xff]
    %v1076 = vld [vmem:[#allocation16 + $0x140] sm:$0xff]
    %v1077 = vld [vmem:[#allocation16 + $0x148] sm:$0xff]
    %v1078 = vld [vmem:[#allocation16 + $0x150] sm:$0xff]
    %v1079 = vld [vmem:[#allocation16 + $0x158] sm:$0xff]
    %v1080 = vld [vmem:[#allocation16 + $0x160] sm:$0xff]
    %v1081 = vld [vmem:[#allocation16 + $0x168] sm:$0xff]
    %v1082 = vld [vmem:[#allocation16 + $0x170] sm:$0xff]
    %v1083 = vld [vmem:[#allocation16 + $0x178] sm:$0xff]
    %v1084 = vld [vmem:[#allocation16 + $0x180] sm:$0xff]
    %v1085 = vld [vmem:[#allocation16 + $0x188] sm:$0xff]
    %v1086 = vld [vmem:[#allocation16 + $0x190] sm:$0xff]
    %v1087 = vld [vmem:[#allocation16 + $0x198] sm:$0xff]
    %v1088 = vld [vmem:[#allocation16 + $0x1a0] sm:$0xff]
    %v1089 = vld [vmem:[#allocation16 + $0x1a8] sm:$0xff]
    %v1090 = vld [vmem:[#allocation16 + $0x1b0] sm:$0xff]
    %v1091 = vld [vmem:[#allocation16 + $0x1b8] sm:$0xff]
    %v1092 = vld [vmem:[#allocation16 + $0x1c0] sm:$0xff]
    %v1093 = vld [vmem:[#allocation16 + $0x1c8] sm:$0xff]
    %v1094 = vld [vmem:[#allocation16 + $0x1d0] sm:$0xff]
    %v1095 = vld [vmem:[#allocation16 + $0x1d8] sm:$0xff]
    %v1096 = vld [vmem:[#allocation16 + $0x1e0] sm:$0xff]
    %v1097 = vld [vmem:[#allocation16 + $0x1e8] sm:$0xff]
    %v1098 = vld [vmem:[#allocation16 + $0x1f0] sm:$0xff]
    %v1099 = vld [vmem:[#allocation16 + $0x1f8] sm:$0xff]
    %v1100 = vld [vmem:[#allocation16 + $0x200] sm:$0xff]
    %v1101 = vld [vmem:[#allocation16 + $0x208] sm:$0xff]
    %v1102 = vld [vmem:[#allocation16 + $0x210] sm:$0xff]
    %v1103 = vld [vmem:[#allocation16 + $0x218] sm:$0xff]
    %v1104 = vld [vmem:[#allocation16 + $0x220] sm:$0xff]
    %v1105 = vld [vmem:[#allocation16 + $0x228] sm:$0xff]
    %v1106 = vld [vmem:[#allocation16 + $0x230] sm:$0xff]
    %v1107 = vld [vmem:[#allocation16 + $0x238] sm:$0xff]
    %v1108 = vld [vmem:[#allocation16 + $0x240] sm:$0xff]
    %v1109 = vld [vmem:[#allocation16 + $0x248] sm:$0xff]
    %v1110 = vld [vmem:[#allocation16 + $0x250] sm:$0xff]
    %v1111 = vld [vmem:[#allocation16 + $0x258] sm:$0xff]
    %v1112 = vld [vmem:[#allocation16 + $0x260] sm:$0xff]
    %v1113 = vld [vmem:[#allocation16 + $0x268] sm:$0xff]
    %v1114 = vld [vmem:[#allocation16 + $0x270] sm:$0xff]
    %v1115 = vld [vmem:[#allocation16 + $0x278] sm:$0xff]
    %v1116 = vld [vmem:[#allocation16 + $0x280] sm:$0xff]
    %v1117 = vld [vmem:[#allocation16 + $0x288] sm:$0xff]
    %v1118 = vld [vmem:[#allocation16 + $0x290] sm:$0xff]
    %v1119 = vld [vmem:[#allocation16 + $0x298] sm:$0xff]
    %v1120 = vld [vmem:[#allocation16 + $0x2a0] sm:$0xff]
    %v1121 = vld [vmem:[#allocation16 + $0x2a8] sm:$0xff]
    %v1122 = vld [vmem:[#allocation16 + $0x2b0] sm:$0xff]
    %v1123 = vld [vmem:[#allocation16 + $0x2b8] sm:$0xff]
    %v1124 = vld [vmem:[#allocation16 + $0x2c0] sm:$0xff]
    %v1125 = vld [vmem:[#allocation16 + $0x2c8] sm:$0xff]
    %v1126 = vld [vmem:[#allocation16 + $0x2d0] sm:$0xff]
    %v1127 = vld [vmem:[#allocation16 + $0x2d8] sm:$0xff]
    %v1128 = vld [vmem:[#allocation16 + $0x2e0] sm:$0xff]
    %v1129 = vld [vmem:[#allocation16 + $0x2e8] sm:$0xff]
    %v1130 = vld [vmem:[#allocation16 + $0x2f0] sm:$0xff]
    %v1131 = vld [vmem:[#allocation16 + $0x2f8] sm:$0xff]
    %v1132 = vld [vmem:[#allocation16 + $0x300] sm:$0xff]
    %v1133 = vld [vmem:[#allocation16 + $0x308] sm:$0xff]
    %v1134 = vld [vmem:[#allocation16 + $0x310] sm:$0xff]
    %v1135 = vld [vmem:[#allocation16 + $0x318] sm:$0xff]
    %v1136 = vld [vmem:[#allocation16 + $0x320] sm:$0xff]
    %v1137 = vld [vmem:[#allocation16 + $0x328] sm:$0xff]
    %v1138 = vld [vmem:[#allocation16 + $0x330] sm:$0xff]
    %v1139 = vld [vmem:[#allocation16 + $0x338] sm:$0xff]
    %v1140 = vld [vmem:[#allocation16 + $0x340] sm:$0xff]
    %v1141 = vld [vmem:[#allocation16 + $0x348] sm:$0xff]
    %v1142 = vld [vmem:[#allocation16 + $0x350] sm:$0xff]
    %v1143 = vld [vmem:[#allocation16 + $0x358] sm:$0xff]
    %v1144 = vld [vmem:[#allocation16 + $0x360] sm:$0xff]
    %v1145 = vld [vmem:[#allocation16 + $0x368] sm:$0xff]
    %v1146 = vld [vmem:[#allocation16 + $0x370] sm:$0xff]
    %v1147 = vld [vmem:[#allocation16 + $0x378] sm:$0xff]
    %v1148 = vld [vmem:[#allocation16 + $0x380] sm:$0xff]
    %v1149 = vld [vmem:[#allocation16 + $0x388] sm:$0xff]
    %v1150 = vld [vmem:[#allocation16 + $0x390] sm:$0xff]
    %v1151 = vld [vmem:[#allocation16 + $0x398] sm:$0xff]
    %v1152 = vld [vmem:[#allocation16 + $0x3a0] sm:$0xff]
    %v1153 = vld [vmem:[#allocation16 + $0x3a8] sm:$0xff]
    %v1154 = vld [vmem:[#allocation16 + $0x3b0] sm:$0xff]
    %v1155 = vld [vmem:[#allocation16 + $0x3b8] sm:$0xff]
    %v1156 = vld [vmem:[#allocation16 + $0x3c0] sm:$0xff]
    %v1157 = vld [vmem:[#allocation16 + $0x3c8] sm:$0xff]
    %v1158 = vld [vmem:[#allocation16 + $0x3d0] sm:$0xff]
    %v1159 = vld [vmem:[#allocation16 + $0x3d8] sm:$0xff]
    %v1160 = vld [vmem:[#allocation16 + $0x3e0] sm:$0xff]
    %v1161 = vld [vmem:[#allocation16 + $0x3e8] sm:$0xff]
    %v1162 = vld [vmem:[#allocation16 + $0x3f0] sm:$0xff]
    %v1163 = vld [vmem:[#allocation16 + $0x3f8] sm:$0xff]
    %v1164 = vld [vmem:[#allocation16 + $0x400] sm:$0xff]
    %v1165 = vld [vmem:[#allocation16 + $0x408] sm:$0xff]
    %v1166 = vld [vmem:[#allocation16 + $0x410] sm:$0xff]
    %v1167 = vld [vmem:[#allocation16 + $0x418] sm:$0xff]
    %v1168 = vld [vmem:[#allocation16 + $0x420] sm:$0xff]
    %v1169 = vld [vmem:[#allocation16 + $0x428] sm:$0xff]
    %v1170 = vld [vmem:[#allocation16 + $0x430] sm:$0xff]
    %v1171 = vld [vmem:[#allocation16 + $0x438] sm:$0xff]
    %v1172 = vld [vmem:[#allocation16 + $0x440] sm:$0xff]
    %v1173 = vld [vmem:[#allocation16 + $0x448] sm:$0xff]
    %v1174 = vld [vmem:[#allocation16 + $0x450] sm:$0xff]
    %v1175 = vld [vmem:[#allocation16 + $0x458] sm:$0xff]
    %v1176 = vld [vmem:[#allocation16 + $0x460] sm:$0xff]
    %v1177 = vld [vmem:[#allocation16 + $0x468] sm:$0xff]
    %v1178 = vld [vmem:[#allocation16 + $0x470] sm:$0xff]
    %v1179 = vld [vmem:[#allocation16 + $0x478] sm:$0xff]
    %v1180 = vld [vmem:[#allocation16 + $0x480] sm:$0xff]
    %v1181 = vld [vmem:[#allocation16 + $0x488] sm:$0xff]
    %v1182 = vld [vmem:[#allocation16 + $0x490] sm:$0xff]
    %v1183 = vld [vmem:[#allocation16 + $0x498] sm:$0xff]
    %v1184 = vld [vmem:[#allocation16 + $0x4a0] sm:$0xff]
    %v1185 = vld [vmem:[#allocation16 + $0x4a8] sm:$0xff]
    %v1186 = vld [vmem:[#allocation16 + $0x4b0] sm:$0xff]
    %v1187 = vld [vmem:[#allocation16 + $0x4b8] sm:$0xff]
    %v1188 = vld [vmem:[#allocation16 + $0x4c0] sm:$0xff]
    %v1189 = vld [vmem:[#allocation16 + $0x4c8] sm:$0xff]
    %v1190 = vld [vmem:[#allocation16 + $0x4d0] sm:$0xff]
    %v1191 = vld [vmem:[#allocation16 + $0x4d8] sm:$0xff]
    %v1192 = vld [vmem:[#allocation16 + $0x4e0] sm:$0xff]
    %v1193 = vld [vmem:[#allocation16 + $0x4e8] sm:$0xff]
    %v1194 = vld [vmem:[#allocation16 + $0x4f0] sm:$0xff]
    %v1195 = vld [vmem:[#allocation16 + $0x4f8] sm:$0xff]
    %v1196 = vld [vmem:[#allocation16 + $0x500] sm:$0xff]
    %v1197 = vld [vmem:[#allocation16 + $0x508] sm:$0xff]
    %v1198 = vld [vmem:[#allocation16 + $0x510] sm:$0xff]
    %v1199 = vld [vmem:[#allocation16 + $0x518] sm:$0xff]
    %v1200 = vld [vmem:[#allocation16 + $0x520] sm:$0xff]
    %v1201 = vld [vmem:[#allocation16 + $0x528] sm:$0xff]
    %v1202 = vld [vmem:[#allocation16 + $0x530] sm:$0xff]
    %v1203 = vld [vmem:[#allocation16 + $0x538] sm:$0xff]
    %v1204 = vld [vmem:[#allocation16 + $0x540] sm:$0xff]
    %v1205 = vld [vmem:[#allocation16 + $0x548] sm:$0xff]
    %v1206 = vld [vmem:[#allocation16 + $0x550] sm:$0xff]
    %v1207 = vld [vmem:[#allocation16 + $0x558] sm:$0xff]
    %v1208 = vld [vmem:[#allocation16 + $0x560] sm:$0xff]
    %v1209 = vld [vmem:[#allocation16 + $0x568] sm:$0xff]
    %v1210 = vld [vmem:[#allocation16 + $0x570] sm:$0xff]
    %v1211 = vld [vmem:[#allocation16 + $0x578] sm:$0xff]
    %v1212 = vld [vmem:[#allocation16 + $0x580] sm:$0xff]
    %v1213 = vld [vmem:[#allocation16 + $0x588] sm:$0xff]
    %v1214 = vld [vmem:[#allocation16 + $0x590] sm:$0xff]
    %v1215 = vld [vmem:[#allocation16 + $0x598] sm:$0xff]
    %v1216 = vld [vmem:[#allocation16 + $0x5a0] sm:$0xff]
    %v1217 = vld [vmem:[#allocation16 + $0x5a8] sm:$0xff]
    %v1218 = vld [vmem:[#allocation16 + $0x5b0] sm:$0xff]
    %v1219 = vld [vmem:[#allocation16 + $0x5b8] sm:$0xff]
    %v1220 = vld [vmem:[#allocation16 + $0x5c0] sm:$0xff]
    %v1221 = vld [vmem:[#allocation16 + $0x5c8] sm:$0xff]
    %v1222 = vld [vmem:[#allocation16 + $0x5d0] sm:$0xff]
    %v1223 = vld [vmem:[#allocation16 + $0x5d8] sm:$0xff]
    %v1224 = vld [vmem:[#allocation16 + $0x5e0] sm:$0xff]
    %v1225 = vld [vmem:[#allocation16 + $0x5e8] sm:$0xff]
    %v1226 = vld [vmem:[#allocation16 + $0x5f0] sm:$0xff]
    %v1227 = vld [vmem:[#allocation16 + $0x5f8] sm:$0xff]
    %v1228 = vld [vmem:[#allocation16 + $0x600] sm:$0xff]
    %v1229 = vld [vmem:[#allocation16 + $0x608] sm:$0xff]
    %v1230 = vld [vmem:[#allocation16 + $0x610] sm:$0xff]
    %v1231 = vld [vmem:[#allocation16 + $0x618] sm:$0xff]
    %v1232 = vld [vmem:[#allocation16 + $0x620] sm:$0xff]
    %v1233 = vld [vmem:[#allocation16 + $0x628] sm:$0xff]
    %v1234 = vld [vmem:[#allocation16 + $0x630] sm:$0xff]
    %v1235 = vld [vmem:[#allocation16 + $0x638] sm:$0xff]
    %v1236 = vld [vmem:[#allocation16 + $0x640] sm:$0xff]
    %v1237 = vld [vmem:[#allocation16 + $0x648] sm:$0xff]
    %v1238 = vld [vmem:[#allocation16 + $0x650] sm:$0xff]
    %v1239 = vld [vmem:[#allocation16 + $0x658] sm:$0xff]
    %v1240 = vld [vmem:[#allocation16 + $0x660] sm:$0xff]
    %v1241 = vld [vmem:[#allocation16 + $0x668] sm:$0xff]
    %v1242 = vld [vmem:[#allocation16 + $0x670] sm:$0xff]
    %v1243 = vld [vmem:[#allocation16 + $0x678] sm:$0xff]
    %v1244 = vld [vmem:[#allocation16 + $0x680] sm:$0xff]
    %v1245 = vld [vmem:[#allocation16 + $0x688] sm:$0xff]
    %v1246 = vld [vmem:[#allocation16 + $0x690] sm:$0xff]
    %v1247 = vld [vmem:[#allocation16 + $0x698] sm:$0xff]
    %v1248 = vld [vmem:[#allocation16 + $0x6a0] sm:$0xff]
    %v1249 = vld [vmem:[#allocation16 + $0x6a8] sm:$0xff]
    %v1250 = vld [vmem:[#allocation16 + $0x6b0] sm:$0xff]
    %v1251 = vld [vmem:[#allocation16 + $0x6b8] sm:$0xff]
    %v1252 = vld [vmem:[#allocation16 + $0x6c0] sm:$0xff]
    %v1253 = vld [vmem:[#allocation16 + $0x6c8] sm:$0xff]
    %v1254 = vld [vmem:[#allocation16 + $0x6d0] sm:$0xff]
    %v1255 = vld [vmem:[#allocation16 + $0x6d8] sm:$0xff]
    %v1256 = vld [vmem:[#allocation16 + $0x6e0] sm:$0xff]
    %v1257 = vld [vmem:[#allocation16 + $0x6e8] sm:$0xff]
    %v1258 = vld [vmem:[#allocation16 + $0x6f0] sm:$0xff]
    %v1259 = vld [vmem:[#allocation16 + $0x6f8] sm:$0xff]
    %v1260 = vld [vmem:[#allocation16 + $0x700] sm:$0xff]
    %v1261 = vld [vmem:[#allocation16 + $0x708] sm:$0xff]
    %v1262 = vld [vmem:[#allocation16 + $0x710] sm:$0xff]
    %v1263 = vld [vmem:[#allocation16 + $0x718] sm:$0xff]
    %v1264 = vld [vmem:[#allocation16 + $0x720] sm:$0xff]
    %v1265 = vld [vmem:[#allocation16 + $0x728] sm:$0xff]
    %v1266 = vld [vmem:[#allocation16 + $0x730] sm:$0xff]
    %v1267 = vld [vmem:[#allocation16 + $0x738] sm:$0xff]
    %v1268 = vld [vmem:[#allocation16 + $0x740] sm:$0xff]
    %v1269 = vld [vmem:[#allocation16 + $0x748] sm:$0xff]
    %v1270 = vld [vmem:[#allocation16 + $0x750] sm:$0xff]
    %v1271 = vld [vmem:[#allocation16 + $0x758] sm:$0xff]
    %v1272 = vld [vmem:[#allocation16 + $0x760] sm:$0xff]
    %v1273 = vld [vmem:[#allocation16 + $0x768] sm:$0xff]
    %v1274 = vld [vmem:[#allocation16 + $0x770] sm:$0xff]
    %v1275 = vld [vmem:[#allocation16 + $0x778] sm:$0xff]
    %v1276 = vld [vmem:[#allocation16 + $0x780] sm:$0xff]
    %v1277 = vld [vmem:[#allocation16 + $0x788] sm:$0xff]
    %v1278 = vld [vmem:[#allocation16 + $0x790] sm:$0xff]
    %v1279 = vld [vmem:[#allocation16 + $0x798] sm:$0xff]
    %v1280 = vld [vmem:[#allocation16 + $0x7a0] sm:$0xff]
    %v1281 = vld [vmem:[#allocation16 + $0x7a8] sm:$0xff]
    %v1282 = vld [vmem:[#allocation16 + $0x7b0] sm:$0xff]
    %v1283 = vld [vmem:[#allocation16 + $0x7b8] sm:$0xff]
    %v1284 = vld [vmem:[#allocation16 + $0x7c0] sm:$0xff]
    %v1285 = vld [vmem:[#allocation16 + $0x7c8] sm:$0xff]
    %v1286 = vld [vmem:[#allocation16 + $0x7d0] sm:$0xff]
    %v1287 = vld [vmem:[#allocation16 + $0x7d8] sm:$0xff]
    %v1288 = vld [vmem:[#allocation16 + $0x7e0] sm:$0xff]
    %v1289 = vld [vmem:[#allocation16 + $0x7e8] sm:$0xff]
    %v1290 = vld [vmem:[#allocation16 + $0x7f0] sm:$0xff]
    %v1291 = vld [vmem:[#allocation16 + $0x7f8] sm:$0xff]
    %v1548 = vunpack.c.l.b16 %v1036
    %v1549 = vunpack.c.h.b16 %v1036
    %v1550 = vunpack.c.l.b16 %v1037
    %v1551 = vunpack.c.h.b16 %v1037
    %v1552 = vunpack.c.l.b16 %v1038
    %v1553 = vunpack.c.h.b16 %v1038
    %v1554 = vunpack.c.l.b16 %v1039
    %v1555 = vunpack.c.h.b16 %v1039
    %v1556 = vunpack.c.l.b16 %v1040
    %v1557 = vunpack.c.h.b16 %v1040
    %v1558 = vunpack.c.l.b16 %v1041
    %v1559 = vunpack.c.h.b16 %v1041
    %v1560 = vunpack.c.l.b16 %v1042
    %v1561 = vunpack.c.h.b16 %v1042
    %v1562 = vunpack.c.l.b16 %v1043
    %v1563 = vunpack.c.h.b16 %v1043
    %v1564 = vunpack.c.l.b16 %v1044
    %v1565 = vunpack.c.h.b16 %v1044
    %v1566 = vunpack.c.l.b16 %v1045
    %v1567 = vunpack.c.h.b16 %v1045
    %v1568 = vunpack.c.l.b16 %v1046
    %v1569 = vunpack.c.h.b16 %v1046
    %v1570 = vunpack.c.l.b16 %v1047
    %v1571 = vunpack.c.h.b16 %v1047
    %v1572 = vunpack.c.l.b16 %v1048
    %v1573 = vunpack.c.h.b16 %v1048
    %v1574 = vunpack.c.l.b16 %v1049
    %v1575 = vunpack.c.h.b16 %v1049
    %v1576 = vunpack.c.l.b16 %v1050
    %v1577 = vunpack.c.h.b16 %v1050
    %v1578 = vunpack.c.l.b16 %v1051
    %v1579 = vunpack.c.h.b16 %v1051
    %v1580 = vunpack.c.l.b16 %v1052
    %v1581 = vunpack.c.h.b16 %v1052
    %v1582 = vunpack.c.l.b16 %v1053
    %v1583 = vunpack.c.h.b16 %v1053
    %v1584 = vunpack.c.l.b16 %v1054
    %v1585 = vunpack.c.h.b16 %v1054
    %v1586 = vunpack.c.l.b16 %v1055
    %v1587 = vunpack.c.h.b16 %v1055
    %v1588 = vunpack.c.l.b16 %v1056
    %v1589 = vunpack.c.h.b16 %v1056
    %v1590 = vunpack.c.l.b16 %v1057
    %v1591 = vunpack.c.h.b16 %v1057
    %v1592 = vunpack.c.l.b16 %v1058
    %v1593 = vunpack.c.h.b16 %v1058
    %v1594 = vunpack.c.l.b16 %v1059
    %v1595 = vunpack.c.h.b16 %v1059
    %v1596 = vunpack.c.l.b16 %v1060
    %v1597 = vunpack.c.h.b16 %v1060
    %v1598 = vunpack.c.l.b16 %v1061
    %v1599 = vunpack.c.h.b16 %v1061
    %v1600 = vunpack.c.l.b16 %v1062
    %v1601 = vunpack.c.h.b16 %v1062
    %v1602 = vunpack.c.l.b16 %v1063
    %v1603 = vunpack.c.h.b16 %v1063
    %v1604 = vunpack.c.l.b16 %v1064
    %v1605 = vunpack.c.h.b16 %v1064
    %v1606 = vunpack.c.l.b16 %v1065
    %v1607 = vunpack.c.h.b16 %v1065
    %v1608 = vunpack.c.l.b16 %v1066
    %v1609 = vunpack.c.h.b16 %v1066
    %v1610 = vunpack.c.l.b16 %v1067
    %v1611 = vunpack.c.h.b16 %v1067
    %v1612 = vunpack.c.l.b16 %v1068
    %v1613 = vunpack.c.h.b16 %v1068
    %v1614 = vunpack.c.l.b16 %v1069
    %v1615 = vunpack.c.h.b16 %v1069
    %v1616 = vunpack.c.l.b16 %v1070
    %v1617 = vunpack.c.h.b16 %v1070
    %v1618 = vunpack.c.l.b16 %v1071
    %v1619 = vunpack.c.h.b16 %v1071
    %v1620 = vunpack.c.l.b16 %v1072
    %v1621 = vunpack.c.h.b16 %v1072
    %v1622 = vunpack.c.l.b16 %v1073
    %v1623 = vunpack.c.h.b16 %v1073
    %v1624 = vunpack.c.l.b16 %v1074
    %v1625 = vunpack.c.h.b16 %v1074
    %v1626 = vunpack.c.l.b16 %v1075
    %v1627 = vunpack.c.h.b16 %v1075
    %v1628 = vunpack.c.l.b16 %v1076
    %v1629 = vunpack.c.h.b16 %v1076
    %v1630 = vunpack.c.l.b16 %v1077
    %v1631 = vunpack.c.h.b16 %v1077
    %v1632 = vunpack.c.l.b16 %v1078
    %v1633 = vunpack.c.h.b16 %v1078
    %v1634 = vunpack.c.l.b16 %v1079
    %v1635 = vunpack.c.h.b16 %v1079
    %v1636 = vunpack.c.l.b16 %v1080
    %v1637 = vunpack.c.h.b16 %v1080
    %v1638 = vunpack.c.l.b16 %v1081
    %v1639 = vunpack.c.h.b16 %v1081
    %v1640 = vunpack.c.l.b16 %v1082
    %v1641 = vunpack.c.h.b16 %v1082
    %v1642 = vunpack.c.l.b16 %v1083
    %v1643 = vunpack.c.h.b16 %v1083
    %v1644 = vunpack.c.l.b16 %v1084
    %v1645 = vunpack.c.h.b16 %v1084
    %v1646 = vunpack.c.l.b16 %v1085
    %v1647 = vunpack.c.h.b16 %v1085
    %v1648 = vunpack.c.l.b16 %v1086
    %v1649 = vunpack.c.h.b16 %v1086
    %v1650 = vunpack.c.l.b16 %v1087
    %v1651 = vunpack.c.h.b16 %v1087
    %v1652 = vunpack.c.l.b16 %v1088
    %v1653 = vunpack.c.h.b16 %v1088
    %v1654 = vunpack.c.l.b16 %v1089
    %v1655 = vunpack.c.h.b16 %v1089
    %v1656 = vunpack.c.l.b16 %v1090
    %v1657 = vunpack.c.h.b16 %v1090
    %v1658 = vunpack.c.l.b16 %v1091
    %v1659 = vunpack.c.h.b16 %v1091
    %v1660 = vunpack.c.l.b16 %v1092
    %v1661 = vunpack.c.h.b16 %v1092
    %v1662 = vunpack.c.l.b16 %v1093
    %v1663 = vunpack.c.h.b16 %v1093
    %v1664 = vunpack.c.l.b16 %v1094
    %v1665 = vunpack.c.h.b16 %v1094
    %v1666 = vunpack.c.l.b16 %v1095
    %v1667 = vunpack.c.h.b16 %v1095
    %v1668 = vunpack.c.l.b16 %v1096
    %v1669 = vunpack.c.h.b16 %v1096
    %v1670 = vunpack.c.l.b16 %v1097
    %v1671 = vunpack.c.h.b16 %v1097
    %v1672 = vunpack.c.l.b16 %v1098
    %v1673 = vunpack.c.h.b16 %v1098
    %v1674 = vunpack.c.l.b16 %v1099
    %v1675 = vunpack.c.h.b16 %v1099
    %v1676 = vunpack.c.l.b16 %v1100
    %v1677 = vunpack.c.h.b16 %v1100
    %v1678 = vunpack.c.l.b16 %v1101
    %v1679 = vunpack.c.h.b16 %v1101
    %v1680 = vunpack.c.l.b16 %v1102
    %v1681 = vunpack.c.h.b16 %v1102
    %v1682 = vunpack.c.l.b16 %v1103
    %v1683 = vunpack.c.h.b16 %v1103
    %v1684 = vunpack.c.l.b16 %v1104
    %v1685 = vunpack.c.h.b16 %v1104
    %v1686 = vunpack.c.l.b16 %v1105
    %v1687 = vunpack.c.h.b16 %v1105
    %v1688 = vunpack.c.l.b16 %v1106
    %v1689 = vunpack.c.h.b16 %v1106
    %v1690 = vunpack.c.l.b16 %v1107
    %v1691 = vunpack.c.h.b16 %v1107
    %v1692 = vunpack.c.l.b16 %v1108
    %v1693 = vunpack.c.h.b16 %v1108
    %v1694 = vunpack.c.l.b16 %v1109
    %v1695 = vunpack.c.h.b16 %v1109
    %v1696 = vunpack.c.l.b16 %v1110
    %v1697 = vunpack.c.h.b16 %v1110
    %v1698 = vunpack.c.l.b16 %v1111
    %v1699 = vunpack.c.h.b16 %v1111
    %v1700 = vunpack.c.l.b16 %v1112
    %v1701 = vunpack.c.h.b16 %v1112
    %v1702 = vunpack.c.l.b16 %v1113
    %v1703 = vunpack.c.h.b16 %v1113
    %v1704 = vunpack.c.l.b16 %v1114
    %v1705 = vunpack.c.h.b16 %v1114
    %v1706 = vunpack.c.l.b16 %v1115
    %v1707 = vunpack.c.h.b16 %v1115
    %v1708 = vunpack.c.l.b16 %v1116
    %v1709 = vunpack.c.h.b16 %v1116
    %v1710 = vunpack.c.l.b16 %v1117
    %v1711 = vunpack.c.h.b16 %v1117
    %v1712 = vunpack.c.l.b16 %v1118
    %v1713 = vunpack.c.h.b16 %v1118
    %v1714 = vunpack.c.l.b16 %v1119
    %v1715 = vunpack.c.h.b16 %v1119
    %v1716 = vunpack.c.l.b16 %v1120
    %v1717 = vunpack.c.h.b16 %v1120
    %v1718 = vunpack.c.l.b16 %v1121
    %v1719 = vunpack.c.h.b16 %v1121
    %v1720 = vunpack.c.l.b16 %v1122
    %v1721 = vunpack.c.h.b16 %v1122
    %v1722 = vunpack.c.l.b16 %v1123
    %v1723 = vunpack.c.h.b16 %v1123
    %v1724 = vunpack.c.l.b16 %v1124
    %v1725 = vunpack.c.h.b16 %v1124
    %v1726 = vunpack.c.l.b16 %v1125
    %v1727 = vunpack.c.h.b16 %v1125
    %v1728 = vunpack.c.l.b16 %v1126
    %v1729 = vunpack.c.h.b16 %v1126
    %v1730 = vunpack.c.l.b16 %v1127
    %v1731 = vunpack.c.h.b16 %v1127
    %v1732 = vunpack.c.l.b16 %v1128
    %v1733 = vunpack.c.h.b16 %v1128
    %v1734 = vunpack.c.l.b16 %v1129
    %v1735 = vunpack.c.h.b16 %v1129
    %v1736 = vunpack.c.l.b16 %v1130
    %v1737 = vunpack.c.h.b16 %v1130
    %v1738 = vunpack.c.l.b16 %v1131
    %v1739 = vunpack.c.h.b16 %v1131
    %v1740 = vunpack.c.l.b16 %v1132
    %v1741 = vunpack.c.h.b16 %v1132
    %v1742 = vunpack.c.l.b16 %v1133
    %v1743 = vunpack.c.h.b16 %v1133
    %v1744 = vunpack.c.l.b16 %v1134
    %v1745 = vunpack.c.h.b16 %v1134
    %v1746 = vunpack.c.l.b16 %v1135
    %v1747 = vunpack.c.h.b16 %v1135
    %v1748 = vunpack.c.l.b16 %v1136
    %v1749 = vunpack.c.h.b16 %v1136
    %v1750 = vunpack.c.l.b16 %v1137
    %v1751 = vunpack.c.h.b16 %v1137
    %v1752 = vunpack.c.l.b16 %v1138
    %v1753 = vunpack.c.h.b16 %v1138
    %v1754 = vunpack.c.l.b16 %v1139
    %v1755 = vunpack.c.h.b16 %v1139
    %v1756 = vunpack.c.l.b16 %v1140
    %v1757 = vunpack.c.h.b16 %v1140
    %v1758 = vunpack.c.l.b16 %v1141
    %v1759 = vunpack.c.h.b16 %v1141
    %v1760 = vunpack.c.l.b16 %v1142
    %v1761 = vunpack.c.h.b16 %v1142
    %v1762 = vunpack.c.l.b16 %v1143
    %v1763 = vunpack.c.h.b16 %v1143
    %v1764 = vunpack.c.l.b16 %v1144
    %v1765 = vunpack.c.h.b16 %v1144
    %v1766 = vunpack.c.l.b16 %v1145
    %v1767 = vunpack.c.h.b16 %v1145
    %v1768 = vunpack.c.l.b16 %v1146
    %v1769 = vunpack.c.h.b16 %v1146
    %v1770 = vunpack.c.l.b16 %v1147
    %v1771 = vunpack.c.h.b16 %v1147
    %v1772 = vunpack.c.l.b16 %v1148
    %v1773 = vunpack.c.h.b16 %v1148
    %v1774 = vunpack.c.l.b16 %v1149
    %v1775 = vunpack.c.h.b16 %v1149
    %v1776 = vunpack.c.l.b16 %v1150
    %v1777 = vunpack.c.h.b16 %v1150
    %v1778 = vunpack.c.l.b16 %v1151
    %v1779 = vunpack.c.h.b16 %v1151
    %v1780 = vunpack.c.l.b16 %v1152
    %v1781 = vunpack.c.h.b16 %v1152
    %v1782 = vunpack.c.l.b16 %v1153
    %v1783 = vunpack.c.h.b16 %v1153
    %v1784 = vunpack.c.l.b16 %v1154
    %v1785 = vunpack.c.h.b16 %v1154
    %v1786 = vunpack.c.l.b16 %v1155
    %v1787 = vunpack.c.h.b16 %v1155
    %v1788 = vunpack.c.l.b16 %v1156
    %v1789 = vunpack.c.h.b16 %v1156
    %v1790 = vunpack.c.l.b16 %v1157
    %v1791 = vunpack.c.h.b16 %v1157
    %v1792 = vunpack.c.l.b16 %v1158
    %v1793 = vunpack.c.h.b16 %v1158
    %v1794 = vunpack.c.l.b16 %v1159
    %v1795 = vunpack.c.h.b16 %v1159
    %v1796 = vunpack.c.l.b16 %v1160
    %v1797 = vunpack.c.h.b16 %v1160
    %v1798 = vunpack.c.l.b16 %v1161
    %v1799 = vunpack.c.h.b16 %v1161
    %v1800 = vunpack.c.l.b16 %v1162
    %v1801 = vunpack.c.h.b16 %v1162
    %v1802 = vunpack.c.l.b16 %v1163
    %v1803 = vunpack.c.h.b16 %v1163
    %v1804 = vunpack.c.l.b16 %v1164
    %v1805 = vunpack.c.h.b16 %v1164
    %v1806 = vunpack.c.l.b16 %v1165
    %v1807 = vunpack.c.h.b16 %v1165
    %v1808 = vunpack.c.l.b16 %v1166
    %v1809 = vunpack.c.h.b16 %v1166
    %v1810 = vunpack.c.l.b16 %v1167
    %v1811 = vunpack.c.h.b16 %v1167
    %v1812 = vunpack.c.l.b16 %v1168
    %v1813 = vunpack.c.h.b16 %v1168
    %v1814 = vunpack.c.l.b16 %v1169
    %v1815 = vunpack.c.h.b16 %v1169
    %v1816 = vunpack.c.l.b16 %v1170
    %v1817 = vunpack.c.h.b16 %v1170
    %v1818 = vunpack.c.l.b16 %v1171
    %v1819 = vunpack.c.h.b16 %v1171
    %v1820 = vunpack.c.l.b16 %v1172
    %v1821 = vunpack.c.h.b16 %v1172
    %v1822 = vunpack.c.l.b16 %v1173
    %v1823 = vunpack.c.h.b16 %v1173
    %v1824 = vunpack.c.l.b16 %v1174
    %v1825 = vunpack.c.h.b16 %v1174
    %v1826 = vunpack.c.l.b16 %v1175
    %v1827 = vunpack.c.h.b16 %v1175
    %v1828 = vunpack.c.l.b16 %v1176
    %v1829 = vunpack.c.h.b16 %v1176
    %v1830 = vunpack.c.l.b16 %v1177
    %v1831 = vunpack.c.h.b16 %v1177
    %v1832 = vunpack.c.l.b16 %v1178
    %v1833 = vunpack.c.h.b16 %v1178
    %v1834 = vunpack.c.l.b16 %v1179
    %v1835 = vunpack.c.h.b16 %v1179
    %v1836 = vunpack.c.l.b16 %v1180
    %v1837 = vunpack.c.h.b16 %v1180
    %v1838 = vunpack.c.l.b16 %v1181
    %v1839 = vunpack.c.h.b16 %v1181
    %v1840 = vunpack.c.l.b16 %v1182
    %v1841 = vunpack.c.h.b16 %v1182
    %v1842 = vunpack.c.l.b16 %v1183
    %v1843 = vunpack.c.h.b16 %v1183
    %v1844 = vunpack.c.l.b16 %v1184
    %v1845 = vunpack.c.h.b16 %v1184
    %v1846 = vunpack.c.l.b16 %v1185
    %v1847 = vunpack.c.h.b16 %v1185
    %v1848 = vunpack.c.l.b16 %v1186
    %v1849 = vunpack.c.h.b16 %v1186
    %v1850 = vunpack.c.l.b16 %v1187
    %v1851 = vunpack.c.h.b16 %v1187
    %v1852 = vunpack.c.l.b16 %v1188
    %v1853 = vunpack.c.h.b16 %v1188
    %v1854 = vunpack.c.l.b16 %v1189
    %v1855 = vunpack.c.h.b16 %v1189
    %v1856 = vunpack.c.l.b16 %v1190
    %v1857 = vunpack.c.h.b16 %v1190
    %v1858 = vunpack.c.l.b16 %v1191
    %v1859 = vunpack.c.h.b16 %v1191
    %v1860 = vunpack.c.l.b16 %v1192
    %v1861 = vunpack.c.h.b16 %v1192
    %v1862 = vunpack.c.l.b16 %v1193
    %v1863 = vunpack.c.h.b16 %v1193
    %v1864 = vunpack.c.l.b16 %v1194
    %v1865 = vunpack.c.h.b16 %v1194
    %v1866 = vunpack.c.l.b16 %v1195
    %v1867 = vunpack.c.h.b16 %v1195
    %v1868 = vunpack.c.l.b16 %v1196
    %v1869 = vunpack.c.h.b16 %v1196
    %v1870 = vunpack.c.l.b16 %v1197
    %v1871 = vunpack.c.h.b16 %v1197
    %v1872 = vunpack.c.l.b16 %v1198
    %v1873 = vunpack.c.h.b16 %v1198
    %v1874 = vunpack.c.l.b16 %v1199
    %v1875 = vunpack.c.h.b16 %v1199
    %v1876 = vunpack.c.l.b16 %v1200
    %v1877 = vunpack.c.h.b16 %v1200
    %v1878 = vunpack.c.l.b16 %v1201
    %v1879 = vunpack.c.h.b16 %v1201
    %v1880 = vunpack.c.l.b16 %v1202
    %v1881 = vunpack.c.h.b16 %v1202
    %v1882 = vunpack.c.l.b16 %v1203
    %v1883 = vunpack.c.h.b16 %v1203
    %v1884 = vunpack.c.l.b16 %v1204
    %v1885 = vunpack.c.h.b16 %v1204
    %v1886 = vunpack.c.l.b16 %v1205
    %v1887 = vunpack.c.h.b16 %v1205
    %v1888 = vunpack.c.l.b16 %v1206
    %v1889 = vunpack.c.h.b16 %v1206
    %v1890 = vunpack.c.l.b16 %v1207
    %v1891 = vunpack.c.h.b16 %v1207
    %v1892 = vunpack.c.l.b16 %v1208
    %v1893 = vunpack.c.h.b16 %v1208
    %v1894 = vunpack.c.l.b16 %v1209
    %v1895 = vunpack.c.h.b16 %v1209
    %v1896 = vunpack.c.l.b16 %v1210
    %v1897 = vunpack.c.h.b16 %v1210
    %v1898 = vunpack.c.l.b16 %v1211
    %v1899 = vunpack.c.h.b16 %v1211
    %v1900 = vunpack.c.l.b16 %v1212
    %v1901 = vunpack.c.h.b16 %v1212
    %v1902 = vunpack.c.l.b16 %v1213
    %v1903 = vunpack.c.h.b16 %v1213
    %v1904 = vunpack.c.l.b16 %v1214
    %v1905 = vunpack.c.h.b16 %v1214
    %v1906 = vunpack.c.l.b16 %v1215
    %v1907 = vunpack.c.h.b16 %v1215
    %v1908 = vunpack.c.l.b16 %v1216
    %v1909 = vunpack.c.h.b16 %v1216
    %v1910 = vunpack.c.l.b16 %v1217
    %v1911 = vunpack.c.h.b16 %v1217
    %v1912 = vunpack.c.l.b16 %v1218
    %v1913 = vunpack.c.h.b16 %v1218
    %v1914 = vunpack.c.l.b16 %v1219
    %v1915 = vunpack.c.h.b16 %v1219
    %v1916 = vunpack.c.l.b16 %v1220
    %v1917 = vunpack.c.h.b16 %v1220
    %v1918 = vunpack.c.l.b16 %v1221
    %v1919 = vunpack.c.h.b16 %v1221
    %v1920 = vunpack.c.l.b16 %v1222
    %v1921 = vunpack.c.h.b16 %v1222
    %v1922 = vunpack.c.l.b16 %v1223
    %v1923 = vunpack.c.h.b16 %v1223
    %v1924 = vunpack.c.l.b16 %v1224
    %v1925 = vunpack.c.h.b16 %v1224
    %v1926 = vunpack.c.l.b16 %v1225
    %v1927 = vunpack.c.h.b16 %v1225
    %v1928 = vunpack.c.l.b16 %v1226
    %v1929 = vunpack.c.h.b16 %v1226
    %v1930 = vunpack.c.l.b16 %v1227
    %v1931 = vunpack.c.h.b16 %v1227
    %v1932 = vunpack.c.l.b16 %v1228
    %v1933 = vunpack.c.h.b16 %v1228
    %v1934 = vunpack.c.l.b16 %v1229
    %v1935 = vunpack.c.h.b16 %v1229
    %v1936 = vunpack.c.l.b16 %v1230
    %v1937 = vunpack.c.h.b16 %v1230
    %v1938 = vunpack.c.l.b16 %v1231
    %v1939 = vunpack.c.h.b16 %v1231
    %v1940 = vunpack.c.l.b16 %v1232
    %v1941 = vunpack.c.h.b16 %v1232
    %v1942 = vunpack.c.l.b16 %v1233
    %v1943 = vunpack.c.h.b16 %v1233
    %v1944 = vunpack.c.l.b16 %v1234
    %v1945 = vunpack.c.h.b16 %v1234
    %v1946 = vunpack.c.l.b16 %v1235
    %v1947 = vunpack.c.h.b16 %v1235
    %v1948 = vunpack.c.l.b16 %v1236
    %v1949 = vunpack.c.h.b16 %v1236
    %v1950 = vunpack.c.l.b16 %v1237
    %v1951 = vunpack.c.h.b16 %v1237
    %v1952 = vunpack.c.l.b16 %v1238
    %v1953 = vunpack.c.h.b16 %v1238
    %v1954 = vunpack.c.l.b16 %v1239
    %v1955 = vunpack.c.h.b16 %v1239
    %v1956 = vunpack.c.l.b16 %v1240
    %v1957 = vunpack.c.h.b16 %v1240
    %v1958 = vunpack.c.l.b16 %v1241
    %v1959 = vunpack.c.h.b16 %v1241
    %v1960 = vunpack.c.l.b16 %v1242
    %v1961 = vunpack.c.h.b16 %v1242
    %v1962 = vunpack.c.l.b16 %v1243
    %v1963 = vunpack.c.h.b16 %v1243
    %v1964 = vunpack.c.l.b16 %v1244
    %v1965 = vunpack.c.h.b16 %v1244
    %v1966 = vunpack.c.l.b16 %v1245
    %v1967 = vunpack.c.h.b16 %v1245
    %v1968 = vunpack.c.l.b16 %v1246
    %v1969 = vunpack.c.h.b16 %v1246
    %v1970 = vunpack.c.l.b16 %v1247
    %v1971 = vunpack.c.h.b16 %v1247
    %v1972 = vunpack.c.l.b16 %v1248
    %v1973 = vunpack.c.h.b16 %v1248
    %v1974 = vunpack.c.l.b16 %v1249
    %v1975 = vunpack.c.h.b16 %v1249
    %v1976 = vunpack.c.l.b16 %v1250
    %v1977 = vunpack.c.h.b16 %v1250
    %v1978 = vunpack.c.l.b16 %v1251
    %v1979 = vunpack.c.h.b16 %v1251
    %v1980 = vunpack.c.l.b16 %v1252
    %v1981 = vunpack.c.h.b16 %v1252
    %v1982 = vunpack.c.l.b16 %v1253
    %v1983 = vunpack.c.h.b16 %v1253
    %v1984 = vunpack.c.l.b16 %v1254
    %v1985 = vunpack.c.h.b16 %v1254
    %v1986 = vunpack.c.l.b16 %v1255
    %v1987 = vunpack.c.h.b16 %v1255
    %v1988 = vunpack.c.l.b16 %v1256
    %v1989 = vunpack.c.h.b16 %v1256
    %v1990 = vunpack.c.l.b16 %v1257
    %v1991 = vunpack.c.h.b16 %v1257
    %v1992 = vunpack.c.l.b16 %v1258
    %v1993 = vunpack.c.h.b16 %v1258
    %v1994 = vunpack.c.l.b16 %v1259
    %v1995 = vunpack.c.h.b16 %v1259
    %v1996 = vunpack.c.l.b16 %v1260
    %v1997 = vunpack.c.h.b16 %v1260
    %v1998 = vunpack.c.l.b16 %v1261
    %v1999 = vunpack.c.h.b16 %v1261
    %v2000 = vunpack.c.l.b16 %v1262
    %v2001 = vunpack.c.h.b16 %v1262
    %v2002 = vunpack.c.l.b16 %v1263
    %v2003 = vunpack.c.h.b16 %v1263
    %v2004 = vunpack.c.l.b16 %v1264
    %v2005 = vunpack.c.h.b16 %v1264
    %v2006 = vunpack.c.l.b16 %v1265
    %v2007 = vunpack.c.h.b16 %v1265
    %v2008 = vunpack.c.l.b16 %v1266
    %v2009 = vunpack.c.h.b16 %v1266
    %v2010 = vunpack.c.l.b16 %v1267
    %v2011 = vunpack.c.h.b16 %v1267
    %v2012 = vunpack.c.l.b16 %v1268
    %v2013 = vunpack.c.h.b16 %v1268
    %v2014 = vunpack.c.l.b16 %v1269
    %v2015 = vunpack.c.h.b16 %v1269
    %v2016 = vunpack.c.l.b16 %v1270
    %v2017 = vunpack.c.h.b16 %v1270
    %v2018 = vunpack.c.l.b16 %v1271
    %v2019 = vunpack.c.h.b16 %v1271
    %v2020 = vunpack.c.l.b16 %v1272
    %v2021 = vunpack.c.h.b16 %v1272
    %v2022 = vunpack.c.l.b16 %v1273
    %v2023 = vunpack.c.h.b16 %v1273
    %v2024 = vunpack.c.l.b16 %v1274
    %v2025 = vunpack.c.h.b16 %v1274
    %v2026 = vunpack.c.l.b16 %v1275
    %v2027 = vunpack.c.h.b16 %v1275
    %v2028 = vunpack.c.l.b16 %v1276
    %v2029 = vunpack.c.h.b16 %v1276
    %v2030 = vunpack.c.l.b16 %v1277
    %v2031 = vunpack.c.h.b16 %v1277
    %v2032 = vunpack.c.l.b16 %v1278
    %v2033 = vunpack.c.h.b16 %v1278
    %v2034 = vunpack.c.l.b16 %v1279
    %v2035 = vunpack.c.h.b16 %v1279
    %v2036 = vunpack.c.l.b16 %v1280
    %v2037 = vunpack.c.h.b16 %v1280
    %v2038 = vunpack.c.l.b16 %v1281
    %v2039 = vunpack.c.h.b16 %v1281
    %v2040 = vunpack.c.l.b16 %v1282
    %v2041 = vunpack.c.h.b16 %v1282
    %v2042 = vunpack.c.l.b16 %v1283
    %v2043 = vunpack.c.h.b16 %v1283
    %v2044 = vunpack.c.l.b16 %v1284
    %v2045 = vunpack.c.h.b16 %v1284
    %v2046 = vunpack.c.l.b16 %v1285
    %v2047 = vunpack.c.h.b16 %v1285
    %v2048 = vunpack.c.l.b16 %v1286
    %v2049 = vunpack.c.h.b16 %v1286
    %v2050 = vunpack.c.l.b16 %v1287
    %v2051 = vunpack.c.h.b16 %v1287
    %v2052 = vunpack.c.l.b16 %v1288
    %v2053 = vunpack.c.h.b16 %v1288
    %v2054 = vunpack.c.l.b16 %v1289
    %v2055 = vunpack.c.h.b16 %v1289
    %v2056 = vunpack.c.l.b16 %v1290
    %v2057 = vunpack.c.h.b16 %v1290
    %v2058 = vunpack.c.l.b16 %v1291
    %v2059 = vunpack.c.h.b16 %v1291
    %v2060 = vpack.c.b16 %v1556, %v1548
    %v2061 = vpack.c.b16 %v1557, %v1549
    %v2062 = vpack.c.b16 %v1558, %v1550
    %v2063 = vpack.c.b16 %v1559, %v1551
    %v2064 = vpack.c.b16 %v1560, %v1552
    %v2065 = vpack.c.b16 %v1561, %v1553
    %v2066 = vpack.c.b16 %v1562, %v1554
    %v2067 = vpack.c.b16 %v1563, %v1555
    %v2068 = vpack.c.b16 %v1572, %v1564
    %v2069 = vpack.c.b16 %v1573, %v1565
    %v2070 = vpack.c.b16 %v1574, %v1566
    %v2071 = vpack.c.b16 %v1575, %v1567
    %v2072 = vpack.c.b16 %v1576, %v1568
    %v2073 = vpack.c.b16 %v1577, %v1569
    %v2074 = vpack.c.b16 %v1578, %v1570
    %v2075 = vpack.c.b16 %v1579, %v1571
    %v2076 = vpack.c.b16 %v1588, %v1580
    %v2077 = vpack.c.b16 %v1589, %v1581
    %v2078 = vpack.c.b16 %v1590, %v1582
    %v2079 = vpack.c.b16 %v1591, %v1583
    %v2080 = vpack.c.b16 %v1592, %v1584
    %v2081 = vpack.c.b16 %v1593, %v1585
    %v2082 = vpack.c.b16 %v1594, %v1586
    %v2083 = vpack.c.b16 %v1595, %v1587
    %v2084 = vpack.c.b16 %v1604, %v1596
    %v2085 = vpack.c.b16 %v1605, %v1597
    %v2086 = vpack.c.b16 %v1606, %v1598
    %v2087 = vpack.c.b16 %v1607, %v1599
    %v2088 = vpack.c.b16 %v1608, %v1600
    %v2089 = vpack.c.b16 %v1609, %v1601
    %v2090 = vpack.c.b16 %v1610, %v1602
    %v2091 = vpack.c.b16 %v1611, %v1603
    %v2092 = vpack.c.b16 %v1620, %v1612
    %v2093 = vpack.c.b16 %v1621, %v1613
    %v2094 = vpack.c.b16 %v1622, %v1614
    %v2095 = vpack.c.b16 %v1623, %v1615
    %v2096 = vpack.c.b16 %v1624, %v1616
    %v2097 = vpack.c.b16 %v1625, %v1617
    %v2098 = vpack.c.b16 %v1626, %v1618
    %v2099 = vpack.c.b16 %v1627, %v1619
    %v2100 = vpack.c.b16 %v1636, %v1628
    %v2101 = vpack.c.b16 %v1637, %v1629
    %v2102 = vpack.c.b16 %v1638, %v1630
    %v2103 = vpack.c.b16 %v1639, %v1631
    %v2104 = vpack.c.b16 %v1640, %v1632
    %v2105 = vpack.c.b16 %v1641, %v1633
    %v2106 = vpack.c.b16 %v1642, %v1634
    %v2107 = vpack.c.b16 %v1643, %v1635
    %v2108 = vpack.c.b16 %v1652, %v1644
    %v2109 = vpack.c.b16 %v1653, %v1645
    %v2110 = vpack.c.b16 %v1654, %v1646
    %v2111 = vpack.c.b16 %v1655, %v1647
    %v2112 = vpack.c.b16 %v1656, %v1648
    %v2113 = vpack.c.b16 %v1657, %v1649
    %v2114 = vpack.c.b16 %v1658, %v1650
    %v2115 = vpack.c.b16 %v1659, %v1651
    %v2116 = vpack.c.b16 %v1668, %v1660
    %v2117 = vpack.c.b16 %v1669, %v1661
    %v2118 = vpack.c.b16 %v1670, %v1662
    %v2119 = vpack.c.b16 %v1671, %v1663
    %v2120 = vpack.c.b16 %v1672, %v1664
    %v2121 = vpack.c.b16 %v1673, %v1665
    %v2122 = vpack.c.b16 %v1674, %v1666
    %v2123 = vpack.c.b16 %v1675, %v1667
    %v2124 = vpack.c.b16 %v1684, %v1676
    %v2125 = vpack.c.b16 %v1685, %v1677
    %v2126 = vpack.c.b16 %v1686, %v1678
    %v2127 = vpack.c.b16 %v1687, %v1679
    %v2128 = vpack.c.b16 %v1688, %v1680
    %v2129 = vpack.c.b16 %v1689, %v1681
    %v2130 = vpack.c.b16 %v1690, %v1682
    %v2131 = vpack.c.b16 %v1691, %v1683
    %v2132 = vpack.c.b16 %v1700, %v1692
    %v2133 = vpack.c.b16 %v1701, %v1693
    %v2134 = vpack.c.b16 %v1702, %v1694
    %v2135 = vpack.c.b16 %v1703, %v1695
    %v2136 = vpack.c.b16 %v1704, %v1696
    %v2137 = vpack.c.b16 %v1705, %v1697
    %v2138 = vpack.c.b16 %v1706, %v1698
    %v2139 = vpack.c.b16 %v1707, %v1699
    %v2140 = vpack.c.b16 %v1716, %v1708
    %v2141 = vpack.c.b16 %v1717, %v1709
    %v2142 = vpack.c.b16 %v1718, %v1710
    %v2143 = vpack.c.b16 %v1719, %v1711
    %v2144 = vpack.c.b16 %v1720, %v1712
    %v2145 = vpack.c.b16 %v1721, %v1713
    %v2146 = vpack.c.b16 %v1722, %v1714
    %v2147 = vpack.c.b16 %v1723, %v1715
    %v2148 = vpack.c.b16 %v1732, %v1724
    %v2149 = vpack.c.b16 %v1733, %v1725
    %v2150 = vpack.c.b16 %v1734, %v1726
    %v2151 = vpack.c.b16 %v1735, %v1727
    %v2152 = vpack.c.b16 %v1736, %v1728
    %v2153 = vpack.c.b16 %v1737, %v1729
    %v2154 = vpack.c.b16 %v1738, %v1730
    %v2155 = vpack.c.b16 %v1739, %v1731
    %v2156 = vpack.c.b16 %v1748, %v1740
    %v2157 = vpack.c.b16 %v1749, %v1741
    %v2158 = vpack.c.b16 %v1750, %v1742
    %v2159 = vpack.c.b16 %v1751, %v1743
    %v2160 = vpack.c.b16 %v1752, %v1744
    %v2161 = vpack.c.b16 %v1753, %v1745
    %v2162 = vpack.c.b16 %v1754, %v1746
    %v2163 = vpack.c.b16 %v1755, %v1747
    %v2164 = vpack.c.b16 %v1764, %v1756
    %v2165 = vpack.c.b16 %v1765, %v1757
    %v2166 = vpack.c.b16 %v1766, %v1758
    %v2167 = vpack.c.b16 %v1767, %v1759
    %v2168 = vpack.c.b16 %v1768, %v1760
    %v2169 = vpack.c.b16 %v1769, %v1761
    %v2170 = vpack.c.b16 %v1770, %v1762
    %v2171 = vpack.c.b16 %v1771, %v1763
    %v2172 = vpack.c.b16 %v1780, %v1772
    %v2173 = vpack.c.b16 %v1781, %v1773
    %v2174 = vpack.c.b16 %v1782, %v1774
    %v2175 = vpack.c.b16 %v1783, %v1775
    %v2176 = vpack.c.b16 %v1784, %v1776
    %v2177 = vpack.c.b16 %v1785, %v1777
    %v2178 = vpack.c.b16 %v1786, %v1778
    %v2179 = vpack.c.b16 %v1787, %v1779
    %v2180 = vpack.c.b16 %v1796, %v1788
    %v2181 = vpack.c.b16 %v1797, %v1789
    %v2182 = vpack.c.b16 %v1798, %v1790
    %v2183 = vpack.c.b16 %v1799, %v1791
    %v2184 = vpack.c.b16 %v1800, %v1792
    %v2185 = vpack.c.b16 %v1801, %v1793
    %v2186 = vpack.c.b16 %v1802, %v1794
    %v2187 = vpack.c.b16 %v1803, %v1795
    %v2188 = vpack.c.b16 %v1812, %v1804
    %v2189 = vpack.c.b16 %v1813, %v1805
    %v2190 = vpack.c.b16 %v1814, %v1806
    %v2191 = vpack.c.b16 %v1815, %v1807
    %v2192 = vpack.c.b16 %v1816, %v1808
    %v2193 = vpack.c.b16 %v1817, %v1809
    %v2194 = vpack.c.b16 %v1818, %v1810
    %v2195 = vpack.c.b16 %v1819, %v1811
    %v2196 = vpack.c.b16 %v1828, %v1820
    %v2197 = vpack.c.b16 %v1829, %v1821
    %v2198 = vpack.c.b16 %v1830, %v1822
    %v2199 = vpack.c.b16 %v1831, %v1823
    %v2200 = vpack.c.b16 %v1832, %v1824
    %v2201 = vpack.c.b16 %v1833, %v1825
    %v2202 = vpack.c.b16 %v1834, %v1826
    %v2203 = vpack.c.b16 %v1835, %v1827
    %v2204 = vpack.c.b16 %v1844, %v1836
    %v2205 = vpack.c.b16 %v1845, %v1837
    %v2206 = vpack.c.b16 %v1846, %v1838
    %v2207 = vpack.c.b16 %v1847, %v1839
    %v2208 = vpack.c.b16 %v1848, %v1840
    %v2209 = vpack.c.b16 %v1849, %v1841
    %v2210 = vpack.c.b16 %v1850, %v1842
    %v2211 = vpack.c.b16 %v1851, %v1843
    %v2212 = vpack.c.b16 %v1860, %v1852
    %v2213 = vpack.c.b16 %v1861, %v1853
    %v2214 = vpack.c.b16 %v1862, %v1854
    %v2215 = vpack.c.b16 %v1863, %v1855
    %v2216 = vpack.c.b16 %v1864, %v1856
    %v2217 = vpack.c.b16 %v1865, %v1857
    %v2218 = vpack.c.b16 %v1866, %v1858
    %v2219 = vpack.c.b16 %v1867, %v1859
    %v2220 = vpack.c.b16 %v1876, %v1868
    %v2221 = vpack.c.b16 %v1877, %v1869
    %v2222 = vpack.c.b16 %v1878, %v1870
    %v2223 = vpack.c.b16 %v1879, %v1871
    %v2224 = vpack.c.b16 %v1880, %v1872
    %v2225 = vpack.c.b16 %v1881, %v1873
    %v2226 = vpack.c.b16 %v1882, %v1874
    %v2227 = vpack.c.b16 %v1883, %v1875
    %v2228 = vpack.c.b16 %v1892, %v1884
    %v2229 = vpack.c.b16 %v1893, %v1885
    %v2230 = vpack.c.b16 %v1894, %v1886
    %v2231 = vpack.c.b16 %v1895, %v1887
    %v2232 = vpack.c.b16 %v1896, %v1888
    %v2233 = vpack.c.b16 %v1897, %v1889
    %v2234 = vpack.c.b16 %v1898, %v1890
    %v2235 = vpack.c.b16 %v1899, %v1891
    %v2236 = vpack.c.b16 %v1908, %v1900
    %v2237 = vpack.c.b16 %v1909, %v1901
    %v2238 = vpack.c.b16 %v1910, %v1902
    %v2239 = vpack.c.b16 %v1911, %v1903
    %v2240 = vpack.c.b16 %v1912, %v1904
    %v2241 = vpack.c.b16 %v1913, %v1905
    %v2242 = vpack.c.b16 %v1914, %v1906
    %v2243 = vpack.c.b16 %v1915, %v1907
    %v2244 = vpack.c.b16 %v1924, %v1916
    %v2245 = vpack.c.b16 %v1925, %v1917
    %v2246 = vpack.c.b16 %v1926, %v1918
    %v2247 = vpack.c.b16 %v1927, %v1919
    %v2248 = vpack.c.b16 %v1928, %v1920
    %v2249 = vpack.c.b16 %v1929, %v1921
    %v2250 = vpack.c.b16 %v1930, %v1922
    %v2251 = vpack.c.b16 %v1931, %v1923
    %v2252 = vpack.c.b16 %v1940, %v1932
    %v2253 = vpack.c.b16 %v1941, %v1933
    %v2254 = vpack.c.b16 %v1942, %v1934
    %v2255 = vpack.c.b16 %v1943, %v1935
    %v2256 = vpack.c.b16 %v1944, %v1936
    %v2257 = vpack.c.b16 %v1945, %v1937
    %v2258 = vpack.c.b16 %v1946, %v1938
    %v2259 = vpack.c.b16 %v1947, %v1939
    %v2260 = vpack.c.b16 %v1956, %v1948
    %v2261 = vpack.c.b16 %v1957, %v1949
    %v2262 = vpack.c.b16 %v1958, %v1950
    %v2263 = vpack.c.b16 %v1959, %v1951
    %v2264 = vpack.c.b16 %v1960, %v1952
    %v2265 = vpack.c.b16 %v1961, %v1953
    %v2266 = vpack.c.b16 %v1962, %v1954
    %v2267 = vpack.c.b16 %v1963, %v1955
    %v2268 = vpack.c.b16 %v1972, %v1964
    %v2269 = vpack.c.b16 %v1973, %v1965
    %v2270 = vpack.c.b16 %v1974, %v1966
    %v2271 = vpack.c.b16 %v1975, %v1967
    %v2272 = vpack.c.b16 %v1976, %v1968
    %v2273 = vpack.c.b16 %v1977, %v1969
    %v2274 = vpack.c.b16 %v1978, %v1970
    %v2275 = vpack.c.b16 %v1979, %v1971
    %v2276 = vpack.c.b16 %v1988, %v1980
    %v2277 = vpack.c.b16 %v1989, %v1981
    %v2278 = vpack.c.b16 %v1990, %v1982
    %v2279 = vpack.c.b16 %v1991, %v1983
    %v2280 = vpack.c.b16 %v1992, %v1984
    %v2281 = vpack.c.b16 %v1993, %v1985
    %v2282 = vpack.c.b16 %v1994, %v1986
    %v2283 = vpack.c.b16 %v1995, %v1987
    %v2284 = vpack.c.b16 %v2004, %v1996
    %v2285 = vpack.c.b16 %v2005, %v1997
    %v2286 = vpack.c.b16 %v2006, %v1998
    %v2287 = vpack.c.b16 %v2007, %v1999
    %v2288 = vpack.c.b16 %v2008, %v2000
    %v2289 = vpack.c.b16 %v2009, %v2001
    %v2290 = vpack.c.b16 %v2010, %v2002
    %v2291 = vpack.c.b16 %v2011, %v2003
    %v2292 = vpack.c.b16 %v2020, %v2012
    %v2293 = vpack.c.b16 %v2021, %v2013
    %v2294 = vpack.c.b16 %v2022, %v2014
    %v2295 = vpack.c.b16 %v2023, %v2015
    %v2296 = vpack.c.b16 %v2024, %v2016
    %v2297 = vpack.c.b16 %v2025, %v2017
    %v2298 = vpack.c.b16 %v2026, %v2018
    %v2299 = vpack.c.b16 %v2027, %v2019
    %v2300 = vpack.c.b16 %v2036, %v2028
    %v2301 = vpack.c.b16 %v2037, %v2029
    %v2302 = vpack.c.b16 %v2038, %v2030
    %v2303 = vpack.c.b16 %v2039, %v2031
    %v2304 = vpack.c.b16 %v2040, %v2032
    %v2305 = vpack.c.b16 %v2041, %v2033
    %v2306 = vpack.c.b16 %v2042, %v2034
    %v2307 = vpack.c.b16 %v2043, %v2035
    %v2308 = vpack.c.b16 %v2052, %v2044
    %v2309 = vpack.c.b16 %v2053, %v2045
    %v2310 = vpack.c.b16 %v2054, %v2046
    %v2311 = vpack.c.b16 %v2055, %v2047
    %v2312 = vpack.c.b16 %v2056, %v2048
    %v2313 = vpack.c.b16 %v2057, %v2049
    %v2314 = vpack.c.b16 %v2058, %v2050
    %v2315 = vpack.c.b16 %v2059, %v2051
    %2572 = vmatprep.subr.bf16.mxu0 %v2117
    %2573 = vmatpush1.bf16.msra.mxu0 %v2116
    %2574 = vmatprep.subr.bf16.mxu0 %v2109
    %2575 = vmatpush1.bf16.msra.mxu0 %v2108
    %2576 = vmatprep.subr.bf16.mxu0 %v2101
    %2577 = vmatpush1.bf16.msra.mxu0 %v2100
    %2578 = vmatprep.subr.bf16.mxu0 %v2093
    %2579 = vmatpush1.bf16.msra.mxu0 %v2092
    %2580 = vmatprep.subr.bf16.mxu0 %v2085
    %2581 = vmatpush1.bf16.msra.mxu0 %v2084
    %2582 = vmatprep.subr.bf16.mxu0 %v2077
    %2583 = vmatpush1.bf16.msra.mxu0 %v2076
    %2584 = vmatprep.subr.bf16.mxu0 %v2069
    %2585 = vmatpush1.bf16.msra.mxu0 %v2068
    %2586 = vmatprep.subr.bf16.mxu0 %v2061
    %2587 = vmatpush1.bf16.msra.mxu0 %v2060
    %2588 = vmatprep.subr.bf16.mxu0 %v2181
    %2589 = vmatpush2.bf16.msra.mxu0 %v2180
    %2590 = vmatprep.subr.bf16.mxu0 %v2173
    %2591 = vmatpush2.bf16.msra.mxu0 %v2172
    %2592 = vmatprep.subr.bf16.mxu0 %v2165
    %2593 = vmatpush2.bf16.msra.mxu0 %v2164
    %2594 = vmatprep.subr.bf16.mxu0 %v2157
    %2595 = vmatpush2.bf16.msra.mxu0 %v2156
    %2596 = vmatprep.subr.bf16.mxu0 %v2149
    %2597 = vmatpush2.bf16.msra.mxu0 %v2148
    %2598 = vmatprep.subr.bf16.mxu0 %v2141
    %2599 = vmatpush2.bf16.msra.mxu0 %v2140
    %2600 = vmatprep.subr.bf16.mxu0 %v2133
    %2601 = vmatpush2.bf16.msra.mxu0 %v2132
    %2602 = vmatprep.subr.bf16.mxu0 %v2125
    %2603 = vmatpush2.bf16.msra.mxu0 %v2124
    %2604 = vmatprep.mubr.bf16.mxu0 %v1033
    %2605 = vmatmul.mubr.bf16.gmra.mxu0 %v1032
    %v2606 = vpop.f32.mrf.mxu0
    %v2607 = vadd.f32 0.0, %v2606
    %v2608 = vpop.f32.mrf.mxu0
    %v2609 = vadd.f32 0.0, %v2608
    %v2610 = vpop.f32.mrf.mxu0
    %v2611 = vadd.f32 0.0, %v2610
    %v2612 = vpop.f32.mrf.mxu0
    %v2613 = vadd.f32 0.0, %v2612
    %2614 = vdwg.mxu0
    %2615 = vmatprep.subr.bf16.mxu0 %v2245
    %2616 = vmatpush1.bf16.msra.mxu0 %v2244
    %2617 = vmatprep.subr.bf16.mxu0 %v2237
    %2618 = vmatpush1.bf16.msra.mxu0 %v2236
    %2619 = vmatprep.subr.bf16.mxu0 %v2229
    %2620 = vmatpush1.bf16.msra.mxu0 %v2228
    %2621 = vmatprep.subr.bf16.mxu0 %v2221
    %2622 = vmatpush1.bf16.msra.mxu0 %v2220
    %2623 = vmatprep.subr.bf16.mxu0 %v2213
    %2624 = vmatpush1.bf16.msra.mxu0 %v2212
    %2625 = vmatprep.subr.bf16.mxu0 %v2205
    %2626 = vmatpush1.bf16.msra.mxu0 %v2204
    %2627 = vmatprep.subr.bf16.mxu0 %v2197
    %2628 = vmatpush1.bf16.msra.mxu0 %v2196
    %2629 = vmatprep.subr.bf16.mxu0 %v2189
    %2630 = vmatpush1.bf16.msra.mxu0 %v2188
    %2631 = vmatprep.subr.bf16.mxu0 %v2309
    %2632 = vmatpush2.bf16.msra.mxu0 %v2308
    %2633 = vmatprep.subr.bf16.mxu0 %v2301
    %2634 = vmatpush2.bf16.msra.mxu0 %v2300
    %2635 = vmatprep.subr.bf16.mxu0 %v2293
    %2636 = vmatpush2.bf16.msra.mxu0 %v2292
    %2637 = vmatprep.subr.bf16.mxu0 %v2285
    %2638 = vmatpush2.bf16.msra.mxu0 %v2284
    %2639 = vmatprep.subr.bf16.mxu0 %v2277
    %2640 = vmatpush2.bf16.msra.mxu0 %v2276
    %2641 = vmatprep.subr.bf16.mxu0 %v2269
    %2642 = vmatpush2.bf16.msra.mxu0 %v2268
    %2643 = vmatprep.subr.bf16.mxu0 %v2261
    %2644 = vmatpush2.bf16.msra.mxu0 %v2260
    %2645 = vmatprep.subr.bf16.mxu0 %v2253
    %2646 = vmatpush2.bf16.msra.mxu0 %v2252
    %2647 = vmatprep.mubr.bf16.mxu0 %v1035
    %2648 = vmatmul.mubr.bf16.gmra.mxu0 %v1034
    %v2649 = vpop.f32.mrf.mxu0
    %v2650 = vadd.f32 %v2607, %v2649
    %v2651 = vpop.f32.mrf.mxu0
    %v2652 = vadd.f32 %v2609, %v2651
    %v2653 = vpop.f32.mrf.mxu0
    %v2654 = vadd.f32 %v2611, %v2653
    %v2655 = vpop.f32.mrf.mxu0
    %v2656 = vadd.f32 %v2613, %v2655
    %2657 = vdwg.mxu0
    %2658 = vmatprep.subr.bf16.mxu0 %v2119
    %2659 = vmatpush1.bf16.msra.mxu0 %v2118
    %2660 = vmatprep.subr.bf16.mxu0 %v2111
    %2661 = vmatpush1.bf16.msra.mxu0 %v2110
    %2662 = vmatprep.subr.bf16.mxu0 %v2103
    %2663 = vmatpush1.bf16.msra.mxu0 %v2102
    %2664 = vmatprep.subr.bf16.mxu0 %v2095
    %2665 = vmatpush1.bf16.msra.mxu0 %v2094
    %2666 = vmatprep.subr.bf16.mxu0 %v2087
    %2667 = vmatpush1.bf16.msra.mxu0 %v2086
    %2668 = vmatprep.subr.bf16.mxu0 %v2079
    %2669 = vmatpush1.bf16.msra.mxu0 %v2078
    %2670 = vmatprep.subr.bf16.mxu0 %v2071
    %2671 = vmatpush1.bf16.msra.mxu0 %v2070
    %2672 = vmatprep.subr.bf16.mxu0 %v2063
    %2673 = vmatpush1.bf16.msra.mxu0 %v2062
    %2674 = vmatprep.subr.bf16.mxu0 %v2183
    %2675 = vmatpush2.bf16.msra.mxu0 %v2182
    %2676 = vmatprep.subr.bf16.mxu0 %v2175
    %2677 = vmatpush2.bf16.msra.mxu0 %v2174
    %2678 = vmatprep.subr.bf16.mxu0 %v2167
    %2679 = vmatpush2.bf16.msra.mxu0 %v2166
    %2680 = vmatprep.subr.bf16.mxu0 %v2159
    %2681 = vmatpush2.bf16.msra.mxu0 %v2158
    %2682 = vmatprep.subr.bf16.mxu0 %v2151
    %2683 = vmatpush2.bf16.msra.mxu0 %v2150
    %2684 = vmatprep.subr.bf16.mxu0 %v2143
    %2685 = vmatpush2.bf16.msra.mxu0 %v2142
    %2686 = vmatprep.subr.bf16.mxu0 %v2135
    %2687 = vmatpush2.bf16.msra.mxu0 %v2134
    %2688 = vmatprep.subr.bf16.mxu0 %v2127
    %2689 = vmatpush2.bf16.msra.mxu0 %v2126
    %2690 = vmatprep.mubr.bf16.mxu0 %v1033
    %2691 = vmatmul.mubr.bf16.gmra.mxu0 %v1032
    %v2692 = vpop.f32.mrf.mxu0
    %v2693 = vadd.f32 0.0, %v2692
    %v2694 = vpop.f32.mrf.mxu0
    %v2695 = vadd.f32 0.0, %v2694
    %v2696 = vpop.f32.mrf.mxu0
    %v2697 = vadd.f32 0.0, %v2696
    %v2698 = vpop.f32.mrf.mxu0
    %v2699 = vadd.f32 0.0, %v2698
    %2700 = vdwg.mxu0
    %2701 = vmatprep.subr.bf16.mxu0 %v2247
    %2702 = vmatpush1.bf16.msra.mxu0 %v2246
    %2703 = vmatprep.subr.bf16.mxu0 %v2239
    %2704 = vmatpush1.bf16.msra.mxu0 %v2238
    %2705 = vmatprep.subr.bf16.mxu0 %v2231
    %2706 = vmatpush1.bf16.msra.mxu0 %v2230
    %2707 = vmatprep.subr.bf16.mxu0 %v2223
    %2708 = vmatpush1.bf16.msra.mxu0 %v2222
    %2709 = vmatprep.subr.bf16.mxu0 %v2215
    %2710 = vmatpush1.bf16.msra.mxu0 %v2214
    %2711 = vmatprep.subr.bf16.mxu0 %v2207
    %2712 = vmatpush1.bf16.msra.mxu0 %v2206
    %2713 = vmatprep.subr.bf16.mxu0 %v2199
    %2714 = vmatpush1.bf16.msra.mxu0 %v2198
    %2715 = vmatprep.subr.bf16.mxu0 %v2191
    %2716 = vmatpush1.bf16.msra.mxu0 %v2190
    %2717 = vmatprep.subr.bf16.mxu0 %v2311
    %2718 = vmatpush2.bf16.msra.mxu0 %v2310
    %2719 = vmatprep.subr.bf16.mxu0 %v2303
    %2720 = vmatpush2.bf16.msra.mxu0 %v2302
    %2721 = vmatprep.subr.bf16.mxu0 %v2295
    %2722 = vmatpush2.bf16.msra.mxu0 %v2294
    %2723 = vmatprep.subr.bf16.mxu0 %v2287
    %2724 = vmatpush2.bf16.msra.mxu0 %v2286
    %2725 = vmatprep.subr.bf16.mxu0 %v2279
    %2726 = vmatpush2.bf16.msra.mxu0 %v2278
    %2727 = vmatprep.subr.bf16.mxu0 %v2271
    %2728 = vmatpush2.bf16.msra.mxu0 %v2270
    %2729 = vmatprep.subr.bf16.mxu0 %v2263
    %2730 = vmatpush2.bf16.msra.mxu0 %v2262
    %2731 = vmatprep.subr.bf16.mxu0 %v2255
    %2732 = vmatpush2.bf16.msra.mxu0 %v2254
    %2733 = vmatprep.mubr.bf16.mxu0 %v1035
    %2734 = vmatmul.mubr.bf16.gmra.mxu0 %v1034
    %v2735 = vpop.f32.mrf.mxu0
    %v2736 = vadd.f32 %v2693, %v2735
    %v2737 = vpop.f32.mrf.mxu0
    %v2738 = vadd.f32 %v2695, %v2737
    %v2739 = vpop.f32.mrf.mxu0
    %v2740 = vadd.f32 %v2697, %v2739
    %v2741 = vpop.f32.mrf.mxu0
    %v2742 = vadd.f32 %v2699, %v2741
    %2743 = vdwg.mxu0
    %2744 = vmatprep.subr.bf16.mxu0 %v2121
    %2745 = vmatpush1.bf16.msra.mxu0 %v2120
    %2746 = vmatprep.subr.bf16.mxu0 %v2113
    %2747 = vmatpush1.bf16.msra.mxu0 %v2112
    %2748 = vmatprep.subr.bf16.mxu0 %v2105
    %2749 = vmatpush1.bf16.msra.mxu0 %v2104
    %2750 = vmatprep.subr.bf16.mxu0 %v2097
    %2751 = vmatpush1.bf16.msra.mxu0 %v2096
    %2752 = vmatprep.subr.bf16.mxu0 %v2089
    %2753 = vmatpush1.bf16.msra.mxu0 %v2088
    %2754 = vmatprep.subr.bf16.mxu0 %v2081
    %2755 = vmatpush1.bf16.msra.mxu0 %v2080
    %2756 = vmatprep.subr.bf16.mxu0 %v2073
    %2757 = vmatpush1.bf16.msra.mxu0 %v2072
    %2758 = vmatprep.subr.bf16.mxu0 %v2065
    %2759 = vmatpush1.bf16.msra.mxu0 %v2064
    %2760 = vmatprep.subr.bf16.mxu0 %v2185
    %2761 = vmatpush2.bf16.msra.mxu0 %v2184
    %2762 = vmatprep.subr.bf16.mxu0 %v2177
    %2763 = vmatpush2.bf16.msra.mxu0 %v2176
    %2764 = vmatprep.subr.bf16.mxu0 %v2169
    %2765 = vmatpush2.bf16.msra.mxu0 %v2168
    %2766 = vmatprep.subr.bf16.mxu0 %v2161
    %2767 = vmatpush2.bf16.msra.mxu0 %v2160
    %2768 = vmatprep.subr.bf16.mxu0 %v2153
    %2769 = vmatpush2.bf16.msra.mxu0 %v2152
    %2770 = vmatprep.subr.bf16.mxu0 %v2145
    %2771 = vmatpush2.bf16.msra.mxu0 %v2144
    %2772 = vmatprep.subr.bf16.mxu0 %v2137
    %2773 = vmatpush2.bf16.msra.mxu0 %v2136
    %2774 = vmatprep.subr.bf16.mxu0 %v2129
    %2775 = vmatpush2.bf16.msra.mxu0 %v2128
    %2776 = vmatprep.mubr.bf16.mxu0 %v1033
    %2777 = vmatmul.mubr.bf16.gmra.mxu0 %v1032
    %v2778 = vpop.f32.mrf.mxu0
    %v2779 = vadd.f32 0.0, %v2778
    %v2780 = vpop.f32.mrf.mxu0
    %v2781 = vadd.f32 0.0, %v2780
    %v2782 = vpop.f32.mrf.mxu0
    %v2783 = vadd.f32 0.0, %v2782
    %v2784 = vpop.f32.mrf.mxu0
    %v2785 = vadd.f32 0.0, %v2784
    %2786 = vdwg.mxu0
    %2787 = vmatprep.subr.bf16.mxu0 %v2249
    %2788 = vmatpush1.bf16.msra.mxu0 %v2248
    %2789 = vmatprep.subr.bf16.mxu0 %v2241
    %2790 = vmatpush1.bf16.msra.mxu0 %v2240
    %2791 = vmatprep.subr.bf16.mxu0 %v2233
    %2792 = vmatpush1.bf16.msra.mxu0 %v2232
    %2793 = vmatprep.subr.bf16.mxu0 %v2225
    %2794 = vmatpush1.bf16.msra.mxu0 %v2224
    %2795 = vmatprep.subr.bf16.mxu0 %v2217
    %2796 = vmatpush1.bf16.msra.mxu0 %v2216
    %2797 = vmatprep.subr.bf16.mxu0 %v2209
    %2798 = vmatpush1.bf16.msra.mxu0 %v2208
    %2799 = vmatprep.subr.bf16.mxu0 %v2201
    %2800 = vmatpush1.bf16.msra.mxu0 %v2200
    %2801 = vmatprep.subr.bf16.mxu0 %v2193
    %2802 = vmatpush1.bf16.msra.mxu0 %v2192
    %2803 = vmatprep.subr.bf16.mxu0 %v2313
    %2804 = vmatpush2.bf16.msra.mxu0 %v2312
    %2805 = vmatprep.subr.bf16.mxu0 %v2305
    %2806 = vmatpush2.bf16.msra.mxu0 %v2304
    %2807 = vmatprep.subr.bf16.mxu0 %v2297
    %2808 = vmatpush2.bf16.msra.mxu0 %v2296
    %2809 = vmatprep.subr.bf16.mxu0 %v2289
    %2810 = vmatpush2.bf16.msra.mxu0 %v2288
    %2811 = vmatprep.subr.bf16.mxu0 %v2281
    %2812 = vmatpush2.bf16.msra.mxu0 %v2280
    %2813 = vmatprep.subr.bf16.mxu0 %v2273
    %2814 = vmatpush2.bf16.msra.mxu0 %v2272
    %2815 = vmatprep.subr.bf16.mxu0 %v2265
    %2816 = vmatpush2.bf16.msra.mxu0 %v2264
    %2817 = vmatprep.subr.bf16.mxu0 %v2257
    %2818 = vmatpush2.bf16.msra.mxu0 %v2256
    %2819 = vmatprep.mubr.bf16.mxu0 %v1035
    %2820 = vmatmul.mubr.bf16.gmra.mxu0 %v1034
    %v2821 = vpop.f32.mrf.mxu0
    %v2822 = vadd.f32 %v2779, %v2821
    %v2823 = vpop.f32.mrf.mxu0
    %v2824 = vadd.f32 %v2781, %v2823
    %v2825 = vpop.f32.mrf.mxu0
    %v2826 = vadd.f32 %v2783, %v2825
    %v2827 = vpop.f32.mrf.mxu0
    %v2828 = vadd.f32 %v2785, %v2827
    %2829 = vdwg.mxu0
    %2830 = vmatprep.subr.bf16.mxu0 %v2123
    %2831 = vmatpush1.bf16.msra.mxu0 %v2122
    %2832 = vmatprep.subr.bf16.mxu0 %v2115
    %2833 = vmatpush1.bf16.msra.mxu0 %v2114
    %2834 = vmatprep.subr.bf16.mxu0 %v2107
    %2835 = vmatpush1.bf16.msra.mxu0 %v2106
    %2836 = vmatprep.subr.bf16.mxu0 %v2099
    %2837 = vmatpush1.bf16.msra.mxu0 %v2098
    %2838 = vmatprep.subr.bf16.mxu0 %v2091
    %2839 = vmatpush1.bf16.msra.mxu0 %v2090
    %2840 = vmatprep.subr.bf16.mxu0 %v2083
    %2841 = vmatpush1.bf16.msra.mxu0 %v2082
    %2842 = vmatprep.subr.bf16.mxu0 %v2075
    %2843 = vmatpush1.bf16.msra.mxu0 %v2074
    %2844 = vmatprep.subr.bf16.mxu0 %v2067
    %2845 = vmatpush1.bf16.msra.mxu0 %v2066
    %2846 = vmatprep.subr.bf16.mxu0 %v2187
    %2847 = vmatpush2.bf16.msra.mxu0 %v2186
    %2848 = vmatprep.subr.bf16.mxu0 %v2179
    %2849 = vmatpush2.bf16.msra.mxu0 %v2178
    %2850 = vmatprep.subr.bf16.mxu0 %v2171
    %2851 = vmatpush2.bf16.msra.mxu0 %v2170
    %2852 = vmatprep.subr.bf16.mxu0 %v2163
    %2853 = vmatpush2.bf16.msra.mxu0 %v2162
    %2854 = vmatprep.subr.bf16.mxu0 %v2155
    %2855 = vmatpush2.bf16.msra.mxu0 %v2154
    %2856 = vmatprep.subr.bf16.mxu0 %v2147
    %2857 = vmatpush2.bf16.msra.mxu0 %v2146
    %2858 = vmatprep.subr.bf16.mxu0 %v2139
    %2859 = vmatpush2.bf16.msra.mxu0 %v2138
    %2860 = vmatprep.subr.bf16.mxu0 %v2131
    %2861 = vmatpush2.bf16.msra.mxu0 %v2130
    %2862 = vmatprep.mubr.bf16.mxu0 %v1033
    %2863 = vmatmul.mubr.bf16.gmra.mxu0 %v1032
    %v2864 = vpop.f32.mrf.mxu0
    %v2865 = vadd.f32 0.0, %v2864
    %v2866 = vpop.f32.mrf.mxu0
    %v2867 = vadd.f32 0.0, %v2866
    %v2868 = vpop.f32.mrf.mxu0
    %v2869 = vadd.f32 0.0, %v2868
    %v2870 = vpop.f32.mrf.mxu0
    %v2871 = vadd.f32 0.0, %v2870
    %2872 = vdwg.mxu0
    %2873 = vmatprep.subr.bf16.mxu0 %v2251
    %2874 = vmatpush1.bf16.msra.mxu0 %v2250
    %2875 = vmatprep.subr.bf16.mxu0 %v2243
    %2876 = vmatpush1.bf16.msra.mxu0 %v2242
    %2877 = vmatprep.subr.bf16.mxu0 %v2235
    %2878 = vmatpush1.bf16.msra.mxu0 %v2234
    %2879 = vmatprep.subr.bf16.mxu0 %v2227
    %2880 = vmatpush1.bf16.msra.mxu0 %v2226
    %2881 = vmatprep.subr.bf16.mxu0 %v2219
    %2882 = vmatpush1.bf16.msra.mxu0 %v2218
    %2883 = vmatprep.subr.bf16.mxu0 %v2211
    %2884 = vmatpush1.bf16.msra.mxu0 %v2210
    %2885 = vmatprep.subr.bf16.mxu0 %v2203
    %2886 = vmatpush1.bf16.msra.mxu0 %v2202
    %2887 = vmatprep.subr.bf16.mxu0 %v2195
    %2888 = vmatpush1.bf16.msra.mxu0 %v2194
    %2889 = vmatprep.subr.bf16.mxu0 %v2315
    %2890 = vmatpush2.bf16.msra.mxu0 %v2314
    %2891 = vmatprep.subr.bf16.mxu0 %v2307
    %2892 = vmatpush2.bf16.msra.mxu0 %v2306
    %2893 = vmatprep.subr.bf16.mxu0 %v2299
    %2894 = vmatpush2.bf16.msra.mxu0 %v2298
    %2895 = vmatprep.subr.bf16.mxu0 %v2291
    %2896 = vmatpush2.bf16.msra.mxu0 %v2290
    %2897 = vmatprep.subr.bf16.mxu0 %v2283
    %2898 = vmatpush2.bf16.msra.mxu0 %v2282
    %2899 = vmatprep.subr.bf16.mxu0 %v2275
    %2900 = vmatpush2.bf16.msra.mxu0 %v2274
    %2901 = vmatprep.subr.bf16.mxu0 %v2267
    %2902 = vmatpush2.bf16.msra.mxu0 %v2266
    %2903 = vmatprep.subr.bf16.mxu0 %v2259
    %2904 = vmatpush2.bf16.msra.mxu0 %v2258
    %2905 = vmatprep.mubr.bf16.mxu0 %v1035
    %2906 = vmatmul.mubr.bf16.gmra.mxu0 %v1034
    %v2907 = vpop.f32.mrf.mxu0
    %v2908 = vadd.f32 %v2865, %v2907
    %v2909 = vpop.f32.mrf.mxu0
    %v2910 = vadd.f32 %v2867, %v2909
    %v2911 = vpop.f32.mrf.mxu0
    %v2912 = vadd.f32 %v2869, %v2911
    %v2913 = vpop.f32.mrf.mxu0
    %v2914 = vadd.f32 %v2871, %v2913
    %2915 = vdwg.mxu0
    %v2916 = vld [vmem:[#allocation17] sm:$0xff]
    %v2918 = vlaneseq
    %v2919 = vshrl.u32 %v2918, 7
    %v2920 = vsub.s32 0, %v2919
    %v2921 = vrot.slane %v2916, %v2920
    %v2922 = vlaneseq
    %v2923 = vshrl.u32 %v2922, 7
    %v2924 = vsub.s32 1, %v2923
    %v2925 = vrot.slane %v2916, %v2924
    %v2926 = vlaneseq
    %v2927 = vshrl.u32 %v2926, 7
    %v2928 = vsub.s32 2, %v2927
    %v2929 = vrot.slane %v2916, %v2928
    %v2930 = vlaneseq
    %v2931 = vshrl.u32 %v2930, 7
    %v2932 = vsub.s32 3, %v2931
    %v2933 = vrot.slane %v2916, %v2932
    %v2934 = vlaneseq
    %v2935 = vshrl.u32 %v2934, 7
    %v2936 = vsub.s32 4, %v2935
    %v2937 = vrot.slane %v2916, %v2936
    %v2938 = vlaneseq
    %v2939 = vshrl.u32 %v2938, 7
    %v2940 = vsub.s32 5, %v2939
    %v2941 = vrot.slane %v2916, %v2940
    %v2942 = vlaneseq
    %v2943 = vshrl.u32 %v2942, 7
    %v2944 = vsub.s32 6, %v2943
    %v2945 = vrot.slane %v2916, %v2944
    %v2946 = vlaneseq
    %v2947 = vshrl.u32 %v2946, 7
    %v2948 = vsub.s32 7, %v2947
    %v2949 = vrot.slane %v2916, %v2948
    %v2958 = vmul.f32 %v2650, %v2921
    %v2959 = vmul.f32 %v2652, %v2925
    %v2960 = vmul.f32 %v2736, %v2929
    %v2961 = vmul.f32 %v2738, %v2933
    %v2962 = vmul.f32 %v2822, %v2937
    %v2963 = vmul.f32 %v2824, %v2941
    %v2964 = vmul.f32 %v2908, %v2945
    %v2965 = vmul.f32 %v2910, %v2949
    %v2966 = vmul.f32 %v2654, %v2921
    %v2967 = vmul.f32 %v2656, %v2925
    %v2968 = vmul.f32 %v2740, %v2929
    %v2969 = vmul.f32 %v2742, %v2933
    %v2970 = vmul.f32 %v2826, %v2937
    %v2971 = vmul.f32 %v2828, %v2941
    %v2972 = vmul.f32 %v2912, %v2945
    %v2973 = vmul.f32 %v2914, %v2949
    %v2974 = vld [vmem:[#allocation19] sm:$0xff]
    %v2976 = vlaneseq
    %v2977 = vshrl.u32 %v2976, 7
    %v2978 = vsub.s32 0, %v2977
    %v2979 = vrot.slane %v2974, %v2978
    %v2980 = vlaneseq
    %v2981 = vshrl.u32 %v2980, 7
    %v2982 = vsub.s32 1, %v2981
    %v2983 = vrot.slane %v2974, %v2982
    %v2984 = vlaneseq
    %v2985 = vshrl.u32 %v2984, 7
    %v2986 = vsub.s32 2, %v2985
    %v2987 = vrot.slane %v2974, %v2986
    %v2988 = vlaneseq
    %v2989 = vshrl.u32 %v2988, 7
    %v2990 = vsub.s32 3, %v2989
    %v2991 = vrot.slane %v2974, %v2990
    %v2992 = vlaneseq
    %v2993 = vshrl.u32 %v2992, 7
    %v2994 = vsub.s32 4, %v2993
    %v2995 = vrot.slane %v2974, %v2994
    %v2996 = vlaneseq
    %v2997 = vshrl.u32 %v2996, 7
    %v2998 = vsub.s32 5, %v2997
    %v2999 = vrot.slane %v2974, %v2998
    %v3000 = vlaneseq
    %v3001 = vshrl.u32 %v3000, 7
    %v3002 = vsub.s32 6, %v3001
    %v3003 = vrot.slane %v2974, %v3002
    %v3004 = vlaneseq
    %v3005 = vshrl.u32 %v3004, 7
    %v3006 = vsub.s32 7, %v3005
    %v3007 = vrot.slane %v2974, %v3006
    %v3016 = vadd.f32 %v2958, %v2979
    %v3017 = vadd.f32 %v2959, %v2983
    %v3018 = vadd.f32 %v2960, %v2987
    %v3019 = vadd.f32 %v2961, %v2991
    %v3020 = vadd.f32 %v2962, %v2995
    %v3021 = vadd.f32 %v2963, %v2999
    %v3022 = vadd.f32 %v2964, %v3003
    %v3023 = vadd.f32 %v2965, %v3007
    %v3024 = vadd.f32 %v2966, %v2979
    %v3025 = vadd.f32 %v2967, %v2983
    %v3026 = vadd.f32 %v2968, %v2987
    %v3027 = vadd.f32 %v2969, %v2991
    %v3028 = vadd.f32 %v2970, %v2995
    %v3029 = vadd.f32 %v2971, %v2999
    %v3030 = vadd.f32 %v2972, %v3003
    %v3031 = vadd.f32 %v2973, %v3007
    %v3032 = vmul.f32 %v3016, 0.2
    %v3033 = vmul.f32 %v3017, 0.2
    %v3034 = vmul.f32 %v3018, 0.2
    %v3035 = vmul.f32 %v3019, 0.2
    %v3036 = vmul.f32 %v3020, 0.2
    %v3037 = vmul.f32 %v3021, 0.2
    %v3038 = vmul.f32 %v3022, 0.2
    %v3039 = vmul.f32 %v3023, 0.2
    %v3040 = vmul.f32 %v3024, 0.2
    %v3041 = vmul.f32 %v3025, 0.2
    %v3042 = vmul.f32 %v3026, 0.2
    %v3043 = vmul.f32 %v3027, 0.2
    %v3044 = vmul.f32 %v3028, 0.2
    %v3045 = vmul.f32 %v3029, 0.2
    %v3046 = vmul.f32 %v3030, 0.2
    %v3047 = vmul.f32 %v3031, 0.2
    %v3048 = vmax.f32 %v3016, %v3032
    %v3049 = vmax.f32 %v3017, %v3033
    %v3050 = vmax.f32 %v3018, %v3034
    %v3051 = vmax.f32 %v3019, %v3035
    %v3052 = vmax.f32 %v3020, %v3036
    %v3053 = vmax.f32 %v3021, %v3037
    %v3054 = vmax.f32 %v3022, %v3038
    %v3055 = vmax.f32 %v3023, %v3039
    %v3056 = vmax.f32 %v3024, %v3040
    %v3057 = vmax.f32 %v3025, %v3041
    %v3058 = vmax.f32 %v3026, %v3042
    %v3059 = vmax.f32 %v3027, %v3043
    %v3060 = vmax.f32 %v3028, %v3044
    %v3061 = vmax.f32 %v3029, %v3045
    %v3062 = vmax.f32 %v3030, %v3046
    %v3063 = vmax.f32 %v3031, %v3047
    %v3064 = vpack.c.bf16 %v3056, %v3048
    %v3065 = vpack.c.bf16 %v3057, %v3049
    %v3066 = vpack.c.bf16 %v3058, %v3050
    %v3067 = vpack.c.bf16 %v3059, %v3051
    %v3068 = vpack.c.bf16 %v3060, %v3052
    %v3069 = vpack.c.bf16 %v3061, %v3053
    %v3070 = vpack.c.bf16 %v3062, %v3054
    %v3071 = vpack.c.bf16 %v3063, %v3055
    %v3072 = vld [vmem:[#allocation20] sm:$0xff]
    %v3073 = vld [vmem:[#allocation20 + $0x8] sm:$0xff]
    %v3074 = vld [vmem:[#allocation20 + $0x10] sm:$0xff]
    %v3075 = vld [vmem:[#allocation20 + $0x18] sm:$0xf]
    %v3076 = vld [vmem:[#allocation20 + $0x1c] sm:$0xff]
    %v3077 = vld [vmem:[#allocation20 + $0x24] sm:$0xff]
    %v3078 = vld [vmem:[#allocation20 + $0x2c] sm:$0xff]
    %v3079 = vld [vmem:[#allocation20 + $0x34] sm:$0xf]
    %v3080 = vld [vmem:[#allocation20 + $0x38] sm:$0xff]
    %v3081 = vld [vmem:[#allocation20 + $0x40] sm:$0xff]
    %v3082 = vld [vmem:[#allocation20 + $0x48] sm:$0xff]
    %v3083 = vld [vmem:[#allocation20 + $0x50] sm:$0xf]
    %v3084 = vld [vmem:[#allocation20 + $0x54] sm:$0xff]
    %v3085 = vld [vmem:[#allocation20 + $0x5c] sm:$0xff]
    %v3086 = vld [vmem:[#allocation20 + $0x64] sm:$0xff]
    %v3087 = vld [vmem:[#allocation20 + $0x6c] sm:$0xf]
    %v3088 = vld [vmem:[#allocation20 + $0x70] sm:$0xff]
    %v3089 = vld [vmem:[#allocation20 + $0x78] sm:$0xff]
    %v3090 = vld [vmem:[#allocation20 + $0x80] sm:$0xff]
    %v3091 = vld [vmem:[#allocation20 + $0x88] sm:$0xf]
    %v3092 = vld [vmem:[#allocation20 + $0x8c] sm:$0xff]
    %v3093 = vld [vmem:[#allocation20 + $0x94] sm:$0xff]
    %v3094 = vld [vmem:[#allocation20 + $0x9c] sm:$0xff]
    %v3095 = vld [vmem:[#allocation20 + $0xa4] sm:$0xf]
    %v3096 = vld [vmem:[#allocation20 + $0xa8] sm:$0xff]
    %v3097 = vld [vmem:[#allocation20 + $0xb0] sm:$0xff]
    %v3098 = vld [vmem:[#allocation20 + $0xb8] sm:$0xff]
    %v3099 = vld [vmem:[#allocation20 + $0xc0] sm:$0xf]
    %v3100 = vld [vmem:[#allocation20 + $0xc4] sm:$0xff]
    %v3101 = vld [vmem:[#allocation20 + $0xcc] sm:$0xff]
    %v3102 = vld [vmem:[#allocation20 + $0xd4] sm:$0xff]
    %v3103 = vld [vmem:[#allocation20 + $0xdc] sm:$0xf]
    %v3104 = vld [vmem:[#allocation20 + $0xe0] sm:$0xff]
    %v3105 = vld [vmem:[#allocation20 + $0xe8] sm:$0xff]
    %v3106 = vld [vmem:[#allocation20 + $0xf0] sm:$0xff]
    %v3107 = vld [vmem:[#allocation20 + $0xf8] sm:$0xf]
    %v3108 = vld [vmem:[#allocation20 + $0xfc] sm:$0xff]
    %v3109 = vld [vmem:[#allocation20 + $0x104] sm:$0xff]
    %v3110 = vld [vmem:[#allocation20 + $0x10c] sm:$0xff]
    %v3111 = vld [vmem:[#allocation20 + $0x114] sm:$0xf]
    %v3112 = vld [vmem:[#allocation20 + $0x118] sm:$0xff]
    %v3113 = vld [vmem:[#allocation20 + $0x120] sm:$0xff]
    %v3114 = vld [vmem:[#allocation20 + $0x128] sm:$0xff]
    %v3115 = vld [vmem:[#allocation20 + $0x130] sm:$0xf]
    %v3116 = vld [vmem:[#allocation20 + $0x134] sm:$0xff]
    %v3117 = vld [vmem:[#allocation20 + $0x13c] sm:$0xff]
    %v3118 = vld [vmem:[#allocation20 + $0x144] sm:$0xff]
    %v3119 = vld [vmem:[#allocation20 + $0x14c] sm:$0xf]
    %v3120 = vld [vmem:[#allocation20 + $0x150] sm:$0xff]
    %v3121 = vld [vmem:[#allocation20 + $0x158] sm:$0xff]
    %v3122 = vld [vmem:[#allocation20 + $0x160] sm:$0xff]
    %v3123 = vld [vmem:[#allocation20 + $0x168] sm:$0xf]
    %v3124 = vld [vmem:[#allocation20 + $0x16c] sm:$0xff]
    %v3125 = vld [vmem:[#allocation20 + $0x174] sm:$0xff]
    %v3126 = vld [vmem:[#allocation20 + $0x17c] sm:$0xff]
    %v3127 = vld [vmem:[#allocation20 + $0x184] sm:$0xf]
    %v3128 = vld [vmem:[#allocation20 + $0x188] sm:$0xff]
    %v3129 = vld [vmem:[#allocation20 + $0x190] sm:$0xff]
    %v3130 = vld [vmem:[#allocation20 + $0x198] sm:$0xff]
    %v3131 = vld [vmem:[#allocation20 + $0x1a0] sm:$0xf]
    %v3132 = vld [vmem:[#allocation20 + $0x1a4] sm:$0xff]
    %v3133 = vld [vmem:[#allocation20 + $0x1ac] sm:$0xff]
    %v3134 = vld [vmem:[#allocation20 + $0x1b4] sm:$0xff]
    %v3135 = vld [vmem:[#allocation20 + $0x1bc] sm:$0xf]
    %v3136 = vld [vmem:[#allocation20 + $0x1c0] sm:$0xff]
    %v3137 = vld [vmem:[#allocation20 + $0x1c8] sm:$0xff]
    %v3138 = vld [vmem:[#allocation20 + $0x1d0] sm:$0xff]
    %v3139 = vld [vmem:[#allocation20 + $0x1d8] sm:$0xf]
    %v3140 = vld [vmem:[#allocation20 + $0x1dc] sm:$0xff]
    %v3141 = vld [vmem:[#allocation20 + $0x1e4] sm:$0xff]
    %v3142 = vld [vmem:[#allocation20 + $0x1ec] sm:$0xff]
    %v3143 = vld [vmem:[#allocation20 + $0x1f4] sm:$0xf]
    %v3144 = vld [vmem:[#allocation20 + $0x1f8] sm:$0xff]
    %v3145 = vld [vmem:[#allocation20 + $0x200] sm:$0xff]
    %v3146 = vld [vmem:[#allocation20 + $0x208] sm:$0xff]
    %v3147 = vld [vmem:[#allocation20 + $0x210] sm:$0xf]
    %v3148 = vld [vmem:[#allocation20 + $0x214] sm:$0xff]
    %v3149 = vld [vmem:[#allocation20 + $0x21c] sm:$0xff]
    %v3150 = vld [vmem:[#allocation20 + $0x224] sm:$0xff]
    %v3151 = vld [vmem:[#allocation20 + $0x22c] sm:$0xf]
    %v3152 = vld [vmem:[#allocation20 + $0x230] sm:$0xff]
    %v3153 = vld [vmem:[#allocation20 + $0x238] sm:$0xff]
    %v3154 = vld [vmem:[#allocation20 + $0x240] sm:$0xff]
    %v3155 = vld [vmem:[#allocation20 + $0x248] sm:$0xf]
    %v3156 = vld [vmem:[#allocation20 + $0x24c] sm:$0xff]
    %v3157 = vld [vmem:[#allocation20 + $0x254] sm:$0xff]
    %v3158 = vld [vmem:[#allocation20 + $0x25c] sm:$0xff]
    %v3159 = vld [vmem:[#allocation20 + $0x264] sm:$0xf]
    %v3160 = vld [vmem:[#allocation20 + $0x268] sm:$0xff]
    %v3161 = vld [vmem:[#allocation20 + $0x270] sm:$0xff]
    %v3162 = vld [vmem:[#allocation20 + $0x278] sm:$0xff]
    %v3163 = vld [vmem:[#allocation20 + $0x280] sm:$0xf]
    %v3164 = vld [vmem:[#allocation20 + $0x284] sm:$0xff]
    %v3165 = vld [vmem:[#allocation20 + $0x28c] sm:$0xff]
    %v3166 = vld [vmem:[#allocation20 + $0x294] sm:$0xff]
    %v3167 = vld [vmem:[#allocation20 + $0x29c] sm:$0xf]
    %v3168 = vld [vmem:[#allocation20 + $0x2a0] sm:$0xff]
    %v3169 = vld [vmem:[#allocation20 + $0x2a8] sm:$0xff]
    %v3170 = vld [vmem:[#allocation20 + $0x2b0] sm:$0xff]
    %v3171 = vld [vmem:[#allocation20 + $0x2b8] sm:$0xf]
    %v3172 = vld [vmem:[#allocation20 + $0x2bc] sm:$0xff]
    %v3173 = vld [vmem:[#allocation20 + $0x2c4] sm:$0xff]
    %v3174 = vld [vmem:[#allocation20 + $0x2cc] sm:$0xff]
    %v3175 = vld [vmem:[#allocation20 + $0x2d4] sm:$0xf]
    %v3176 = vld [vmem:[#allocation20 + $0x2d8] sm:$0xff]
    %v3177 = vld [vmem:[#allocation20 + $0x2e0] sm:$0xff]
    %v3178 = vld [vmem:[#allocation20 + $0x2e8] sm:$0xff]
    %v3179 = vld [vmem:[#allocation20 + $0x2f0] sm:$0xf]
    %v3180 = vld [vmem:[#allocation20 + $0x2f4] sm:$0xff]
    %v3181 = vld [vmem:[#allocation20 + $0x2fc] sm:$0xff]
    %v3182 = vld [vmem:[#allocation20 + $0x304] sm:$0xff]
    %v3183 = vld [vmem:[#allocation20 + $0x30c] sm:$0xf]
    %v3184 = vld [vmem:[#allocation20 + $0x310] sm:$0xff]
    %v3185 = vld [vmem:[#allocation20 + $0x318] sm:$0xff]
    %v3186 = vld [vmem:[#allocation20 + $0x320] sm:$0xff]
    %v3187 = vld [vmem:[#allocation20 + $0x328] sm:$0xf]
    %v3188 = vld [vmem:[#allocation20 + $0x32c] sm:$0xff]
    %v3189 = vld [vmem:[#allocation20 + $0x334] sm:$0xff]
    %v3190 = vld [vmem:[#allocation20 + $0x33c] sm:$0xff]
    %v3191 = vld [vmem:[#allocation20 + $0x344] sm:$0xf]
    %v3192 = vld [vmem:[#allocation20 + $0x348] sm:$0xff]
    %v3193 = vld [vmem:[#allocation20 + $0x350] sm:$0xff]
    %v3194 = vld [vmem:[#allocation20 + $0x358] sm:$0xff]
    %v3195 = vld [vmem:[#allocation20 + $0x360] sm:$0xf]
    %v3196 = vld [vmem:[#allocation20 + $0x364] sm:$0xff]
    %v3197 = vld [vmem:[#allocation20 + $0x36c] sm:$0xff]
    %v3198 = vld [vmem:[#allocation20 + $0x374] sm:$0xff]
    %v3199 = vld [vmem:[#allocation20 + $0x37c] sm:$0xf]
    %v3200 = vld [vmem:[#allocation20 + $0x380] sm:$0xff]
    %v3201 = vld [vmem:[#allocation20 + $0x388] sm:$0xff]
    %v3202 = vld [vmem:[#allocation20 + $0x390] sm:$0xff]
    %v3203 = vld [vmem:[#allocation20 + $0x398] sm:$0xf]
    %v3204 = vld [vmem:[#allocation20 + $0x39c] sm:$0xff]
    %v3205 = vld [vmem:[#allocation20 + $0x3a4] sm:$0xff]
    %v3206 = vld [vmem:[#allocation20 + $0x3ac] sm:$0xff]
    %v3207 = vld [vmem:[#allocation20 + $0x3b4] sm:$0xf]
    %v3208 = vld [vmem:[#allocation20 + $0x3b8] sm:$0xff]
    %v3209 = vld [vmem:[#allocation20 + $0x3c0] sm:$0xff]
    %v3210 = vld [vmem:[#allocation20 + $0x3c8] sm:$0xff]
    %v3211 = vld [vmem:[#allocation20 + $0x3d0] sm:$0xf]
    %v3212 = vld [vmem:[#allocation20 + $0x3d4] sm:$0xff]
    %v3213 = vld [vmem:[#allocation20 + $0x3dc] sm:$0xff]
    %v3214 = vld [vmem:[#allocation20 + $0x3e4] sm:$0xff]
    %v3215 = vld [vmem:[#allocation20 + $0x3ec] sm:$0xf]
    %v3216 = vld [vmem:[#allocation20 + $0x3f0] sm:$0xff]
    %v3217 = vld [vmem:[#allocation20 + $0x3f8] sm:$0xff]
    %v3218 = vld [vmem:[#allocation20 + $0x400] sm:$0xff]
    %v3219 = vld [vmem:[#allocation20 + $0x408] sm:$0xf]
    %v3220 = vld [vmem:[#allocation20 + $0x40c] sm:$0xff]
    %v3221 = vld [vmem:[#allocation20 + $0x414] sm:$0xff]
    %v3222 = vld [vmem:[#allocation20 + $0x41c] sm:$0xff]
    %v3223 = vld [vmem:[#allocation20 + $0x424] sm:$0xf]
    %v3224 = vld [vmem:[#allocation20 + $0x428] sm:$0xff]
    %v3225 = vld [vmem:[#allocation20 + $0x430] sm:$0xff]
    %v3226 = vld [vmem:[#allocation20 + $0x438] sm:$0xff]
    %v3227 = vld [vmem:[#allocation20 + $0x440] sm:$0xf]
    %v3228 = vld [vmem:[#allocation20 + $0x444] sm:$0xff]
    %v3229 = vld [vmem:[#allocation20 + $0x44c] sm:$0xff]
    %v3230 = vld [vmem:[#allocation20 + $0x454] sm:$0xff]
    %v3231 = vld [vmem:[#allocation20 + $0x45c] sm:$0xf]
    %v3232 = vld [vmem:[#allocation20 + $0x460] sm:$0xff]
    %v3233 = vld [vmem:[#allocation20 + $0x468] sm:$0xff]
    %v3234 = vld [vmem:[#allocation20 + $0x470] sm:$0xff]
    %v3235 = vld [vmem:[#allocation20 + $0x478] sm:$0xf]
    %v3236 = vld [vmem:[#allocation20 + $0x47c] sm:$0xff]
    %v3237 = vld [vmem:[#allocation20 + $0x484] sm:$0xff]
    %v3238 = vld [vmem:[#allocation20 + $0x48c] sm:$0xff]
    %v3239 = vld [vmem:[#allocation20 + $0x494] sm:$0xf]
    %v3240 = vld [vmem:[#allocation20 + $0x498] sm:$0xff]
    %v3241 = vld [vmem:[#allocation20 + $0x4a0] sm:$0xff]
    %v3242 = vld [vmem:[#allocation20 + $0x4a8] sm:$0xff]
    %v3243 = vld [vmem:[#allocation20 + $0x4b0] sm:$0xf]
    %v3244 = vld [vmem:[#allocation20 + $0x4b4] sm:$0xff]
    %v3245 = vld [vmem:[#allocation20 + $0x4bc] sm:$0xff]
    %v3246 = vld [vmem:[#allocation20 + $0x4c4] sm:$0xff]
    %v3247 = vld [vmem:[#allocation20 + $0x4cc] sm:$0xf]
    %v3248 = vld [vmem:[#allocation20 + $0x4d0] sm:$0xff]
    %v3249 = vld [vmem:[#allocation20 + $0x4d8] sm:$0xff]
    %v3250 = vld [vmem:[#allocation20 + $0x4e0] sm:$0xff]
    %v3251 = vld [vmem:[#allocation20 + $0x4e8] sm:$0xf]
    %v3252 = vld [vmem:[#allocation20 + $0x4ec] sm:$0xff]
    %v3253 = vld [vmem:[#allocation20 + $0x4f4] sm:$0xff]
    %v3254 = vld [vmem:[#allocation20 + $0x4fc] sm:$0xff]
    %v3255 = vld [vmem:[#allocation20 + $0x504] sm:$0xf]
    %v3256 = vld [vmem:[#allocation20 + $0x508] sm:$0xff]
    %v3257 = vld [vmem:[#allocation20 + $0x510] sm:$0xff]
    %v3258 = vld [vmem:[#allocation20 + $0x518] sm:$0xff]
    %v3259 = vld [vmem:[#allocation20 + $0x520] sm:$0xf]
    %v3260 = vld [vmem:[#allocation20 + $0x524] sm:$0xff]
    %v3261 = vld [vmem:[#allocation20 + $0x52c] sm:$0xff]
    %v3262 = vld [vmem:[#allocation20 + $0x534] sm:$0xff]
    %v3263 = vld [vmem:[#allocation20 + $0x53c] sm:$0xf]
    %v3264 = vld [vmem:[#allocation20 + $0x540] sm:$0xff]
    %v3265 = vld [vmem:[#allocation20 + $0x548] sm:$0xff]
    %v3266 = vld [vmem:[#allocation20 + $0x550] sm:$0xff]
    %v3267 = vld [vmem:[#allocation20 + $0x558] sm:$0xf]
    %v3268 = vld [vmem:[#allocation20 + $0x55c] sm:$0xff]
    %v3269 = vld [vmem:[#allocation20 + $0x564] sm:$0xff]
    %v3270 = vld [vmem:[#allocation20 + $0x56c] sm:$0xff]
    %v3271 = vld [vmem:[#allocation20 + $0x574] sm:$0xf]
    %v3272 = vld [vmem:[#allocation20 + $0x578] sm:$0xff]
    %v3273 = vld [vmem:[#allocation20 + $0x580] sm:$0xff]
    %v3274 = vld [vmem:[#allocation20 + $0x588] sm:$0xff]
    %v3275 = vld [vmem:[#allocation20 + $0x590] sm:$0xf]
    %v3276 = vld [vmem:[#allocation20 + $0x594] sm:$0xff]
    %v3277 = vld [vmem:[#allocation20 + $0x59c] sm:$0xff]
    %v3278 = vld [vmem:[#allocation20 + $0x5a4] sm:$0xff]
    %v3279 = vld [vmem:[#allocation20 + $0x5ac] sm:$0xf]
    %v3280 = vld [vmem:[#allocation20 + $0x5b0] sm:$0xff]
    %v3281 = vld [vmem:[#allocation20 + $0x5b8] sm:$0xff]
    %v3282 = vld [vmem:[#allocation20 + $0x5c0] sm:$0xff]
    %v3283 = vld [vmem:[#allocation20 + $0x5c8] sm:$0xf]
    %v3284 = vld [vmem:[#allocation20 + $0x5cc] sm:$0xff]
    %v3285 = vld [vmem:[#allocation20 + $0x5d4] sm:$0xff]
    %v3286 = vld [vmem:[#allocation20 + $0x5dc] sm:$0xff]
    %v3287 = vld [vmem:[#allocation20 + $0x5e4] sm:$0xf]
    %v3288 = vld [vmem:[#allocation20 + $0x5e8] sm:$0xff]
    %v3289 = vld [vmem:[#allocation20 + $0x5f0] sm:$0xff]
    %v3290 = vld [vmem:[#allocation20 + $0x5f8] sm:$0xff]
    %v3291 = vld [vmem:[#allocation20 + $0x600] sm:$0xf]
    %v3292 = vld [vmem:[#allocation20 + $0x604] sm:$0xff]
    %v3293 = vld [vmem:[#allocation20 + $0x60c] sm:$0xff]
    %v3294 = vld [vmem:[#allocation20 + $0x614] sm:$0xff]
    %v3295 = vld [vmem:[#allocation20 + $0x61c] sm:$0xf]
    %v3296 = vld [vmem:[#allocation20 + $0x620] sm:$0xff]
    %v3297 = vld [vmem:[#allocation20 + $0x628] sm:$0xff]
    %v3298 = vld [vmem:[#allocation20 + $0x630] sm:$0xff]
    %v3299 = vld [vmem:[#allocation20 + $0x638] sm:$0xf]
    %v3300 = vld [vmem:[#allocation20 + $0x63c] sm:$0xff]
    %v3301 = vld [vmem:[#allocation20 + $0x644] sm:$0xff]
    %v3302 = vld [vmem:[#allocation20 + $0x64c] sm:$0xff]
    %v3303 = vld [vmem:[#allocation20 + $0x654] sm:$0xf]
    %v3304 = vld [vmem:[#allocation20 + $0x658] sm:$0xff]
    %v3305 = vld [vmem:[#allocation20 + $0x660] sm:$0xff]
    %v3306 = vld [vmem:[#allocation20 + $0x668] sm:$0xff]
    %v3307 = vld [vmem:[#allocation20 + $0x670] sm:$0xf]
    %v3308 = vld [vmem:[#allocation20 + $0x674] sm:$0xff]
    %v3309 = vld [vmem:[#allocation20 + $0x67c] sm:$0xff]
    %v3310 = vld [vmem:[#allocation20 + $0x684] sm:$0xff]
    %v3311 = vld [vmem:[#allocation20 + $0x68c] sm:$0xf]
    %v3312 = vld [vmem:[#allocation20 + $0x690] sm:$0xff]
    %v3313 = vld [vmem:[#allocation20 + $0x698] sm:$0xff]
    %v3314 = vld [vmem:[#allocation20 + $0x6a0] sm:$0xff]
    %v3315 = vld [vmem:[#allocation20 + $0x6a8] sm:$0xf]
    %v3316 = vld [vmem:[#allocation20 + $0x6ac] sm:$0xff]
    %v3317 = vld [vmem:[#allocation20 + $0x6b4] sm:$0xff]
    %v3318 = vld [vmem:[#allocation20 + $0x6bc] sm:$0xff]
    %v3319 = vld [vmem:[#allocation20 + $0x6c4] sm:$0xf]
    %v3320 = vld [vmem:[#allocation20 + $0x6c8] sm:$0xff]
    %v3321 = vld [vmem:[#allocation20 + $0x6d0] sm:$0xff]
    %v3322 = vld [vmem:[#allocation20 + $0x6d8] sm:$0xff]
    %v3323 = vld [vmem:[#allocation20 + $0x6e0] sm:$0xf]
    %v3324 = vld [vmem:[#allocation20 + $0x6e4] sm:$0xff]
    %v3325 = vld [vmem:[#allocation20 + $0x6ec] sm:$0xff]
    %v3326 = vld [vmem:[#allocation20 + $0x6f4] sm:$0xff]
    %v3327 = vld [vmem:[#allocation20 + $0x6fc] sm:$0xf]
    %v3328 = vld [vmem:[#allocation20 + $0x700] sm:$0xff]
    %v3329 = vld [vmem:[#allocation20 + $0x708] sm:$0xff]
    %v3330 = vld [vmem:[#allocation20 + $0x710] sm:$0xff]
    %v3331 = vld [vmem:[#allocation20 + $0x718] sm:$0xf]
    %v3332 = vld [vmem:[#allocation20 + $0x71c] sm:$0xff]
    %v3333 = vld [vmem:[#allocation20 + $0x724] sm:$0xff]
    %v3334 = vld [vmem:[#allocation20 + $0x72c] sm:$0xff]
    %v3335 = vld [vmem:[#allocation20 + $0x734] sm:$0xf]
    %v3336 = vld [vmem:[#allocation20 + $0x738] sm:$0xff]
    %v3337 = vld [vmem:[#allocation20 + $0x740] sm:$0xff]
    %v3338 = vld [vmem:[#allocation20 + $0x748] sm:$0xff]
    %v3339 = vld [vmem:[#allocation20 + $0x750] sm:$0xf]
    %v3340 = vld [vmem:[#allocation20 + $0x754] sm:$0xff]
    %v3341 = vld [vmem:[#allocation20 + $0x75c] sm:$0xff]
    %v3342 = vld [vmem:[#allocation20 + $0x764] sm:$0xff]
    %v3343 = vld [vmem:[#allocation20 + $0x76c] sm:$0xf]
    %v3344 = vld [vmem:[#allocation20 + $0x770] sm:$0xff]
    %v3345 = vld [vmem:[#allocation20 + $0x778] sm:$0xff]
    %v3346 = vld [vmem:[#allocation20 + $0x780] sm:$0xff]
    %v3347 = vld [vmem:[#allocation20 + $0x788] sm:$0xf]
    %v3348 = vld [vmem:[#allocation20 + $0x78c] sm:$0xff]
    %v3349 = vld [vmem:[#allocation20 + $0x794] sm:$0xff]
    %v3350 = vld [vmem:[#allocation20 + $0x79c] sm:$0xff]
    %v3351 = vld [vmem:[#allocation20 + $0x7a4] sm:$0xf]
    %v3352 = vld [vmem:[#allocation20 + $0x7a8] sm:$0xff]
    %v3353 = vld [vmem:[#allocation20 + $0x7b0] sm:$0xff]
    %v3354 = vld [vmem:[#allocation20 + $0x7b8] sm:$0xff]
    %v3355 = vld [vmem:[#allocation20 + $0x7c0] sm:$0xf]
    %v3356 = vld [vmem:[#allocation20 + $0x7c4] sm:$0xff]
    %v3357 = vld [vmem:[#allocation20 + $0x7cc] sm:$0xff]
    %v3358 = vld [vmem:[#allocation20 + $0x7d4] sm:$0xff]
    %v3359 = vld [vmem:[#allocation20 + $0x7dc] sm:$0xf]
    %v3360 = vld [vmem:[#allocation20 + $0x7e0] sm:$0xff]
    %v3361 = vld [vmem:[#allocation20 + $0x7e8] sm:$0xff]
    %v3362 = vld [vmem:[#allocation20 + $0x7f0] sm:$0xff]
    %v3363 = vld [vmem:[#allocation20 + $0x7f8] sm:$0xf]
    %v3364 = vld [vmem:[#allocation20 + $0x7fc] sm:$0xff]
    %v3365 = vld [vmem:[#allocation20 + $0x804] sm:$0xff]
    %v3366 = vld [vmem:[#allocation20 + $0x80c] sm:$0xff]
    %v3367 = vld [vmem:[#allocation20 + $0x814] sm:$0xf]
    %v3368 = vld [vmem:[#allocation20 + $0x818] sm:$0xff]
    %v3369 = vld [vmem:[#allocation20 + $0x820] sm:$0xff]
    %v3370 = vld [vmem:[#allocation20 + $0x828] sm:$0xff]
    %v3371 = vld [vmem:[#allocation20 + $0x830] sm:$0xf]
    %v3372 = vld [vmem:[#allocation20 + $0x834] sm:$0xff]
    %v3373 = vld [vmem:[#allocation20 + $0x83c] sm:$0xff]
    %v3374 = vld [vmem:[#allocation20 + $0x844] sm:$0xff]
    %v3375 = vld [vmem:[#allocation20 + $0x84c] sm:$0xf]
    %v3376 = vld [vmem:[#allocation20 + $0x850] sm:$0xff]
    %v3377 = vld [vmem:[#allocation20 + $0x858] sm:$0xff]
    %v3378 = vld [vmem:[#allocation20 + $0x860] sm:$0xff]
    %v3379 = vld [vmem:[#allocation20 + $0x868] sm:$0xf]
    %v3380 = vld [vmem:[#allocation20 + $0x86c] sm:$0xff]
    %v3381 = vld [vmem:[#allocation20 + $0x874] sm:$0xff]
    %v3382 = vld [vmem:[#allocation20 + $0x87c] sm:$0xff]
    %v3383 = vld [vmem:[#allocation20 + $0x884] sm:$0xf]
    %v3384 = vld [vmem:[#allocation20 + $0x888] sm:$0xff]
    %v3385 = vld [vmem:[#allocation20 + $0x890] sm:$0xff]
    %v3386 = vld [vmem:[#allocation20 + $0x898] sm:$0xff]
    %v3387 = vld [vmem:[#allocation20 + $0x8a0] sm:$0xf]
    %v3388 = vld [vmem:[#allocation20 + $0x8a4] sm:$0xff]
    %v3389 = vld [vmem:[#allocation20 + $0x8ac] sm:$0xff]
    %v3390 = vld [vmem:[#allocation20 + $0x8b4] sm:$0xff]
    %v3391 = vld [vmem:[#allocation20 + $0x8bc] sm:$0xf]
    %v3392 = vld [vmem:[#allocation20 + $0x8c0] sm:$0xff]
    %v3393 = vld [vmem:[#allocation20 + $0x8c8] sm:$0xff]
    %v3394 = vld [vmem:[#allocation20 + $0x8d0] sm:$0xff]
    %v3395 = vld [vmem:[#allocation20 + $0x8d8] sm:$0xf]
    %v3396 = vld [vmem:[#allocation20 + $0x8dc] sm:$0xff]
    %v3397 = vld [vmem:[#allocation20 + $0x8e4] sm:$0xff]
    %v3398 = vld [vmem:[#allocation20 + $0x8ec] sm:$0xff]
    %v3399 = vld [vmem:[#allocation20 + $0x8f4] sm:$0xf]
    %v3400 = vld [vmem:[#allocation20 + $0x8f8] sm:$0xff]
    %v3401 = vld [vmem:[#allocation20 + $0x900] sm:$0xff]
    %v3402 = vld [vmem:[#allocation20 + $0x908] sm:$0xff]
    %v3403 = vld [vmem:[#allocation20 + $0x910] sm:$0xf]
    %v3404 = vld [vmem:[#allocation20 + $0x914] sm:$0xff]
    %v3405 = vld [vmem:[#allocation20 + $0x91c] sm:$0xff]
    %v3406 = vld [vmem:[#allocation20 + $0x924] sm:$0xff]
    %v3407 = vld [vmem:[#allocation20 + $0x92c] sm:$0xf]
    %v3408 = vld [vmem:[#allocation20 + $0x930] sm:$0xff]
    %v3409 = vld [vmem:[#allocation20 + $0x938] sm:$0xff]
    %v3410 = vld [vmem:[#allocation20 + $0x940] sm:$0xff]
    %v3411 = vld [vmem:[#allocation20 + $0x948] sm:$0xf]
    %v3412 = vld [vmem:[#allocation20 + $0x94c] sm:$0xff]
    %v3413 = vld [vmem:[#allocation20 + $0x954] sm:$0xff]
    %v3414 = vld [vmem:[#allocation20 + $0x95c] sm:$0xff]
    %v3415 = vld [vmem:[#allocation20 + $0x964] sm:$0xf]
    %v3416 = vld [vmem:[#allocation20 + $0x968] sm:$0xff]
    %v3417 = vld [vmem:[#allocation20 + $0x970] sm:$0xff]
    %v3418 = vld [vmem:[#allocation20 + $0x978] sm:$0xff]
    %v3419 = vld [vmem:[#allocation20 + $0x980] sm:$0xf]
    %v3420 = vld [vmem:[#allocation20 + $0x984] sm:$0xff]
    %v3421 = vld [vmem:[#allocation20 + $0x98c] sm:$0xff]
    %v3422 = vld [vmem:[#allocation20 + $0x994] sm:$0xff]
    %v3423 = vld [vmem:[#allocation20 + $0x99c] sm:$0xf]
    %v3424 = vld [vmem:[#allocation20 + $0x9a0] sm:$0xff]
    %v3425 = vld [vmem:[#allocation20 + $0x9a8] sm:$0xff]
    %v3426 = vld [vmem:[#allocation20 + $0x9b0] sm:$0xff]
    %v3427 = vld [vmem:[#allocation20 + $0x9b8] sm:$0xf]
    %v3428 = vld [vmem:[#allocation20 + $0x9bc] sm:$0xff]
    %v3429 = vld [vmem:[#allocation20 + $0x9c4] sm:$0xff]
    %v3430 = vld [vmem:[#allocation20 + $0x9cc] sm:$0xff]
    %v3431 = vld [vmem:[#allocation20 + $0x9d4] sm:$0xf]
    %v3432 = vld [vmem:[#allocation20 + $0x9d8] sm:$0xff]
    %v3433 = vld [vmem:[#allocation20 + $0x9e0] sm:$0xff]
    %v3434 = vld [vmem:[#allocation20 + $0x9e8] sm:$0xff]
    %v3435 = vld [vmem:[#allocation20 + $0x9f0] sm:$0xf]
    %v3436 = vld [vmem:[#allocation20 + $0x9f4] sm:$0xff]
    %v3437 = vld [vmem:[#allocation20 + $0x9fc] sm:$0xff]
    %v3438 = vld [vmem:[#allocation20 + $0xa04] sm:$0xff]
    %v3439 = vld [vmem:[#allocation20 + $0xa0c] sm:$0xf]
    %v3440 = vld [vmem:[#allocation20 + $0xa10] sm:$0xff]
    %v3441 = vld [vmem:[#allocation20 + $0xa18] sm:$0xff]
    %v3442 = vld [vmem:[#allocation20 + $0xa20] sm:$0xff]
    %v3443 = vld [vmem:[#allocation20 + $0xa28] sm:$0xf]
    %v3444 = vld [vmem:[#allocation20 + $0xa2c] sm:$0xff]
    %v3445 = vld [vmem:[#allocation20 + $0xa34] sm:$0xff]
    %v3446 = vld [vmem:[#allocation20 + $0xa3c] sm:$0xff]
    %v3447 = vld [vmem:[#allocation20 + $0xa44] sm:$0xf]
    %v3448 = vld [vmem:[#allocation20 + $0xa48] sm:$0xff]
    %v3449 = vld [vmem:[#allocation20 + $0xa50] sm:$0xff]
    %v3450 = vld [vmem:[#allocation20 + $0xa58] sm:$0xff]
    %v3451 = vld [vmem:[#allocation20 + $0xa60] sm:$0xf]
    %v3452 = vld [vmem:[#allocation20 + $0xa64] sm:$0xff]
    %v3453 = vld [vmem:[#allocation20 + $0xa6c] sm:$0xff]
    %v3454 = vld [vmem:[#allocation20 + $0xa74] sm:$0xff]
    %v3455 = vld [vmem:[#allocation20 + $0xa7c] sm:$0xf]
    %v3456 = vld [vmem:[#allocation20 + $0xa80] sm:$0xff]
    %v3457 = vld [vmem:[#allocation20 + $0xa88] sm:$0xff]
    %v3458 = vld [vmem:[#allocation20 + $0xa90] sm:$0xff]
    %v3459 = vld [vmem:[#allocation20 + $0xa98] sm:$0xf]
    %v3460 = vld [vmem:[#allocation20 + $0xa9c] sm:$0xff]
    %v3461 = vld [vmem:[#allocation20 + $0xaa4] sm:$0xff]
    %v3462 = vld [vmem:[#allocation20 + $0xaac] sm:$0xff]
    %v3463 = vld [vmem:[#allocation20 + $0xab4] sm:$0xf]
    %v3464 = vld [vmem:[#allocation20 + $0xab8] sm:$0xff]
    %v3465 = vld [vmem:[#allocation20 + $0xac0] sm:$0xff]
    %v3466 = vld [vmem:[#allocation20 + $0xac8] sm:$0xff]
    %v3467 = vld [vmem:[#allocation20 + $0xad0] sm:$0xf]
    %v3468 = vld [vmem:[#allocation20 + $0xad4] sm:$0xff]
    %v3469 = vld [vmem:[#allocation20 + $0xadc] sm:$0xff]
    %v3470 = vld [vmem:[#allocation20 + $0xae4] sm:$0xff]
    %v3471 = vld [vmem:[#allocation20 + $0xaec] sm:$0xf]
    %v3472 = vld [vmem:[#allocation20 + $0xaf0] sm:$0xff]
    %v3473 = vld [vmem:[#allocation20 + $0xaf8] sm:$0xff]
    %v3474 = vld [vmem:[#allocation20 + $0xb00] sm:$0xff]
    %v3475 = vld [vmem:[#allocation20 + $0xb08] sm:$0xf]
    %v3476 = vld [vmem:[#allocation20 + $0xb0c] sm:$0xff]
    %v3477 = vld [vmem:[#allocation20 + $0xb14] sm:$0xff]
    %v3478 = vld [vmem:[#allocation20 + $0xb1c] sm:$0xff]
    %v3479 = vld [vmem:[#allocation20 + $0xb24] sm:$0xf]
    %v3480 = vld [vmem:[#allocation20 + $0xb28] sm:$0xff]
    %v3481 = vld [vmem:[#allocation20 + $0xb30] sm:$0xff]
    %v3482 = vld [vmem:[#allocation20 + $0xb38] sm:$0xff]
    %v3483 = vld [vmem:[#allocation20 + $0xb40] sm:$0xf]
    %v3484 = vld [vmem:[#allocation20 + $0xb44] sm:$0xff]
    %v3485 = vld [vmem:[#allocation20 + $0xb4c] sm:$0xff]
    %v3486 = vld [vmem:[#allocation20 + $0xb54] sm:$0xff]
    %v3487 = vld [vmem:[#allocation20 + $0xb5c] sm:$0xf]
    %v3488 = vld [vmem:[#allocation20 + $0xb60] sm:$0xff]
    %v3489 = vld [vmem:[#allocation20 + $0xb68] sm:$0xff]
    %v3490 = vld [vmem:[#allocation20 + $0xb70] sm:$0xff]
    %v3491 = vld [vmem:[#allocation20 + $0xb78] sm:$0xf]
    %v3492 = vld [vmem:[#allocation20 + $0xb7c] sm:$0xff]
    %v3493 = vld [vmem:[#allocation20 + $0xb84] sm:$0xff]
    %v3494 = vld [vmem:[#allocation20 + $0xb8c] sm:$0xff]
    %v3495 = vld [vmem:[#allocation20 + $0xb94] sm:$0xf]
    %v3496 = vld [vmem:[#allocation20 + $0xb98] sm:$0xff]
    %v3497 = vld [vmem:[#allocation20 + $0xba0] sm:$0xff]
    %v3498 = vld [vmem:[#allocation20 + $0xba8] sm:$0xff]
    %v3499 = vld [vmem:[#allocation20 + $0xbb0] sm:$0xf]
    %v3500 = vld [vmem:[#allocation20 + $0xbb4] sm:$0xff]
    %v3501 = vld [vmem:[#allocation20 + $0xbbc] sm:$0xff]
    %v3502 = vld [vmem:[#allocation20 + $0xbc4] sm:$0xff]
    %v3503 = vld [vmem:[#allocation20 + $0xbcc] sm:$0xf]
    %v3504 = vld [vmem:[#allocation20 + $0xbd0] sm:$0xff]
    %v3505 = vld [vmem:[#allocation20 + $0xbd8] sm:$0xff]
    %v3506 = vld [vmem:[#allocation20 + $0xbe0] sm:$0xff]
    %v3507 = vld [vmem:[#allocation20 + $0xbe8] sm:$0xf]
    %v3508 = vld [vmem:[#allocation20 + $0xbec] sm:$0xff]
    %v3509 = vld [vmem:[#allocation20 + $0xbf4] sm:$0xff]
    %v3510 = vld [vmem:[#allocation20 + $0xbfc] sm:$0xff]
    %v3511 = vld [vmem:[#allocation20 + $0xc04] sm:$0xf]
    %v3512 = vld [vmem:[#allocation20 + $0xc08] sm:$0xff]
    %v3513 = vld [vmem:[#allocation20 + $0xc10] sm:$0xff]
    %v3514 = vld [vmem:[#allocation20 + $0xc18] sm:$0xff]
    %v3515 = vld [vmem:[#allocation20 + $0xc20] sm:$0xf]
    %v3516 = vld [vmem:[#allocation20 + $0xc24] sm:$0xff]
    %v3517 = vld [vmem:[#allocation20 + $0xc2c] sm:$0xff]
    %v3518 = vld [vmem:[#allocation20 + $0xc34] sm:$0xff]
    %v3519 = vld [vmem:[#allocation20 + $0xc3c] sm:$0xf]
    %v3520 = vld [vmem:[#allocation20 + $0xc40] sm:$0xff]
    %v3521 = vld [vmem:[#allocation20 + $0xc48] sm:$0xff]
    %v3522 = vld [vmem:[#allocation20 + $0xc50] sm:$0xff]
    %v3523 = vld [vmem:[#allocation20 + $0xc58] sm:$0xf]
    %v3524 = vld [vmem:[#allocation20 + $0xc5c] sm:$0xff]
    %v3525 = vld [vmem:[#allocation20 + $0xc64] sm:$0xff]
    %v3526 = vld [vmem:[#allocation20 + $0xc6c] sm:$0xff]
    %v3527 = vld [vmem:[#allocation20 + $0xc74] sm:$0xf]
    %v3528 = vld [vmem:[#allocation20 + $0xc78] sm:$0xff]
    %v3529 = vld [vmem:[#allocation20 + $0xc80] sm:$0xff]
    %v3530 = vld [vmem:[#allocation20 + $0xc88] sm:$0xff]
    %v3531 = vld [vmem:[#allocation20 + $0xc90] sm:$0xf]
    %v3532 = vld [vmem:[#allocation20 + $0xc94] sm:$0xff]
    %v3533 = vld [vmem:[#allocation20 + $0xc9c] sm:$0xff]
    %v3534 = vld [vmem:[#allocation20 + $0xca4] sm:$0xff]
    %v3535 = vld [vmem:[#allocation20 + $0xcac] sm:$0xf]
    %v3536 = vld [vmem:[#allocation20 + $0xcb0] sm:$0xff]
    %v3537 = vld [vmem:[#allocation20 + $0xcb8] sm:$0xff]
    %v3538 = vld [vmem:[#allocation20 + $0xcc0] sm:$0xff]
    %v3539 = vld [vmem:[#allocation20 + $0xcc8] sm:$0xf]
    %v3540 = vld [vmem:[#allocation20 + $0xccc] sm:$0xff]
    %v3541 = vld [vmem:[#allocation20 + $0xcd4] sm:$0xff]
    %v3542 = vld [vmem:[#allocation20 + $0xcdc] sm:$0xff]
    %v3543 = vld [vmem:[#allocation20 + $0xce4] sm:$0xf]
    %v3544 = vld [vmem:[#allocation20 + $0xce8] sm:$0xff]
    %v3545 = vld [vmem:[#allocation20 + $0xcf0] sm:$0xff]
    %v3546 = vld [vmem:[#allocation20 + $0xcf8] sm:$0xff]
    %v3547 = vld [vmem:[#allocation20 + $0xd00] sm:$0xf]
    %v3548 = vld [vmem:[#allocation20 + $0xd04] sm:$0xff]
    %v3549 = vld [vmem:[#allocation20 + $0xd0c] sm:$0xff]
    %v3550 = vld [vmem:[#allocation20 + $0xd14] sm:$0xff]
    %v3551 = vld [vmem:[#allocation20 + $0xd1c] sm:$0xf]
    %v3552 = vld [vmem:[#allocation20 + $0xd20] sm:$0xff]
    %v3553 = vld [vmem:[#allocation20 + $0xd28] sm:$0xff]
    %v3554 = vld [vmem:[#allocation20 + $0xd30] sm:$0xff]
    %v3555 = vld [vmem:[#allocation20 + $0xd38] sm:$0xf]
    %v3556 = vld [vmem:[#allocation20 + $0xd3c] sm:$0xff]
    %v3557 = vld [vmem:[#allocation20 + $0xd44] sm:$0xff]
    %v3558 = vld [vmem:[#allocation20 + $0xd4c] sm:$0xff]
    %v3559 = vld [vmem:[#allocation20 + $0xd54] sm:$0xf]
    %v3560 = vld [vmem:[#allocation20 + $0xd58] sm:$0xff]
    %v3561 = vld [vmem:[#allocation20 + $0xd60] sm:$0xff]
    %v3562 = vld [vmem:[#allocation20 + $0xd68] sm:$0xff]
    %v3563 = vld [vmem:[#allocation20 + $0xd70] sm:$0xf]
    %v3564 = vld [vmem:[#allocation20 + $0xd74] sm:$0xff]
    %v3565 = vld [vmem:[#allocation20 + $0xd7c] sm:$0xff]
    %v3566 = vld [vmem:[#allocation20 + $0xd84] sm:$0xff]
    %v3567 = vld [vmem:[#allocation20 + $0xd8c] sm:$0xf]
    %v3568 = vld [vmem:[#allocation20 + $0xd90] sm:$0xff]
    %v3569 = vld [vmem:[#allocation20 + $0xd98] sm:$0xff]
    %v3570 = vld [vmem:[#allocation20 + $0xda0] sm:$0xff]
    %v3571 = vld [vmem:[#allocation20 + $0xda8] sm:$0xf]
    %v3572 = vld [vmem:[#allocation20 + $0xdac] sm:$0xff]
    %v3573 = vld [vmem:[#allocation20 + $0xdb4] sm:$0xff]
    %v3574 = vld [vmem:[#allocation20 + $0xdbc] sm:$0xff]
    %v3575 = vld [vmem:[#allocation20 + $0xdc4] sm:$0xf]
    %v3576 = vld [vmem:[#allocation20 + $0xdc8] sm:$0xff]
    %v3577 = vld [vmem:[#allocation20 + $0xdd0] sm:$0xff]
    %v3578 = vld [vmem:[#allocation20 + $0xdd8] sm:$0xff]
    %v3579 = vld [vmem:[#allocation20 + $0xde0] sm:$0xf]
    %v3580 = vld [vmem:[#allocation20 + $0xde4] sm:$0xff]
    %v3581 = vld [vmem:[#allocation20 + $0xdec] sm:$0xff]
    %v3582 = vld [vmem:[#allocation20 + $0xdf4] sm:$0xff]
    %v3583 = vld [vmem:[#allocation20 + $0xdfc] sm:$0xf]
    %v3584 = vld [vmem:[#allocation22] sm:$0xff]
    %v3586 = vlaneseq
    %v3587 = vshrl.u32 %v3586, 7
    %v3588 = vsub.s32 0, %v3587
    %v3589 = vrot.slane %v3584, %v3588
    %v3590 = vlaneseq
    %v3591 = vshrl.u32 %v3590, 7
    %v3592 = vsub.s32 1, %v3591
    %v3593 = vrot.slane %v3584, %v3592
    %v3594 = vlaneseq
    %v3595 = vshrl.u32 %v3594, 7
    %v3596 = vsub.s32 2, %v3595
    %v3597 = vrot.slane %v3584, %v3596
    %v3598 = vlaneseq
    %v3599 = vshrl.u32 %v3598, 7
    %v3600 = vsub.s32 3, %v3599
    %v3601 = vrot.slane %v3584, %v3600
    %v3602 = vlaneseq
    %v3603 = vshrl.u32 %v3602, 7
    %v3604 = vsub.s32 4, %v3603
    %v3605 = vrot.slane %v3584, %v3604
    %v3606 = vlaneseq
    %v3607 = vshrl.u32 %v3606, 7
    %v3608 = vsub.s32 5, %v3607
    %v3609 = vrot.slane %v3584, %v3608
    %v3610 = vlaneseq
    %v3611 = vshrl.u32 %v3610, 7
    %v3612 = vsub.s32 6, %v3611
    %v3613 = vrot.slane %v3584, %v3612
    %v4133 = vunpack.c.l.b16 %v3072
    %v4134 = vunpack.c.h.b16 %v3072
    %v4135 = vunpack.c.l.b16 %v3073
    %v4136 = vunpack.c.h.b16 %v3073
    %v4137 = vunpack.c.l.b16 %v3074
    %v4138 = vunpack.c.h.b16 %v3074
    %v4139 = vunpack.c.l.b16 %v3075
    %v4140 = vunpack.c.l.b16 %v3076
    %v4141 = vunpack.c.h.b16 %v3076
    %v4142 = vunpack.c.l.b16 %v3077
    %v4143 = vunpack.c.h.b16 %v3077
    %v4144 = vunpack.c.l.b16 %v3078
    %v4145 = vunpack.c.h.b16 %v3078
    %v4146 = vunpack.c.l.b16 %v3079
    %v4147 = vunpack.c.l.b16 %v3080
    %v4148 = vunpack.c.h.b16 %v3080
    %v4149 = vunpack.c.l.b16 %v3081
    %v4150 = vunpack.c.h.b16 %v3081
    %v4151 = vunpack.c.l.b16 %v3082
    %v4152 = vunpack.c.h.b16 %v3082
    %v4153 = vunpack.c.l.b16 %v3083
    %v4154 = vunpack.c.l.b16 %v3084
    %v4155 = vunpack.c.h.b16 %v3084
    %v4156 = vunpack.c.l.b16 %v3085
    %v4157 = vunpack.c.h.b16 %v3085
    %v4158 = vunpack.c.l.b16 %v3086
    %v4159 = vunpack.c.h.b16 %v3086
    %v4160 = vunpack.c.l.b16 %v3087
    %v4161 = vunpack.c.l.b16 %v3088
    %v4162 = vunpack.c.h.b16 %v3088
    %v4163 = vunpack.c.l.b16 %v3089
    %v4164 = vunpack.c.h.b16 %v3089
    %v4165 = vunpack.c.l.b16 %v3090
    %v4166 = vunpack.c.h.b16 %v3090
    %v4167 = vunpack.c.l.b16 %v3091
    %v4168 = vunpack.c.l.b16 %v3092
    %v4169 = vunpack.c.h.b16 %v3092
    %v4170 = vunpack.c.l.b16 %v3093
    %v4171 = vunpack.c.h.b16 %v3093
    %v4172 = vunpack.c.l.b16 %v3094
    %v4173 = vunpack.c.h.b16 %v3094
    %v4174 = vunpack.c.l.b16 %v3095
    %v4175 = vunpack.c.l.b16 %v3096
    %v4176 = vunpack.c.h.b16 %v3096
    %v4177 = vunpack.c.l.b16 %v3097
    %v4178 = vunpack.c.h.b16 %v3097
    %v4179 = vunpack.c.l.b16 %v3098
    %v4180 = vunpack.c.h.b16 %v3098
    %v4181 = vunpack.c.l.b16 %v3099
    %v4182 = vunpack.c.l.b16 %v3100
    %v4183 = vunpack.c.h.b16 %v3100
    %v4184 = vunpack.c.l.b16 %v3101
    %v4185 = vunpack.c.h.b16 %v3101
    %v4186 = vunpack.c.l.b16 %v3102
    %v4187 = vunpack.c.h.b16 %v3102
    %v4188 = vunpack.c.l.b16 %v3103
    %v4189 = vunpack.c.l.b16 %v3104
    %v4190 = vunpack.c.h.b16 %v3104
    %v4191 = vunpack.c.l.b16 %v3105
    %v4192 = vunpack.c.h.b16 %v3105
    %v4193 = vunpack.c.l.b16 %v3106
    %v4194 = vunpack.c.h.b16 %v3106
    %v4195 = vunpack.c.l.b16 %v3107
    %v4196 = vunpack.c.l.b16 %v3108
    %v4197 = vunpack.c.h.b16 %v3108
    %v4198 = vunpack.c.l.b16 %v3109
    %v4199 = vunpack.c.h.b16 %v3109
    %v4200 = vunpack.c.l.b16 %v3110
    %v4201 = vunpack.c.h.b16 %v3110
    %v4202 = vunpack.c.l.b16 %v3111
    %v4203 = vunpack.c.l.b16 %v3112
    %v4204 = vunpack.c.h.b16 %v3112
    %v4205 = vunpack.c.l.b16 %v3113
    %v4206 = vunpack.c.h.b16 %v3113
    %v4207 = vunpack.c.l.b16 %v3114
    %v4208 = vunpack.c.h.b16 %v3114
    %v4209 = vunpack.c.l.b16 %v3115
    %v4210 = vunpack.c.l.b16 %v3116
    %v4211 = vunpack.c.h.b16 %v3116
    %v4212 = vunpack.c.l.b16 %v3117
    %v4213 = vunpack.c.h.b16 %v3117
    %v4214 = vunpack.c.l.b16 %v3118
    %v4215 = vunpack.c.h.b16 %v3118
    %v4216 = vunpack.c.l.b16 %v3119
    %v4217 = vunpack.c.l.b16 %v3120
    %v4218 = vunpack.c.h.b16 %v3120
    %v4219 = vunpack.c.l.b16 %v3121
    %v4220 = vunpack.c.h.b16 %v3121
    %v4221 = vunpack.c.l.b16 %v3122
    %v4222 = vunpack.c.h.b16 %v3122
    %v4223 = vunpack.c.l.b16 %v3123
    %v4224 = vunpack.c.l.b16 %v3124
    %v4225 = vunpack.c.h.b16 %v3124
    %v4226 = vunpack.c.l.b16 %v3125
    %v4227 = vunpack.c.h.b16 %v3125
    %v4228 = vunpack.c.l.b16 %v3126
    %v4229 = vunpack.c.h.b16 %v3126
    %v4230 = vunpack.c.l.b16 %v3127
    %v4231 = vunpack.c.l.b16 %v3128
    %v4232 = vunpack.c.h.b16 %v3128
    %v4233 = vunpack.c.l.b16 %v3129
    %v4234 = vunpack.c.h.b16 %v3129
    %v4235 = vunpack.c.l.b16 %v3130
    %v4236 = vunpack.c.h.b16 %v3130
    %v4237 = vunpack.c.l.b16 %v3131
    %v4238 = vunpack.c.l.b16 %v3132
    %v4239 = vunpack.c.h.b16 %v3132
    %v4240 = vunpack.c.l.b16 %v3133
    %v4241 = vunpack.c.h.b16 %v3133
    %v4242 = vunpack.c.l.b16 %v3134
    %v4243 = vunpack.c.h.b16 %v3134
    %v4244 = vunpack.c.l.b16 %v3135
    %v4245 = vunpack.c.l.b16 %v3136
    %v4246 = vunpack.c.h.b16 %v3136
    %v4247 = vunpack.c.l.b16 %v3137
    %v4248 = vunpack.c.h.b16 %v3137
    %v4249 = vunpack.c.l.b16 %v3138
    %v4250 = vunpack.c.h.b16 %v3138
    %v4251 = vunpack.c.l.b16 %v3139
    %v4252 = vunpack.c.l.b16 %v3140
    %v4253 = vunpack.c.h.b16 %v3140
    %v4254 = vunpack.c.l.b16 %v3141
    %v4255 = vunpack.c.h.b16 %v3141
    %v4256 = vunpack.c.l.b16 %v3142
    %v4257 = vunpack.c.h.b16 %v3142
    %v4258 = vunpack.c.l.b16 %v3143
    %v4259 = vunpack.c.l.b16 %v3144
    %v4260 = vunpack.c.h.b16 %v3144
    %v4261 = vunpack.c.l.b16 %v3145
    %v4262 = vunpack.c.h.b16 %v3145
    %v4263 = vunpack.c.l.b16 %v3146
    %v4264 = vunpack.c.h.b16 %v3146
    %v4265 = vunpack.c.l.b16 %v3147
    %v4266 = vunpack.c.l.b16 %v3148
    %v4267 = vunpack.c.h.b16 %v3148
    %v4268 = vunpack.c.l.b16 %v3149
    %v4269 = vunpack.c.h.b16 %v3149
    %v4270 = vunpack.c.l.b16 %v3150
    %v4271 = vunpack.c.h.b16 %v3150
    %v4272 = vunpack.c.l.b16 %v3151
    %v4273 = vunpack.c.l.b16 %v3152
    %v4274 = vunpack.c.h.b16 %v3152
    %v4275 = vunpack.c.l.b16 %v3153
    %v4276 = vunpack.c.h.b16 %v3153
    %v4277 = vunpack.c.l.b16 %v3154
    %v4278 = vunpack.c.h.b16 %v3154
    %v4279 = vunpack.c.l.b16 %v3155
    %v4280 = vunpack.c.l.b16 %v3156
    %v4281 = vunpack.c.h.b16 %v3156
    %v4282 = vunpack.c.l.b16 %v3157
    %v4283 = vunpack.c.h.b16 %v3157
    %v4284 = vunpack.c.l.b16 %v3158
    %v4285 = vunpack.c.h.b16 %v3158
    %v4286 = vunpack.c.l.b16 %v3159
    %v4287 = vunpack.c.l.b16 %v3160
    %v4288 = vunpack.c.h.b16 %v3160
    %v4289 = vunpack.c.l.b16 %v3161
    %v4290 = vunpack.c.h.b16 %v3161
    %v4291 = vunpack.c.l.b16 %v3162
    %v4292 = vunpack.c.h.b16 %v3162
    %v4293 = vunpack.c.l.b16 %v3163
    %v4294 = vunpack.c.l.b16 %v3164
    %v4295 = vunpack.c.h.b16 %v3164
    %v4296 = vunpack.c.l.b16 %v3165
    %v4297 = vunpack.c.h.b16 %v3165
    %v4298 = vunpack.c.l.b16 %v3166
    %v4299 = vunpack.c.h.b16 %v3166
    %v4300 = vunpack.c.l.b16 %v3167
    %v4301 = vunpack.c.l.b16 %v3168
    %v4302 = vunpack.c.h.b16 %v3168
    %v4303 = vunpack.c.l.b16 %v3169
    %v4304 = vunpack.c.h.b16 %v3169
    %v4305 = vunpack.c.l.b16 %v3170
    %v4306 = vunpack.c.h.b16 %v3170
    %v4307 = vunpack.c.l.b16 %v3171
    %v4308 = vunpack.c.l.b16 %v3172
    %v4309 = vunpack.c.h.b16 %v3172
    %v4310 = vunpack.c.l.b16 %v3173
    %v4311 = vunpack.c.h.b16 %v3173
    %v4312 = vunpack.c.l.b16 %v3174
    %v4313 = vunpack.c.h.b16 %v3174
    %v4314 = vunpack.c.l.b16 %v3175
    %v4315 = vunpack.c.l.b16 %v3176
    %v4316 = vunpack.c.h.b16 %v3176
    %v4317 = vunpack.c.l.b16 %v3177
    %v4318 = vunpack.c.h.b16 %v3177
    %v4319 = vunpack.c.l.b16 %v3178
    %v4320 = vunpack.c.h.b16 %v3178
    %v4321 = vunpack.c.l.b16 %v3179
    %v4322 = vunpack.c.l.b16 %v3180
    %v4323 = vunpack.c.h.b16 %v3180
    %v4324 = vunpack.c.l.b16 %v3181
    %v4325 = vunpack.c.h.b16 %v3181
    %v4326 = vunpack.c.l.b16 %v3182
    %v4327 = vunpack.c.h.b16 %v3182
    %v4328 = vunpack.c.l.b16 %v3183
    %v4329 = vunpack.c.l.b16 %v3184
    %v4330 = vunpack.c.h.b16 %v3184
    %v4331 = vunpack.c.l.b16 %v3185
    %v4332 = vunpack.c.h.b16 %v3185
    %v4333 = vunpack.c.l.b16 %v3186
    %v4334 = vunpack.c.h.b16 %v3186
    %v4335 = vunpack.c.l.b16 %v3187
    %v4336 = vunpack.c.l.b16 %v3188
    %v4337 = vunpack.c.h.b16 %v3188
    %v4338 = vunpack.c.l.b16 %v3189
    %v4339 = vunpack.c.h.b16 %v3189
    %v4340 = vunpack.c.l.b16 %v3190
    %v4341 = vunpack.c.h.b16 %v3190
    %v4342 = vunpack.c.l.b16 %v3191
    %v4343 = vunpack.c.l.b16 %v3192
    %v4344 = vunpack.c.h.b16 %v3192
    %v4345 = vunpack.c.l.b16 %v3193
    %v4346 = vunpack.c.h.b16 %v3193
    %v4347 = vunpack.c.l.b16 %v3194
    %v4348 = vunpack.c.h.b16 %v3194
    %v4349 = vunpack.c.l.b16 %v3195
    %v4350 = vunpack.c.l.b16 %v3196
    %v4351 = vunpack.c.h.b16 %v3196
    %v4352 = vunpack.c.l.b16 %v3197
    %v4353 = vunpack.c.h.b16 %v3197
    %v4354 = vunpack.c.l.b16 %v3198
    %v4355 = vunpack.c.h.b16 %v3198
    %v4356 = vunpack.c.l.b16 %v3199
    %v4357 = vunpack.c.l.b16 %v3200
    %v4358 = vunpack.c.h.b16 %v3200
    %v4359 = vunpack.c.l.b16 %v3201
    %v4360 = vunpack.c.h.b16 %v3201
    %v4361 = vunpack.c.l.b16 %v3202
    %v4362 = vunpack.c.h.b16 %v3202
    %v4363 = vunpack.c.l.b16 %v3203
    %v4364 = vunpack.c.l.b16 %v3204
    %v4365 = vunpack.c.h.b16 %v3204
    %v4366 = vunpack.c.l.b16 %v3205
    %v4367 = vunpack.c.h.b16 %v3205
    %v4368 = vunpack.c.l.b16 %v3206
    %v4369 = vunpack.c.h.b16 %v3206
    %v4370 = vunpack.c.l.b16 %v3207
    %v4371 = vunpack.c.l.b16 %v3208
    %v4372 = vunpack.c.h.b16 %v3208
    %v4373 = vunpack.c.l.b16 %v3209
    %v4374 = vunpack.c.h.b16 %v3209
    %v4375 = vunpack.c.l.b16 %v3210
    %v4376 = vunpack.c.h.b16 %v3210
    %v4377 = vunpack.c.l.b16 %v3211
    %v4378 = vunpack.c.l.b16 %v3212
    %v4379 = vunpack.c.h.b16 %v3212
    %v4380 = vunpack.c.l.b16 %v3213
    %v4381 = vunpack.c.h.b16 %v3213
    %v4382 = vunpack.c.l.b16 %v3214
    %v4383 = vunpack.c.h.b16 %v3214
    %v4384 = vunpack.c.l.b16 %v3215
    %v4385 = vunpack.c.l.b16 %v3216
    %v4386 = vunpack.c.h.b16 %v3216
    %v4387 = vunpack.c.l.b16 %v3217
    %v4388 = vunpack.c.h.b16 %v3217
    %v4389 = vunpack.c.l.b16 %v3218
    %v4390 = vunpack.c.h.b16 %v3218
    %v4391 = vunpack.c.l.b16 %v3219
    %v4392 = vunpack.c.l.b16 %v3220
    %v4393 = vunpack.c.h.b16 %v3220
    %v4394 = vunpack.c.l.b16 %v3221
    %v4395 = vunpack.c.h.b16 %v3221
    %v4396 = vunpack.c.l.b16 %v3222
    %v4397 = vunpack.c.h.b16 %v3222
    %v4398 = vunpack.c.l.b16 %v3223
    %v4399 = vunpack.c.l.b16 %v3224
    %v4400 = vunpack.c.h.b16 %v3224
    %v4401 = vunpack.c.l.b16 %v3225
    %v4402 = vunpack.c.h.b16 %v3225
    %v4403 = vunpack.c.l.b16 %v3226
    %v4404 = vunpack.c.h.b16 %v3226
    %v4405 = vunpack.c.l.b16 %v3227
    %v4406 = vunpack.c.l.b16 %v3228
    %v4407 = vunpack.c.h.b16 %v3228
    %v4408 = vunpack.c.l.b16 %v3229
    %v4409 = vunpack.c.h.b16 %v3229
    %v4410 = vunpack.c.l.b16 %v3230
    %v4411 = vunpack.c.h.b16 %v3230
    %v4412 = vunpack.c.l.b16 %v3231
    %v4413 = vunpack.c.l.b16 %v3232
    %v4414 = vunpack.c.h.b16 %v3232
    %v4415 = vunpack.c.l.b16 %v3233
    %v4416 = vunpack.c.h.b16 %v3233
    %v4417 = vunpack.c.l.b16 %v3234
    %v4418 = vunpack.c.h.b16 %v3234
    %v4419 = vunpack.c.l.b16 %v3235
    %v4420 = vunpack.c.l.b16 %v3236
    %v4421 = vunpack.c.h.b16 %v3236
    %v4422 = vunpack.c.l.b16 %v3237
    %v4423 = vunpack.c.h.b16 %v3237
    %v4424 = vunpack.c.l.b16 %v3238
    %v4425 = vunpack.c.h.b16 %v3238
    %v4426 = vunpack.c.l.b16 %v3239
    %v4427 = vunpack.c.l.b16 %v3240
    %v4428 = vunpack.c.h.b16 %v3240
    %v4429 = vunpack.c.l.b16 %v3241
    %v4430 = vunpack.c.h.b16 %v3241
    %v4431 = vunpack.c.l.b16 %v3242
    %v4432 = vunpack.c.h.b16 %v3242
    %v4433 = vunpack.c.l.b16 %v3243
    %v4434 = vunpack.c.l.b16 %v3244
    %v4435 = vunpack.c.h.b16 %v3244
    %v4436 = vunpack.c.l.b16 %v3245
    %v4437 = vunpack.c.h.b16 %v3245
    %v4438 = vunpack.c.l.b16 %v3246
    %v4439 = vunpack.c.h.b16 %v3246
    %v4440 = vunpack.c.l.b16 %v3247
    %v4441 = vunpack.c.l.b16 %v3248
    %v4442 = vunpack.c.h.b16 %v3248
    %v4443 = vunpack.c.l.b16 %v3249
    %v4444 = vunpack.c.h.b16 %v3249
    %v4445 = vunpack.c.l.b16 %v3250
    %v4446 = vunpack.c.h.b16 %v3250
    %v4447 = vunpack.c.l.b16 %v3251
    %v4448 = vunpack.c.l.b16 %v3252
    %v4449 = vunpack.c.h.b16 %v3252
    %v4450 = vunpack.c.l.b16 %v3253
    %v4451 = vunpack.c.h.b16 %v3253
    %v4452 = vunpack.c.l.b16 %v3254
    %v4453 = vunpack.c.h.b16 %v3254
    %v4454 = vunpack.c.l.b16 %v3255
    %v4455 = vunpack.c.l.b16 %v3256
    %v4456 = vunpack.c.h.b16 %v3256
    %v4457 = vunpack.c.l.b16 %v3257
    %v4458 = vunpack.c.h.b16 %v3257
    %v4459 = vunpack.c.l.b16 %v3258
    %v4460 = vunpack.c.h.b16 %v3258
    %v4461 = vunpack.c.l.b16 %v3259
    %v4462 = vunpack.c.l.b16 %v3260
    %v4463 = vunpack.c.h.b16 %v3260
    %v4464 = vunpack.c.l.b16 %v3261
    %v4465 = vunpack.c.h.b16 %v3261
    %v4466 = vunpack.c.l.b16 %v3262
    %v4467 = vunpack.c.h.b16 %v3262
    %v4468 = vunpack.c.l.b16 %v3263
    %v4469 = vunpack.c.l.b16 %v3264
    %v4470 = vunpack.c.h.b16 %v3264
    %v4471 = vunpack.c.l.b16 %v3265
    %v4472 = vunpack.c.h.b16 %v3265
    %v4473 = vunpack.c.l.b16 %v3266
    %v4474 = vunpack.c.h.b16 %v3266
    %v4475 = vunpack.c.l.b16 %v3267
    %v4476 = vunpack.c.l.b16 %v3268
    %v4477 = vunpack.c.h.b16 %v3268
    %v4478 = vunpack.c.l.b16 %v3269
    %v4479 = vunpack.c.h.b16 %v3269
    %v4480 = vunpack.c.l.b16 %v3270
    %v4481 = vunpack.c.h.b16 %v3270
    %v4482 = vunpack.c.l.b16 %v3271
    %v4483 = vunpack.c.l.b16 %v3272
    %v4484 = vunpack.c.h.b16 %v3272
    %v4485 = vunpack.c.l.b16 %v3273
    %v4486 = vunpack.c.h.b16 %v3273
    %v4487 = vunpack.c.l.b16 %v3274
    %v4488 = vunpack.c.h.b16 %v3274
    %v4489 = vunpack.c.l.b16 %v3275
    %v4490 = vunpack.c.l.b16 %v3276
    %v4491 = vunpack.c.h.b16 %v3276
    %v4492 = vunpack.c.l.b16 %v3277
    %v4493 = vunpack.c.h.b16 %v3277
    %v4494 = vunpack.c.l.b16 %v3278
    %v4495 = vunpack.c.h.b16 %v3278
    %v4496 = vunpack.c.l.b16 %v3279
    %v4497 = vunpack.c.l.b16 %v3280
    %v4498 = vunpack.c.h.b16 %v3280
    %v4499 = vunpack.c.l.b16 %v3281
    %v4500 = vunpack.c.h.b16 %v3281
    %v4501 = vunpack.c.l.b16 %v3282
    %v4502 = vunpack.c.h.b16 %v3282
    %v4503 = vunpack.c.l.b16 %v3283
    %v4504 = vunpack.c.l.b16 %v3284
    %v4505 = vunpack.c.h.b16 %v3284
    %v4506 = vunpack.c.l.b16 %v3285
    %v4507 = vunpack.c.h.b16 %v3285
    %v4508 = vunpack.c.l.b16 %v3286
    %v4509 = vunpack.c.h.b16 %v3286
    %v4510 = vunpack.c.l.b16 %v3287
    %v4511 = vunpack.c.l.b16 %v3288
    %v4512 = vunpack.c.h.b16 %v3288
    %v4513 = vunpack.c.l.b16 %v3289
    %v4514 = vunpack.c.h.b16 %v3289
    %v4515 = vunpack.c.l.b16 %v3290
    %v4516 = vunpack.c.h.b16 %v3290
    %v4517 = vunpack.c.l.b16 %v3291
    %v4518 = vunpack.c.l.b16 %v3292
    %v4519 = vunpack.c.h.b16 %v3292
    %v4520 = vunpack.c.l.b16 %v3293
    %v4521 = vunpack.c.h.b16 %v3293
    %v4522 = vunpack.c.l.b16 %v3294
    %v4523 = vunpack.c.h.b16 %v3294
    %v4524 = vunpack.c.l.b16 %v3295
    %v4525 = vunpack.c.l.b16 %v3296
    %v4526 = vunpack.c.h.b16 %v3296
    %v4527 = vunpack.c.l.b16 %v3297
    %v4528 = vunpack.c.h.b16 %v3297
    %v4529 = vunpack.c.l.b16 %v3298
    %v4530 = vunpack.c.h.b16 %v3298
    %v4531 = vunpack.c.l.b16 %v3299
    %v4532 = vunpack.c.l.b16 %v3300
    %v4533 = vunpack.c.h.b16 %v3300
    %v4534 = vunpack.c.l.b16 %v3301
    %v4535 = vunpack.c.h.b16 %v3301
    %v4536 = vunpack.c.l.b16 %v3302
    %v4537 = vunpack.c.h.b16 %v3302
    %v4538 = vunpack.c.l.b16 %v3303
    %v4539 = vunpack.c.l.b16 %v3304
    %v4540 = vunpack.c.h.b16 %v3304
    %v4541 = vunpack.c.l.b16 %v3305
    %v4542 = vunpack.c.h.b16 %v3305
    %v4543 = vunpack.c.l.b16 %v3306
    %v4544 = vunpack.c.h.b16 %v3306
    %v4545 = vunpack.c.l.b16 %v3307
    %v4546 = vunpack.c.l.b16 %v3308
    %v4547 = vunpack.c.h.b16 %v3308
    %v4548 = vunpack.c.l.b16 %v3309
    %v4549 = vunpack.c.h.b16 %v3309
    %v4550 = vunpack.c.l.b16 %v3310
    %v4551 = vunpack.c.h.b16 %v3310
    %v4552 = vunpack.c.l.b16 %v3311
    %v4553 = vunpack.c.l.b16 %v3312
    %v4554 = vunpack.c.h.b16 %v3312
    %v4555 = vunpack.c.l.b16 %v3313
    %v4556 = vunpack.c.h.b16 %v3313
    %v4557 = vunpack.c.l.b16 %v3314
    %v4558 = vunpack.c.h.b16 %v3314
    %v4559 = vunpack.c.l.b16 %v3315
    %v4560 = vunpack.c.l.b16 %v3316
    %v4561 = vunpack.c.h.b16 %v3316
    %v4562 = vunpack.c.l.b16 %v3317
    %v4563 = vunpack.c.h.b16 %v3317
    %v4564 = vunpack.c.l.b16 %v3318
    %v4565 = vunpack.c.h.b16 %v3318
    %v4566 = vunpack.c.l.b16 %v3319
    %v4567 = vunpack.c.l.b16 %v3320
    %v4568 = vunpack.c.h.b16 %v3320
    %v4569 = vunpack.c.l.b16 %v3321
    %v4570 = vunpack.c.h.b16 %v3321
    %v4571 = vunpack.c.l.b16 %v3322
    %v4572 = vunpack.c.h.b16 %v3322
    %v4573 = vunpack.c.l.b16 %v3323
    %v4574 = vunpack.c.l.b16 %v3324
    %v4575 = vunpack.c.h.b16 %v3324
    %v4576 = vunpack.c.l.b16 %v3325
    %v4577 = vunpack.c.h.b16 %v3325
    %v4578 = vunpack.c.l.b16 %v3326
    %v4579 = vunpack.c.h.b16 %v3326
    %v4580 = vunpack.c.l.b16 %v3327
    %v4581 = vunpack.c.l.b16 %v3328
    %v4582 = vunpack.c.h.b16 %v3328
    %v4583 = vunpack.c.l.b16 %v3329
    %v4584 = vunpack.c.h.b16 %v3329
    %v4585 = vunpack.c.l.b16 %v3330
    %v4586 = vunpack.c.h.b16 %v3330
    %v4587 = vunpack.c.l.b16 %v3331
    %v4588 = vunpack.c.l.b16 %v3332
    %v4589 = vunpack.c.h.b16 %v3332
    %v4590 = vunpack.c.l.b16 %v3333
    %v4591 = vunpack.c.h.b16 %v3333
    %v4592 = vunpack.c.l.b16 %v3334
    %v4593 = vunpack.c.h.b16 %v3334
    %v4594 = vunpack.c.l.b16 %v3335
    %v4595 = vunpack.c.l.b16 %v3336
    %v4596 = vunpack.c.h.b16 %v3336
    %v4597 = vunpack.c.l.b16 %v3337
    %v4598 = vunpack.c.h.b16 %v3337
    %v4599 = vunpack.c.l.b16 %v3338
    %v4600 = vunpack.c.h.b16 %v3338
    %v4601 = vunpack.c.l.b16 %v3339
    %v4602 = vunpack.c.l.b16 %v3340
    %v4603 = vunpack.c.h.b16 %v3340
    %v4604 = vunpack.c.l.b16 %v3341
    %v4605 = vunpack.c.h.b16 %v3341
    %v4606 = vunpack.c.l.b16 %v3342
    %v4607 = vunpack.c.h.b16 %v3342
    %v4608 = vunpack.c.l.b16 %v3343
    %v4609 = vunpack.c.l.b16 %v3344
    %v4610 = vunpack.c.h.b16 %v3344
    %v4611 = vunpack.c.l.b16 %v3345
    %v4612 = vunpack.c.h.b16 %v3345
    %v4613 = vunpack.c.l.b16 %v3346
    %v4614 = vunpack.c.h.b16 %v3346
    %v4615 = vunpack.c.l.b16 %v3347
    %v4616 = vunpack.c.l.b16 %v3348
    %v4617 = vunpack.c.h.b16 %v3348
    %v4618 = vunpack.c.l.b16 %v3349
    %v4619 = vunpack.c.h.b16 %v3349
    %v4620 = vunpack.c.l.b16 %v3350
    %v4621 = vunpack.c.h.b16 %v3350
    %v4622 = vunpack.c.l.b16 %v3351
    %v4623 = vunpack.c.l.b16 %v3352
    %v4624 = vunpack.c.h.b16 %v3352
    %v4625 = vunpack.c.l.b16 %v3353
    %v4626 = vunpack.c.h.b16 %v3353
    %v4627 = vunpack.c.l.b16 %v3354
    %v4628 = vunpack.c.h.b16 %v3354
    %v4629 = vunpack.c.l.b16 %v3355
    %v4630 = vunpack.c.l.b16 %v3356
    %v4631 = vunpack.c.h.b16 %v3356
    %v4632 = vunpack.c.l.b16 %v3357
    %v4633 = vunpack.c.h.b16 %v3357
    %v4634 = vunpack.c.l.b16 %v3358
    %v4635 = vunpack.c.h.b16 %v3358
    %v4636 = vunpack.c.l.b16 %v3359
    %v4637 = vunpack.c.l.b16 %v3360
    %v4638 = vunpack.c.h.b16 %v3360
    %v4639 = vunpack.c.l.b16 %v3361
    %v4640 = vunpack.c.h.b16 %v3361
    %v4641 = vunpack.c.l.b16 %v3362
    %v4642 = vunpack.c.h.b16 %v3362
    %v4643 = vunpack.c.l.b16 %v3363
    %v4644 = vunpack.c.l.b16 %v3364
    %v4645 = vunpack.c.h.b16 %v3364
    %v4646 = vunpack.c.l.b16 %v3365
    %v4647 = vunpack.c.h.b16 %v3365
    %v4648 = vunpack.c.l.b16 %v3366
    %v4649 = vunpack.c.h.b16 %v3366
    %v4650 = vunpack.c.l.b16 %v3367
    %v4651 = vunpack.c.l.b16 %v3368
    %v4652 = vunpack.c.h.b16 %v3368
    %v4653 = vunpack.c.l.b16 %v3369
    %v4654 = vunpack.c.h.b16 %v3369
    %v4655 = vunpack.c.l.b16 %v3370
    %v4656 = vunpack.c.h.b16 %v3370
    %v4657 = vunpack.c.l.b16 %v3371
    %v4658 = vunpack.c.l.b16 %v3372
    %v4659 = vunpack.c.h.b16 %v3372
    %v4660 = vunpack.c.l.b16 %v3373
    %v4661 = vunpack.c.h.b16 %v3373
    %v4662 = vunpack.c.l.b16 %v3374
    %v4663 = vunpack.c.h.b16 %v3374
    %v4664 = vunpack.c.l.b16 %v3375
    %v4665 = vunpack.c.l.b16 %v3376
    %v4666 = vunpack.c.h.b16 %v3376
    %v4667 = vunpack.c.l.b16 %v3377
    %v4668 = vunpack.c.h.b16 %v3377
    %v4669 = vunpack.c.l.b16 %v3378
    %v4670 = vunpack.c.h.b16 %v3378
    %v4671 = vunpack.c.l.b16 %v3379
    %v4672 = vunpack.c.l.b16 %v3380
    %v4673 = vunpack.c.h.b16 %v3380
    %v4674 = vunpack.c.l.b16 %v3381
    %v4675 = vunpack.c.h.b16 %v3381
    %v4676 = vunpack.c.l.b16 %v3382
    %v4677 = vunpack.c.h.b16 %v3382
    %v4678 = vunpack.c.l.b16 %v3383
    %v4679 = vunpack.c.l.b16 %v3384
    %v4680 = vunpack.c.h.b16 %v3384
    %v4681 = vunpack.c.l.b16 %v3385
    %v4682 = vunpack.c.h.b16 %v3385
    %v4683 = vunpack.c.l.b16 %v3386
    %v4684 = vunpack.c.h.b16 %v3386
    %v4685 = vunpack.c.l.b16 %v3387
    %v4686 = vunpack.c.l.b16 %v3388
    %v4687 = vunpack.c.h.b16 %v3388
    %v4688 = vunpack.c.l.b16 %v3389
    %v4689 = vunpack.c.h.b16 %v3389
    %v4690 = vunpack.c.l.b16 %v3390
    %v4691 = vunpack.c.h.b16 %v3390
    %v4692 = vunpack.c.l.b16 %v3391
    %v4693 = vunpack.c.l.b16 %v3392
    %v4694 = vunpack.c.h.b16 %v3392
    %v4695 = vunpack.c.l.b16 %v3393
    %v4696 = vunpack.c.h.b16 %v3393
    %v4697 = vunpack.c.l.b16 %v3394
    %v4698 = vunpack.c.h.b16 %v3394
    %v4699 = vunpack.c.l.b16 %v3395
    %v4700 = vunpack.c.l.b16 %v3396
    %v4701 = vunpack.c.h.b16 %v3396
    %v4702 = vunpack.c.l.b16 %v3397
    %v4703 = vunpack.c.h.b16 %v3397
    %v4704 = vunpack.c.l.b16 %v3398
    %v4705 = vunpack.c.h.b16 %v3398
    %v4706 = vunpack.c.l.b16 %v3399
    %v4707 = vunpack.c.l.b16 %v3400
    %v4708 = vunpack.c.h.b16 %v3400
    %v4709 = vunpack.c.l.b16 %v3401
    %v4710 = vunpack.c.h.b16 %v3401
    %v4711 = vunpack.c.l.b16 %v3402
    %v4712 = vunpack.c.h.b16 %v3402
    %v4713 = vunpack.c.l.b16 %v3403
    %v4714 = vunpack.c.l.b16 %v3404
    %v4715 = vunpack.c.h.b16 %v3404
    %v4716 = vunpack.c.l.b16 %v3405
    %v4717 = vunpack.c.h.b16 %v3405
    %v4718 = vunpack.c.l.b16 %v3406
    %v4719 = vunpack.c.h.b16 %v3406
    %v4720 = vunpack.c.l.b16 %v3407
    %v4721 = vunpack.c.l.b16 %v3408
    %v4722 = vunpack.c.h.b16 %v3408
    %v4723 = vunpack.c.l.b16 %v3409
    %v4724 = vunpack.c.h.b16 %v3409
    %v4725 = vunpack.c.l.b16 %v3410
    %v4726 = vunpack.c.h.b16 %v3410
    %v4727 = vunpack.c.l.b16 %v3411
    %v4728 = vunpack.c.l.b16 %v3412
    %v4729 = vunpack.c.h.b16 %v3412
    %v4730 = vunpack.c.l.b16 %v3413
    %v4731 = vunpack.c.h.b16 %v3413
    %v4732 = vunpack.c.l.b16 %v3414
    %v4733 = vunpack.c.h.b16 %v3414
    %v4734 = vunpack.c.l.b16 %v3415
    %v4735 = vunpack.c.l.b16 %v3416
    %v4736 = vunpack.c.h.b16 %v3416
    %v4737 = vunpack.c.l.b16 %v3417
    %v4738 = vunpack.c.h.b16 %v3417
    %v4739 = vunpack.c.l.b16 %v3418
    %v4740 = vunpack.c.h.b16 %v3418
    %v4741 = vunpack.c.l.b16 %v3419
    %v4742 = vunpack.c.l.b16 %v3420
    %v4743 = vunpack.c.h.b16 %v3420
    %v4744 = vunpack.c.l.b16 %v3421
    %v4745 = vunpack.c.h.b16 %v3421
    %v4746 = vunpack.c.l.b16 %v3422
    %v4747 = vunpack.c.h.b16 %v3422
    %v4748 = vunpack.c.l.b16 %v3423
    %v4749 = vunpack.c.l.b16 %v3424
    %v4750 = vunpack.c.h.b16 %v3424
    %v4751 = vunpack.c.l.b16 %v3425
    %v4752 = vunpack.c.h.b16 %v3425
    %v4753 = vunpack.c.l.b16 %v3426
    %v4754 = vunpack.c.h.b16 %v3426
    %v4755 = vunpack.c.l.b16 %v3427
    %v4756 = vunpack.c.l.b16 %v3428
    %v4757 = vunpack.c.h.b16 %v3428
    %v4758 = vunpack.c.l.b16 %v3429
    %v4759 = vunpack.c.h.b16 %v3429
    %v4760 = vunpack.c.l.b16 %v3430
    %v4761 = vunpack.c.h.b16 %v3430
    %v4762 = vunpack.c.l.b16 %v3431
    %v4763 = vunpack.c.l.b16 %v3432
    %v4764 = vunpack.c.h.b16 %v3432
    %v4765 = vunpack.c.l.b16 %v3433
    %v4766 = vunpack.c.h.b16 %v3433
    %v4767 = vunpack.c.l.b16 %v3434
    %v4768 = vunpack.c.h.b16 %v3434
    %v4769 = vunpack.c.l.b16 %v3435
    %v4770 = vunpack.c.l.b16 %v3436
    %v4771 = vunpack.c.h.b16 %v3436
    %v4772 = vunpack.c.l.b16 %v3437
    %v4773 = vunpack.c.h.b16 %v3437
    %v4774 = vunpack.c.l.b16 %v3438
    %v4775 = vunpack.c.h.b16 %v3438
    %v4776 = vunpack.c.l.b16 %v3439
    %v4777 = vunpack.c.l.b16 %v3440
    %v4778 = vunpack.c.h.b16 %v3440
    %v4779 = vunpack.c.l.b16 %v3441
    %v4780 = vunpack.c.h.b16 %v3441
    %v4781 = vunpack.c.l.b16 %v3442
    %v4782 = vunpack.c.h.b16 %v3442
    %v4783 = vunpack.c.l.b16 %v3443
    %v4784 = vunpack.c.l.b16 %v3444
    %v4785 = vunpack.c.h.b16 %v3444
    %v4786 = vunpack.c.l.b16 %v3445
    %v4787 = vunpack.c.h.b16 %v3445
    %v4788 = vunpack.c.l.b16 %v3446
    %v4789 = vunpack.c.h.b16 %v3446
    %v4790 = vunpack.c.l.b16 %v3447
    %v4791 = vunpack.c.l.b16 %v3448
    %v4792 = vunpack.c.h.b16 %v3448
    %v4793 = vunpack.c.l.b16 %v3449
    %v4794 = vunpack.c.h.b16 %v3449
    %v4795 = vunpack.c.l.b16 %v3450
    %v4796 = vunpack.c.h.b16 %v3450
    %v4797 = vunpack.c.l.b16 %v3451
    %v4798 = vunpack.c.l.b16 %v3452
    %v4799 = vunpack.c.h.b16 %v3452
    %v4800 = vunpack.c.l.b16 %v3453
    %v4801 = vunpack.c.h.b16 %v3453
    %v4802 = vunpack.c.l.b16 %v3454
    %v4803 = vunpack.c.h.b16 %v3454
    %v4804 = vunpack.c.l.b16 %v3455
    %v4805 = vunpack.c.l.b16 %v3456
    %v4806 = vunpack.c.h.b16 %v3456
    %v4807 = vunpack.c.l.b16 %v3457
    %v4808 = vunpack.c.h.b16 %v3457
    %v4809 = vunpack.c.l.b16 %v3458
    %v4810 = vunpack.c.h.b16 %v3458
    %v4811 = vunpack.c.l.b16 %v3459
    %v4812 = vunpack.c.l.b16 %v3460
    %v4813 = vunpack.c.h.b16 %v3460
    %v4814 = vunpack.c.l.b16 %v3461
    %v4815 = vunpack.c.h.b16 %v3461
    %v4816 = vunpack.c.l.b16 %v3462
    %v4817 = vunpack.c.h.b16 %v3462
    %v4818 = vunpack.c.l.b16 %v3463
    %v4819 = vunpack.c.l.b16 %v3464
    %v4820 = vunpack.c.h.b16 %v3464
    %v4821 = vunpack.c.l.b16 %v3465
    %v4822 = vunpack.c.h.b16 %v3465
    %v4823 = vunpack.c.l.b16 %v3466
    %v4824 = vunpack.c.h.b16 %v3466
    %v4825 = vunpack.c.l.b16 %v3467
    %v4826 = vunpack.c.l.b16 %v3468
    %v4827 = vunpack.c.h.b16 %v3468
    %v4828 = vunpack.c.l.b16 %v3469
    %v4829 = vunpack.c.h.b16 %v3469
    %v4830 = vunpack.c.l.b16 %v3470
    %v4831 = vunpack.c.h.b16 %v3470
    %v4832 = vunpack.c.l.b16 %v3471
    %v4833 = vunpack.c.l.b16 %v3472
    %v4834 = vunpack.c.h.b16 %v3472
    %v4835 = vunpack.c.l.b16 %v3473
    %v4836 = vunpack.c.h.b16 %v3473
    %v4837 = vunpack.c.l.b16 %v3474
    %v4838 = vunpack.c.h.b16 %v3474
    %v4839 = vunpack.c.l.b16 %v3475
    %v4840 = vunpack.c.l.b16 %v3476
    %v4841 = vunpack.c.h.b16 %v3476
    %v4842 = vunpack.c.l.b16 %v3477
    %v4843 = vunpack.c.h.b16 %v3477
    %v4844 = vunpack.c.l.b16 %v3478
    %v4845 = vunpack.c.h.b16 %v3478
    %v4846 = vunpack.c.l.b16 %v3479
    %v4847 = vunpack.c.l.b16 %v3480
    %v4848 = vunpack.c.h.b16 %v3480
    %v4849 = vunpack.c.l.b16 %v3481
    %v4850 = vunpack.c.h.b16 %v3481
    %v4851 = vunpack.c.l.b16 %v3482
    %v4852 = vunpack.c.h.b16 %v3482
    %v4853 = vunpack.c.l.b16 %v3483
    %v4854 = vunpack.c.l.b16 %v3484
    %v4855 = vunpack.c.h.b16 %v3484
    %v4856 = vunpack.c.l.b16 %v3485
    %v4857 = vunpack.c.h.b16 %v3485
    %v4858 = vunpack.c.l.b16 %v3486
    %v4859 = vunpack.c.h.b16 %v3486
    %v4860 = vunpack.c.l.b16 %v3487
    %v4861 = vunpack.c.l.b16 %v3488
    %v4862 = vunpack.c.h.b16 %v3488
    %v4863 = vunpack.c.l.b16 %v3489
    %v4864 = vunpack.c.h.b16 %v3489
    %v4865 = vunpack.c.l.b16 %v3490
    %v4866 = vunpack.c.h.b16 %v3490
    %v4867 = vunpack.c.l.b16 %v3491
    %v4868 = vunpack.c.l.b16 %v3492
    %v4869 = vunpack.c.h.b16 %v3492
    %v4870 = vunpack.c.l.b16 %v3493
    %v4871 = vunpack.c.h.b16 %v3493
    %v4872 = vunpack.c.l.b16 %v3494
    %v4873 = vunpack.c.h.b16 %v3494
    %v4874 = vunpack.c.l.b16 %v3495
    %v4875 = vunpack.c.l.b16 %v3496
    %v4876 = vunpack.c.h.b16 %v3496
    %v4877 = vunpack.c.l.b16 %v3497
    %v4878 = vunpack.c.h.b16 %v3497
    %v4879 = vunpack.c.l.b16 %v3498
    %v4880 = vunpack.c.h.b16 %v3498
    %v4881 = vunpack.c.l.b16 %v3499
    %v4882 = vunpack.c.l.b16 %v3500
    %v4883 = vunpack.c.h.b16 %v3500
    %v4884 = vunpack.c.l.b16 %v3501
    %v4885 = vunpack.c.h.b16 %v3501
    %v4886 = vunpack.c.l.b16 %v3502
    %v4887 = vunpack.c.h.b16 %v3502
    %v4888 = vunpack.c.l.b16 %v3503
    %v4889 = vunpack.c.l.b16 %v3504
    %v4890 = vunpack.c.h.b16 %v3504
    %v4891 = vunpack.c.l.b16 %v3505
    %v4892 = vunpack.c.h.b16 %v3505
    %v4893 = vunpack.c.l.b16 %v3506
    %v4894 = vunpack.c.h.b16 %v3506
    %v4895 = vunpack.c.l.b16 %v3507
    %v4896 = vunpack.c.l.b16 %v3508
    %v4897 = vunpack.c.h.b16 %v3508
    %v4898 = vunpack.c.l.b16 %v3509
    %v4899 = vunpack.c.h.b16 %v3509
    %v4900 = vunpack.c.l.b16 %v3510
    %v4901 = vunpack.c.h.b16 %v3510
    %v4902 = vunpack.c.l.b16 %v3511
    %v4903 = vunpack.c.l.b16 %v3512
    %v4904 = vunpack.c.h.b16 %v3512
    %v4905 = vunpack.c.l.b16 %v3513
    %v4906 = vunpack.c.h.b16 %v3513
    %v4907 = vunpack.c.l.b16 %v3514
    %v4908 = vunpack.c.h.b16 %v3514
    %v4909 = vunpack.c.l.b16 %v3515
    %v4910 = vunpack.c.l.b16 %v3516
    %v4911 = vunpack.c.h.b16 %v3516
    %v4912 = vunpack.c.l.b16 %v3517
    %v4913 = vunpack.c.h.b16 %v3517
    %v4914 = vunpack.c.l.b16 %v3518
    %v4915 = vunpack.c.h.b16 %v3518
    %v4916 = vunpack.c.l.b16 %v3519
    %v4917 = vunpack.c.l.b16 %v3520
    %v4918 = vunpack.c.h.b16 %v3520
    %v4919 = vunpack.c.l.b16 %v3521
    %v4920 = vunpack.c.h.b16 %v3521
    %v4921 = vunpack.c.l.b16 %v3522
    %v4922 = vunpack.c.h.b16 %v3522
    %v4923 = vunpack.c.l.b16 %v3523
    %v4924 = vunpack.c.l.b16 %v3524
    %v4925 = vunpack.c.h.b16 %v3524
    %v4926 = vunpack.c.l.b16 %v3525
    %v4927 = vunpack.c.h.b16 %v3525
    %v4928 = vunpack.c.l.b16 %v3526
    %v4929 = vunpack.c.h.b16 %v3526
    %v4930 = vunpack.c.l.b16 %v3527
    %v4931 = vunpack.c.l.b16 %v3528
    %v4932 = vunpack.c.h.b16 %v3528
    %v4933 = vunpack.c.l.b16 %v3529
    %v4934 = vunpack.c.h.b16 %v3529
    %v4935 = vunpack.c.l.b16 %v3530
    %v4936 = vunpack.c.h.b16 %v3530
    %v4937 = vunpack.c.l.b16 %v3531
    %v4938 = vunpack.c.l.b16 %v3532
    %v4939 = vunpack.c.h.b16 %v3532
    %v4940 = vunpack.c.l.b16 %v3533
    %v4941 = vunpack.c.h.b16 %v3533
    %v4942 = vunpack.c.l.b16 %v3534
    %v4943 = vunpack.c.h.b16 %v3534
    %v4944 = vunpack.c.l.b16 %v3535
    %v4945 = vunpack.c.l.b16 %v3536
    %v4946 = vunpack.c.h.b16 %v3536
    %v4947 = vunpack.c.l.b16 %v3537
    %v4948 = vunpack.c.h.b16 %v3537
    %v4949 = vunpack.c.l.b16 %v3538
    %v4950 = vunpack.c.h.b16 %v3538
    %v4951 = vunpack.c.l.b16 %v3539
    %v4952 = vunpack.c.l.b16 %v3540
    %v4953 = vunpack.c.h.b16 %v3540
    %v4954 = vunpack.c.l.b16 %v3541
    %v4955 = vunpack.c.h.b16 %v3541
    %v4956 = vunpack.c.l.b16 %v3542
    %v4957 = vunpack.c.h.b16 %v3542
    %v4958 = vunpack.c.l.b16 %v3543
    %v4959 = vunpack.c.l.b16 %v3544
    %v4960 = vunpack.c.h.b16 %v3544
    %v4961 = vunpack.c.l.b16 %v3545
    %v4962 = vunpack.c.h.b16 %v3545
    %v4963 = vunpack.c.l.b16 %v3546
    %v4964 = vunpack.c.h.b16 %v3546
    %v4965 = vunpack.c.l.b16 %v3547
    %v4966 = vunpack.c.l.b16 %v3548
    %v4967 = vunpack.c.h.b16 %v3548
    %v4968 = vunpack.c.l.b16 %v3549
    %v4969 = vunpack.c.h.b16 %v3549
    %v4970 = vunpack.c.l.b16 %v3550
    %v4971 = vunpack.c.h.b16 %v3550
    %v4972 = vunpack.c.l.b16 %v3551
    %v4973 = vunpack.c.l.b16 %v3552
    %v4974 = vunpack.c.h.b16 %v3552
    %v4975 = vunpack.c.l.b16 %v3553
    %v4976 = vunpack.c.h.b16 %v3553
    %v4977 = vunpack.c.l.b16 %v3554
    %v4978 = vunpack.c.h.b16 %v3554
    %v4979 = vunpack.c.l.b16 %v3555
    %v4980 = vunpack.c.l.b16 %v3556
    %v4981 = vunpack.c.h.b16 %v3556
    %v4982 = vunpack.c.l.b16 %v3557
    %v4983 = vunpack.c.h.b16 %v3557
    %v4984 = vunpack.c.l.b16 %v3558
    %v4985 = vunpack.c.h.b16 %v3558
    %v4986 = vunpack.c.l.b16 %v3559
    %v4987 = vunpack.c.l.b16 %v3560
    %v4988 = vunpack.c.h.b16 %v3560
    %v4989 = vunpack.c.l.b16 %v3561
    %v4990 = vunpack.c.h.b16 %v3561
    %v4991 = vunpack.c.l.b16 %v3562
    %v4992 = vunpack.c.h.b16 %v3562
    %v4993 = vunpack.c.l.b16 %v3563
    %v4994 = vunpack.c.l.b16 %v3564
    %v4995 = vunpack.c.h.b16 %v3564
    %v4996 = vunpack.c.l.b16 %v3565
    %v4997 = vunpack.c.h.b16 %v3565
    %v4998 = vunpack.c.l.b16 %v3566
    %v4999 = vunpack.c.h.b16 %v3566
    %v5000 = vunpack.c.l.b16 %v3567
    %v5001 = vunpack.c.l.b16 %v3568
    %v5002 = vunpack.c.h.b16 %v3568
    %v5003 = vunpack.c.l.b16 %v3569
    %v5004 = vunpack.c.h.b16 %v3569
    %v5005 = vunpack.c.l.b16 %v3570
    %v5006 = vunpack.c.h.b16 %v3570
    %v5007 = vunpack.c.l.b16 %v3571
    %v5008 = vunpack.c.l.b16 %v3572
    %v5009 = vunpack.c.h.b16 %v3572
    %v5010 = vunpack.c.l.b16 %v3573
    %v5011 = vunpack.c.h.b16 %v3573
    %v5012 = vunpack.c.l.b16 %v3574
    %v5013 = vunpack.c.h.b16 %v3574
    %v5014 = vunpack.c.l.b16 %v3575
    %v5015 = vunpack.c.l.b16 %v3576
    %v5016 = vunpack.c.h.b16 %v3576
    %v5017 = vunpack.c.l.b16 %v3577
    %v5018 = vunpack.c.h.b16 %v3577
    %v5019 = vunpack.c.l.b16 %v3578
    %v5020 = vunpack.c.h.b16 %v3578
    %v5021 = vunpack.c.l.b16 %v3579
    %v5022 = vunpack.c.l.b16 %v3580
    %v5023 = vunpack.c.h.b16 %v3580
    %v5024 = vunpack.c.l.b16 %v3581
    %v5025 = vunpack.c.h.b16 %v3581
    %v5026 = vunpack.c.l.b16 %v3582
    %v5027 = vunpack.c.h.b16 %v3582
    %v5028 = vunpack.c.l.b16 %v3583
    %v5029 = vpack.c.b16 %v4140, %v4133
    %v5030 = vpack.c.b16 %v4141, %v4134
    %v5031 = vpack.c.b16 %v4142, %v4135
    %v5032 = vpack.c.b16 %v4143, %v4136
    %v5033 = vpack.c.b16 %v4144, %v4137
    %v5034 = vpack.c.b16 %v4145, %v4138
    %v5035 = vpack.c.b16 %v4146, %v4139
    %v5036 = vpack.c.b16 %v4154, %v4147
    %v5037 = vpack.c.b16 %v4155, %v4148
    %v5038 = vpack.c.b16 %v4156, %v4149
    %v5039 = vpack.c.b16 %v4157, %v4150
    %v5040 = vpack.c.b16 %v4158, %v4151
    %v5041 = vpack.c.b16 %v4159, %v4152
    %v5042 = vpack.c.b16 %v4160, %v4153
    %v5043 = vpack.c.b16 %v4168, %v4161
    %v5044 = vpack.c.b16 %v4169, %v4162
    %v5045 = vpack.c.b16 %v4170, %v4163
    %v5046 = vpack.c.b16 %v4171, %v4164
    %v5047 = vpack.c.b16 %v4172, %v4165
    %v5048 = vpack.c.b16 %v4173, %v4166
    %v5049 = vpack.c.b16 %v4174, %v4167
    %v5050 = vpack.c.b16 %v4182, %v4175
    %v5051 = vpack.c.b16 %v4183, %v4176
    %v5052 = vpack.c.b16 %v4184, %v4177
    %v5053 = vpack.c.b16 %v4185, %v4178
    %v5054 = vpack.c.b16 %v4186, %v4179
    %v5055 = vpack.c.b16 %v4187, %v4180
    %v5056 = vpack.c.b16 %v4188, %v4181
    %v5057 = vpack.c.b16 %v4196, %v4189
    %v5058 = vpack.c.b16 %v4197, %v4190
    %v5059 = vpack.c.b16 %v4198, %v4191
    %v5060 = vpack.c.b16 %v4199, %v4192
    %v5061 = vpack.c.b16 %v4200, %v4193
    %v5062 = vpack.c.b16 %v4201, %v4194
    %v5063 = vpack.c.b16 %v4202, %v4195
    %v5064 = vpack.c.b16 %v4210, %v4203
    %v5065 = vpack.c.b16 %v4211, %v4204
    %v5066 = vpack.c.b16 %v4212, %v4205
    %v5067 = vpack.c.b16 %v4213, %v4206
    %v5068 = vpack.c.b16 %v4214, %v4207
    %v5069 = vpack.c.b16 %v4215, %v4208
    %v5070 = vpack.c.b16 %v4216, %v4209
    %v5071 = vpack.c.b16 %v4224, %v4217
    %v5072 = vpack.c.b16 %v4225, %v4218
    %v5073 = vpack.c.b16 %v4226, %v4219
    %v5074 = vpack.c.b16 %v4227, %v4220
    %v5075 = vpack.c.b16 %v4228, %v4221
    %v5076 = vpack.c.b16 %v4229, %v4222
    %v5077 = vpack.c.b16 %v4230, %v4223
    %v5078 = vpack.c.b16 %v4238, %v4231
    %v5079 = vpack.c.b16 %v4239, %v4232
    %v5080 = vpack.c.b16 %v4240, %v4233
    %v5081 = vpack.c.b16 %v4241, %v4234
    %v5082 = vpack.c.b16 %v4242, %v4235
    %v5083 = vpack.c.b16 %v4243, %v4236
    %v5084 = vpack.c.b16 %v4244, %v4237
    %v5085 = vpack.c.b16 %v4252, %v4245
    %v5086 = vpack.c.b16 %v4253, %v4246
    %v5087 = vpack.c.b16 %v4254, %v4247
    %v5088 = vpack.c.b16 %v4255, %v4248
    %v5089 = vpack.c.b16 %v4256, %v4249
    %v5090 = vpack.c.b16 %v4257, %v4250
    %v5091 = vpack.c.b16 %v4258, %v4251
    %v5092 = vpack.c.b16 %v4266, %v4259
    %v5093 = vpack.c.b16 %v4267, %v4260
    %v5094 = vpack.c.b16 %v4268, %v4261
    %v5095 = vpack.c.b16 %v4269, %v4262
    %v5096 = vpack.c.b16 %v4270, %v4263
    %v5097 = vpack.c.b16 %v4271, %v4264
    %v5098 = vpack.c.b16 %v4272, %v4265
    %v5099 = vpack.c.b16 %v4280, %v4273
    %v5100 = vpack.c.b16 %v4281, %v4274
    %v5101 = vpack.c.b16 %v4282, %v4275
    %v5102 = vpack.c.b16 %v4283, %v4276
    %v5103 = vpack.c.b16 %v4284, %v4277
    %v5104 = vpack.c.b16 %v4285, %v4278
    %v5105 = vpack.c.b16 %v4286, %v4279
    %v5106 = vpack.c.b16 %v4294, %v4287
    %v5107 = vpack.c.b16 %v4295, %v4288
    %v5108 = vpack.c.b16 %v4296, %v4289
    %v5109 = vpack.c.b16 %v4297, %v4290
    %v5110 = vpack.c.b16 %v4298, %v4291
    %v5111 = vpack.c.b16 %v4299, %v4292
    %v5112 = vpack.c.b16 %v4300, %v4293
    %v5113 = vpack.c.b16 %v4308, %v4301
    %v5114 = vpack.c.b16 %v4309, %v4302
    %v5115 = vpack.c.b16 %v4310, %v4303
    %v5116 = vpack.c.b16 %v4311, %v4304
    %v5117 = vpack.c.b16 %v4312, %v4305
    %v5118 = vpack.c.b16 %v4313, %v4306
    %v5119 = vpack.c.b16 %v4314, %v4307
    %v5120 = vpack.c.b16 %v4322, %v4315
    %v5121 = vpack.c.b16 %v4323, %v4316
    %v5122 = vpack.c.b16 %v4324, %v4317
    %v5123 = vpack.c.b16 %v4325, %v4318
    %v5124 = vpack.c.b16 %v4326, %v4319
    %v5125 = vpack.c.b16 %v4327, %v4320
    %v5126 = vpack.c.b16 %v4328, %v4321
    %v5127 = vpack.c.b16 %v4336, %v4329
    %v5128 = vpack.c.b16 %v4337, %v4330
    %v5129 = vpack.c.b16 %v4338, %v4331
    %v5130 = vpack.c.b16 %v4339, %v4332
    %v5131 = vpack.c.b16 %v4340, %v4333
    %v5132 = vpack.c.b16 %v4341, %v4334
    %v5133 = vpack.c.b16 %v4342, %v4335
    %v5134 = vpack.c.b16 %v4350, %v4343
    %v5135 = vpack.c.b16 %v4351, %v4344
    %v5136 = vpack.c.b16 %v4352, %v4345
    %v5137 = vpack.c.b16 %v4353, %v4346
    %v5138 = vpack.c.b16 %v4354, %v4347
    %v5139 = vpack.c.b16 %v4355, %v4348
    %v5140 = vpack.c.b16 %v4356, %v4349
    %v5141 = vpack.c.b16 %v4364, %v4357
    %v5142 = vpack.c.b16 %v4365, %v4358
    %v5143 = vpack.c.b16 %v4366, %v4359
    %v5144 = vpack.c.b16 %v4367, %v4360
    %v5145 = vpack.c.b16 %v4368, %v4361
    %v5146 = vpack.c.b16 %v4369, %v4362
    %v5147 = vpack.c.b16 %v4370, %v4363
    %v5148 = vpack.c.b16 %v4378, %v4371
    %v5149 = vpack.c.b16 %v4379, %v4372
    %v5150 = vpack.c.b16 %v4380, %v4373
    %v5151 = vpack.c.b16 %v4381, %v4374
    %v5152 = vpack.c.b16 %v4382, %v4375
    %v5153 = vpack.c.b16 %v4383, %v4376
    %v5154 = vpack.c.b16 %v4384, %v4377
    %v5155 = vpack.c.b16 %v4392, %v4385
    %v5156 = vpack.c.b16 %v4393, %v4386
    %v5157 = vpack.c.b16 %v4394, %v4387
    %v5158 = vpack.c.b16 %v4395, %v4388
    %v5159 = vpack.c.b16 %v4396, %v4389
    %v5160 = vpack.c.b16 %v4397, %v4390
    %v5161 = vpack.c.b16 %v4398, %v4391
    %v5162 = vpack.c.b16 %v4406, %v4399
    %v5163 = vpack.c.b16 %v4407, %v4400
    %v5164 = vpack.c.b16 %v4408, %v4401
    %v5165 = vpack.c.b16 %v4409, %v4402
    %v5166 = vpack.c.b16 %v4410, %v4403
    %v5167 = vpack.c.b16 %v4411, %v4404
    %v5168 = vpack.c.b16 %v4412, %v4405
    %v5169 = vpack.c.b16 %v4420, %v4413
    %v5170 = vpack.c.b16 %v4421, %v4414
    %v5171 = vpack.c.b16 %v4422, %v4415
    %v5172 = vpack.c.b16 %v4423, %v4416
    %v5173 = vpack.c.b16 %v4424, %v4417
    %v5174 = vpack.c.b16 %v4425, %v4418
    %v5175 = vpack.c.b16 %v4426, %v4419
    %v5176 = vpack.c.b16 %v4434, %v4427
    %v5177 = vpack.c.b16 %v4435, %v4428
    %v5178 = vpack.c.b16 %v4436, %v4429
    %v5179 = vpack.c.b16 %v4437, %v4430
    %v5180 = vpack.c.b16 %v4438, %v4431
    %v5181 = vpack.c.b16 %v4439, %v4432
    %v5182 = vpack.c.b16 %v4440, %v4433
    %v5183 = vpack.c.b16 %v4448, %v4441
    %v5184 = vpack.c.b16 %v4449, %v4442
    %v5185 = vpack.c.b16 %v4450, %v4443
    %v5186 = vpack.c.b16 %v4451, %v4444
    %v5187 = vpack.c.b16 %v4452, %v4445
    %v5188 = vpack.c.b16 %v4453, %v4446
    %v5189 = vpack.c.b16 %v4454, %v4447
    %v5190 = vpack.c.b16 %v4462, %v4455
    %v5191 = vpack.c.b16 %v4463, %v4456
    %v5192 = vpack.c.b16 %v4464, %v4457
    %v5193 = vpack.c.b16 %v4465, %v4458
    %v5194 = vpack.c.b16 %v4466, %v4459
    %v5195 = vpack.c.b16 %v4467, %v4460
    %v5196 = vpack.c.b16 %v4468, %v4461
    %v5197 = vpack.c.b16 %v4476, %v4469
    %v5198 = vpack.c.b16 %v4477, %v4470
    %v5199 = vpack.c.b16 %v4478, %v4471
    %v5200 = vpack.c.b16 %v4479, %v4472
    %v5201 = vpack.c.b16 %v4480, %v4473
    %v5202 = vpack.c.b16 %v4481, %v4474
    %v5203 = vpack.c.b16 %v4482, %v4475
    %v5204 = vpack.c.b16 %v4490, %v4483
    %v5205 = vpack.c.b16 %v4491, %v4484
    %v5206 = vpack.c.b16 %v4492, %v4485
    %v5207 = vpack.c.b16 %v4493, %v4486
    %v5208 = vpack.c.b16 %v4494, %v4487
    %v5209 = vpack.c.b16 %v4495, %v4488
    %v5210 = vpack.c.b16 %v4496, %v4489
    %v5211 = vpack.c.b16 %v4504, %v4497
    %v5212 = vpack.c.b16 %v4505, %v4498
    %v5213 = vpack.c.b16 %v4506, %v4499
    %v5214 = vpack.c.b16 %v4507, %v4500
    %v5215 = vpack.c.b16 %v4508, %v4501
    %v5216 = vpack.c.b16 %v4509, %v4502
    %v5217 = vpack.c.b16 %v4510, %v4503
    %v5218 = vpack.c.b16 %v4518, %v4511
    %v5219 = vpack.c.b16 %v4519, %v4512
    %v5220 = vpack.c.b16 %v4520, %v4513
    %v5221 = vpack.c.b16 %v4521, %v4514
    %v5222 = vpack.c.b16 %v4522, %v4515
    %v5223 = vpack.c.b16 %v4523, %v4516
    %v5224 = vpack.c.b16 %v4524, %v4517
    %v5225 = vpack.c.b16 %v4532, %v4525
    %v5226 = vpack.c.b16 %v4533, %v4526
    %v5227 = vpack.c.b16 %v4534, %v4527
    %v5228 = vpack.c.b16 %v4535, %v4528
    %v5229 = vpack.c.b16 %v4536, %v4529
    %v5230 = vpack.c.b16 %v4537, %v4530
    %v5231 = vpack.c.b16 %v4538, %v4531
    %v5232 = vpack.c.b16 %v4546, %v4539
    %v5233 = vpack.c.b16 %v4547, %v4540
    %v5234 = vpack.c.b16 %v4548, %v4541
    %v5235 = vpack.c.b16 %v4549, %v4542
    %v5236 = vpack.c.b16 %v4550, %v4543
    %v5237 = vpack.c.b16 %v4551, %v4544
    %v5238 = vpack.c.b16 %v4552, %v4545
    %v5239 = vpack.c.b16 %v4560, %v4553
    %v5240 = vpack.c.b16 %v4561, %v4554
    %v5241 = vpack.c.b16 %v4562, %v4555
    %v5242 = vpack.c.b16 %v4563, %v4556
    %v5243 = vpack.c.b16 %v4564, %v4557
    %v5244 = vpack.c.b16 %v4565, %v4558
    %v5245 = vpack.c.b16 %v4566, %v4559
    %v5246 = vpack.c.b16 %v4574, %v4567
    %v5247 = vpack.c.b16 %v4575, %v4568
    %v5248 = vpack.c.b16 %v4576, %v4569
    %v5249 = vpack.c.b16 %v4577, %v4570
    %v5250 = vpack.c.b16 %v4578, %v4571
    %v5251 = vpack.c.b16 %v4579, %v4572
    %v5252 = vpack.c.b16 %v4580, %v4573
    %v5253 = vpack.c.b16 %v4588, %v4581
    %v5254 = vpack.c.b16 %v4589, %v4582
    %v5255 = vpack.c.b16 %v4590, %v4583
    %v5256 = vpack.c.b16 %v4591, %v4584
    %v5257 = vpack.c.b16 %v4592, %v4585
    %v5258 = vpack.c.b16 %v4593, %v4586
    %v5259 = vpack.c.b16 %v4594, %v4587
    %v5260 = vpack.c.b16 %v4602, %v4595
    %v5261 = vpack.c.b16 %v4603, %v4596
    %v5262 = vpack.c.b16 %v4604, %v4597
    %v5263 = vpack.c.b16 %v4605, %v4598
    %v5264 = vpack.c.b16 %v4606, %v4599
    %v5265 = vpack.c.b16 %v4607, %v4600
    %v5266 = vpack.c.b16 %v4608, %v4601
    %v5267 = vpack.c.b16 %v4616, %v4609
    %v5268 = vpack.c.b16 %v4617, %v4610
    %v5269 = vpack.c.b16 %v4618, %v4611
    %v5270 = vpack.c.b16 %v4619, %v4612
    %v5271 = vpack.c.b16 %v4620, %v4613
    %v5272 = vpack.c.b16 %v4621, %v4614
    %v5273 = vpack.c.b16 %v4622, %v4615
    %v5274 = vpack.c.b16 %v4630, %v4623
    %v5275 = vpack.c.b16 %v4631, %v4624
    %v5276 = vpack.c.b16 %v4632, %v4625
    %v5277 = vpack.c.b16 %v4633, %v4626
    %v5278 = vpack.c.b16 %v4634, %v4627
    %v5279 = vpack.c.b16 %v4635, %v4628
    %v5280 = vpack.c.b16 %v4636, %v4629
    %v5281 = vpack.c.b16 %v4644, %v4637
    %v5282 = vpack.c.b16 %v4645, %v4638
    %v5283 = vpack.c.b16 %v4646, %v4639
    %v5284 = vpack.c.b16 %v4647, %v4640
    %v5285 = vpack.c.b16 %v4648, %v4641
    %v5286 = vpack.c.b16 %v4649, %v4642
    %v5287 = vpack.c.b16 %v4650, %v4643
    %v5288 = vpack.c.b16 %v4658, %v4651
    %v5289 = vpack.c.b16 %v4659, %v4652
    %v5290 = vpack.c.b16 %v4660, %v4653
    %v5291 = vpack.c.b16 %v4661, %v4654
    %v5292 = vpack.c.b16 %v4662, %v4655
    %v5293 = vpack.c.b16 %v4663, %v4656
    %v5294 = vpack.c.b16 %v4664, %v4657
    %v5295 = vpack.c.b16 %v4672, %v4665
    %v5296 = vpack.c.b16 %v4673, %v4666
    %v5297 = vpack.c.b16 %v4674, %v4667
    %v5298 = vpack.c.b16 %v4675, %v4668
    %v5299 = vpack.c.b16 %v4676, %v4669
    %v5300 = vpack.c.b16 %v4677, %v4670
    %v5301 = vpack.c.b16 %v4678, %v4671
    %v5302 = vpack.c.b16 %v4686, %v4679
    %v5303 = vpack.c.b16 %v4687, %v4680
    %v5304 = vpack.c.b16 %v4688, %v4681
    %v5305 = vpack.c.b16 %v4689, %v4682
    %v5306 = vpack.c.b16 %v4690, %v4683
    %v5307 = vpack.c.b16 %v4691, %v4684
    %v5308 = vpack.c.b16 %v4692, %v4685
    %v5309 = vpack.c.b16 %v4700, %v4693
    %v5310 = vpack.c.b16 %v4701, %v4694
    %v5311 = vpack.c.b16 %v4702, %v4695
    %v5312 = vpack.c.b16 %v4703, %v4696
    %v5313 = vpack.c.b16 %v4704, %v4697
    %v5314 = vpack.c.b16 %v4705, %v4698
    %v5315 = vpack.c.b16 %v4706, %v4699
    %v5316 = vpack.c.b16 %v4714, %v4707
    %v5317 = vpack.c.b16 %v4715, %v4708
    %v5318 = vpack.c.b16 %v4716, %v4709
    %v5319 = vpack.c.b16 %v4717, %v4710
    %v5320 = vpack.c.b16 %v4718, %v4711
    %v5321 = vpack.c.b16 %v4719, %v4712
    %v5322 = vpack.c.b16 %v4720, %v4713
    %v5323 = vpack.c.b16 %v4728, %v4721
    %v5324 = vpack.c.b16 %v4729, %v4722
    %v5325 = vpack.c.b16 %v4730, %v4723
    %v5326 = vpack.c.b16 %v4731, %v4724
    %v5327 = vpack.c.b16 %v4732, %v4725
    %v5328 = vpack.c.b16 %v4733, %v4726
    %v5329 = vpack.c.b16 %v4734, %v4727
    %v5330 = vpack.c.b16 %v4742, %v4735
    %v5331 = vpack.c.b16 %v4743, %v4736
    %v5332 = vpack.c.b16 %v4744, %v4737
    %v5333 = vpack.c.b16 %v4745, %v4738
    %v5334 = vpack.c.b16 %v4746, %v4739
    %v5335 = vpack.c.b16 %v4747, %v4740
    %v5336 = vpack.c.b16 %v4748, %v4741
    %v5337 = vpack.c.b16 %v4756, %v4749
    %v5338 = vpack.c.b16 %v4757, %v4750
    %v5339 = vpack.c.b16 %v4758, %v4751
    %v5340 = vpack.c.b16 %v4759, %v4752
    %v5341 = vpack.c.b16 %v4760, %v4753
    %v5342 = vpack.c.b16 %v4761, %v4754
    %v5343 = vpack.c.b16 %v4762, %v4755
    %v5344 = vpack.c.b16 %v4770, %v4763
    %v5345 = vpack.c.b16 %v4771, %v4764
    %v5346 = vpack.c.b16 %v4772, %v4765
    %v5347 = vpack.c.b16 %v4773, %v4766
    %v5348 = vpack.c.b16 %v4774, %v4767
    %v5349 = vpack.c.b16 %v4775, %v4768
    %v5350 = vpack.c.b16 %v4776, %v4769
    %v5351 = vpack.c.b16 %v4784, %v4777
    %v5352 = vpack.c.b16 %v4785, %v4778
    %v5353 = vpack.c.b16 %v4786, %v4779
    %v5354 = vpack.c.b16 %v4787, %v4780
    %v5355 = vpack.c.b16 %v4788, %v4781
    %v5356 = vpack.c.b16 %v4789, %v4782
    %v5357 = vpack.c.b16 %v4790, %v4783
    %v5358 = vpack.c.b16 %v4798, %v4791
    %v5359 = vpack.c.b16 %v4799, %v4792
    %v5360 = vpack.c.b16 %v4800, %v4793
    %v5361 = vpack.c.b16 %v4801, %v4794
    %v5362 = vpack.c.b16 %v4802, %v4795
    %v5363 = vpack.c.b16 %v4803, %v4796
    %v5364 = vpack.c.b16 %v4804, %v4797
    %v5365 = vpack.c.b16 %v4812, %v4805
    %v5366 = vpack.c.b16 %v4813, %v4806
    %v5367 = vpack.c.b16 %v4814, %v4807
    %v5368 = vpack.c.b16 %v4815, %v4808
    %v5369 = vpack.c.b16 %v4816, %v4809
    %v5370 = vpack.c.b16 %v4817, %v4810
    %v5371 = vpack.c.b16 %v4818, %v4811
    %v5372 = vpack.c.b16 %v4826, %v4819
    %v5373 = vpack.c.b16 %v4827, %v4820
    %v5374 = vpack.c.b16 %v4828, %v4821
    %v5375 = vpack.c.b16 %v4829, %v4822
    %v5376 = vpack.c.b16 %v4830, %v4823
    %v5377 = vpack.c.b16 %v4831, %v4824
    %v5378 = vpack.c.b16 %v4832, %v4825
    %v5379 = vpack.c.b16 %v4840, %v4833
    %v5380 = vpack.c.b16 %v4841, %v4834
    %v5381 = vpack.c.b16 %v4842, %v4835
    %v5382 = vpack.c.b16 %v4843, %v4836
    %v5383 = vpack.c.b16 %v4844, %v4837
    %v5384 = vpack.c.b16 %v4845, %v4838
    %v5385 = vpack.c.b16 %v4846, %v4839
    %v5386 = vpack.c.b16 %v4854, %v4847
    %v5387 = vpack.c.b16 %v4855, %v4848
    %v5388 = vpack.c.b16 %v4856, %v4849
    %v5389 = vpack.c.b16 %v4857, %v4850
    %v5390 = vpack.c.b16 %v4858, %v4851
    %v5391 = vpack.c.b16 %v4859, %v4852
    %v5392 = vpack.c.b16 %v4860, %v4853
    %v5393 = vpack.c.b16 %v4868, %v4861
    %v5394 = vpack.c.b16 %v4869, %v4862
    %v5395 = vpack.c.b16 %v4870, %v4863
    %v5396 = vpack.c.b16 %v4871, %v4864
    %v5397 = vpack.c.b16 %v4872, %v4865
    %v5398 = vpack.c.b16 %v4873, %v4866
    %v5399 = vpack.c.b16 %v4874, %v4867
    %v5400 = vpack.c.b16 %v4882, %v4875
    %v5401 = vpack.c.b16 %v4883, %v4876
    %v5402 = vpack.c.b16 %v4884, %v4877
    %v5403 = vpack.c.b16 %v4885, %v4878
    %v5404 = vpack.c.b16 %v4886, %v4879
    %v5405 = vpack.c.b16 %v4887, %v4880
    %v5406 = vpack.c.b16 %v4888, %v4881
    %v5407 = vpack.c.b16 %v4896, %v4889
    %v5408 = vpack.c.b16 %v4897, %v4890
    %v5409 = vpack.c.b16 %v4898, %v4891
    %v5410 = vpack.c.b16 %v4899, %v4892
    %v5411 = vpack.c.b16 %v4900, %v4893
    %v5412 = vpack.c.b16 %v4901, %v4894
    %v5413 = vpack.c.b16 %v4902, %v4895
    %v5414 = vpack.c.b16 %v4910, %v4903
    %v5415 = vpack.c.b16 %v4911, %v4904
    %v5416 = vpack.c.b16 %v4912, %v4905
    %v5417 = vpack.c.b16 %v4913, %v4906
    %v5418 = vpack.c.b16 %v4914, %v4907
    %v5419 = vpack.c.b16 %v4915, %v4908
    %v5420 = vpack.c.b16 %v4916, %v4909
    %v5421 = vpack.c.b16 %v4924, %v4917
    %v5422 = vpack.c.b16 %v4925, %v4918
    %v5423 = vpack.c.b16 %v4926, %v4919
    %v5424 = vpack.c.b16 %v4927, %v4920
    %v5425 = vpack.c.b16 %v4928, %v4921
    %v5426 = vpack.c.b16 %v4929, %v4922
    %v5427 = vpack.c.b16 %v4930, %v4923
    %v5428 = vpack.c.b16 %v4938, %v4931
    %v5429 = vpack.c.b16 %v4939, %v4932
    %v5430 = vpack.c.b16 %v4940, %v4933
    %v5431 = vpack.c.b16 %v4941, %v4934
    %v5432 = vpack.c.b16 %v4942, %v4935
    %v5433 = vpack.c.b16 %v4943, %v4936
    %v5434 = vpack.c.b16 %v4944, %v4937
    %v5435 = vpack.c.b16 %v4952, %v4945
    %v5436 = vpack.c.b16 %v4953, %v4946
    %v5437 = vpack.c.b16 %v4954, %v4947
    %v5438 = vpack.c.b16 %v4955, %v4948
    %v5439 = vpack.c.b16 %v4956, %v4949
    %v5440 = vpack.c.b16 %v4957, %v4950
    %v5441 = vpack.c.b16 %v4958, %v4951
    %v5442 = vpack.c.b16 %v4966, %v4959
    %v5443 = vpack.c.b16 %v4967, %v4960
    %v5444 = vpack.c.b16 %v4968, %v4961
    %v5445 = vpack.c.b16 %v4969, %v4962
    %v5446 = vpack.c.b16 %v4970, %v4963
    %v5447 = vpack.c.b16 %v4971, %v4964
    %v5448 = vpack.c.b16 %v4972, %v4965
    %v5449 = vpack.c.b16 %v4980, %v4973
    %v5450 = vpack.c.b16 %v4981, %v4974
    %v5451 = vpack.c.b16 %v4982, %v4975
    %v5452 = vpack.c.b16 %v4983, %v4976
    %v5453 = vpack.c.b16 %v4984, %v4977
    %v5454 = vpack.c.b16 %v4985, %v4978
    %v5455 = vpack.c.b16 %v4986, %v4979
    %v5456 = vpack.c.b16 %v4994, %v4987
    %v5457 = vpack.c.b16 %v4995, %v4988
    %v5458 = vpack.c.b16 %v4996, %v4989
    %v5459 = vpack.c.b16 %v4997, %v4990
    %v5460 = vpack.c.b16 %v4998, %v4991
    %v5461 = vpack.c.b16 %v4999, %v4992
    %v5462 = vpack.c.b16 %v5000, %v4993
    %v5463 = vpack.c.b16 %v5008, %v5001
    %v5464 = vpack.c.b16 %v5009, %v5002
    %v5465 = vpack.c.b16 %v5010, %v5003
    %v5466 = vpack.c.b16 %v5011, %v5004
    %v5467 = vpack.c.b16 %v5012, %v5005
    %v5468 = vpack.c.b16 %v5013, %v5006
    %v5469 = vpack.c.b16 %v5014, %v5007
    %v5470 = vpack.c.b16 %v5022, %v5015
    %v5471 = vpack.c.b16 %v5023, %v5016
    %v5472 = vpack.c.b16 %v5024, %v5017
    %v5473 = vpack.c.b16 %v5025, %v5018
    %v5474 = vpack.c.b16 %v5026, %v5019
    %v5475 = vpack.c.b16 %v5027, %v5020
    %v5476 = vpack.c.b16 %v5028, %v5021
    %5925 = vmatprep.subr.bf16.mxu0 %v5079
    %5926 = vmatpush1.bf16.msra.mxu0 %v5078
    %5927 = vmatprep.subr.bf16.mxu0 %v5072
    %5928 = vmatpush1.bf16.msra.mxu0 %v5071
    %5929 = vmatprep.subr.bf16.mxu0 %v5065
    %5930 = vmatpush1.bf16.msra.mxu0 %v5064
    %5931 = vmatprep.subr.bf16.mxu0 %v5058
    %5932 = vmatpush1.bf16.msra.mxu0 %v5057
    %5933 = vmatprep.subr.bf16.mxu0 %v5051
    %5934 = vmatpush1.bf16.msra.mxu0 %v5050
    %5935 = vmatprep.subr.bf16.mxu0 %v5044
    %5936 = vmatpush1.bf16.msra.mxu0 %v5043
    %5937 = vmatprep.subr.bf16.mxu0 %v5037
    %5938 = vmatpush1.bf16.msra.mxu0 %v5036
    %5939 = vmatprep.subr.bf16.mxu0 %v5030
    %5940 = vmatpush1.bf16.msra.mxu0 %v5029
    %5941 = vmatprep.subr.bf16.mxu0 %v5135
    %5942 = vmatpush2.bf16.msra.mxu0 %v5134
    %5943 = vmatprep.subr.bf16.mxu0 %v5128
    %5944 = vmatpush2.bf16.msra.mxu0 %v5127
    %5945 = vmatprep.subr.bf16.mxu0 %v5121
    %5946 = vmatpush2.bf16.msra.mxu0 %v5120
    %5947 = vmatprep.subr.bf16.mxu0 %v5114
    %5948 = vmatpush2.bf16.msra.mxu0 %v5113
    %5949 = vmatprep.subr.bf16.mxu0 %v5107
    %5950 = vmatpush2.bf16.msra.mxu0 %v5106
    %5951 = vmatprep.subr.bf16.mxu0 %v5100
    %5952 = vmatpush2.bf16.msra.mxu0 %v5099
    %5953 = vmatprep.subr.bf16.mxu0 %v5093
    %5954 = vmatpush2.bf16.msra.mxu0 %v5092
    %5955 = vmatprep.subr.bf16.mxu0 %v5086
    %5956 = vmatpush2.bf16.msra.mxu0 %v5085
    %5957 = vmatprep.mubr.bf16.mxu0 %v3065
    %5958 = vmatmul.mubr.bf16.gmra.mxu0 %v3064
    %v5959 = vpop.f32.mrf.mxu0
    %v5960 = vadd.f32 %v3589, %v5959
    %v5961 = vpop.f32.mrf.mxu0
    %v5962 = vadd.f32 %v3593, %v5961
    %v5963 = vpop.f32.mrf.mxu0
    %v5964 = vadd.f32 %v3589, %v5963
    %v5965 = vpop.f32.mrf.mxu0
    %v5966 = vadd.f32 %v3593, %v5965
    %5967 = vdwg.mxu0
    %5968 = vmatprep.subr.bf16.mxu0 %v5191
    %5969 = vmatpush1.bf16.msra.mxu0 %v5190
    %5970 = vmatprep.subr.bf16.mxu0 %v5184
    %5971 = vmatpush1.bf16.msra.mxu0 %v5183
    %5972 = vmatprep.subr.bf16.mxu0 %v5177
    %5973 = vmatpush1.bf16.msra.mxu0 %v5176
    %5974 = vmatprep.subr.bf16.mxu0 %v5170
    %5975 = vmatpush1.bf16.msra.mxu0 %v5169
    %5976 = vmatprep.subr.bf16.mxu0 %v5163
    %5977 = vmatpush1.bf16.msra.mxu0 %v5162
    %5978 = vmatprep.subr.bf16.mxu0 %v5156
    %5979 = vmatpush1.bf16.msra.mxu0 %v5155
    %5980 = vmatprep.subr.bf16.mxu0 %v5149
    %5981 = vmatpush1.bf16.msra.mxu0 %v5148
    %5982 = vmatprep.subr.bf16.mxu0 %v5142
    %5983 = vmatpush1.bf16.msra.mxu0 %v5141
    %5984 = vmatprep.subr.bf16.mxu0 %v5247
    %5985 = vmatpush2.bf16.msra.mxu0 %v5246
    %5986 = vmatprep.subr.bf16.mxu0 %v5240
    %5987 = vmatpush2.bf16.msra.mxu0 %v5239
    %5988 = vmatprep.subr.bf16.mxu0 %v5233
    %5989 = vmatpush2.bf16.msra.mxu0 %v5232
    %5990 = vmatprep.subr.bf16.mxu0 %v5226
    %5991 = vmatpush2.bf16.msra.mxu0 %v5225
    %5992 = vmatprep.subr.bf16.mxu0 %v5219
    %5993 = vmatpush2.bf16.msra.mxu0 %v5218
    %5994 = vmatprep.subr.bf16.mxu0 %v5212
    %5995 = vmatpush2.bf16.msra.mxu0 %v5211
    %5996 = vmatprep.subr.bf16.mxu0 %v5205
    %5997 = vmatpush2.bf16.msra.mxu0 %v5204
    %5998 = vmatprep.subr.bf16.mxu0 %v5198
    %5999 = vmatpush2.bf16.msra.mxu0 %v5197
    %6000 = vmatprep.mubr.bf16.mxu0 %v3067
    %6001 = vmatmul.mubr.bf16.gmra.mxu0 %v3066
    %v6002 = vpop.f32.mrf.mxu0
    %v6003 = vadd.f32 %v5960, %v6002
    %v6004 = vpop.f32.mrf.mxu0
    %v6005 = vadd.f32 %v5962, %v6004
    %v6006 = vpop.f32.mrf.mxu0
    %v6007 = vadd.f32 %v5964, %v6006
    %v6008 = vpop.f32.mrf.mxu0
    %v6009 = vadd.f32 %v5966, %v6008
    %6010 = vdwg.mxu0
    %6011 = vmatprep.subr.bf16.mxu0 %v5303
    %6012 = vmatpush1.bf16.msra.mxu0 %v5302
    %6013 = vmatprep.subr.bf16.mxu0 %v5296
    %6014 = vmatpush1.bf16.msra.mxu0 %v5295
    %6015 = vmatprep.subr.bf16.mxu0 %v5289
    %6016 = vmatpush1.bf16.msra.mxu0 %v5288
    %6017 = vmatprep.subr.bf16.mxu0 %v5282
    %6018 = vmatpush1.bf16.msra.mxu0 %v5281
    %6019 = vmatprep.subr.bf16.mxu0 %v5275
    %6020 = vmatpush1.bf16.msra.mxu0 %v5274
    %6021 = vmatprep.subr.bf16.mxu0 %v5268
    %6022 = vmatpush1.bf16.msra.mxu0 %v5267
    %6023 = vmatprep.subr.bf16.mxu0 %v5261
    %6024 = vmatpush1.bf16.msra.mxu0 %v5260
    %6025 = vmatprep.subr.bf16.mxu0 %v5254
    %6026 = vmatpush1.bf16.msra.mxu0 %v5253
    %6027 = vmatprep.subr.bf16.mxu0 %v5359
    %6028 = vmatpush2.bf16.msra.mxu0 %v5358
    %6029 = vmatprep.subr.bf16.mxu0 %v5352
    %6030 = vmatpush2.bf16.msra.mxu0 %v5351
    %6031 = vmatprep.subr.bf16.mxu0 %v5345
    %6032 = vmatpush2.bf16.msra.mxu0 %v5344
    %6033 = vmatprep.subr.bf16.mxu0 %v5338
    %6034 = vmatpush2.bf16.msra.mxu0 %v5337
    %6035 = vmatprep.subr.bf16.mxu0 %v5331
    %6036 = vmatpush2.bf16.msra.mxu0 %v5330
    %6037 = vmatprep.subr.bf16.mxu0 %v5324
    %6038 = vmatpush2.bf16.msra.mxu0 %v5323
    %6039 = vmatprep.subr.bf16.mxu0 %v5317
    %6040 = vmatpush2.bf16.msra.mxu0 %v5316
    %6041 = vmatprep.subr.bf16.mxu0 %v5310
    %6042 = vmatpush2.bf16.msra.mxu0 %v5309
    %6043 = vmatprep.mubr.bf16.mxu0 %v3069
    %6044 = vmatmul.mubr.bf16.gmra.mxu0 %v3068
    %v6045 = vpop.f32.mrf.mxu0
    %v6046 = vadd.f32 %v6003, %v6045
    %v6047 = vpop.f32.mrf.mxu0
    %v6048 = vadd.f32 %v6005, %v6047
    %v6049 = vpop.f32.mrf.mxu0
    %v6050 = vadd.f32 %v6007, %v6049
    %v6051 = vpop.f32.mrf.mxu0
    %v6052 = vadd.f32 %v6009, %v6051
    %6053 = vdwg.mxu0
    %6054 = vmatprep.subr.bf16.mxu0 %v5415
    %6055 = vmatpush1.bf16.msra.mxu0 %v5414
    %6056 = vmatprep.subr.bf16.mxu0 %v5408
    %6057 = vmatpush1.bf16.msra.mxu0 %v5407
    %6058 = vmatprep.subr.bf16.mxu0 %v5401
    %6059 = vmatpush1.bf16.msra.mxu0 %v5400
    %6060 = vmatprep.subr.bf16.mxu0 %v5394
    %6061 = vmatpush1.bf16.msra.mxu0 %v5393
    %6062 = vmatprep.subr.bf16.mxu0 %v5387
    %6063 = vmatpush1.bf16.msra.mxu0 %v5386
    %6064 = vmatprep.subr.bf16.mxu0 %v5380
    %6065 = vmatpush1.bf16.msra.mxu0 %v5379
    %6066 = vmatprep.subr.bf16.mxu0 %v5373
    %6067 = vmatpush1.bf16.msra.mxu0 %v5372
    %6068 = vmatprep.subr.bf16.mxu0 %v5366
    %6069 = vmatpush1.bf16.msra.mxu0 %v5365
    %6070 = vmatprep.subr.bf16.mxu0 %v5471
    %6071 = vmatpush2.bf16.msra.mxu0 %v5470
    %6072 = vmatprep.subr.bf16.mxu0 %v5464
    %6073 = vmatpush2.bf16.msra.mxu0 %v5463
    %6074 = vmatprep.subr.bf16.mxu0 %v5457
    %6075 = vmatpush2.bf16.msra.mxu0 %v5456
    %6076 = vmatprep.subr.bf16.mxu0 %v5450
    %6077 = vmatpush2.bf16.msra.mxu0 %v5449
    %6078 = vmatprep.subr.bf16.mxu0 %v5443
    %6079 = vmatpush2.bf16.msra.mxu0 %v5442
    %6080 = vmatprep.subr.bf16.mxu0 %v5436
    %6081 = vmatpush2.bf16.msra.mxu0 %v5435
    %6082 = vmatprep.subr.bf16.mxu0 %v5429
    %6083 = vmatpush2.bf16.msra.mxu0 %v5428
    %6084 = vmatprep.subr.bf16.mxu0 %v5422
    %6085 = vmatpush2.bf16.msra.mxu0 %v5421
    %6086 = vmatprep.mubr.bf16.mxu0 %v3071
    %6087 = vmatmul.mubr.bf16.gmra.mxu0 %v3070
    %v6088 = vpop.f32.mrf.mxu0
    %v6089 = vadd.f32 %v6046, %v6088
    %v6090 = vpop.f32.mrf.mxu0
    %v6091 = vadd.f32 %v6048, %v6090
    %v6092 = vpop.f32.mrf.mxu0
    %v6093 = vadd.f32 %v6050, %v6092
    %v6094 = vpop.f32.mrf.mxu0
    %v6095 = vadd.f32 %v6052, %v6094
    %6096 = vdwg.mxu0
    %6097 = vmatprep.subr.bf16.mxu0 %v5081
    %6098 = vmatpush1.bf16.msra.mxu0 %v5080
    %6099 = vmatprep.subr.bf16.mxu0 %v5074
    %6100 = vmatpush1.bf16.msra.mxu0 %v5073
    %6101 = vmatprep.subr.bf16.mxu0 %v5067
    %6102 = vmatpush1.bf16.msra.mxu0 %v5066
    %6103 = vmatprep.subr.bf16.mxu0 %v5060
    %6104 = vmatpush1.bf16.msra.mxu0 %v5059
    %6105 = vmatprep.subr.bf16.mxu0 %v5053
    %6106 = vmatpush1.bf16.msra.mxu0 %v5052
    %6107 = vmatprep.subr.bf16.mxu0 %v5046
    %6108 = vmatpush1.bf16.msra.mxu0 %v5045
    %6109 = vmatprep.subr.bf16.mxu0 %v5039
    %6110 = vmatpush1.bf16.msra.mxu0 %v5038
    %6111 = vmatprep.subr.bf16.mxu0 %v5032
    %6112 = vmatpush1.bf16.msra.mxu0 %v5031
    %6113 = vmatprep.subr.bf16.mxu0 %v5137
    %6114 = vmatpush2.bf16.msra.mxu0 %v5136
    %6115 = vmatprep.subr.bf16.mxu0 %v5130
    %6116 = vmatpush2.bf16.msra.mxu0 %v5129
    %6117 = vmatprep.subr.bf16.mxu0 %v5123
    %6118 = vmatpush2.bf16.msra.mxu0 %v5122
    %6119 = vmatprep.subr.bf16.mxu0 %v5116
    %6120 = vmatpush2.bf16.msra.mxu0 %v5115
    %6121 = vmatprep.subr.bf16.mxu0 %v5109
    %6122 = vmatpush2.bf16.msra.mxu0 %v5108
    %6123 = vmatprep.subr.bf16.mxu0 %v5102
    %6124 = vmatpush2.bf16.msra.mxu0 %v5101
    %6125 = vmatprep.subr.bf16.mxu0 %v5095
    %6126 = vmatpush2.bf16.msra.mxu0 %v5094
    %6127 = vmatprep.subr.bf16.mxu0 %v5088
    %6128 = vmatpush2.bf16.msra.mxu0 %v5087
    %6129 = vmatprep.mubr.bf16.mxu0 %v3065
    %6130 = vmatmul.mubr.bf16.gmra.mxu0 %v3064
    %v6131 = vpop.f32.mrf.mxu0
    %v6132 = vadd.f32 %v3597, %v6131
    %v6133 = vpop.f32.mrf.mxu0
    %v6134 = vadd.f32 %v3601, %v6133
    %v6135 = vpop.f32.mrf.mxu0
    %v6136 = vadd.f32 %v3597, %v6135
    %v6137 = vpop.f32.mrf.mxu0
    %v6138 = vadd.f32 %v3601, %v6137
    %6139 = vdwg.mxu0
    %6140 = vmatprep.subr.bf16.mxu0 %v5193
    %6141 = vmatpush1.bf16.msra.mxu0 %v5192
    %6142 = vmatprep.subr.bf16.mxu0 %v5186
    %6143 = vmatpush1.bf16.msra.mxu0 %v5185
    %6144 = vmatprep.subr.bf16.mxu0 %v5179
    %6145 = vmatpush1.bf16.msra.mxu0 %v5178
    %6146 = vmatprep.subr.bf16.mxu0 %v5172
    %6147 = vmatpush1.bf16.msra.mxu0 %v5171
    %6148 = vmatprep.subr.bf16.mxu0 %v5165
    %6149 = vmatpush1.bf16.msra.mxu0 %v5164
    %6150 = vmatprep.subr.bf16.mxu0 %v5158
    %6151 = vmatpush1.bf16.msra.mxu0 %v5157
    %6152 = vmatprep.subr.bf16.mxu0 %v5151
    %6153 = vmatpush1.bf16.msra.mxu0 %v5150
    %6154 = vmatprep.subr.bf16.mxu0 %v5144
    %6155 = vmatpush1.bf16.msra.mxu0 %v5143
    %6156 = vmatprep.subr.bf16.mxu0 %v5249
    %6157 = vmatpush2.bf16.msra.mxu0 %v5248
    %6158 = vmatprep.subr.bf16.mxu0 %v5242
    %6159 = vmatpush2.bf16.msra.mxu0 %v5241
    %6160 = vmatprep.subr.bf16.mxu0 %v5235
    %6161 = vmatpush2.bf16.msra.mxu0 %v5234
    %6162 = vmatprep.subr.bf16.mxu0 %v5228
    %6163 = vmatpush2.bf16.msra.mxu0 %v5227
    %6164 = vmatprep.subr.bf16.mxu0 %v5221
    %6165 = vmatpush2.bf16.msra.mxu0 %v5220
    %6166 = vmatprep.subr.bf16.mxu0 %v5214
    %6167 = vmatpush2.bf16.msra.mxu0 %v5213
    %6168 = vmatprep.subr.bf16.mxu0 %v5207
    %6169 = vmatpush2.bf16.msra.mxu0 %v5206
    %6170 = vmatprep.subr.bf16.mxu0 %v5200
    %6171 = vmatpush2.bf16.msra.mxu0 %v5199
    %6172 = vmatprep.mubr.bf16.mxu0 %v3067
    %6173 = vmatmul.mubr.bf16.gmra.mxu0 %v3066
    %v6174 = vpop.f32.mrf.mxu0
    %v6175 = vadd.f32 %v6132, %v6174
    %v6176 = vpop.f32.mrf.mxu0
    %v6177 = vadd.f32 %v6134, %v6176
    %v6178 = vpop.f32.mrf.mxu0
    %v6179 = vadd.f32 %v6136, %v6178
    %v6180 = vpop.f32.mrf.mxu0
    %v6181 = vadd.f32 %v6138, %v6180
    %6182 = vdwg.mxu0
    %6183 = vmatprep.subr.bf16.mxu0 %v5305
    %6184 = vmatpush1.bf16.msra.mxu0 %v5304
    %6185 = vmatprep.subr.bf16.mxu0 %v5298
    %6186 = vmatpush1.bf16.msra.mxu0 %v5297
    %6187 = vmatprep.subr.bf16.mxu0 %v5291
    %6188 = vmatpush1.bf16.msra.mxu0 %v5290
    %6189 = vmatprep.subr.bf16.mxu0 %v5284
    %6190 = vmatpush1.bf16.msra.mxu0 %v5283
    %6191 = vmatprep.subr.bf16.mxu0 %v5277
    %6192 = vmatpush1.bf16.msra.mxu0 %v5276
    %6193 = vmatprep.subr.bf16.mxu0 %v5270
    %6194 = vmatpush1.bf16.msra.mxu0 %v5269
    %6195 = vmatprep.subr.bf16.mxu0 %v5263
    %6196 = vmatpush1.bf16.msra.mxu0 %v5262
    %6197 = vmatprep.subr.bf16.mxu0 %v5256
    %6198 = vmatpush1.bf16.msra.mxu0 %v5255
    %6199 = vmatprep.subr.bf16.mxu0 %v5361
    %6200 = vmatpush2.bf16.msra.mxu0 %v5360
    %6201 = vmatprep.subr.bf16.mxu0 %v5354
    %6202 = vmatpush2.bf16.msra.mxu0 %v5353
    %6203 = vmatprep.subr.bf16.mxu0 %v5347
    %6204 = vmatpush2.bf16.msra.mxu0 %v5346
    %6205 = vmatprep.subr.bf16.mxu0 %v5340
    %6206 = vmatpush2.bf16.msra.mxu0 %v5339
    %6207 = vmatprep.subr.bf16.mxu0 %v5333
    %6208 = vmatpush2.bf16.msra.mxu0 %v5332
    %6209 = vmatprep.subr.bf16.mxu0 %v5326
    %6210 = vmatpush2.bf16.msra.mxu0 %v5325
    %6211 = vmatprep.subr.bf16.mxu0 %v5319
    %6212 = vmatpush2.bf16.msra.mxu0 %v5318
    %6213 = vmatprep.subr.bf16.mxu0 %v5312
    %6214 = vmatpush2.bf16.msra.mxu0 %v5311
    %6215 = vmatprep.mubr.bf16.mxu0 %v3069
    %6216 = vmatmul.mubr.bf16.gmra.mxu0 %v3068
    %v6217 = vpop.f32.mrf.mxu0
    %v6218 = vadd.f32 %v6175, %v6217
    %v6219 = vpop.f32.mrf.mxu0
    %v6220 = vadd.f32 %v6177, %v6219
    %v6221 = vpop.f32.mrf.mxu0
    %v6222 = vadd.f32 %v6179, %v6221
    %v6223 = vpop.f32.mrf.mxu0
    %v6224 = vadd.f32 %v6181, %v6223
    %6225 = vdwg.mxu0
    %6226 = vmatprep.subr.bf16.mxu0 %v5417
    %6227 = vmatpush1.bf16.msra.mxu0 %v5416
    %6228 = vmatprep.subr.bf16.mxu0 %v5410
    %6229 = vmatpush1.bf16.msra.mxu0 %v5409
    %6230 = vmatprep.subr.bf16.mxu0 %v5403
    %6231 = vmatpush1.bf16.msra.mxu0 %v5402
    %6232 = vmatprep.subr.bf16.mxu0 %v5396
    %6233 = vmatpush1.bf16.msra.mxu0 %v5395
    %6234 = vmatprep.subr.bf16.mxu0 %v5389
    %6235 = vmatpush1.bf16.msra.mxu0 %v5388
    %6236 = vmatprep.subr.bf16.mxu0 %v5382
    %6237 = vmatpush1.bf16.msra.mxu0 %v5381
    %6238 = vmatprep.subr.bf16.mxu0 %v5375
    %6239 = vmatpush1.bf16.msra.mxu0 %v5374
    %6240 = vmatprep.subr.bf16.mxu0 %v5368
    %6241 = vmatpush1.bf16.msra.mxu0 %v5367
    %6242 = vmatprep.subr.bf16.mxu0 %v5473
    %6243 = vmatpush2.bf16.msra.mxu0 %v5472
    %6244 = vmatprep.subr.bf16.mxu0 %v5466
    %6245 = vmatpush2.bf16.msra.mxu0 %v5465
    %6246 = vmatprep.subr.bf16.mxu0 %v5459
    %6247 = vmatpush2.bf16.msra.mxu0 %v5458
    %6248 = vmatprep.subr.bf16.mxu0 %v5452
    %6249 = vmatpush2.bf16.msra.mxu0 %v5451
    %6250 = vmatprep.subr.bf16.mxu0 %v5445
    %6251 = vmatpush2.bf16.msra.mxu0 %v5444
    %6252 = vmatprep.subr.bf16.mxu0 %v5438
    %6253 = vmatpush2.bf16.msra.mxu0 %v5437
    %6254 = vmatprep.subr.bf16.mxu0 %v5431
    %6255 = vmatpush2.bf16.msra.mxu0 %v5430
    %6256 = vmatprep.subr.bf16.mxu0 %v5424
    %6257 = vmatpush2.bf16.msra.mxu0 %v5423
    %6258 = vmatprep.mubr.bf16.mxu0 %v3071
    %6259 = vmatmul.mubr.bf16.gmra.mxu0 %v3070
    %v6260 = vpop.f32.mrf.mxu0
    %v6261 = vadd.f32 %v6218, %v6260
    %v6262 = vpop.f32.mrf.mxu0
    %v6263 = vadd.f32 %v6220, %v6262
    %v6264 = vpop.f32.mrf.mxu0
    %v6265 = vadd.f32 %v6222, %v6264
    %v6266 = vpop.f32.mrf.mxu0
    %v6267 = vadd.f32 %v6224, %v6266
    %6268 = vdwg.mxu0
    %6269 = vmatprep.subr.bf16.mxu0 %v5083
    %6270 = vmatpush1.bf16.msra.mxu0 %v5082
    %6271 = vmatprep.subr.bf16.mxu0 %v5076
    %6272 = vmatpush1.bf16.msra.mxu0 %v5075
    %6273 = vmatprep.subr.bf16.mxu0 %v5069
    %6274 = vmatpush1.bf16.msra.mxu0 %v5068
    %6275 = vmatprep.subr.bf16.mxu0 %v5062
    %6276 = vmatpush1.bf16.msra.mxu0 %v5061
    %6277 = vmatprep.subr.bf16.mxu0 %v5055
    %6278 = vmatpush1.bf16.msra.mxu0 %v5054
    %6279 = vmatprep.subr.bf16.mxu0 %v5048
    %6280 = vmatpush1.bf16.msra.mxu0 %v5047
    %6281 = vmatprep.subr.bf16.mxu0 %v5041
    %6282 = vmatpush1.bf16.msra.mxu0 %v5040
    %6283 = vmatprep.subr.bf16.mxu0 %v5034
    %6284 = vmatpush1.bf16.msra.mxu0 %v5033
    %6285 = vmatprep.subr.bf16.mxu0 %v5139
    %6286 = vmatpush2.bf16.msra.mxu0 %v5138
    %6287 = vmatprep.subr.bf16.mxu0 %v5132
    %6288 = vmatpush2.bf16.msra.mxu0 %v5131
    %6289 = vmatprep.subr.bf16.mxu0 %v5125
    %6290 = vmatpush2.bf16.msra.mxu0 %v5124
    %6291 = vmatprep.subr.bf16.mxu0 %v5118
    %6292 = vmatpush2.bf16.msra.mxu0 %v5117
    %6293 = vmatprep.subr.bf16.mxu0 %v5111
    %6294 = vmatpush2.bf16.msra.mxu0 %v5110
    %6295 = vmatprep.subr.bf16.mxu0 %v5104
    %6296 = vmatpush2.bf16.msra.mxu0 %v5103
    %6297 = vmatprep.subr.bf16.mxu0 %v5097
    %6298 = vmatpush2.bf16.msra.mxu0 %v5096
    %6299 = vmatprep.subr.bf16.mxu0 %v5090
    %6300 = vmatpush2.bf16.msra.mxu0 %v5089
    %6301 = vmatprep.mubr.bf16.mxu0 %v3065
    %6302 = vmatmul.mubr.bf16.gmra.mxu0 %v3064
    %v6303 = vpop.f32.mrf.mxu0
    %v6304 = vadd.f32 %v3605, %v6303
    %v6305 = vpop.f32.mrf.mxu0
    %v6306 = vadd.f32 %v3609, %v6305
    %v6307 = vpop.f32.mrf.mxu0
    %v6308 = vadd.f32 %v3605, %v6307
    %v6309 = vpop.f32.mrf.mxu0
    %v6310 = vadd.f32 %v3609, %v6309
    %6311 = vdwg.mxu0
    %6312 = vmatprep.subr.bf16.mxu0 %v5195
    %6313 = vmatpush1.bf16.msra.mxu0 %v5194
    %6314 = vmatprep.subr.bf16.mxu0 %v5188
    %6315 = vmatpush1.bf16.msra.mxu0 %v5187
    %6316 = vmatprep.subr.bf16.mxu0 %v5181
    %6317 = vmatpush1.bf16.msra.mxu0 %v5180
    %6318 = vmatprep.subr.bf16.mxu0 %v5174
    %6319 = vmatpush1.bf16.msra.mxu0 %v5173
    %6320 = vmatprep.subr.bf16.mxu0 %v5167
    %6321 = vmatpush1.bf16.msra.mxu0 %v5166
    %6322 = vmatprep.subr.bf16.mxu0 %v5160
    %6323 = vmatpush1.bf16.msra.mxu0 %v5159
    %6324 = vmatprep.subr.bf16.mxu0 %v5153
    %6325 = vmatpush1.bf16.msra.mxu0 %v5152
    %6326 = vmatprep.subr.bf16.mxu0 %v5146
    %6327 = vmatpush1.bf16.msra.mxu0 %v5145
    %6328 = vmatprep.subr.bf16.mxu0 %v5251
    %6329 = vmatpush2.bf16.msra.mxu0 %v5250
    %6330 = vmatprep.subr.bf16.mxu0 %v5244
    %6331 = vmatpush2.bf16.msra.mxu0 %v5243
    %6332 = vmatprep.subr.bf16.mxu0 %v5237
    %6333 = vmatpush2.bf16.msra.mxu0 %v5236
    %6334 = vmatprep.subr.bf16.mxu0 %v5230
    %6335 = vmatpush2.bf16.msra.mxu0 %v5229
    %6336 = vmatprep.subr.bf16.mxu0 %v5223
    %6337 = vmatpush2.bf16.msra.mxu0 %v5222
    %6338 = vmatprep.subr.bf16.mxu0 %v5216
    %6339 = vmatpush2.bf16.msra.mxu0 %v5215
    %6340 = vmatprep.subr.bf16.mxu0 %v5209
    %6341 = vmatpush2.bf16.msra.mxu0 %v5208
    %6342 = vmatprep.subr.bf16.mxu0 %v5202
    %6343 = vmatpush2.bf16.msra.mxu0 %v5201
    %6344 = vmatprep.mubr.bf16.mxu0 %v3067
    %6345 = vmatmul.mubr.bf16.gmra.mxu0 %v3066
    %v6346 = vpop.f32.mrf.mxu0
    %v6347 = vadd.f32 %v6304, %v6346
    %v6348 = vpop.f32.mrf.mxu0
    %v6349 = vadd.f32 %v6306, %v6348
    %v6350 = vpop.f32.mrf.mxu0
    %v6351 = vadd.f32 %v6308, %v6350
    %v6352 = vpop.f32.mrf.mxu0
    %v6353 = vadd.f32 %v6310, %v6352
    %6354 = vdwg.mxu0
    %6355 = vmatprep.subr.bf16.mxu0 %v5307
    %6356 = vmatpush1.bf16.msra.mxu0 %v5306
    %6357 = vmatprep.subr.bf16.mxu0 %v5300
    %6358 = vmatpush1.bf16.msra.mxu0 %v5299
    %6359 = vmatprep.subr.bf16.mxu0 %v5293
    %6360 = vmatpush1.bf16.msra.mxu0 %v5292
    %6361 = vmatprep.subr.bf16.mxu0 %v5286
    %6362 = vmatpush1.bf16.msra.mxu0 %v5285
    %6363 = vmatprep.subr.bf16.mxu0 %v5279
    %6364 = vmatpush1.bf16.msra.mxu0 %v5278
    %6365 = vmatprep.subr.bf16.mxu0 %v5272
    %6366 = vmatpush1.bf16.msra.mxu0 %v5271
    %6367 = vmatprep.subr.bf16.mxu0 %v5265
    %6368 = vmatpush1.bf16.msra.mxu0 %v5264
    %6369 = vmatprep.subr.bf16.mxu0 %v5258
    %6370 = vmatpush1.bf16.msra.mxu0 %v5257
    %6371 = vmatprep.subr.bf16.mxu0 %v5363
    %6372 = vmatpush2.bf16.msra.mxu0 %v5362
    %6373 = vmatprep.subr.bf16.mxu0 %v5356
    %6374 = vmatpush2.bf16.msra.mxu0 %v5355
    %6375 = vmatprep.subr.bf16.mxu0 %v5349
    %6376 = vmatpush2.bf16.msra.mxu0 %v5348
    %6377 = vmatprep.subr.bf16.mxu0 %v5342
    %6378 = vmatpush2.bf16.msra.mxu0 %v5341
    %6379 = vmatprep.subr.bf16.mxu0 %v5335
    %6380 = vmatpush2.bf16.msra.mxu0 %v5334
    %6381 = vmatprep.subr.bf16.mxu0 %v5328
    %6382 = vmatpush2.bf16.msra.mxu0 %v5327
    %6383 = vmatprep.subr.bf16.mxu0 %v5321
    %6384 = vmatpush2.bf16.msra.mxu0 %v5320
    %6385 = vmatprep.subr.bf16.mxu0 %v5314
    %6386 = vmatpush2.bf16.msra.mxu0 %v5313
    %6387 = vmatprep.mubr.bf16.mxu0 %v3069
    %6388 = vmatmul.mubr.bf16.gmra.mxu0 %v3068
    %v6389 = vpop.f32.mrf.mxu0
    %v6390 = vadd.f32 %v6347, %v6389
    %v6391 = vpop.f32.mrf.mxu0
    %v6392 = vadd.f32 %v6349, %v6391
    %v6393 = vpop.f32.mrf.mxu0
    %v6394 = vadd.f32 %v6351, %v6393
    %v6395 = vpop.f32.mrf.mxu0
    %v6396 = vadd.f32 %v6353, %v6395
    %6397 = vdwg.mxu0
    %6398 = vmatprep.subr.bf16.mxu0 %v5419
    %6399 = vmatpush1.bf16.msra.mxu0 %v5418
    %6400 = vmatprep.subr.bf16.mxu0 %v5412
    %6401 = vmatpush1.bf16.msra.mxu0 %v5411
    %6402 = vmatprep.subr.bf16.mxu0 %v5405
    %6403 = vmatpush1.bf16.msra.mxu0 %v5404
    %6404 = vmatprep.subr.bf16.mxu0 %v5398
    %6405 = vmatpush1.bf16.msra.mxu0 %v5397
    %6406 = vmatprep.subr.bf16.mxu0 %v5391
    %6407 = vmatpush1.bf16.msra.mxu0 %v5390
    %6408 = vmatprep.subr.bf16.mxu0 %v5384
    %6409 = vmatpush1.bf16.msra.mxu0 %v5383
    %6410 = vmatprep.subr.bf16.mxu0 %v5377
    %6411 = vmatpush1.bf16.msra.mxu0 %v5376
    %6412 = vmatprep.subr.bf16.mxu0 %v5370
    %6413 = vmatpush1.bf16.msra.mxu0 %v5369
    %6414 = vmatprep.subr.bf16.mxu0 %v5475
    %6415 = vmatpush2.bf16.msra.mxu0 %v5474
    %6416 = vmatprep.subr.bf16.mxu0 %v5468
    %6417 = vmatpush2.bf16.msra.mxu0 %v5467
    %6418 = vmatprep.subr.bf16.mxu0 %v5461
    %6419 = vmatpush2.bf16.msra.mxu0 %v5460
    %6420 = vmatprep.subr.bf16.mxu0 %v5454
    %6421 = vmatpush2.bf16.msra.mxu0 %v5453
    %6422 = vmatprep.subr.bf16.mxu0 %v5447
    %6423 = vmatpush2.bf16.msra.mxu0 %v5446
    %6424 = vmatprep.subr.bf16.mxu0 %v5440
    %6425 = vmatpush2.bf16.msra.mxu0 %v5439
    %6426 = vmatprep.subr.bf16.mxu0 %v5433
    %6427 = vmatpush2.bf16.msra.mxu0 %v5432
    %6428 = vmatprep.subr.bf16.mxu0 %v5426
    %6429 = vmatpush2.bf16.msra.mxu0 %v5425
    %6430 = vmatprep.mubr.bf16.mxu0 %v3071
    %6431 = vmatmul.mubr.bf16.gmra.mxu0 %v3070
    %v6432 = vpop.f32.mrf.mxu0
    %v6433 = vadd.f32 %v6390, %v6432
    %v6434 = vpop.f32.mrf.mxu0
    %v6435 = vadd.f32 %v6392, %v6434
    %v6436 = vpop.f32.mrf.mxu0
    %v6437 = vadd.f32 %v6394, %v6436
    %v6438 = vpop.f32.mrf.mxu0
    %v6439 = vadd.f32 %v6396, %v6438
    %6440 = vdwg.mxu0
    %6441 = vmatprep.subr.bf16.mxu0 0
    %6442 = vmatpush1.bf16.msra.mxu0 %v5084
    %6443 = vmatprep.subr.bf16.mxu0 0
    %6444 = vmatpush1.bf16.msra.mxu0 %v5077
    %6445 = vmatprep.subr.bf16.mxu0 0
    %6446 = vmatpush1.bf16.msra.mxu0 %v5070
    %6447 = vmatprep.subr.bf16.mxu0 0
    %6448 = vmatpush1.bf16.msra.mxu0 %v5063
    %6449 = vmatprep.subr.bf16.mxu0 0
    %6450 = vmatpush1.bf16.msra.mxu0 %v5056
    %6451 = vmatprep.subr.bf16.mxu0 0
    %6452 = vmatpush1.bf16.msra.mxu0 %v5049
    %6453 = vmatprep.subr.bf16.mxu0 0
    %6454 = vmatpush1.bf16.msra.mxu0 %v5042
    %6455 = vmatprep.subr.bf16.mxu0 0
    %6456 = vmatpush1.bf16.msra.mxu0 %v5035
    %6457 = vmatprep.subr.bf16.mxu0 0
    %6458 = vmatpush2.bf16.msra.mxu0 %v5140
    %6459 = vmatprep.subr.bf16.mxu0 0
    %6460 = vmatpush2.bf16.msra.mxu0 %v5133
    %6461 = vmatprep.subr.bf16.mxu0 0
    %6462 = vmatpush2.bf16.msra.mxu0 %v5126
    %6463 = vmatprep.subr.bf16.mxu0 0
    %6464 = vmatpush2.bf16.msra.mxu0 %v5119
    %6465 = vmatprep.subr.bf16.mxu0 0
    %6466 = vmatpush2.bf16.msra.mxu0 %v5112
    %6467 = vmatprep.subr.bf16.mxu0 0
    %6468 = vmatpush2.bf16.msra.mxu0 %v5105
    %6469 = vmatprep.subr.bf16.mxu0 0
    %6470 = vmatpush2.bf16.msra.mxu0 %v5098
    %6471 = vmatprep.subr.bf16.mxu0 0
    %6472 = vmatpush2.bf16.msra.mxu0 %v5091
    %6473 = vmatprep.mubr.bf16.mxu0 %v3065
    %6474 = vmatmul.mubr.bf16.gmra.mxu0 %v3064
    %v6475 = vpop.f32.mrf.mxu0
    %v6476 = vadd.f32 %v3613, %v6475
    %v6477 = vpop.f32.mrf.mxu0
    %v6478 = vpop.f32.mrf.mxu0
    %v6479 = vadd.f32 %v3613, %v6478
    %v6480 = vpop.f32.mrf.mxu0
    %6481 = vdwg.mxu0
    %6482 = vmatprep.subr.bf16.mxu0 0
    %6483 = vmatpush1.bf16.msra.mxu0 %v5196
    %6484 = vmatprep.subr.bf16.mxu0 0
    %6485 = vmatpush1.bf16.msra.mxu0 %v5189
    %6486 = vmatprep.subr.bf16.mxu0 0
    %6487 = vmatpush1.bf16.msra.mxu0 %v5182
    %6488 = vmatprep.subr.bf16.mxu0 0
    %6489 = vmatpush1.bf16.msra.mxu0 %v5175
    %6490 = vmatprep.subr.bf16.mxu0 0
    %6491 = vmatpush1.bf16.msra.mxu0 %v5168
    %6492 = vmatprep.subr.bf16.mxu0 0
    %6493 = vmatpush1.bf16.msra.mxu0 %v5161
    %6494 = vmatprep.subr.bf16.mxu0 0
    %6495 = vmatpush1.bf16.msra.mxu0 %v5154
    %6496 = vmatprep.subr.bf16.mxu0 0
    %6497 = vmatpush1.bf16.msra.mxu0 %v5147
    %6498 = vmatprep.subr.bf16.mxu0 0
    %6499 = vmatpush2.bf16.msra.mxu0 %v5252
    %6500 = vmatprep.subr.bf16.mxu0 0
    %6501 = vmatpush2.bf16.msra.mxu0 %v5245
    %6502 = vmatprep.subr.bf16.mxu0 0
    %6503 = vmatpush2.bf16.msra.mxu0 %v5238
    %6504 = vmatprep.subr.bf16.mxu0 0
    %6505 = vmatpush2.bf16.msra.mxu0 %v5231
    %6506 = vmatprep.subr.bf16.mxu0 0
    %6507 = vmatpush2.bf16.msra.mxu0 %v5224
    %6508 = vmatprep.subr.bf16.mxu0 0
    %6509 = vmatpush2.bf16.msra.mxu0 %v5217
    %6510 = vmatprep.subr.bf16.mxu0 0
    %6511 = vmatpush2.bf16.msra.mxu0 %v5210
    %6512 = vmatprep.subr.bf16.mxu0 0
    %6513 = vmatpush2.bf16.msra.mxu0 %v5203
    %6514 = vmatprep.mubr.bf16.mxu0 %v3067
    %6515 = vmatmul.mubr.bf16.gmra.mxu0 %v3066
    %v6516 = vpop.f32.mrf.mxu0
    %v6517 = vadd.f32 %v6476, %v6516
    %v6518 = vpop.f32.mrf.mxu0
    %v6519 = vpop.f32.mrf.mxu0
    %v6520 = vadd.f32 %v6479, %v6519
    %v6521 = vpop.f32.mrf.mxu0
    %6522 = vdwg.mxu0
    %6523 = vmatprep.subr.bf16.mxu0 0
    %6524 = vmatpush1.bf16.msra.mxu0 %v5308
    %6525 = vmatprep.subr.bf16.mxu0 0
    %6526 = vmatpush1.bf16.msra.mxu0 %v5301
    %6527 = vmatprep.subr.bf16.mxu0 0
    %6528 = vmatpush1.bf16.msra.mxu0 %v5294
    %6529 = vmatprep.subr.bf16.mxu0 0
    %6530 = vmatpush1.bf16.msra.mxu0 %v5287
    %6531 = vmatprep.subr.bf16.mxu0 0
    %6532 = vmatpush1.bf16.msra.mxu0 %v5280
    %6533 = vmatprep.subr.bf16.mxu0 0
    %6534 = vmatpush1.bf16.msra.mxu0 %v5273
    %6535 = vmatprep.subr.bf16.mxu0 0
    %6536 = vmatpush1.bf16.msra.mxu0 %v5266
    %6537 = vmatprep.subr.bf16.mxu0 0
    %6538 = vmatpush1.bf16.msra.mxu0 %v5259
    %6539 = vmatprep.subr.bf16.mxu0 0
    %6540 = vmatpush2.bf16.msra.mxu0 %v5364
    %6541 = vmatprep.subr.bf16.mxu0 0
    %6542 = vmatpush2.bf16.msra.mxu0 %v5357
    %6543 = vmatprep.subr.bf16.mxu0 0
    %6544 = vmatpush2.bf16.msra.mxu0 %v5350
    %6545 = vmatprep.subr.bf16.mxu0 0
    %6546 = vmatpush2.bf16.msra.mxu0 %v5343
    %6547 = vmatprep.subr.bf16.mxu0 0
    %6548 = vmatpush2.bf16.msra.mxu0 %v5336
    %6549 = vmatprep.subr.bf16.mxu0 0
    %6550 = vmatpush2.bf16.msra.mxu0 %v5329
    %6551 = vmatprep.subr.bf16.mxu0 0
    %6552 = vmatpush2.bf16.msra.mxu0 %v5322
    %6553 = vmatprep.subr.bf16.mxu0 0
    %6554 = vmatpush2.bf16.msra.mxu0 %v5315
    %6555 = vmatprep.mubr.bf16.mxu0 %v3069
    %6556 = vmatmul.mubr.bf16.gmra.mxu0 %v3068
    %v6557 = vpop.f32.mrf.mxu0
    %v6558 = vadd.f32 %v6517, %v6557
    %v6559 = vpop.f32.mrf.mxu0
    %v6560 = vpop.f32.mrf.mxu0
    %v6561 = vadd.f32 %v6520, %v6560
    %v6562 = vpop.f32.mrf.mxu0
    %6563 = vdwg.mxu0
    %6564 = vmatprep.subr.bf16.mxu0 0
    %6565 = vmatpush1.bf16.msra.mxu0 %v5420
    %6566 = vmatprep.subr.bf16.mxu0 0
    %6567 = vmatpush1.bf16.msra.mxu0 %v5413
    %6568 = vmatprep.subr.bf16.mxu0 0
    %6569 = vmatpush1.bf16.msra.mxu0 %v5406
    %6570 = vmatprep.subr.bf16.mxu0 0
    %6571 = vmatpush1.bf16.msra.mxu0 %v5399
    %6572 = vmatprep.subr.bf16.mxu0 0
    %6573 = vmatpush1.bf16.msra.mxu0 %v5392
    %6574 = vmatprep.subr.bf16.mxu0 0
    %6575 = vmatpush1.bf16.msra.mxu0 %v5385
    %6576 = vmatprep.subr.bf16.mxu0 0
    %6577 = vmatpush1.bf16.msra.mxu0 %v5378
    %6578 = vmatprep.subr.bf16.mxu0 0
    %6579 = vmatpush1.bf16.msra.mxu0 %v5371
    %6580 = vmatprep.subr.bf16.mxu0 0
    %6581 = vmatpush2.bf16.msra.mxu0 %v5476
    %6582 = vmatprep.subr.bf16.mxu0 0
    %6583 = vmatpush2.bf16.msra.mxu0 %v5469
    %6584 = vmatprep.subr.bf16.mxu0 0
    %6585 = vmatpush2.bf16.msra.mxu0 %v5462
    %6586 = vmatprep.subr.bf16.mxu0 0
    %6587 = vmatpush2.bf16.msra.mxu0 %v5455
    %6588 = vmatprep.subr.bf16.mxu0 0
    %6589 = vmatpush2.bf16.msra.mxu0 %v5448
    %6590 = vmatprep.subr.bf16.mxu0 0
    %6591 = vmatpush2.bf16.msra.mxu0 %v5441
    %6592 = vmatprep.subr.bf16.mxu0 0
    %6593 = vmatpush2.bf16.msra.mxu0 %v5434
    %6594 = vmatprep.subr.bf16.mxu0 0
    %6595 = vmatpush2.bf16.msra.mxu0 %v5427
    %6596 = vmatprep.mubr.bf16.mxu0 %v3071
    %6597 = vmatmul.mubr.bf16.gmra.mxu0 %v3070
    %v6598 = vpop.f32.mrf.mxu0
    %v6599 = vadd.f32 %v6558, %v6598
    %v6600 = vpop.f32.mrf.mxu0
    %v6601 = vpop.f32.mrf.mxu0
    %v6602 = vadd.f32 %v6561, %v6601
    %v6603 = vpop.f32.mrf.mxu0
    %6604 = vdwg.mxu0
    %v6605 = vtanh.pop %v6089
    %v6606 = vtanh.pop %v6091
    %v6607 = vtanh.pop %v6261
    %v6608 = vtanh.pop %v6263
    %v6609 = vtanh.pop %v6433
    %v6610 = vtanh.pop %v6435
    %v6611 = vtanh.pop %v6599
    %v6612 = vtanh.pop %v6093
    %v6613 = vtanh.pop %v6095
    %v6614 = vtanh.pop %v6265
    %v6615 = vtanh.pop %v6267
    %v6616 = vtanh.pop %v6437
    %v6617 = vtanh.pop %v6439
    %v6618 = vtanh.pop %v6602
    %v6619 = vpack.c.bf16 %v6612, %v6605
    %v6620 = vpack.c.bf16 %v6613, %v6606
    %v6621 = vpack.c.bf16 %v6614, %v6607
    %v6622 = vpack.c.bf16 %v6615, %v6608
    %v6623 = vpack.c.bf16 %v6616, %v6609
    %v6624 = vpack.c.bf16 %v6617, %v6610
    %v6625 = vpack.c.bf16 %v6618, %v6611
    %v6633 = vunpack.c.l.b16 %v6619
    %v6634 = vunpack.c.l.b16 %v6620
    %v6635 = vunpack.c.l.b16 %v6621
    %v6636 = vunpack.c.l.b16 %v6622
    %v6637 = vunpack.c.l.b16 %v6623
    %v6638 = vunpack.c.l.b16 %v6624
    %v6639 = vunpack.c.l.b16 %v6625
    %v6640 = vunpack.c.h.b16 %v6619
    %v6641 = vunpack.c.h.b16 %v6620
    %v6642 = vunpack.c.h.b16 %v6621
    %v6643 = vunpack.c.h.b16 %v6622
    %v6644 = vunpack.c.h.b16 %v6623
    %v6645 = vunpack.c.h.b16 %v6624
    %v6646 = vunpack.c.h.b16 %v6625
    %v6647 = vpack.c.b16 %v6634, %v6633
    %v6648 = vpack.c.b16 %v6636, %v6635
    %v6649 = vpack.c.b16 %v6638, %v6637
    %v6650 = vpack.c.b16 %v6639, %v6639
    %v6651 = vpack.c.b16 %v6641, %v6640
    %v6652 = vpack.c.b16 %v6643, %v6642
    %v6653 = vpack.c.b16 %v6645, %v6644
    %v6654 = vpack.c.b16 %v6646, %v6646
    %6663 = vst [vmem:[#allocation23] sm:$0xff] %v6647
    %6664 = vst [vmem:[#allocation23 + $0x8] sm:$0xff] %v6648
    %6665 = vst [vmem:[#allocation23 + $0x10] sm:$0xff] %v6649
    %6666 = vst [vmem:[#allocation23 + $0x18] sm:$0xf] %v6650
    %6667 = vst [vmem:[#allocation23 + $0x1c] sm:$0xff] %v6651
    %6668 = vst [vmem:[#allocation23 + $0x24] sm:$0xff] %v6652
    %6669 = vst [vmem:[#allocation23 + $0x2c] sm:$0xff] %v6653
    %6670 = vst [vmem:[#allocation23 + $0x34] sm:$0xf] %v6654
    // Predicated region
    $region110: #{generator_forward.1} parent=1 // pred_check
      _
    $region111: #{generator_forward.1} parent=1 // pred_check_branch
      %6672 = sbr.rel (0) target = $region113
    $region112: #{generator_forward.1} parent=1 // pred_region
      %s6674 = ssub.s32 896, 896
      %6675 = vsyncadd [#allocation4], %s6674
      %s6676 = sshll.u32 [#allocation23], 4
      %s6677 = int_to_ptr.vmem [resolvable:$true] %s6676
      %6682 = dma.vmem_to_hbm [thread:$0]  %s6677, 896, %s14, [#allocation4], 448, 448, 28
    $region113: #{generator_forward.1} parent=1 // pred_fallthru
      _
    // Predicated region
    $region114: #{generator_forward.1} parent=1 // pred_check
      _
    $region115: #{generator_forward.1} parent=1 // pred_check_branch
      %6684 = sbr.rel (0) target = $region117
    $region116: #{generator_forward.1} parent=1 // pred_region
      %6685 = dma.done [#allocation4], 896
    $region117: #{generator_forward.1} parent=1 // pred_fallthru
      _
    %6686 = vsyncpa [#allocation3], 1
    %6687 = vsyncpa [#allocation6], 1
    %6688 = vsyncpa [#allocation9], 1
    %6689 = vsyncpa [#allocation12], 1
    %6690 = vsyncpa [#allocation15], 1
    %6691 = vsyncpa [#allocation18], 1
    %6692 = vsyncpa [#allocation21], 1
    %6693 = vsyncpa [#allocation4], 1

// kernel: generator_forward.1
$region0: #{generator_forward.1}
  #allocation0 [shape = 'u32[]', space=smem, size = 0x4, offset = 0x4, fixed_abs, tag = 'smem constant byte address 0x4 - core index']
  #allocation1 [shape = 'u32[144,128]{1,0:T(1,128)}', space=vmem, size = 0x12000, scoped, tag = 'internal scratch']
  %s0 = inlined_call_operand.vmem [shape: bf16[16,64], index: 0, kind: input, shape index: {}]
  %s1 = inlined_call_operand.hbm [shape: bf16[64,128], index: 1, kind: input, shape index: {}]
  %s2 = inlined_call_operand.hbm [shape: f32[1,128], index: 2, kind: input, shape index: {}]
  %s3 = inlined_call_operand.hbm [shape: bf16[128,256], index: 3, kind: input, shape index: {}]
  %s4 = inlined_call_operand.hbm [shape: f32[1,256], index: 4, kind: input, shape index: {}]
  %s5 = inlined_call_operand.hbm [shape: f32[1,256], index: 5, kind: input, shape index: {}]
  %s6 = inlined_call_operand.hbm [shape: bf16[256,512], index: 6, kind: input, shape index: {}]
  %s7 = inlined_call_operand.hbm [shape: f32[1,512], index: 7, kind: input, shape index: {}]
  %s8 = inlined_call_operand.hbm [shape: f32[1,512], index: 8, kind: input, shape index: {}]
  %s9 = inlined_call_operand.hbm [shape: bf16[512,1024], index: 9, kind: input, shape index: {}]
  %s10 = inlined_call_operand.hbm [shape: f32[1,1024], index: 10, kind: input, shape index: {}]
  %s11 = inlined_call_operand.hbm [shape: f32[1,1024], index: 11, kind: input, shape index: {}]
  %s12 = inlined_call_operand.hbm [shape: bf16[1024,896], index: 12, kind: input, shape index: {}]
  %s13 = inlined_call_operand.hbm [shape: f32[1,896], index: 13, kind: input, shape index: {}]
  %s14 = inlined_call_operand.hbm [shape: bf16[16,896], index: 14, kind: output, shape index: {}]
  %s15 = sld [smem:[#allocation0]]
  $region118: #{generator_forward.1} parent=0
    _
  %s17 = ssub.s32 1, %s15
  %s18 = scalar_select 0, %s17, %s15
  $region1: #{generator_forward.1} parent=0
    #allocation2 [shape = 'u8[16384]{0}', space=vmem, size = 0x4000, scoped, tag = 'input window, operand 1, single buffered']
    #allocation3 [shape = 's32[1]{0}', space=sflag, size = 0x4, scoped, tag = 'scoped memory for generator_forward.1']
    #allocation4 [shape = 's32[1]{0}', space=sflag, size = 0x4, scoped, tag = 'scoped memory for generator_forward.1']
    #allocation5 [shape = 'u8[512]{0}', space=vmem, size = 0x400, scoped, tag = 'input window, operand 2, single buffered']
    #allocation6 [shape = 's32[1]{0}', space=sflag, size = 0x4, scoped, tag = 'scoped memory for generator_forward.1']
    #allocation7 [shape = 'u8[65536]{0}', space=vmem, size = 0x10000, scoped, tag = 'input window, operand 3, single buffered']
    #allocation8 [shape = 'u8[1024]{0}', space=vmem, size = 0x400, scoped, tag = 'input window, operand 4, single buffered']
    #allocation9 [shape = 's32[1]{0}', space=sflag, size = 0x4, scoped, tag = 'scoped memory for generator_forward.1']
    #allocation10 [shape = 'u8[1024]{0}', space=vmem, size = 0x400, scoped, tag = 'input window, operand 5, single buffered']
    #allocation11 [shape = 'u8[262144]{0}', space=vmem, size = 0x40000, scoped, tag = 'input window, operand 6, single buffered']
    #allocation12 [shape = 's32[1]{0}', space=sflag, size = 0x4, scoped, tag = 'scoped memory for generator_forward.1']
    #allocation13 [shape = 'u8[2048]{0}', space=vmem, size = 0x800, scoped, tag = 'input window, operand 7, single buffered']
    #allocation14 [shape = 'u8[2048]{0}', space=vmem, size = 0x800, scoped, tag = 'input window, operand 8, single buffered']
    #allocation15 [shape = 's32[1]{0}', space=sflag, size = 0x4, scoped, tag = 'scoped memory for generator_forward.1']
    #allocation16 [shape = 'u8[1048576]{0}', space=vmem, size = 0x100000, scoped, tag = 'input window, operand 9, single buffered']
    #allocation17 [shape = 'u8[4096]{0}', space=vmem, size = 0x1000, scoped, tag = 'input window, operand 10, single buffered']
    #allocation18 [shape = 's32[1]{0}', space=sflag, size = 0x4, scoped, tag = 'scoped memory for generator_forward.1']
    #allocation19 [shape = 'u8[4096]{0}', space=vmem, size = 0x1000, scoped, tag = 'input window, operand 11, single buffered']
    #allocation20 [shape = 'u8[1835008]{0}', space=vmem, size = 0x1c0000, scoped, tag = 'input window, operand 12, single buffered']
    #allocation21 [shape = 's32[1]{0}', space=sflag, size = 0x4, scoped, tag = 'scoped memory for generator_forward.1']
    #allocation22 [shape = 'u8[3584]{0}', space=vmem, size = 0x1000, scoped, tag = 'input window, operand 13, single buffered']
    #allocation23 [shape = 'u8[28672]{0}', space=vmem, size = 0x7000, scoped, tag = 'output window, operand 0, single buffered']
    %19 = vsyncpa [#allocation3], 0
    %20 = vsyncpa [#allocation6], 0
    %21 = vsyncpa [#allocation9], 0
    %22 = vsyncpa [#allocation12], 0
    %23 = vsyncpa [#allocation15], 0
    %24 = vsyncpa [#allocation18], 0
    %25 = vsyncpa [#allocation21], 0
    %26 = vsyncpa [#allocation4], 0
    // Predicated region
    $region2: #{generator_forward.1} parent=1 // pred_check
      _
    $region3: #{generator_forward.1} parent=1 // pred_check_branch
      %28 = sbr.rel (0) target = $region5
    $region4: #{generator_forward.1} parent=1 // pred_region
      _
    $region5: #{generator_forward.1} parent=1 // pred_fallthru
      _
    // Predicated region
    $region6: #{generator_forward.1} parent=1 // pred_check
      _
    $region7: #{generator_forward.1} parent=1 // pred_check_branch
      %30 = sbr.rel (0) target = $region9
    $region8: #{generator_forward.1} parent=1 // pred_region
      %s32 = ssub.s32 512, 512
      %33 = vsyncadd [#allocation3], %s32
      %s34 = sshll.u32 [#allocation2], 4
      %s35 = int_to_ptr.vmem [resolvable:$true] %s34
      %40 = dma.hbm_to_vmem [thread:$0]  %s1, 512, %s35, [#allocation3], 64, 64, 4
    $region9: #{generator_forward.1} parent=1 // pred_fallthru
      _
    // Predicated region
    $region10: #{generator_forward.1} parent=1 // pred_check
      _
    $region11: #{generator_forward.1} parent=1 // pred_check_branch
      %42 = sbr.rel (0) target = $region13
    $region12: #{generator_forward.1} parent=1 // pred_region
      %s44 = ssub.s32 16, 16
      %45 = vsyncadd [#allocation6], %s44
      %s47 = sshll.u32 [#allocation5], 4
      %s48 = int_to_ptr.vmem [resolvable:$true] %s47
      %50 = dma.hbm_to_vmem [thread:$0]  %s2, 16, %s48, [#allocation6]
    $region13: #{generator_forward.1} parent=1 // pred_fallthru
      _
    // Predicated region
    $region14: #{generator_forward.1} parent=1 // pred_check
      _
    $region15: #{generator_forward.1} parent=1 // pred_check_branch
      %52 = sbr.rel (0) target = $region17
    $region16: #{generator_forward.1} parent=1 // pred_region
      %s54 = ssub.s32 2048, 2048
      %55 = vsyncadd [#allocation6], %s54
      %s56 = sshll.u32 [#allocation7], 4
      %s57 = int_to_ptr.vmem [resolvable:$true] %s56
      %62 = dma.hbm_to_vmem [thread:$0]  %s3, 2048, %s57, [#allocation6], 128, 128, 8
    $region17: #{generator_forward.1} parent=1 // pred_fallthru
      _
    // Predicated region
    $region18: #{generator_forward.1} parent=1 // pred_check
      _
    $region19: #{generator_forward.1} parent=1 // pred_check_branch
      %64 = sbr.rel (0) target = $region21
    $region20: #{generator_forward.1} parent=1 // pred_region
      %s66 = ssub.s32 32, 32
      %67 = vsyncadd [#allocation9], %s66
      %s69 = sshll.u32 [#allocation8], 4
      %s70 = int_to_ptr.vmem [resolvable:$true] %s69
      %72 = dma.hbm_to_vmem [thread:$0]  %s4, 32, %s70, [#allocation9]
    $region21: #{generator_forward.1} parent=1 // pred_fallthru
      _
    // Predicated region
    $region22: #{generator_forward.1} parent=1 // pred_check
      _
    $region23: #{generator_forward.1} parent=1 // pred_check_branch
      %74 = sbr.rel (0) target = $region25
    $region24: #{generator_forward.1} parent=1 // pred_region
      %s76 = ssub.s32 32, 32
      %77 = vsyncadd [#allocation9], %s76
      %s79 = sshll.u32 [#allocation10], 4
      %s80 = int_to_ptr.vmem [resolvable:$true] %s79
      %82 = dma.hbm_to_vmem [thread:$0]  %s5, 32, %s80, [#allocation9]
    $region25: #{generator_forward.1} parent=1 // pred_fallthru
      _
    // Predicated region
    $region26: #{generator_forward.1} parent=1 // pred_check
      _
    $region27: #{generator_forward.1} parent=1 // pred_check_branch
      %84 = sbr.rel (0) target = $region29
    $region28: #{generator_forward.1} parent=1 // pred_region
      %s86 = ssub.s32 8192, 8192
      %87 = vsyncadd [#allocation12], %s86
      %s88 = sshll.u32 [#allocation11], 4
      %s89 = int_to_ptr.vmem [resolvable:$true] %s88
      %94 = dma.hbm_to_vmem [thread:$0]  %s6, 8192, %s89, [#allocation12], 256, 256, 16
    $region29: #{generator_forward.1} parent=1 // pred_fallthru
      _
    // Predicated region
    $region30: #{generator_forward.1} parent=1 // pred_check
      _
    $region31: #{generator_forward.1} parent=1 // pred_check_branch
      %96 = sbr.rel (0) target = $region33
    $region32: #{generator_forward.1} parent=1 // pred_region
      %s98 = ssub.s32 64, 64
      %99 = vsyncadd [#allocation12], %s98
      %s101 = sshll.u32 [#allocation13], 4
      %s102 = int_to_ptr.vmem [resolvable:$true] %s101
      %104 = dma.hbm_to_vmem [thread:$0]  %s7, 64, %s102, [#allocation12]
    $region33: #{generator_forward.1} parent=1 // pred_fallthru
      _
    // Predicated region
    $region34: #{generator_forward.1} parent=1 // pred_check
      _
    $region35: #{generator_forward.1} parent=1 // pred_check_branch
      %106 = sbr.rel (0) target = $region37
    $region36: #{generator_forward.1} parent=1 // pred_region
      %s108 = ssub.s32 64, 64
      %109 = vsyncadd [#allocation15], %s108
      %s111 = sshll.u32 [#allocation14], 4
      %s112 = int_to_ptr.vmem [resolvable:$true] %s111
      %114 = dma.hbm_to_vmem [thread:$0]  %s8, 64, %s112, [#allocation15]
    $region37: #{generator_forward.1} parent=1 // pred_fallthru
      _
    // Predicated region
    $region38: #{generator_forward.1} parent=1 // pred_check
      _
    $region39: #{generator_forward.1} parent=1 // pred_check_branch
      %116 = sbr.rel (0) target = $region41
    $region40: #{generator_forward.1} parent=1 // pred_region
      %s118 = ssub.s32 32768, 32768
      %119 = vsyncadd [#allocation15], %s118
      %s120 = sshll.u32 [#allocation16], 4
      %s121 = int_to_ptr.vmem [resolvable:$true] %s120
      %126 = dma.hbm_to_vmem [thread:$0]  %s9, 32768, %s121, [#allocation15], 512, 512, 32
    $region41: #{generator_forward.1} parent=1 // pred_fallthru
      _
    // Predicated region
    $region42: #{generator_forward.1} parent=1 // pred_check
      _
    $region43: #{generator_forward.1} parent=1 // pred_check_branch
      %128 = sbr.rel (0) target = $region45
    $region44: #{generator_forward.1} parent=1 // pred_region
      %s130 = ssub.s32 128, 128
      %131 = vsyncadd [#allocation18], %s130
      %s133 = sshll.u32 [#allocation17], 4
      %s134 = int_to_ptr.vmem [resolvable:$true] %s133
      %136 = dma.hbm_to_vmem [thread:$0]  %s10, 128, %s134, [#allocation18]
    $region45: #{generator_forward.1} parent=1 // pred_fallthru
      _
    // Predicated region
    $region46: #{generator_forward.1} parent=1 // pred_check
      _
    $region47: #{generator_forward.1} parent=1 // pred_check_branch
      %138 = sbr.rel (0) target = $region49
    $region48: #{generator_forward.1} parent=1 // pred_region
      %s140 = ssub.s32 128, 128
      %141 = vsyncadd [#allocation18], %s140
      %s143 = sshll.u32 [#allocation19], 4
      %s144 = int_to_ptr.vmem [resolvable:$true] %s143
      %146 = dma.hbm_to_vmem [thread:$0]  %s11, 128, %s144, [#allocation18]
    $region49: #{generator_forward.1} parent=1 // pred_fallthru
      _
    // Predicated region
    $region50: #{generator_forward.1} parent=1 // pred_check
      _
    $region51: #{generator_forward.1} parent=1 // pred_check_branch
      %148 = sbr.rel (0) target = $region53
    $region52: #{generator_forward.1} parent=1 // pred_region
      %s150 = ssub.s32 57344, 57344
      %151 = vsyncadd [#allocation21], %s150
      %s152 = sshll.u32 [#allocation20], 4
      %s153 = int_to_ptr.vmem [resolvable:$true] %s152
      %158 = dma.hbm_to_vmem [thread:$0]  %s12, 57344, %s153, [#allocation21], 448, 448, 28
    $region53: #{generator_forward.1} parent=1 // pred_fallthru
      _
    // Predicated region
    $region54: #{generator_forward.1} parent=1 // pred_check
      _
    $region55: #{generator_forward.1} parent=1 // pred_check_branch
      %160 = sbr.rel (0) target = $region57
    $region56: #{generator_forward.1} parent=1 // pred_region
      %s162 = ssub.s32 112, 112
      %163 = vsyncadd [#allocation21], %s162
      %s165 = sshll.u32 [#allocation22], 4
      %s166 = int_to_ptr.vmem [resolvable:$true] %s165
      %168 = dma.hbm_to_vmem [thread:$0]  %s13, 112, %s166, [#allocation21]
    $region57: #{generator_forward.1} parent=1 // pred_fallthru
      _
    // Predicated region
    $region58: #{generator_forward.1} parent=1 // pred_check
      _
    $region59: #{generator_forward.1} parent=1 // pred_check_branch
      %170 = sbr.rel (0) target = $region61
    $region60: #{generator_forward.1} parent=1 // pred_region
      %171 = dma.done [#allocation3], 512
    $region61: #{generator_forward.1} parent=1 // pred_fallthru
      _
    // Predicated region
    $region62: #{generator_forward.1} parent=1 // pred_check
      _
    $region63: #{generator_forward.1} parent=1 // pred_check_branch
      %173 = sbr.rel (0) target = $region65
    $region64: #{generator_forward.1} parent=1 // pred_region
      %174 = dma.done [#allocation6], 16
    $region65: #{generator_forward.1} parent=1 // pred_fallthru
      _
    // Predicated region
    $region66: #{generator_forward.1} parent=1 // pred_check
      _
    $region67: #{generator_forward.1} parent=1 // pred_check_branch
      %176 = sbr.rel (0) target = $region69
    $region68: #{generator_forward.1} parent=1 // pred_region
      %177 = dma.done [#allocation6], 2048
    $region69: #{generator_forward.1} parent=1 // pred_fallthru
      _
    // Predicated region
    $region70: #{generator_forward.1} parent=1 // pred_check
      _
    $region71: #{generator_forward.1} parent=1 // pred_check_branch
      %179 = sbr.rel (0) target = $region73
    $region72: #{generator_forward.1} parent=1 // pred_region
      %180 = dma.done [#allocation9], 32
    $region73: #{generator_forward.1} parent=1 // pred_fallthru
      _
    // Predicated region
    $region74: #{generator_forward.1} parent=1 // pred_check
      _
    $region75: #{generator_forward.1} parent=1 // pred_check_branch
      %182 = sbr.rel (0) target = $region77
    $region76: #{generator_forward.1} parent=1 // pred_region
      %183 = dma.done [#allocation9], 32
    $region77: #{generator_forward.1} parent=1 // pred_fallthru
      _
    // Predicated region
    $region78: #{generator_forward.1} parent=1 // pred_check
      _
    $region79: #{generator_forward.1} parent=1 // pred_check_branch
      %185 = sbr.rel (0) target = $region81
    $region80: #{generator_forward.1} parent=1 // pred_region
      %186 = dma.done [#allocation12], 8192
    $region81: #{generator_forward.1} parent=1 // pred_fallthru
      _
    // Predicated region
    $region82: #{generator_forward.1} parent=1 // pred_check
      _
    $region83: #{generator_forward.1} parent=1 // pred_check_branch
      %188 = sbr.rel (0) target = $region85
    $region84: #{generator_forward.1} parent=1 // pred_region
      %189 = dma.done [#allocation12], 64
    $region85: #{generator_forward.1} parent=1 // pred_fallthru
      _
    // Predicated region
    $region86: #{generator_forward.1} parent=1 // pred_check
      _
    $region87: #{generator_forward.1} parent=1 // pred_check_branch
      %191 = sbr.rel (0) target = $region89
    $region88: #{generator_forward.1} parent=1 // pred_region
      %192 = dma.done [#allocation15], 64
    $region89: #{generator_forward.1} parent=1 // pred_fallthru
      _
    // Predicated region
    $region90: #{generator_forward.1} parent=1 // pred_check
      _
    $region91: #{generator_forward.1} parent=1 // pred_check_branch
      %194 = sbr.rel (0) target = $region93
    $region92: #{generator_forward.1} parent=1 // pred_region
      %195 = dma.done [#allocation15], 32768
    $region93: #{generator_forward.1} parent=1 // pred_fallthru
      _
    // Predicated region
    $region94: #{generator_forward.1} parent=1 // pred_check
      _
    $region95: #{generator_forward.1} parent=1 // pred_check_branch
      %197 = sbr.rel (0) target = $region97
    $region96: #{generator_forward.1} parent=1 // pred_region
      %198 = dma.done [#allocation18], 128
    $region97: #{generator_forward.1} parent=1 // pred_fallthru
      _
    // Predicated region
    $region98: #{generator_forward.1} parent=1 // pred_check
      _
    $region99: #{generator_forward.1} parent=1 // pred_check_branch
      %200 = sbr.rel (0) target = $region101
    $region100: #{generator_forward.1} parent=1 // pred_region
      %201 = dma.done [#allocation18], 128
    $region101: #{generator_forward.1} parent=1 // pred_fallthru
      _
    // Predicated region
    $region102: #{generator_forward.1} parent=1 // pred_check
      _
    $region103: #{generator_forward.1} parent=1 // pred_check_branch
      %203 = sbr.rel (0) target = $region105
    $region104: #{generator_forward.1} parent=1 // pred_region
      %204 = dma.done [#allocation21], 57344
    $region105: #{generator_forward.1} parent=1 // pred_fallthru
      _
    // Predicated region
    $region106: #{generator_forward.1} parent=1 // pred_check
      _
    $region107: #{generator_forward.1} parent=1 // pred_check_branch
      %206 = sbr.rel (0) target = $region109
    $region108: #{generator_forward.1} parent=1 // pred_region
      %207 = dma.done [#allocation21], 112
    $region109: #{generator_forward.1} parent=1 // pred_fallthru
      _
    %v209 = vld [vmem:[%s0] sm:$0xf]
    %v210 = vld [vmem:[%s0 + $0x4] sm:$0xf]
    %v211 = vld [vmem:[#allocation2] sm:$0xf]
    %v212 = vld [vmem:[#allocation2 + $0x4] sm:$0xf]
    %v213 = vld [vmem:[#allocation2 + $0x8] sm:$0xf]
    %v214 = vld [vmem:[#allocation2 + $0xc] sm:$0xf]
    %v215 = vld [vmem:[#allocation2 + $0x10] sm:$0xf]
    %v216 = vld [vmem:[#allocation2 + $0x14] sm:$0xf]
    %v217 = vld [vmem:[#allocation2 + $0x18] sm:$0xf]
    %v218 = vld [vmem:[#allocation2 + $0x1c] sm:$0xf]
    %v219 = vld [vmem:[#allocation5] sm:$0x1]
    %v221 = vlaneseq
    %v222 = vshrl.u32 %v221, 7
    %v223 = vsub.s32 0, %v222
    %v224 = vrot.slane %v219, %v223
    %v228 = vunpack.c.l.b16 %v209
    %v229 = vunpack.c.l.b16 %v210
    %v230 = vpack.c.b16 %v229, %v228
    %v239 = vunpack.c.l.b16 %v211
    %v240 = vunpack.c.l.b16 %v212
    %v241 = vunpack.c.l.b16 %v213
    %v242 = vunpack.c.l.b16 %v214
    %v243 = vunpack.c.l.b16 %v215
    %v244 = vunpack.c.l.b16 %v216
    %v245 = vunpack.c.l.b16 %v217
    %v246 = vunpack.c.l.b16 %v218
    %v247 = vpack.c.b16 %v240, %v239
    %v248 = vpack.c.b16 %v242, %v241
    %v249 = vpack.c.b16 %v244, %v243
    %v250 = vpack.c.b16 %v246, %v245
    %vm255 = vcmask 523264
    %v257 = vsel %vm255, %v230, 0
    %259 = vmatprep.subr.bf16.mxu0 0
    %260 = vmatpush1.bf16.msra.mxu0 0
    %261 = vmatprep.subr.bf16.mxu0 0
    %262 = vmatpush1.bf16.msra.mxu0 0
    %263 = vmatprep.subr.bf16.mxu0 0
    %264 = vmatpush1.bf16.msra.mxu0 0
    %265 = vmatprep.subr.bf16.mxu0 0
    %266 = vmatpush1.bf16.msra.mxu0 0
    %267 = vmatprep.subr.bf16.mxu0 0
    %268 = vmatpush1.bf16.msra.mxu0 %v250
    %269 = vmatprep.subr.bf16.mxu0 0
    %270 = vmatpush1.bf16.msra.mxu0 %v249
    %271 = vmatprep.subr.bf16.mxu0 0
    %272 = vmatpush1.bf16.msra.mxu0 %v248
    %273 = vmatprep.subr.bf16.mxu0 0
    %274 = vmatpush1.bf16.msra.mxu0 %v247
    %275 = vmatprep.subr.bf16.mxu0 0
    %276 = vmatpush2.bf16.msra.mxu0 0
    %277 = vmatprep.subr.bf16.mxu0 0
    %278 = vmatpush2.bf16.msra.mxu0 0
    %279 = vmatprep.subr.bf16.mxu0 0
    %280 = vmatpush2.bf16.msra.mxu0 0
    %281 = vmatprep.subr.bf16.mxu0 0
    %282 = vmatpush2.bf16.msra.mxu0 0
    %283 = vmatprep.subr.bf16.mxu0 0
    %284 = vmatpush2.bf16.msra.mxu0 0
    %285 = vmatprep.subr.bf16.mxu0 0
    %286 = vmatpush2.bf16.msra.mxu0 0
    %287 = vmatprep.subr.bf16.mxu0 0
    %288 = vmatpush2.bf16.msra.mxu0 0
    %289 = vmatprep.subr.bf16.mxu0 0
    %290 = vmatpush2.bf16.msra.mxu0 0
    %291 = vmatprep.mubr.bf16.mxu0 0
    %292 = vmatmul.mubr.bf16.gmra.mxu0 %v257
    %v293 = vpop.f32.mrf.mxu0
    %v294 = vadd.f32 %v224, %v293
    %v295 = vpop.f32.mrf.mxu0
    %v296 = vpop.f32.mrf.mxu0
    %v297 = vadd.f32 %v224, %v296
    %v298 = vpop.f32.mrf.mxu0
    %299 = vdwg.mxu0
    %v300 = vmul.f32 %v294, 0.2
    %v301 = vmul.f32 %v297, 0.2
    %v302 = vmax.f32 %v294, %v300
    %v303 = vmax.f32 %v297, %v301
    %v304 = vpack.c.bf16 %v303, %v302
    %v305 = vld [vmem:[#allocation7] sm:$0xff]
    %v306 = vld [vmem:[#allocation7 + $0x8] sm:$0xff]
    %v307 = vld [vmem:[#allocation7 + $0x10] sm:$0xff]
    %v308 = vld [vmem:[#allocation7 + $0x18] sm:$0xff]
    %v309 = vld [vmem:[#allocation7 + $0x20] sm:$0xff]
    %v310 = vld [vmem:[#allocation7 + $0x28] sm:$0xff]
    %v311 = vld [vmem:[#allocation7 + $0x30] sm:$0xff]
    %v312 = vld [vmem:[#allocation7 + $0x38] sm:$0xff]
    %v313 = vld [vmem:[#allocation7 + $0x40] sm:$0xff]
    %v314 = vld [vmem:[#allocation7 + $0x48] sm:$0xff]
    %v315 = vld [vmem:[#allocation7 + $0x50] sm:$0xff]
    %v316 = vld [vmem:[#allocation7 + $0x58] sm:$0xff]
    %v317 = vld [vmem:[#allocation7 + $0x60] sm:$0xff]
    %v318 = vld [vmem:[#allocation7 + $0x68] sm:$0xff]
    %v319 = vld [vmem:[#allocation7 + $0x70] sm:$0xff]
    %v320 = vld [vmem:[#allocation7 + $0x78] sm:$0xff]
    %v337 = vunpack.c.l.b16 %v305
    %v338 = vunpack.c.h.b16 %v305
    %v339 = vunpack.c.l.b16 %v306
    %v340 = vunpack.c.h.b16 %v306
    %v341 = vunpack.c.l.b16 %v307
    %v342 = vunpack.c.h.b16 %v307
    %v343 = vunpack.c.l.b16 %v308
    %v344 = vunpack.c.h.b16 %v308
    %v345 = vunpack.c.l.b16 %v309
    %v346 = vunpack.c.h.b16 %v309
    %v347 = vunpack.c.l.b16 %v310
    %v348 = vunpack.c.h.b16 %v310
    %v349 = vunpack.c.l.b16 %v311
    %v350 = vunpack.c.h.b16 %v311
    %v351 = vunpack.c.l.b16 %v312
    %v352 = vunpack.c.h.b16 %v312
    %v353 = vunpack.c.l.b16 %v313
    %v354 = vunpack.c.h.b16 %v313
    %v355 = vunpack.c.l.b16 %v314
    %v356 = vunpack.c.h.b16 %v314
    %v357 = vunpack.c.l.b16 %v315
    %v358 = vunpack.c.h.b16 %v315
    %v359 = vunpack.c.l.b16 %v316
    %v360 = vunpack.c.h.b16 %v316
    %v361 = vunpack.c.l.b16 %v317
    %v362 = vunpack.c.h.b16 %v317
    %v363 = vunpack.c.l.b16 %v318
    %v364 = vunpack.c.h.b16 %v318
    %v365 = vunpack.c.l.b16 %v319
    %v366 = vunpack.c.h.b16 %v319
    %v367 = vunpack.c.l.b16 %v320
    %v368 = vunpack.c.h.b16 %v320
    %v369 = vpack.c.b16 %v339, %v337
    %v370 = vpack.c.b16 %v340, %v338
    %v371 = vpack.c.b16 %v343, %v341
    %v372 = vpack.c.b16 %v344, %v342
    %v373 = vpack.c.b16 %v347, %v345
    %v374 = vpack.c.b16 %v348, %v346
    %v375 = vpack.c.b16 %v351, %v349
    %v376 = vpack.c.b16 %v352, %v350
    %v377 = vpack.c.b16 %v355, %v353
    %v378 = vpack.c.b16 %v356, %v354
    %v379 = vpack.c.b16 %v359, %v357
    %v380 = vpack.c.b16 %v360, %v358
    %v381 = vpack.c.b16 %v363, %v361
    %v382 = vpack.c.b16 %v364, %v362
    %v383 = vpack.c.b16 %v367, %v365
    %v384 = vpack.c.b16 %v368, %v366
    %401 = vmatprep.subr.bf16.mxu0 %v384
    %402 = vmatpush1.bf16.msra.mxu0 %v383
    %403 = vmatprep.subr.bf16.mxu0 %v382
    %404 = vmatpush1.bf16.msra.mxu0 %v381
    %405 = vmatprep.subr.bf16.mxu0 %v380
    %406 = vmatpush1.bf16.msra.mxu0 %v379
    %407 = vmatprep.subr.bf16.mxu0 %v378
    %408 = vmatpush1.bf16.msra.mxu0 %v377
    %409 = vmatprep.subr.bf16.mxu0 %v376
    %410 = vmatpush1.bf16.msra.mxu0 %v375
    %411 = vmatprep.subr.bf16.mxu0 %v374
    %412 = vmatpush1.bf16.msra.mxu0 %v373
    %413 = vmatprep.subr.bf16.mxu0 %v372
    %414 = vmatpush1.bf16.msra.mxu0 %v371
    %415 = vmatprep.subr.bf16.mxu0 %v370
    %416 = vmatpush1.bf16.msra.mxu0 %v369
    %417 = vmatprep.subr.bf16.mxu0 0
    %418 = vmatpush2.bf16.msra.mxu0 0
    %419 = vmatprep.subr.bf16.mxu0 0
    %420 = vmatpush2.bf16.msra.mxu0 0
    %421 = vmatprep.subr.bf16.mxu0 0
    %422 = vmatpush2.bf16.msra.mxu0 0
    %423 = vmatprep.subr.bf16.mxu0 0
    %424 = vmatpush2.bf16.msra.mxu0 0
    %425 = vmatprep.subr.bf16.mxu0 0
    %426 = vmatpush2.bf16.msra.mxu0 0
    %427 = vmatprep.subr.bf16.mxu0 0
    %428 = vmatpush2.bf16.msra.mxu0 0
    %429 = vmatprep.subr.bf16.mxu0 0
    %430 = vmatpush2.bf16.msra.mxu0 0
    %431 = vmatprep.subr.bf16.mxu0 0
    %432 = vmatpush2.bf16.msra.mxu0 0
    %433 = vmatprep.mubr.bf16.mxu0 0
    %434 = vmatmul.mubr.bf16.gmra.mxu0 %v304
    %v435 = vpop.f32.mrf.mxu0
    %v436 = vadd.f32 0.0, %v435
    %v437 = vpop.f32.mrf.mxu0
    %v438 = vadd.f32 0.0, %v437
    %v439 = vpop.f32.mrf.mxu0
    %v440 = vadd.f32 0.0, %v439
    %v441 = vpop.f32.mrf.mxu0
    %v442 = vadd.f32 0.0, %v441
    %443 = vdwg.mxu0
    %v444 = vld [vmem:[#allocation8] sm:$0x3]
    %v446 = vlaneseq
    %v447 = vshrl.u32 %v446, 7
    %v448 = vsub.s32 0, %v447
    %v449 = vrot.slane %v444, %v448
    %v450 = vlaneseq
    %v451 = vshrl.u32 %v450, 7
    %v452 = vsub.s32 1, %v451
    %v453 = vrot.slane %v444, %v452
    %v456 = vmul.f32 %v436, %v449
    %v457 = vmul.f32 %v438, %v453
    %v458 = vmul.f32 %v440, %v449
    %v459 = vmul.f32 %v442, %v453
    %v460 = vld [vmem:[#allocation10] sm:$0x3]
    %v462 = vlaneseq
    %v463 = vshrl.u32 %v462, 7
    %v464 = vsub.s32 0, %v463
    %v465 = vrot.slane %v460, %v464
    %v466 = vlaneseq
    %v467 = vshrl.u32 %v466, 7
    %v468 = vsub.s32 1, %v467
    %v469 = vrot.slane %v460, %v468
    %v472 = vadd.f32 %v456, %v465
    %v473 = vadd.f32 %v457, %v469
    %v474 = vadd.f32 %v458, %v465
    %v475 = vadd.f32 %v459, %v469
    %v476 = vmul.f32 %v472, 0.2
    %v477 = vmul.f32 %v473, 0.2
    %v478 = vmul.f32 %v474, 0.2
    %v479 = vmul.f32 %v475, 0.2
    %v480 = vmax.f32 %v472, %v476
    %v481 = vmax.f32 %v473, %v477
    %v482 = vmax.f32 %v474, %v478
    %v483 = vmax.f32 %v475, %v479
    %v484 = vpack.c.bf16 %v482, %v480
    %v485 = vpack.c.bf16 %v483, %v481
    %v486 = vld [vmem:[#allocation11] sm:$0xff]
    %v487 = vld [vmem:[#allocation11 + $0x8] sm:$0xff]
    %v488 = vld [vmem:[#allocation11 + $0x10] sm:$0xff]
    %v489 = vld [vmem:[#allocation11 + $0x18] sm:$0xff]
    %v490 = vld [vmem:[#allocation11 + $0x20] sm:$0xff]
    %v491 = vld [vmem:[#allocation11 + $0x28] sm:$0xff]
    %v492 = vld [vmem:[#allocation11 + $0x30] sm:$0xff]
    %v493 = vld [vmem:[#allocation11 + $0x38] sm:$0xff]
    %v494 = vld [vmem:[#allocation11 + $0x40] sm:$0xff]
    %v495 = vld [vmem:[#allocation11 + $0x48] sm:$0xff]
    %v496 = vld [vmem:[#allocation11 + $0x50] sm:$0xff]
    %v497 = vld [vmem:[#allocation11 + $0x58] sm:$0xff]
    %v498 = vld [vmem:[#allocation11 + $0x60] sm:$0xff]
    %v499 = vld [vmem:[#allocation11 + $0x68] sm:$0xff]
    %v500 = vld [vmem:[#allocation11 + $0x70] sm:$0xff]
    %v501 = vld [vmem:[#allocation11 + $0x78] sm:$0xff]
    %v502 = vld [vmem:[#allocation11 + $0x80] sm:$0xff]
    %v503 = vld [vmem:[#allocation11 + $0x88] sm:$0xff]
    %v504 = vld [vmem:[#allocation11 + $0x90] sm:$0xff]
    %v505 = vld [vmem:[#allocation11 + $0x98] sm:$0xff]
    %v506 = vld [vmem:[#allocation11 + $0xa0] sm:$0xff]
    %v507 = vld [vmem:[#allocation11 + $0xa8] sm:$0xff]
    %v508 = vld [vmem:[#allocation11 + $0xb0] sm:$0xff]
    %v509 = vld [vmem:[#allocation11 + $0xb8] sm:$0xff]
    %v510 = vld [vmem:[#allocation11 + $0xc0] sm:$0xff]
    %v511 = vld [vmem:[#allocation11 + $0xc8] sm:$0xff]
    %v512 = vld [vmem:[#allocation11 + $0xd0] sm:$0xff]
    %v513 = vld [vmem:[#allocation11 + $0xd8] sm:$0xff]
    %v514 = vld [vmem:[#allocation11 + $0xe0] sm:$0xff]
    %v515 = vld [vmem:[#allocation11 + $0xe8] sm:$0xff]
    %v516 = vld [vmem:[#allocation11 + $0xf0] sm:$0xff]
    %v517 = vld [vmem:[#allocation11 + $0xf8] sm:$0xff]
    %v518 = vld [vmem:[#allocation11 + $0x100] sm:$0xff]
    %v519 = vld [vmem:[#allocation11 + $0x108] sm:$0xff]
    %v520 = vld [vmem:[#allocation11 + $0x110] sm:$0xff]
    %v521 = vld [vmem:[#allocation11 + $0x118] sm:$0xff]
    %v522 = vld [vmem:[#allocation11 + $0x120] sm:$0xff]
    %v523 = vld [vmem:[#allocation11 + $0x128] sm:$0xff]
    %v524 = vld [vmem:[#allocation11 + $0x130] sm:$0xff]
    %v525 = vld [vmem:[#allocation11 + $0x138] sm:$0xff]
    %v526 = vld [vmem:[#allocation11 + $0x140] sm:$0xff]
    %v527 = vld [vmem:[#allocation11 + $0x148] sm:$0xff]
    %v528 = vld [vmem:[#allocation11 + $0x150] sm:$0xff]
    %v529 = vld [vmem:[#allocation11 + $0x158] sm:$0xff]
    %v530 = vld [vmem:[#allocation11 + $0x160] sm:$0xff]
    %v531 = vld [vmem:[#allocation11 + $0x168] sm:$0xff]
    %v532 = vld [vmem:[#allocation11 + $0x170] sm:$0xff]
    %v533 = vld [vmem:[#allocation11 + $0x178] sm:$0xff]
    %v534 = vld [vmem:[#allocation11 + $0x180] sm:$0xff]
    %v535 = vld [vmem:[#allocation11 + $0x188] sm:$0xff]
    %v536 = vld [vmem:[#allocation11 + $0x190] sm:$0xff]
    %v537 = vld [vmem:[#allocation11 + $0x198] sm:$0xff]
    %v538 = vld [vmem:[#allocation11 + $0x1a0] sm:$0xff]
    %v539 = vld [vmem:[#allocation11 + $0x1a8] sm:$0xff]
    %v540 = vld [vmem:[#allocation11 + $0x1b0] sm:$0xff]
    %v541 = vld [vmem:[#allocation11 + $0x1b8] sm:$0xff]
    %v542 = vld [vmem:[#allocation11 + $0x1c0] sm:$0xff]
    %v543 = vld [vmem:[#allocation11 + $0x1c8] sm:$0xff]
    %v544 = vld [vmem:[#allocation11 + $0x1d0] sm:$0xff]
    %v545 = vld [vmem:[#allocation11 + $0x1d8] sm:$0xff]
    %v546 = vld [vmem:[#allocation11 + $0x1e0] sm:$0xff]
    %v547 = vld [vmem:[#allocation11 + $0x1e8] sm:$0xff]
    %v548 = vld [vmem:[#allocation11 + $0x1f0] sm:$0xff]
    %v549 = vld [vmem:[#allocation11 + $0x1f8] sm:$0xff]
    %v614 = vunpack.c.l.b16 %v486
    %v615 = vunpack.c.h.b16 %v486
    %v616 = vunpack.c.l.b16 %v487
    %v617 = vunpack.c.h.b16 %v487
    %v618 = vunpack.c.l.b16 %v488
    %v619 = vunpack.c.h.b16 %v488
    %v620 = vunpack.c.l.b16 %v489
    %v621 = vunpack.c.h.b16 %v489
    %v622 = vunpack.c.l.b16 %v490
    %v623 = vunpack.c.h.b16 %v490
    %v624 = vunpack.c.l.b16 %v491
    %v625 = vunpack.c.h.b16 %v491
    %v626 = vunpack.c.l.b16 %v492
    %v627 = vunpack.c.h.b16 %v492
    %v628 = vunpack.c.l.b16 %v493
    %v629 = vunpack.c.h.b16 %v493
    %v630 = vunpack.c.l.b16 %v494
    %v631 = vunpack.c.h.b16 %v494
    %v632 = vunpack.c.l.b16 %v495
    %v633 = vunpack.c.h.b16 %v495
    %v634 = vunpack.c.l.b16 %v496
    %v635 = vunpack.c.h.b16 %v496
    %v636 = vunpack.c.l.b16 %v497
    %v637 = vunpack.c.h.b16 %v497
    %v638 = vunpack.c.l.b16 %v498
    %v639 = vunpack.c.h.b16 %v498
    %v640 = vunpack.c.l.b16 %v499
    %v641 = vunpack.c.h.b16 %v499
    %v642 = vunpack.c.l.b16 %v500
    %v643 = vunpack.c.h.b16 %v500
    %v644 = vunpack.c.l.b16 %v501
    %v645 = vunpack.c.h.b16 %v501
    %v646 = vunpack.c.l.b16 %v502
    %v647 = vunpack.c.h.b16 %v502
    %v648 = vunpack.c.l.b16 %v503
    %v649 = vunpack.c.h.b16 %v503
    %v650 = vunpack.c.l.b16 %v504
    %v651 = vunpack.c.h.b16 %v504
    %v652 = vunpack.c.l.b16 %v505
    %v653 = vunpack.c.h.b16 %v505
    %v654 = vunpack.c.l.b16 %v506
    %v655 = vunpack.c.h.b16 %v506
    %v656 = vunpack.c.l.b16 %v507
    %v657 = vunpack.c.h.b16 %v507
    %v658 = vunpack.c.l.b16 %v508
    %v659 = vunpack.c.h.b16 %v508
    %v660 = vunpack.c.l.b16 %v509
    %v661 = vunpack.c.h.b16 %v509
    %v662 = vunpack.c.l.b16 %v510
    %v663 = vunpack.c.h.b16 %v510
    %v664 = vunpack.c.l.b16 %v511
    %v665 = vunpack.c.h.b16 %v511
    %v666 = vunpack.c.l.b16 %v512
    %v667 = vunpack.c.h.b16 %v512
    %v668 = vunpack.c.l.b16 %v513
    %v669 = vunpack.c.h.b16 %v513
    %v670 = vunpack.c.l.b16 %v514
    %v671 = vunpack.c.h.b16 %v514
    %v672 = vunpack.c.l.b16 %v515
    %v673 = vunpack.c.h.b16 %v515
    %v674 = vunpack.c.l.b16 %v516
    %v675 = vunpack.c.h.b16 %v516
    %v676 = vunpack.c.l.b16 %v517
    %v677 = vunpack.c.h.b16 %v517
    %v678 = vunpack.c.l.b16 %v518
    %v679 = vunpack.c.h.b16 %v518
    %v680 = vunpack.c.l.b16 %v519
    %v681 = vunpack.c.h.b16 %v519
    %v682 = vunpack.c.l.b16 %v520
    %v683 = vunpack.c.h.b16 %v520
    %v684 = vunpack.c.l.b16 %v521
    %v685 = vunpack.c.h.b16 %v521
    %v686 = vunpack.c.l.b16 %v522
    %v687 = vunpack.c.h.b16 %v522
    %v688 = vunpack.c.l.b16 %v523
    %v689 = vunpack.c.h.b16 %v523
    %v690 = vunpack.c.l.b16 %v524
    %v691 = vunpack.c.h.b16 %v524
    %v692 = vunpack.c.l.b16 %v525
    %v693 = vunpack.c.h.b16 %v525
    %v694 = vunpack.c.l.b16 %v526
    %v695 = vunpack.c.h.b16 %v526
    %v696 = vunpack.c.l.b16 %v527
    %v697 = vunpack.c.h.b16 %v527
    %v698 = vunpack.c.l.b16 %v528
    %v699 = vunpack.c.h.b16 %v528
    %v700 = vunpack.c.l.b16 %v529
    %v701 = vunpack.c.h.b16 %v529
    %v702 = vunpack.c.l.b16 %v530
    %v703 = vunpack.c.h.b16 %v530
    %v704 = vunpack.c.l.b16 %v531
    %v705 = vunpack.c.h.b16 %v531
    %v706 = vunpack.c.l.b16 %v532
    %v707 = vunpack.c.h.b16 %v532
    %v708 = vunpack.c.l.b16 %v533
    %v709 = vunpack.c.h.b16 %v533
    %v710 = vunpack.c.l.b16 %v534
    %v711 = vunpack.c.h.b16 %v534
    %v712 = vunpack.c.l.b16 %v535
    %v713 = vunpack.c.h.b16 %v535
    %v714 = vunpack.c.l.b16 %v536
    %v715 = vunpack.c.h.b16 %v536
    %v716 = vunpack.c.l.b16 %v537
    %v717 = vunpack.c.h.b16 %v537
    %v718 = vunpack.c.l.b16 %v538
    %v719 = vunpack.c.h.b16 %v538
    %v720 = vunpack.c.l.b16 %v539
    %v721 = vunpack.c.h.b16 %v539
    %v722 = vunpack.c.l.b16 %v540
    %v723 = vunpack.c.h.b16 %v540
    %v724 = vunpack.c.l.b16 %v541
    %v725 = vunpack.c.h.b16 %v541
    %v726 = vunpack.c.l.b16 %v542
    %v727 = vunpack.c.h.b16 %v542
    %v728 = vunpack.c.l.b16 %v543
    %v729 = vunpack.c.h.b16 %v543
    %v730 = vunpack.c.l.b16 %v544
    %v731 = vunpack.c.h.b16 %v544
    %v732 = vunpack.c.l.b16 %v545
    %v733 = vunpack.c.h.b16 %v545
    %v734 = vunpack.c.l.b16 %v546
    %v735 = vunpack.c.h.b16 %v546
    %v736 = vunpack.c.l.b16 %v547
    %v737 = vunpack.c.h.b16 %v547
    %v738 = vunpack.c.l.b16 %v548
    %v739 = vunpack.c.h.b16 %v548
    %v740 = vunpack.c.l.b16 %v549
    %v741 = vunpack.c.h.b16 %v549
    %v742 = vpack.c.b16 %v618, %v614
    %v743 = vpack.c.b16 %v619, %v615
    %v744 = vpack.c.b16 %v620, %v616
    %v745 = vpack.c.b16 %v621, %v617
    %v746 = vpack.c.b16 %v626, %v622
    %v747 = vpack.c.b16 %v627, %v623
    %v748 = vpack.c.b16 %v628, %v624
    %v749 = vpack.c.b16 %v629, %v625
    %v750 = vpack.c.b16 %v634, %v630
    %v751 = vpack.c.b16 %v635, %v631
    %v752 = vpack.c.b16 %v636, %v632
    %v753 = vpack.c.b16 %v637, %v633
    %v754 = vpack.c.b16 %v642, %v638
    %v755 = vpack.c.b16 %v643, %v639
    %v756 = vpack.c.b16 %v644, %v640
    %v757 = vpack.c.b16 %v645, %v641
    %v758 = vpack.c.b16 %v650, %v646
    %v759 = vpack.c.b16 %v651, %v647
    %v760 = vpack.c.b16 %v652, %v648
    %v761 = vpack.c.b16 %v653, %v649
    %v762 = vpack.c.b16 %v658, %v654
    %v763 = vpack.c.b16 %v659, %v655
    %v764 = vpack.c.b16 %v660, %v656
    %v765 = vpack.c.b16 %v661, %v657
    %v766 = vpack.c.b16 %v666, %v662
    %v767 = vpack.c.b16 %v667, %v663
    %v768 = vpack.c.b16 %v668, %v664
    %v769 = vpack.c.b16 %v669, %v665
    %v770 = vpack.c.b16 %v674, %v670
    %v771 = vpack.c.b16 %v675, %v671
    %v772 = vpack.c.b16 %v676, %v672
    %v773 = vpack.c.b16 %v677, %v673
    %v774 = vpack.c.b16 %v682, %v678
    %v775 = vpack.c.b16 %v683, %v679
    %v776 = vpack.c.b16 %v684, %v680
    %v777 = vpack.c.b16 %v685, %v681
    %v778 = vpack.c.b16 %v690, %v686
    %v779 = vpack.c.b16 %v691, %v687
    %v780 = vpack.c.b16 %v692, %v688
    %v781 = vpack.c.b16 %v693, %v689
    %v782 = vpack.c.b16 %v698, %v694
    %v783 = vpack.c.b16 %v699, %v695
    %v784 = vpack.c.b16 %v700, %v696
    %v785 = vpack.c.b16 %v701, %v697
    %v786 = vpack.c.b16 %v706, %v702
    %v787 = vpack.c.b16 %v707, %v703
    %v788 = vpack.c.b16 %v708, %v704
    %v789 = vpack.c.b16 %v709, %v705
    %v790 = vpack.c.b16 %v714, %v710
    %v791 = vpack.c.b16 %v715, %v711
    %v792 = vpack.c.b16 %v716, %v712
    %v793 = vpack.c.b16 %v717, %v713
    %v794 = vpack.c.b16 %v722, %v718
    %v795 = vpack.c.b16 %v723, %v719
    %v796 = vpack.c.b16 %v724, %v720
    %v797 = vpack.c.b16 %v725, %v721
    %v798 = vpack.c.b16 %v730, %v726
    %v799 = vpack.c.b16 %v731, %v727
    %v800 = vpack.c.b16 %v732, %v728
    %v801 = vpack.c.b16 %v733, %v729
    %v802 = vpack.c.b16 %v738, %v734
    %v803 = vpack.c.b16 %v739, %v735
    %v804 = vpack.c.b16 %v740, %v736
    %v805 = vpack.c.b16 %v741, %v737
    %870 = vmatprep.subr.bf16.mxu0 %v771
    %871 = vmatpush1.bf16.msra.mxu0 %v770
    %872 = vmatprep.subr.bf16.mxu0 %v767
    %873 = vmatpush1.bf16.msra.mxu0 %v766
    %874 = vmatprep.subr.bf16.mxu0 %v763
    %875 = vmatpush1.bf16.msra.mxu0 %v762
    %876 = vmatprep.subr.bf16.mxu0 %v759
    %877 = vmatpush1.bf16.msra.mxu0 %v758
    %878 = vmatprep.subr.bf16.mxu0 %v755
    %879 = vmatpush1.bf16.msra.mxu0 %v754
    %880 = vmatprep.subr.bf16.mxu0 %v751
    %881 = vmatpush1.bf16.msra.mxu0 %v750
    %882 = vmatprep.subr.bf16.mxu0 %v747
    %883 = vmatpush1.bf16.msra.mxu0 %v746
    %884 = vmatprep.subr.bf16.mxu0 %v743
    %885 = vmatpush1.bf16.msra.mxu0 %v742
    %886 = vmatprep.subr.bf16.mxu0 %v803
    %887 = vmatpush2.bf16.msra.mxu0 %v802
    %888 = vmatprep.subr.bf16.mxu0 %v799
    %889 = vmatpush2.bf16.msra.mxu0 %v798
    %890 = vmatprep.subr.bf16.mxu0 %v795
    %891 = vmatpush2.bf16.msra.mxu0 %v794
    %892 = vmatprep.subr.bf16.mxu0 %v791
    %893 = vmatpush2.bf16.msra.mxu0 %v790
    %894 = vmatprep.subr.bf16.mxu0 %v787
    %895 = vmatpush2.bf16.msra.mxu0 %v786
    %896 = vmatprep.subr.bf16.mxu0 %v783
    %897 = vmatpush2.bf16.msra.mxu0 %v782
    %898 = vmatprep.subr.bf16.mxu0 %v779
    %899 = vmatpush2.bf16.msra.mxu0 %v778
    %900 = vmatprep.subr.bf16.mxu0 %v775
    %901 = vmatpush2.bf16.msra.mxu0 %v774
    %902 = vmatprep.mubr.bf16.mxu0 %v485
    %903 = vmatmul.mubr.bf16.gmra.mxu0 %v484
    %v904 = vpop.f32.mrf.mxu0
    %v905 = vadd.f32 0.0, %v904
    %v906 = vpop.f32.mrf.mxu0
    %v907 = vadd.f32 0.0, %v906
    %v908 = vpop.f32.mrf.mxu0
    %v909 = vadd.f32 0.0, %v908
    %v910 = vpop.f32.mrf.mxu0
    %v911 = vadd.f32 0.0, %v910
    %912 = vdwg.mxu0
    %913 = vmatprep.subr.bf16.mxu0 %v773
    %914 = vmatpush1.bf16.msra.mxu0 %v772
    %915 = vmatprep.subr.bf16.mxu0 %v769
    %916 = vmatpush1.bf16.msra.mxu0 %v768
    %917 = vmatprep.subr.bf16.mxu0 %v765
    %918 = vmatpush1.bf16.msra.mxu0 %v764
    %919 = vmatprep.subr.bf16.mxu0 %v761
    %920 = vmatpush1.bf16.msra.mxu0 %v760
    %921 = vmatprep.subr.bf16.mxu0 %v757
    %922 = vmatpush1.bf16.msra.mxu0 %v756
    %923 = vmatprep.subr.bf16.mxu0 %v753
    %924 = vmatpush1.bf16.msra.mxu0 %v752
    %925 = vmatprep.subr.bf16.mxu0 %v749
    %926 = vmatpush1.bf16.msra.mxu0 %v748
    %927 = vmatprep.subr.bf16.mxu0 %v745
    %928 = vmatpush1.bf16.msra.mxu0 %v744
    %929 = vmatprep.subr.bf16.mxu0 %v805
    %930 = vmatpush2.bf16.msra.mxu0 %v804
    %931 = vmatprep.subr.bf16.mxu0 %v801
    %932 = vmatpush2.bf16.msra.mxu0 %v800
    %933 = vmatprep.subr.bf16.mxu0 %v797
    %934 = vmatpush2.bf16.msra.mxu0 %v796
    %935 = vmatprep.subr.bf16.mxu0 %v793
    %936 = vmatpush2.bf16.msra.mxu0 %v792
    %937 = vmatprep.subr.bf16.mxu0 %v789
    %938 = vmatpush2.bf16.msra.mxu0 %v788
    %939 = vmatprep.subr.bf16.mxu0 %v785
    %940 = vmatpush2.bf16.msra.mxu0 %v784
    %941 = vmatprep.subr.bf16.mxu0 %v781
    %942 = vmatpush2.bf16.msra.mxu0 %v780
    %943 = vmatprep.subr.bf16.mxu0 %v777
    %944 = vmatpush2.bf16.msra.mxu0 %v776
    %945 = vmatprep.mubr.bf16.mxu0 %v485
    %946 = vmatmul.mubr.bf16.gmra.mxu0 %v484
    %v947 = vpop.f32.mrf.mxu0
    %v948 = vadd.f32 0.0, %v947
    %v949 = vpop.f32.mrf.mxu0
    %v950 = vadd.f32 0.0, %v949
    %v951 = vpop.f32.mrf.mxu0
    %v952 = vadd.f32 0.0, %v951
    %v953 = vpop.f32.mrf.mxu0
    %v954 = vadd.f32 0.0, %v953
    %955 = vdwg.mxu0
    %v956 = vld [vmem:[#allocation13] sm:$0xf]
    %v958 = vlaneseq
    %v959 = vshrl.u32 %v958, 7
    %v960 = vsub.s32 0, %v959
    %v961 = vrot.slane %v956, %v960
    %v962 = vlaneseq
    %v963 = vshrl.u32 %v962, 7
    %v964 = vsub.s32 1, %v963
    %v965 = vrot.slane %v956, %v964
    %v966 = vlaneseq
    %v967 = vshrl.u32 %v966, 7
    %v968 = vsub.s32 2, %v967
    %v969 = vrot.slane %v956, %v968
    %v970 = vlaneseq
    %v971 = vshrl.u32 %v970, 7
    %v972 = vsub.s32 3, %v971
    %v973 = vrot.slane %v956, %v972
    %v978 = vmul.f32 %v905, %v961
    %v979 = vmul.f32 %v907, %v965
    %v980 = vmul.f32 %v948, %v969
    %v981 = vmul.f32 %v950, %v973
    %v982 = vmul.f32 %v909, %v961
    %v983 = vmul.f32 %v911, %v965
    %v984 = vmul.f32 %v952, %v969
    %v985 = vmul.f32 %v954, %v973
    %v986 = vld [vmem:[#allocation14] sm:$0xf]
    %v988 = vlaneseq
    %v989 = vshrl.u32 %v988, 7
    %v990 = vsub.s32 0, %v989
    %v991 = vrot.slane %v986, %v990
    %v992 = vlaneseq
    %v993 = vshrl.u32 %v992, 7
    %v994 = vsub.s32 1, %v993
    %v995 = vrot.slane %v986, %v994
    %v996 = vlaneseq
    %v997 = vshrl.u32 %v996, 7
    %v998 = vsub.s32 2, %v997
    %v999 = vrot.slane %v986, %v998
    %v1000 = vlaneseq
    %v1001 = vshrl.u32 %v1000, 7
    %v1002 = vsub.s32 3, %v1001
    %v1003 = vrot.slane %v986, %v1002
    %v1008 = vadd.f32 %v978, %v991
    %v1009 = vadd.f32 %v979, %v995
    %v1010 = vadd.f32 %v980, %v999
    %v1011 = vadd.f32 %v981, %v1003
    %v1012 = vadd.f32 %v982, %v991
    %v1013 = vadd.f32 %v983, %v995
    %v1014 = vadd.f32 %v984, %v999
    %v1015 = vadd.f32 %v985, %v1003
    %v1016 = vmul.f32 %v1008, 0.2
    %v1017 = vmul.f32 %v1009, 0.2
    %v1018 = vmul.f32 %v1010, 0.2
    %v1019 = vmul.f32 %v1011, 0.2
    %v1020 = vmul.f32 %v1012, 0.2
    %v1021 = vmul.f32 %v1013, 0.2
    %v1022 = vmul.f32 %v1014, 0.2
    %v1023 = vmul.f32 %v1015, 0.2
    %v1024 = vmax.f32 %v1008, %v1016
    %v1025 = vmax.f32 %v1009, %v1017
    %v1026 = vmax.f32 %v1010, %v1018
    %v1027 = vmax.f32 %v1011, %v1019
    %v1028 = vmax.f32 %v1012, %v1020
    %v1029 = vmax.f32 %v1013, %v1021
    %v1030 = vmax.f32 %v1014, %v1022
    %v1031 = vmax.f32 %v1015, %v1023
    %v1032 = vpack.c.bf16 %v1028, %v1024
    %v1033 = vpack.c.bf16 %v1029, %v1025
    %v1034 = vpack.c.bf16 %v1030, %v1026
    %v1035 = vpack.c.bf16 %v1031, %v1027
    %v1036 = vld [vmem:[#allocation16] sm:$0xff]
    %v1037 = vld [vmem:[#allocation16 + $0x8] sm:$0xff]
    %v1038 = vld [vmem:[#allocation16 + $0x10] sm:$0xff]
    %v1039 = vld [vmem:[#allocation16 + $0x18] sm:$0xff]
    %v1040 = vld [vmem:[#allocation16 + $0x20] sm:$0xff]
    %v1041 = vld [vmem:[#allocation16 + $0x28] sm:$0xff]
    %v1042 = vld [vmem:[#allocation16 + $0x30] sm:$0xff]
    %v1043 = vld [vmem:[#allocation16 + $0x38] sm:$0xff]
    %v1044 = vld [vmem:[#allocation16 + $0x40] sm:$0xff]
    %v1045 = vld [vmem:[#allocation16 + $0x48] sm:$0xff]
    %v1046 = vld [vmem:[#allocation16 + $0x50] sm:$0xff]
    %v1047 = vld [vmem:[#allocation16 + $0x58] sm:$0xff]
    %v1048 = vld [vmem:[#allocation16 + $0x60] sm:$0xff]
    %v1049 = vld [vmem:[#allocation16 + $0x68] sm:$0xff]
    %v1050 = vld [vmem:[#allocation16 + $0x70] sm:$0xff]
    %v1051 = vld [vmem:[#allocation16 + $0x78] sm:$0xff]
    %v1052 = vld [vmem:[#allocation16 + $0x80] sm:$0xff]
    %v1053 = vld [vmem:[#allocation16 + $0x88] sm:$0xff]
    %v1054 = vld [vmem:[#allocation16 + $0x90] sm:$0xff]
    %v1055 = vld [vmem:[#allocation16 + $0x98] sm:$0xff]
    %v1056 = vld [vmem:[#allocation16 + $0xa0] sm:$0xff]
    %v1057 = vld [vmem:[#allocation16 + $0xa8] sm:$0xff]
    %v1058 = vld [vmem:[#allocation16 + $0xb0] sm:$0xff]
    %v1059 = vld [vmem:[#allocation16 + $0xb8] sm:$0xff]
    %v1060 = vld [vmem:[#allocation16 + $0xc0] sm:$0xff]
    %v1061 = vld [vmem:[#allocation16 + $0xc8] sm:$0xff]
    %v1062 = vld [vmem:[#allocation16 + $0xd0] sm:$0xff]
    %v1063 = vld [vmem:[#allocation16 + $0xd8] sm:$0xff]
    %v1064 = vld [vmem:[#allocation16 + $0xe0] sm:$0xff]
    %v1065 = vld [vmem:[#allocation16 + $0xe8] sm:$0xff]
    %v1066 = vld [vmem:[#allocation16 + $0xf0] sm:$0xff]
    %v1067 = vld [vmem:[#allocation16 + $0xf8] sm:$0xff]
    %v1068 = vld [vmem:[#allocation16 + $0x100] sm:$0xff]
    %v1069 = vld [vmem:[#allocation16 + $0x108] sm:$0xff]
    %v1070 = vld [vmem:[#allocation16 + $0x110] sm:$0xff]
    %v1071 = vld [vmem:[#allocation16 + $0x118] sm:$0xff]
    %v1072 = vld [vmem:[#allocation16 + $0x120] sm:$0xff]
    %v1073 = vld [vmem:[#allocation16 + $0x128] sm:$0xff]
    %v1074 = vld [vmem:[#allocation16 + $0x130] sm:$0xff]
    %v1075 = vld [vmem:[#allocation16 + $0x138] sm:$0xff]
    %v1076 = vld [vmem:[#allocation16 + $0x140] sm:$0xff]
    %v1077 = vld [vmem:[#allocation16 + $0x148] sm:$0xff]
    %v1078 = vld [vmem:[#allocation16 + $0x150] sm:$0xff]
    %v1079 = vld [vmem:[#allocation16 + $0x158] sm:$0xff]
    %v1080 = vld [vmem:[#allocation16 + $0x160] sm:$0xff]
    %v1081 = vld [vmem:[#allocation16 + $0x168] sm:$0xff]
    %v1082 = vld [vmem:[#allocation16 + $0x170] sm:$0xff]
    %v1083 = vld [vmem:[#allocation16 + $0x178] sm:$0xff]
    %v1084 = vld [vmem:[#allocation16 + $0x180] sm:$0xff]
    %v1085 = vld [vmem:[#allocation16 + $0x188] sm:$0xff]
    %v1086 = vld [vmem:[#allocation16 + $0x190] sm:$0xff]
    %v1087 = vld [vmem:[#allocation16 + $0x198] sm:$0xff]
    %v1088 = vld [vmem:[#allocation16 + $0x1a0] sm:$0xff]
    %v1089 = vld [vmem:[#allocation16 + $0x1a8] sm:$0xff]
    %v1090 = vld [vmem:[#allocation16 + $0x1b0] sm:$0xff]
    %v1091 = vld [vmem:[#allocation16 + $0x1b8] sm:$0xff]
    %v1092 = vld [vmem:[#allocation16 + $0x1c0] sm:$0xff]
    %v1093 = vld [vmem:[#allocation16 + $0x1c8] sm:$0xff]
    %v1094 = vld [vmem:[#allocation16 + $0x1d0] sm:$0xff]
    %v1095 = vld [vmem:[#allocation16 + $0x1d8] sm:$0xff]
    %v1096 = vld [vmem:[#allocation16 + $0x1e0] sm:$0xff]
    %v1097 = vld [vmem:[#allocation16 + $0x1e8] sm:$0xff]
    %v1098 = vld [vmem:[#allocation16 + $0x1f0] sm:$0xff]
    %v1099 = vld [vmem:[#allocation16 + $0x1f8] sm:$0xff]
    %v1100 = vld [vmem:[#allocation16 + $0x200] sm:$0xff]
    %v1101 = vld [vmem:[#allocation16 + $0x208] sm:$0xff]
    %v1102 = vld [vmem:[#allocation16 + $0x210] sm:$0xff]
    %v1103 = vld [vmem:[#allocation16 + $0x218] sm:$0xff]
    %v1104 = vld [vmem:[#allocation16 + $0x220] sm:$0xff]
    %v1105 = vld [vmem:[#allocation16 + $0x228] sm:$0xff]
    %v1106 = vld [vmem:[#allocation16 + $0x230] sm:$0xff]
    %v1107 = vld [vmem:[#allocation16 + $0x238] sm:$0xff]
    %v1108 = vld [vmem:[#allocation16 + $0x240] sm:$0xff]
    %v1109 = vld [vmem:[#allocation16 + $0x248] sm:$0xff]
    %v1110 = vld [vmem:[#allocation16 + $0x250] sm:$0xff]
    %v1111 = vld [vmem:[#allocation16 + $0x258] sm:$0xff]
    %v1112 = vld [vmem:[#allocation16 + $0x260] sm:$0xff]
    %v1113 = vld [vmem:[#allocation16 + $0x268] sm:$0xff]
    %v1114 = vld [vmem:[#allocation16 + $0x270] sm:$0xff]
    %v1115 = vld [vmem:[#allocation16 + $0x278] sm:$0xff]
    %v1116 = vld [vmem:[#allocation16 + $0x280] sm:$0xff]
    %v1117 = vld [vmem:[#allocation16 + $0x288] sm:$0xff]
    %v1118 = vld [vmem:[#allocation16 + $0x290] sm:$0xff]
    %v1119 = vld [vmem:[#allocation16 + $0x298] sm:$0xff]
    %v1120 = vld [vmem:[#allocation16 + $0x2a0] sm:$0xff]
    %v1121 = vld [vmem:[#allocation16 + $0x2a8] sm:$0xff]
    %v1122 = vld [vmem:[#allocation16 + $0x2b0] sm:$0xff]
    %v1123 = vld [vmem:[#allocation16 + $0x2b8] sm:$0xff]
    %v1124 = vld [vmem:[#allocation16 + $0x2c0] sm:$0xff]
    %v1125 = vld [vmem:[#allocation16 + $0x2c8] sm:$0xff]
    %v1126 = vld [vmem:[#allocation16 + $0x2d0] sm:$0xff]
    %v1127 = vld [vmem:[#allocation16 + $0x2d8] sm:$0xff]
    %v1128 = vld [vmem:[#allocation16 + $0x2e0] sm:$0xff]
    %v1129 = vld [vmem:[#allocation16 + $0x2e8] sm:$0xff]
    %v1130 = vld [vmem:[#allocation16 + $0x2f0] sm:$0xff]
    %v1131 = vld [vmem:[#allocation16 + $0x2f8] sm:$0xff]
    %v1132 = vld [vmem:[#allocation16 + $0x300] sm:$0xff]
    %v1133 = vld [vmem:[#allocation16 + $0x308] sm:$0xff]
    %v1134 = vld [vmem:[#allocation16 + $0x310] sm:$0xff]
    %v1135 = vld [vmem:[#allocation16 + $0x318] sm:$0xff]
    %v1136 = vld [vmem:[#allocation16 + $0x320] sm:$0xff]
    %v1137 = vld [vmem:[#allocation16 + $0x328] sm:$0xff]
    %v1138 = vld [vmem:[#allocation16 + $0x330] sm:$0xff]
    %v1139 = vld [vmem:[#allocation16 + $0x338] sm:$0xff]
    %v1140 = vld [vmem:[#allocation16 + $0x340] sm:$0xff]
    %v1141 = vld [vmem:[#allocation16 + $0x348] sm:$0xff]
    %v1142 = vld [vmem:[#allocation16 + $0x350] sm:$0xff]
    %v1143 = vld [vmem:[#allocation16 + $0x358] sm:$0xff]
    %v1144 = vld [vmem:[#allocation16 + $0x360] sm:$0xff]
    %v1145 = vld [vmem:[#allocation16 + $0x368] sm:$0xff]
    %v1146 = vld [vmem:[#allocation16 + $0x370] sm:$0xff]
    %v1147 = vld [vmem:[#allocation16 + $0x378] sm:$0xff]
    %v1148 = vld [vmem:[#allocation16 + $0x380] sm:$0xff]
    %v1149 = vld [vmem:[#allocation16 + $0x388] sm:$0xff]
    %v1150 = vld [vmem:[#allocation16 + $0x390] sm:$0xff]
    %v1151 = vld [vmem:[#allocation16 + $0x398] sm:$0xff]
    %v1152 = vld [vmem:[#allocation16 + $0x3a0] sm:$0xff]
    %v1153 = vld [vmem:[#allocation16 + $0x3a8] sm:$0xff]
    %v1154 = vld [vmem:[#allocation16 + $0x3b0] sm:$0xff]
    %v1155 = vld [vmem:[#allocation16 + $0x3b8] sm:$0xff]
    %v1156 = vld [vmem:[#allocation16 + $0x3c0] sm:$0xff]
    %v1157 = vld [vmem:[#allocation16 + $0x3c8] sm:$0xff]
    %v1158 = vld [vmem:[#allocation16 + $0x3d0] sm:$0xff]
    %v1159 = vld [vmem:[#allocation16 + $0x3d8] sm:$0xff]
    %v1160 = vld [vmem:[#allocation16 + $0x3e0] sm:$0xff]
    %v1161 = vld [vmem:[#allocation16 + $0x3e8] sm:$0xff]
    %v1162 = vld [vmem:[#allocation16 + $0x3f0] sm:$0xff]
    %v1163 = vld [vmem:[#allocation16 + $0x3f8] sm:$0xff]
    %v1164 = vld [vmem:[#allocation16 + $0x400] sm:$0xff]
    %v1165 = vld [vmem:[#allocation16 + $0x408] sm:$0xff]
    %v1166 = vld [vmem:[#allocation16 + $0x410] sm:$0xff]
    %v1167 = vld [vmem:[#allocation16 + $0x418] sm:$0xff]
    %v1168 = vld [vmem:[#allocation16 + $0x420] sm:$0xff]
    %v1169 = vld [vmem:[#allocation16 + $0x428] sm:$0xff]
    %v1170 = vld [vmem:[#allocation16 + $0x430] sm:$0xff]
    %v1171 = vld [vmem:[#allocation16 + $0x438] sm:$0xff]
    %v1172 = vld [vmem:[#allocation16 + $0x440] sm:$0xff]
    %v1173 = vld [vmem:[#allocation16 + $0x448] sm:$0xff]
    %v1174 = vld [vmem:[#allocation16 + $0x450] sm:$0xff]
    %v1175 = vld [vmem:[#allocation16 + $0x458] sm:$0xff]
    %v1176 = vld [vmem:[#allocation16 + $0x460] sm:$0xff]
    %v1177 = vld [vmem:[#allocation16 + $0x468] sm:$0xff]
    %v1178 = vld [vmem:[#allocation16 + $0x470] sm:$0xff]
    %v1179 = vld [vmem:[#allocation16 + $0x478] sm:$0xff]
    %v1180 = vld [vmem:[#allocation16 + $0x480] sm:$0xff]
    %v1181 = vld [vmem:[#allocation16 + $0x488] sm:$0xff]
    %v1182 = vld [vmem:[#allocation16 + $0x490] sm:$0xff]
    %v1183 = vld [vmem:[#allocation16 + $0x498] sm:$0xff]
    %v1184 = vld [vmem:[#allocation16 + $0x4a0] sm:$0xff]
    %v1185 = vld [vmem:[#allocation16 + $0x4a8] sm:$0xff]
    %v1186 = vld [vmem:[#allocation16 + $0x4b0] sm:$0xff]
    %v1187 = vld [vmem:[#allocation16 + $0x4b8] sm:$0xff]
    %v1188 = vld [vmem:[#allocation16 + $0x4c0] sm:$0xff]
    %v1189 = vld [vmem:[#allocation16 + $0x4c8] sm:$0xff]
    %v1190 = vld [vmem:[#allocation16 + $0x4d0] sm:$0xff]
    %v1191 = vld [vmem:[#allocation16 + $0x4d8] sm:$0xff]
    %v1192 = vld [vmem:[#allocation16 + $0x4e0] sm:$0xff]
    %v1193 = vld [vmem:[#allocation16 + $0x4e8] sm:$0xff]
    %v1194 = vld [vmem:[#allocation16 + $0x4f0] sm:$0xff]
    %v1195 = vld [vmem:[#allocation16 + $0x4f8] sm:$0xff]
    %v1196 = vld [vmem:[#allocation16 + $0x500] sm:$0xff]
    %v1197 = vld [vmem:[#allocation16 + $0x508] sm:$0xff]
    %v1198 = vld [vmem:[#allocation16 + $0x510] sm:$0xff]
    %v1199 = vld [vmem:[#allocation16 + $0x518] sm:$0xff]
    %v1200 = vld [vmem:[#allocation16 + $0x520] sm:$0xff]
    %v1201 = vld [vmem:[#allocation16 + $0x528] sm:$0xff]
    %v1202 = vld [vmem:[#allocation16 + $0x530] sm:$0xff]
    %v1203 = vld [vmem:[#allocation16 + $0x538] sm:$0xff]
    %v1204 = vld [vmem:[#allocation16 + $0x540] sm:$0xff]
    %v1205 = vld [vmem:[#allocation16 + $0x548] sm:$0xff]
    %v1206 = vld [vmem:[#allocation16 + $0x550] sm:$0xff]
    %v1207 = vld [vmem:[#allocation16 + $0x558] sm:$0xff]
    %v1208 = vld [vmem:[#allocation16 + $0x560] sm:$0xff]
    %v1209 = vld [vmem:[#allocation16 + $0x568] sm:$0xff]
    %v1210 = vld [vmem:[#allocation16 + $0x570] sm:$0xff]
    %v1211 = vld [vmem:[#allocation16 + $0x578] sm:$0xff]
    %v1212 = vld [vmem:[#allocation16 + $0x580] sm:$0xff]
    %v1213 = vld [vmem:[#allocation16 + $0x588] sm:$0xff]
    %v1214 = vld [vmem:[#allocation16 + $0x590] sm:$0xff]
    %v1215 = vld [vmem:[#allocation16 + $0x598] sm:$0xff]
    %v1216 = vld [vmem:[#allocation16 + $0x5a0] sm:$0xff]
    %v1217 = vld [vmem:[#allocation16 + $0x5a8] sm:$0xff]
    %v1218 = vld [vmem:[#allocation16 + $0x5b0] sm:$0xff]
    %v1219 = vld [vmem:[#allocation16 + $0x5b8] sm:$0xff]
    %v1220 = vld [vmem:[#allocation16 + $0x5c0] sm:$0xff]
    %v1221 = vld [vmem:[#allocation16 + $0x5c8] sm:$0xff]
    %v1222 = vld [vmem:[#allocation16 + $0x5d0] sm:$0xff]
    %v1223 = vld [vmem:[#allocation16 + $0x5d8] sm:$0xff]
    %v1224 = vld [vmem:[#allocation16 + $0x5e0] sm:$0xff]
    %v1225 = vld [vmem:[#allocation16 + $0x5e8] sm:$0xff]
    %v1226 = vld [vmem:[#allocation16 + $0x5f0] sm:$0xff]
    %v1227 = vld [vmem:[#allocation16 + $0x5f8] sm:$0xff]
    %v1228 = vld [vmem:[#allocation16 + $0x600] sm:$0xff]
    %v1229 = vld [vmem:[#allocation16 + $0x608] sm:$0xff]
    %v1230 = vld [vmem:[#allocation16 + $0x610] sm:$0xff]
    %v1231 = vld [vmem:[#allocation16 + $0x618] sm:$0xff]
    %v1232 = vld [vmem:[#allocation16 + $0x620] sm:$0xff]
    %v1233 = vld [vmem:[#allocation16 + $0x628] sm:$0xff]
    %v1234 = vld [vmem:[#allocation16 + $0x630] sm:$0xff]
    %v1235 = vld [vmem:[#allocation16 + $0x638] sm:$0xff]
    %v1236 = vld [vmem:[#allocation16 + $0x640] sm:$0xff]
    %v1237 = vld [vmem:[#allocation16 + $0x648] sm:$0xff]
    %v1238 = vld [vmem:[#allocation16 + $0x650] sm:$0xff]
    %v1239 = vld [vmem:[#allocation16 + $0x658] sm:$0xff]
    %v1240 = vld [vmem:[#allocation16 + $0x660] sm:$0xff]
    %v1241 = vld [vmem:[#allocation16 + $0x668] sm:$0xff]
    %v1242 = vld [vmem:[#allocation16 + $0x670] sm:$0xff]
    %v1243 = vld [vmem:[#allocation16 + $0x678] sm:$0xff]
    %v1244 = vld [vmem:[#allocation16 + $0x680] sm:$0xff]
    %v1245 = vld [vmem:[#allocation16 + $0x688] sm:$0xff]
    %v1246 = vld [vmem:[#allocation16 + $0x690] sm:$0xff]
    %v1247 = vld [vmem:[#allocation16 + $0x698] sm:$0xff]
    %v1248 = vld [vmem:[#allocation16 + $0x6a0] sm:$0xff]
    %v1249 = vld [vmem:[#allocation16 + $0x6a8] sm:$0xff]
    %v1250 = vld [vmem:[#allocation16 + $0x6b0] sm:$0xff]
    %v1251 = vld [vmem:[#allocation16 + $0x6b8] sm:$0xff]
    %v1252 = vld [vmem:[#allocation16 + $0x6c0] sm:$0xff]
    %v1253 = vld [vmem:[#allocation16 + $0x6c8] sm:$0xff]
    %v1254 = vld [vmem:[#allocation16 + $0x6d0] sm:$0xff]
    %v1255 = vld [vmem:[#allocation16 + $0x6d8] sm:$0xff]
    %v1256 = vld [vmem:[#allocation16 + $0x6e0] sm:$0xff]
    %v1257 = vld [vmem:[#allocation16 + $0x6e8] sm:$0xff]
    %v1258 = vld [vmem:[#allocation16 + $0x6f0] sm:$0xff]
    %v1259 = vld [vmem:[#allocation16 + $0x6f8] sm:$0xff]
    %v1260 = vld [vmem:[#allocation16 + $0x700] sm:$0xff]
    %v1261 = vld [vmem:[#allocation16 + $0x708] sm:$0xff]
    %v1262 = vld [vmem:[#allocation16 + $0x710] sm:$0xff]
    %v1263 = vld [vmem:[#allocation16 + $0x718] sm:$0xff]
    %v1264 = vld [vmem:[#allocation16 + $0x720] sm:$0xff]
    %v1265 = vld [vmem:[#allocation16 + $0x728] sm:$0xff]
    %v1266 = vld [vmem:[#allocation16 + $0x730] sm:$0xff]
    %v1267 = vld [vmem:[#allocation16 + $0x738] sm:$0xff]
    %v1268 = vld [vmem:[#allocation16 + $0x740] sm:$0xff]
    %v1269 = vld [vmem:[#allocation16 + $0x748] sm:$0xff]
    %v1270 = vld [vmem:[#allocation16 + $0x750] sm:$0xff]
    %v1271 = vld [vmem:[#allocation16 + $0x758] sm:$0xff]
    %v1272 = vld [vmem:[#allocation16 + $0x760] sm:$0xff]
    %v1273 = vld [vmem:[#allocation16 + $0x768] sm:$0xff]
    %v1274 = vld [vmem:[#allocation16 + $0x770] sm:$0xff]
    %v1275 = vld [vmem:[#allocation16 + $0x778] sm:$0xff]
    %v1276 = vld [vmem:[#allocation16 + $0x780] sm:$0xff]
    %v1277 = vld [vmem:[#allocation16 + $0x788] sm:$0xff]
    %v1278 = vld [vmem:[#allocation16 + $0x790] sm:$0xff]
    %v1279 = vld [vmem:[#allocation16 + $0x798] sm:$0xff]
    %v1280 = vld [vmem:[#allocation16 + $0x7a0] sm:$0xff]
    %v1281 = vld [vmem:[#allocation16 + $0x7a8] sm:$0xff]
    %v1282 = vld [vmem:[#allocation16 + $0x7b0] sm:$0xff]
    %v1283 = vld [vmem:[#allocation16 + $0x7b8] sm:$0xff]
    %v1284 = vld [vmem:[#allocation16 + $0x7c0] sm:$0xff]
    %v1285 = vld [vmem:[#allocation16 + $0x7c8] sm:$0xff]
    %v1286 = vld [vmem:[#allocation16 + $0x7d0] sm:$0xff]
    %v1287 = vld [vmem:[#allocation16 + $0x7d8] sm:$0xff]
    %v1288 = vld [vmem:[#allocation16 + $0x7e0] sm:$0xff]
    %v1289 = vld [vmem:[#allocation16 + $0x7e8] sm:$0xff]
    %v1290 = vld [vmem:[#allocation16 + $0x7f0] sm:$0xff]
    %v1291 = vld [vmem:[#allocation16 + $0x7f8] sm:$0xff]
    %v1548 = vunpack.c.l.b16 %v1036
    %v1549 = vunpack.c.h.b16 %v1036
    %v1550 = vunpack.c.l.b16 %v1037
    %v1551 = vunpack.c.h.b16 %v1037
    %v1552 = vunpack.c.l.b16 %v1038
    %v1553 = vunpack.c.h.b16 %v1038
    %v1554 = vunpack.c.l.b16 %v1039
    %v1555 = vunpack.c.h.b16 %v1039
    %v1556 = vunpack.c.l.b16 %v1040
    %v1557 = vunpack.c.h.b16 %v1040
    %v1558 = vunpack.c.l.b16 %v1041
    %v1559 = vunpack.c.h.b16 %v1041
    %v1560 = vunpack.c.l.b16 %v1042
    %v1561 = vunpack.c.h.b16 %v1042
    %v1562 = vunpack.c.l.b16 %v1043
    %v1563 = vunpack.c.h.b16 %v1043
    %v1564 = vunpack.c.l.b16 %v1044
    %v1565 = vunpack.c.h.b16 %v1044
    %v1566 = vunpack.c.l.b16 %v1045
    %v1567 = vunpack.c.h.b16 %v1045
    %v1568 = vunpack.c.l.b16 %v1046
    %v1569 = vunpack.c.h.b16 %v1046
    %v1570 = vunpack.c.l.b16 %v1047
    %v1571 = vunpack.c.h.b16 %v1047
    %v1572 = vunpack.c.l.b16 %v1048
    %v1573 = vunpack.c.h.b16 %v1048
    %v1574 = vunpack.c.l.b16 %v1049
    %v1575 = vunpack.c.h.b16 %v1049
    %v1576 = vunpack.c.l.b16 %v1050
    %v1577 = vunpack.c.h.b16 %v1050
    %v1578 = vunpack.c.l.b16 %v1051
    %v1579 = vunpack.c.h.b16 %v1051
    %v1580 = vunpack.c.l.b16 %v1052
    %v1581 = vunpack.c.h.b16 %v1052
    %v1582 = vunpack.c.l.b16 %v1053
    %v1583 = vunpack.c.h.b16 %v1053
    %v1584 = vunpack.c.l.b16 %v1054
    %v1585 = vunpack.c.h.b16 %v1054
    %v1586 = vunpack.c.l.b16 %v1055
    %v1587 = vunpack.c.h.b16 %v1055
    %v1588 = vunpack.c.l.b16 %v1056
    %v1589 = vunpack.c.h.b16 %v1056
    %v1590 = vunpack.c.l.b16 %v1057
    %v1591 = vunpack.c.h.b16 %v1057
    %v1592 = vunpack.c.l.b16 %v1058
    %v1593 = vunpack.c.h.b16 %v1058
    %v1594 = vunpack.c.l.b16 %v1059
    %v1595 = vunpack.c.h.b16 %v1059
    %v1596 = vunpack.c.l.b16 %v1060
    %v1597 = vunpack.c.h.b16 %v1060
    %v1598 = vunpack.c.l.b16 %v1061
    %v1599 = vunpack.c.h.b16 %v1061
    %v1600 = vunpack.c.l.b16 %v1062
    %v1601 = vunpack.c.h.b16 %v1062
    %v1602 = vunpack.c.l.b16 %v1063
    %v1603 = vunpack.c.h.b16 %v1063
    %v1604 = vunpack.c.l.b16 %v1064
    %v1605 = vunpack.c.h.b16 %v1064
    %v1606 = vunpack.c.l.b16 %v1065
    %v1607 = vunpack.c.h.b16 %v1065
    %v1608 = vunpack.c.l.b16 %v1066
    %v1609 = vunpack.c.h.b16 %v1066
    %v1610 = vunpack.c.l.b16 %v1067
    %v1611 = vunpack.c.h.b16 %v1067
    %v1612 = vunpack.c.l.b16 %v1068
    %v1613 = vunpack.c.h.b16 %v1068
    %v1614 = vunpack.c.l.b16 %v1069
    %v1615 = vunpack.c.h.b16 %v1069
    %v1616 = vunpack.c.l.b16 %v1070
    %v1617 = vunpack.c.h.b16 %v1070
    %v1618 = vunpack.c.l.b16 %v1071
    %v1619 = vunpack.c.h.b16 %v1071
    %v1620 = vunpack.c.l.b16 %v1072
    %v1621 = vunpack.c.h.b16 %v1072
    %v1622 = vunpack.c.l.b16 %v1073
    %v1623 = vunpack.c.h.b16 %v1073
    %v1624 = vunpack.c.l.b16 %v1074
    %v1625 = vunpack.c.h.b16 %v1074
    %v1626 = vunpack.c.l.b16 %v1075
    %v1627 = vunpack.c.h.b16 %v1075
    %v1628 = vunpack.c.l.b16 %v1076
    %v1629 = vunpack.c.h.b16 %v1076
    %v1630 = vunpack.c.l.b16 %v1077
    %v1631 = vunpack.c.h.b16 %v1077
    %v1632 = vunpack.c.l.b16 %v1078
    %v1633 = vunpack.c.h.b16 %v1078
    %v1634 = vunpack.c.l.b16 %v1079
    %v1635 = vunpack.c.h.b16 %v1079
    %v1636 = vunpack.c.l.b16 %v1080
    %v1637 = vunpack.c.h.b16 %v1080
    %v1638 = vunpack.c.l.b16 %v1081
    %v1639 = vunpack.c.h.b16 %v1081
    %v1640 = vunpack.c.l.b16 %v1082
    %v1641 = vunpack.c.h.b16 %v1082
    %v1642 = vunpack.c.l.b16 %v1083
    %v1643 = vunpack.c.h.b16 %v1083
    %v1644 = vunpack.c.l.b16 %v1084
    %v1645 = vunpack.c.h.b16 %v1084
    %v1646 = vunpack.c.l.b16 %v1085
    %v1647 = vunpack.c.h.b16 %v1085
    %v1648 = vunpack.c.l.b16 %v1086
    %v1649 = vunpack.c.h.b16 %v1086
    %v1650 = vunpack.c.l.b16 %v1087
    %v1651 = vunpack.c.h.b16 %v1087
    %v1652 = vunpack.c.l.b16 %v1088
    %v1653 = vunpack.c.h.b16 %v1088
    %v1654 = vunpack.c.l.b16 %v1089
    %v1655 = vunpack.c.h.b16 %v1089
    %v1656 = vunpack.c.l.b16 %v1090
    %v1657 = vunpack.c.h.b16 %v1090
    %v1658 = vunpack.c.l.b16 %v1091
    %v1659 = vunpack.c.h.b16 %v1091
    %v1660 = vunpack.c.l.b16 %v1092
    %v1661 = vunpack.c.h.b16 %v1092
    %v1662 = vunpack.c.l.b16 %v1093
    %v1663 = vunpack.c.h.b16 %v1093
    %v1664 = vunpack.c.l.b16 %v1094
    %v1665 = vunpack.c.h.b16 %v1094
    %v1666 = vunpack.c.l.b16 %v1095
    %v1667 = vunpack.c.h.b16 %v1095
    %v1668 = vunpack.c.l.b16 %v1096
    %v1669 = vunpack.c.h.b16 %v1096
    %v1670 = vunpack.c.l.b16 %v1097
    %v1671 = vunpack.c.h.b16 %v1097
    %v1672 = vunpack.c.l.b16 %v1098
    %v1673 = vunpack.c.h.b16 %v1098
    %v1674 = vunpack.c.l.b16 %v1099
    %v1675 = vunpack.c.h.b16 %v1099
    %v1676 = vunpack.c.l.b16 %v1100
    %v1677 = vunpack.c.h.b16 %v1100
    %v1678 = vunpack.c.l.b16 %v1101
    %v1679 = vunpack.c.h.b16 %v1101
    %v1680 = vunpack.c.l.b16 %v1102
    %v1681 = vunpack.c.h.b16 %v1102
    %v1682 = vunpack.c.l.b16 %v1103
    %v1683 = vunpack.c.h.b16 %v1103
    %v1684 = vunpack.c.l.b16 %v1104
    %v1685 = vunpack.c.h.b16 %v1104
    %v1686 = vunpack.c.l.b16 %v1105
    %v1687 = vunpack.c.h.b16 %v1105
    %v1688 = vunpack.c.l.b16 %v1106
    %v1689 = vunpack.c.h.b16 %v1106
    %v1690 = vunpack.c.l.b16 %v1107
    %v1691 = vunpack.c.h.b16 %v1107
    %v1692 = vunpack.c.l.b16 %v1108
    %v1693 = vunpack.c.h.b16 %v1108
    %v1694 = vunpack.c.l.b16 %v1109
    %v1695 = vunpack.c.h.b16 %v1109
    %v1696 = vunpack.c.l.b16 %v1110
    %v1697 = vunpack.c.h.b16 %v1110
    %v1698 = vunpack.c.l.b16 %v1111
    %v1699 = vunpack.c.h.b16 %v1111
    %v1700 = vunpack.c.l.b16 %v1112
    %v1701 = vunpack.c.h.b16 %v1112
    %v1702 = vunpack.c.l.b16 %v1113
    %v1703 = vunpack.c.h.b16 %v1113
    %v1704 = vunpack.c.l.b16 %v1114
    %v1705 = vunpack.c.h.b16 %v1114
    %v1706 = vunpack.c.l.b16 %v1115
    %v1707 = vunpack.c.h.b16 %v1115
    %v1708 = vunpack.c.l.b16 %v1116
    %v1709 = vunpack.c.h.b16 %v1116
    %v1710 = vunpack.c.l.b16 %v1117
    %v1711 = vunpack.c.h.b16 %v1117
    %v1712 = vunpack.c.l.b16 %v1118
    %v1713 = vunpack.c.h.b16 %v1118
    %v1714 = vunpack.c.l.b16 %v1119
    %v1715 = vunpack.c.h.b16 %v1119
    %v1716 = vunpack.c.l.b16 %v1120
    %v1717 = vunpack.c.h.b16 %v1120
    %v1718 = vunpack.c.l.b16 %v1121
    %v1719 = vunpack.c.h.b16 %v1121
    %v1720 = vunpack.c.l.b16 %v1122
    %v1721 = vunpack.c.h.b16 %v1122
    %v1722 = vunpack.c.l.b16 %v1123
    %v1723 = vunpack.c.h.b16 %v1123
    %v1724 = vunpack.c.l.b16 %v1124
    %v1725 = vunpack.c.h.b16 %v1124
    %v1726 = vunpack.c.l.b16 %v1125
    %v1727 = vunpack.c.h.b16 %v1125
    %v1728 = vunpack.c.l.b16 %v1126
    %v1729 = vunpack.c.h.b16 %v1126
    %v1730 = vunpack.c.l.b16 %v1127
    %v1731 = vunpack.c.h.b16 %v1127
    %v1732 = vunpack.c.l.b16 %v1128
    %v1733 = vunpack.c.h.b16 %v1128
    %v1734 = vunpack.c.l.b16 %v1129
    %v1735 = vunpack.c.h.b16 %v1129
    %v1736 = vunpack.c.l.b16 %v1130
    %v1737 = vunpack.c.h.b16 %v1130
    %v1738 = vunpack.c.l.b16 %v1131
    %v1739 = vunpack.c.h.b16 %v1131
    %v1740 = vunpack.c.l.b16 %v1132
    %v1741 = vunpack.c.h.b16 %v1132
    %v1742 = vunpack.c.l.b16 %v1133
    %v1743 = vunpack.c.h.b16 %v1133
    %v1744 = vunpack.c.l.b16 %v1134
    %v1745 = vunpack.c.h.b16 %v1134
    %v1746 = vunpack.c.l.b16 %v1135
    %v1747 = vunpack.c.h.b16 %v1135
    %v1748 = vunpack.c.l.b16 %v1136
    %v1749 = vunpack.c.h.b16 %v1136
    %v1750 = vunpack.c.l.b16 %v1137
    %v1751 = vunpack.c.h.b16 %v1137
    %v1752 = vunpack.c.l.b16 %v1138
    %v1753 = vunpack.c.h.b16 %v1138
    %v1754 = vunpack.c.l.b16 %v1139
    %v1755 = vunpack.c.h.b16 %v1139
    %v1756 = vunpack.c.l.b16 %v1140
    %v1757 = vunpack.c.h.b16 %v1140
    %v1758 = vunpack.c.l.b16 %v1141
    %v1759 = vunpack.c.h.b16 %v1141
    %v1760 = vunpack.c.l.b16 %v1142
    %v1761 = vunpack.c.h.b16 %v1142
    %v1762 = vunpack.c.l.b16 %v1143
    %v1763 = vunpack.c.h.b16 %v1143
    %v1764 = vunpack.c.l.b16 %v1144
    %v1765 = vunpack.c.h.b16 %v1144
    %v1766 = vunpack.c.l.b16 %v1145
    %v1767 = vunpack.c.h.b16 %v1145
    %v1768 = vunpack.c.l.b16 %v1146
    %v1769 = vunpack.c.h.b16 %v1146
    %v1770 = vunpack.c.l.b16 %v1147
    %v1771 = vunpack.c.h.b16 %v1147
    %v1772 = vunpack.c.l.b16 %v1148
    %v1773 = vunpack.c.h.b16 %v1148
    %v1774 = vunpack.c.l.b16 %v1149
    %v1775 = vunpack.c.h.b16 %v1149
    %v1776 = vunpack.c.l.b16 %v1150
    %v1777 = vunpack.c.h.b16 %v1150
    %v1778 = vunpack.c.l.b16 %v1151
    %v1779 = vunpack.c.h.b16 %v1151
    %v1780 = vunpack.c.l.b16 %v1152
    %v1781 = vunpack.c.h.b16 %v1152
    %v1782 = vunpack.c.l.b16 %v1153
    %v1783 = vunpack.c.h.b16 %v1153
    %v1784 = vunpack.c.l.b16 %v1154
    %v1785 = vunpack.c.h.b16 %v1154
    %v1786 = vunpack.c.l.b16 %v1155
    %v1787 = vunpack.c.h.b16 %v1155
    %v1788 = vunpack.c.l.b16 %v1156
    %v1789 = vunpack.c.h.b16 %v1156
    %v1790 = vunpack.c.l.b16 %v1157
    %v1791 = vunpack.c.h.b16 %v1157
    %v1792 = vunpack.c.l.b16 %v1158
    %v1793 = vunpack.c.h.b16 %v1158
    %v1794 = vunpack.c.l.b16 %v1159
    %v1795 = vunpack.c.h.b16 %v1159
    %v1796 = vunpack.c.l.b16 %v1160
    %v1797 = vunpack.c.h.b16 %v1160
    %v1798 = vunpack.c.l.b16 %v1161
    %v1799 = vunpack.c.h.b16 %v1161
    %v1800 = vunpack.c.l.b16 %v1162
    %v1801 = vunpack.c.h.b16 %v1162
    %v1802 = vunpack.c.l.b16 %v1163
    %v1803 = vunpack.c.h.b16 %v1163
    %v1804 = vunpack.c.l.b16 %v1164
    %v1805 = vunpack.c.h.b16 %v1164
    %v1806 = vunpack.c.l.b16 %v1165
    %v1807 = vunpack.c.h.b16 %v1165
    %v1808 = vunpack.c.l.b16 %v1166
    %v1809 = vunpack.c.h.b16 %v1166
    %v1810 = vunpack.c.l.b16 %v1167
    %v1811 = vunpack.c.h.b16 %v1167
    %v1812 = vunpack.c.l.b16 %v1168
    %v1813 = vunpack.c.h.b16 %v1168
    %v1814 = vunpack.c.l.b16 %v1169
    %v1815 = vunpack.c.h.b16 %v1169
    %v1816 = vunpack.c.l.b16 %v1170
    %v1817 = vunpack.c.h.b16 %v1170
    %v1818 = vunpack.c.l.b16 %v1171
    %v1819 = vunpack.c.h.b16 %v1171
    %v1820 = vunpack.c.l.b16 %v1172
    %v1821 = vunpack.c.h.b16 %v1172
    %v1822 = vunpack.c.l.b16 %v1173
    %v1823 = vunpack.c.h.b16 %v1173
    %v1824 = vunpack.c.l.b16 %v1174
    %v1825 = vunpack.c.h.b16 %v1174
    %v1826 = vunpack.c.l.b16 %v1175
    %v1827 = vunpack.c.h.b16 %v1175
    %v1828 = vunpack.c.l.b16 %v1176
    %v1829 = vunpack.c.h.b16 %v1176
    %v1830 = vunpack.c.l.b16 %v1177
    %v1831 = vunpack.c.h.b16 %v1177
    %v1832 = vunpack.c.l.b16 %v1178
    %v1833 = vunpack.c.h.b16 %v1178
    %v1834 = vunpack.c.l.b16 %v1179
    %v1835 = vunpack.c.h.b16 %v1179
    %v1836 = vunpack.c.l.b16 %v1180
    %v1837 = vunpack.c.h.b16 %v1180
    %v1838 = vunpack.c.l.b16 %v1181
    %v1839 = vunpack.c.h.b16 %v1181
    %v1840 = vunpack.c.l.b16 %v1182
    %v1841 = vunpack.c.h.b16 %v1182
    %v1842 = vunpack.c.l.b16 %v1183
    %v1843 = vunpack.c.h.b16 %v1183
    %v1844 = vunpack.c.l.b16 %v1184
    %v1845 = vunpack.c.h.b16 %v1184
    %v1846 = vunpack.c.l.b16 %v1185
    %v1847 = vunpack.c.h.b16 %v1185
    %v1848 = vunpack.c.l.b16 %v1186
    %v1849 = vunpack.c.h.b16 %v1186
    %v1850 = vunpack.c.l.b16 %v1187
    %v1851 = vunpack.c.h.b16 %v1187
    %v1852 = vunpack.c.l.b16 %v1188
    %v1853 = vunpack.c.h.b16 %v1188
    %v1854 = vunpack.c.l.b16 %v1189
    %v1855 = vunpack.c.h.b16 %v1189
    %v1856 = vunpack.c.l.b16 %v1190
    %v1857 = vunpack.c.h.b16 %v1190
    %v1858 = vunpack.c.l.b16 %v1191
    %v1859 = vunpack.c.h.b16 %v1191
    %v1860 = vunpack.c.l.b16 %v1192
    %v1861 = vunpack.c.h.b16 %v1192
    %v1862 = vunpack.c.l.b16 %v1193
    %v1863 = vunpack.c.h.b16 %v1193
    %v1864 = vunpack.c.l.b16 %v1194
    %v1865 = vunpack.c.h.b16 %v1194
    %v1866 = vunpack.c.l.b16 %v1195
    %v1867 = vunpack.c.h.b16 %v1195
    %v1868 = vunpack.c.l.b16 %v1196
    %v1869 = vunpack.c.h.b16 %v1196
    %v1870 = vunpack.c.l.b16 %v1197
    %v1871 = vunpack.c.h.b16 %v1197
    %v1872 = vunpack.c.l.b16 %v1198
    %v1873 = vunpack.c.h.b16 %v1198
    %v1874 = vunpack.c.l.b16 %v1199
    %v1875 = vunpack.c.h.b16 %v1199
    %v1876 = vunpack.c.l.b16 %v1200
    %v1877 = vunpack.c.h.b16 %v1200
    %v1878 = vunpack.c.l.b16 %v1201
    %v1879 = vunpack.c.h.b16 %v1201
    %v1880 = vunpack.c.l.b16 %v1202
    %v1881 = vunpack.c.h.b16 %v1202
    %v1882 = vunpack.c.l.b16 %v1203
    %v1883 = vunpack.c.h.b16 %v1203
    %v1884 = vunpack.c.l.b16 %v1204
    %v1885 = vunpack.c.h.b16 %v1204
    %v1886 = vunpack.c.l.b16 %v1205
    %v1887 = vunpack.c.h.b16 %v1205
    %v1888 = vunpack.c.l.b16 %v1206
    %v1889 = vunpack.c.h.b16 %v1206
    %v1890 = vunpack.c.l.b16 %v1207
    %v1891 = vunpack.c.h.b16 %v1207
    %v1892 = vunpack.c.l.b16 %v1208
    %v1893 = vunpack.c.h.b16 %v1208
    %v1894 = vunpack.c.l.b16 %v1209
    %v1895 = vunpack.c.h.b16 %v1209
    %v1896 = vunpack.c.l.b16 %v1210
    %v1897 = vunpack.c.h.b16 %v1210
    %v1898 = vunpack.c.l.b16 %v1211
    %v1899 = vunpack.c.h.b16 %v1211
    %v1900 = vunpack.c.l.b16 %v1212
    %v1901 = vunpack.c.h.b16 %v1212
    %v1902 = vunpack.c.l.b16 %v1213
    %v1903 = vunpack.c.h.b16 %v1213
    %v1904 = vunpack.c.l.b16 %v1214
    %v1905 = vunpack.c.h.b16 %v1214
    %v1906 = vunpack.c.l.b16 %v1215
    %v1907 = vunpack.c.h.b16 %v1215
    %v1908 = vunpack.c.l.b16 %v1216
    %v1909 = vunpack.c.h.b16 %v1216
    %v1910 = vunpack.c.l.b16 %v1217
    %v1911 = vunpack.c.h.b16 %v1217
    %v1912 = vunpack.c.l.b16 %v1218
    %v1913 = vunpack.c.h.b16 %v1218
    %v1914 = vunpack.c.l.b16 %v1219
    %v1915 = vunpack.c.h.b16 %v1219
    %v1916 = vunpack.c.l.b16 %v1220
    %v1917 = vunpack.c.h.b16 %v1220
    %v1918 = vunpack.c.l.b16 %v1221
    %v1919 = vunpack.c.h.b16 %v1221
    %v1920 = vunpack.c.l.b16 %v1222
    %v1921 = vunpack.c.h.b16 %v1222
    %v1922 = vunpack.c.l.b16 %v1223
    %v1923 = vunpack.c.h.b16 %v1223
    %v1924 = vunpack.c.l.b16 %v1224
    %v1925 = vunpack.c.h.b16 %v1224
    %v1926 = vunpack.c.l.b16 %v1225
    %v1927 = vunpack.c.h.b16 %v1225
    %v1928 = vunpack.c.l.b16 %v1226
    %v1929 = vunpack.c.h.b16 %v1226
    %v1930 = vunpack.c.l.b16 %v1227
    %v1931 = vunpack.c.h.b16 %v1227
    %v1932 = vunpack.c.l.b16 %v1228
    %v1933 = vunpack.c.h.b16 %v1228
    %v1934 = vunpack.c.l.b16 %v1229
    %v1935 = vunpack.c.h.b16 %v1229
    %v1936 = vunpack.c.l.b16 %v1230
    %v1937 = vunpack.c.h.b16 %v1230
    %v1938 = vunpack.c.l.b16 %v1231
    %v1939 = vunpack.c.h.b16 %v1231
    %v1940 = vunpack.c.l.b16 %v1232
    %v1941 = vunpack.c.h.b16 %v1232
    %v1942 = vunpack.c.l.b16 %v1233
    %v1943 = vunpack.c.h.b16 %v1233
    %v1944 = vunpack.c.l.b16 %v1234
    %v1945 = vunpack.c.h.b16 %v1234
    %v1946 = vunpack.c.l.b16 %v1235
    %v1947 = vunpack.c.h.b16 %v1235
    %v1948 = vunpack.c.l.b16 %v1236
    %v1949 = vunpack.c.h.b16 %v1236
    %v1950 = vunpack.c.l.b16 %v1237
    %v1951 = vunpack.c.h.b16 %v1237
    %v1952 = vunpack.c.l.b16 %v1238
    %v1953 = vunpack.c.h.b16 %v1238
    %v1954 = vunpack.c.l.b16 %v1239
    %v1955 = vunpack.c.h.b16 %v1239
    %v1956 = vunpack.c.l.b16 %v1240
    %v1957 = vunpack.c.h.b16 %v1240
    %v1958 = vunpack.c.l.b16 %v1241
    %v1959 = vunpack.c.h.b16 %v1241
    %v1960 = vunpack.c.l.b16 %v1242
    %v1961 = vunpack.c.h.b16 %v1242
    %v1962 = vunpack.c.l.b16 %v1243
    %v1963 = vunpack.c.h.b16 %v1243
    %v1964 = vunpack.c.l.b16 %v1244
    %v1965 = vunpack.c.h.b16 %v1244
    %v1966 = vunpack.c.l.b16 %v1245
    %v1967 = vunpack.c.h.b16 %v1245
    %v1968 = vunpack.c.l.b16 %v1246
    %v1969 = vunpack.c.h.b16 %v1246
    %v1970 = vunpack.c.l.b16 %v1247
    %v1971 = vunpack.c.h.b16 %v1247
    %v1972 = vunpack.c.l.b16 %v1248
    %v1973 = vunpack.c.h.b16 %v1248
    %v1974 = vunpack.c.l.b16 %v1249
    %v1975 = vunpack.c.h.b16 %v1249
    %v1976 = vunpack.c.l.b16 %v1250
    %v1977 = vunpack.c.h.b16 %v1250
    %v1978 = vunpack.c.l.b16 %v1251
    %v1979 = vunpack.c.h.b16 %v1251
    %v1980 = vunpack.c.l.b16 %v1252
    %v1981 = vunpack.c.h.b16 %v1252
    %v1982 = vunpack.c.l.b16 %v1253
    %v1983 = vunpack.c.h.b16 %v1253
    %v1984 = vunpack.c.l.b16 %v1254
    %v1985 = vunpack.c.h.b16 %v1254
    %v1986 = vunpack.c.l.b16 %v1255
    %v1987 = vunpack.c.h.b16 %v1255
    %v1988 = vunpack.c.l.b16 %v1256
    %v1989 = vunpack.c.h.b16 %v1256
    %v1990 = vunpack.c.l.b16 %v1257
    %v1991 = vunpack.c.h.b16 %v1257
    %v1992 = vunpack.c.l.b16 %v1258
    %v1993 = vunpack.c.h.b16 %v1258
    %v1994 = vunpack.c.l.b16 %v1259
    %v1995 = vunpack.c.h.b16 %v1259
    %v1996 = vunpack.c.l.b16 %v1260
    %v1997 = vunpack.c.h.b16 %v1260
    %v1998 = vunpack.c.l.b16 %v1261
    %v1999 = vunpack.c.h.b16 %v1261
    %v2000 = vunpack.c.l.b16 %v1262
    %v2001 = vunpack.c.h.b16 %v1262
    %v2002 = vunpack.c.l.b16 %v1263
    %v2003 = vunpack.c.h.b16 %v1263
    %v2004 = vunpack.c.l.b16 %v1264
    %v2005 = vunpack.c.h.b16 %v1264
    %v2006 = vunpack.c.l.b16 %v1265
    %v2007 = vunpack.c.h.b16 %v1265
    %v2008 = vunpack.c.l.b16 %v1266
    %v2009 = vunpack.c.h.b16 %v1266
    %v2010 = vunpack.c.l.b16 %v1267
    %v2011 = vunpack.c.h.b16 %v1267
    %v2012 = vunpack.c.l.b16 %v1268
    %v2013 = vunpack.c.h.b16 %v1268
    %v2014 = vunpack.c.l.b16 %v1269
    %v2015 = vunpack.c.h.b16 %v1269
    %v2016 = vunpack.c.l.b16 %v1270
    %v2017 = vunpack.c.h.b16 %v1270
    %v2018 = vunpack.c.l.b16 %v1271
    %v2019 = vunpack.c.h.b16 %v1271
    %v2020 = vunpack.c.l.b16 %v1272
    %v2021 = vunpack.c.h.b16 %v1272
    %v2022 = vunpack.c.l.b16 %v1273
    %v2023 = vunpack.c.h.b16 %v1273
    %v2024 = vunpack.c.l.b16 %v1274
    %v2025 = vunpack.c.h.b16 %v1274
    %v2026 = vunpack.c.l.b16 %v1275
    %v2027 = vunpack.c.h.b16 %v1275
    %v2028 = vunpack.c.l.b16 %v1276
    %v2029 = vunpack.c.h.b16 %v1276
    %v2030 = vunpack.c.l.b16 %v1277
    %v2031 = vunpack.c.h.b16 %v1277
    %v2032 = vunpack.c.l.b16 %v1278
    %v2033 = vunpack.c.h.b16 %v1278
    %v2034 = vunpack.c.l.b16 %v1279
    %v2035 = vunpack.c.h.b16 %v1279
    %v2036 = vunpack.c.l.b16 %v1280
    %v2037 = vunpack.c.h.b16 %v1280
    %v2038 = vunpack.c.l.b16 %v1281
    %v2039 = vunpack.c.h.b16 %v1281
    %v2040 = vunpack.c.l.b16 %v1282
    %v2041 = vunpack.c.h.b16 %v1282
    %v2042 = vunpack.c.l.b16 %v1283
    %v2043 = vunpack.c.h.b16 %v1283
    %v2044 = vunpack.c.l.b16 %v1284
    %v2045 = vunpack.c.h.b16 %v1284
    %v2046 = vunpack.c.l.b16 %v1285
    %v2047 = vunpack.c.h.b16 %v1285
    %v2048 = vunpack.c.l.b16 %v1286
    %v2049 = vunpack.c.h.b16 %v1286
    %v2050 = vunpack.c.l.b16 %v1287
    %v2051 = vunpack.c.h.b16 %v1287
    %v2052 = vunpack.c.l.b16 %v1288
    %v2053 = vunpack.c.h.b16 %v1288
    %v2054 = vunpack.c.l.b16 %v1289
    %v2055 = vunpack.c.h.b16 %v1289
    %v2056 = vunpack.c.l.b16 %v1290
    %v2057 = vunpack.c.h.b16 %v1290
    %v2058 = vunpack.c.l.b16 %v1291
    %v2059 = vunpack.c.h.b16 %v1291
    %v2060 = vpack.c.b16 %v1556, %v1548
    %v2061 = vpack.c.b16 %v1557, %v1549
    %v2062 = vpack.c.b16 %v1558, %v1550
    %v2063 = vpack.c.b16 %v1559, %v1551
    %v2064 = vpack.c.b16 %v1560, %v1552
    %v2065 = vpack.c.b16 %v1561, %v1553
    %v2066 = vpack.c.b16 %v1562, %v1554
    %v2067 = vpack.c.b16 %v1563, %v1555
    %v2068 = vpack.c.b16 %v1572, %v1564
    %v2069 = vpack.c.b16 %v1573, %v1565
    %v2070 = vpack.c.b16 %v1574, %v1566
    %v2071 = vpack.c.b16 %v1575, %v1567
    %v2072 = vpack.c.b16 %v1576, %v1568
    %v2073 = vpack.c.b16 %v1577, %v1569
    %v2074 = vpack.c.b16 %v1578, %v1570
    %v2075 = vpack.c.b16 %v1579, %v1571
    %v2076 = vpack.c.b16 %v1588, %v1580
    %v2077 = vpack.c.b16 %v1589, %v1581
    %v2078 = vpack.c.b16 %v1590, %v1582
    %v2079 = vpack.c.b16 %v1591, %v1583
    %v2080 = vpack.c.b16 %v1592, %v1584
    %v2081 = vpack.c.b16 %v1593, %v1585
    %v2082 = vpack.c.b16 %v1594, %v1586
    %v2083 = vpack.c.b16 %v1595, %v1587
    %v2084 = vpack.c.b16 %v1604, %v1596
    %v2085 = vpack.c.b16 %v1605, %v1597
    %v2086 = vpack.c.b16 %v1606, %v1598
    %v2087 = vpack.c.b16 %v1607, %v1599
    %v2088 = vpack.c.b16 %v1608, %v1600
    %v2089 = vpack.c.b16 %v1609, %v1601
    %v2090 = vpack.c.b16 %v1610, %v1602
    %v2091 = vpack.c.b16 %v1611, %v1603
    %v2092 = vpack.c.b16 %v1620, %v1612
    %v2093 = vpack.c.b16 %v1621, %v1613
    %v2094 = vpack.c.b16 %v1622, %v1614
    %v2095 = vpack.c.b16 %v1623, %v1615
    %v2096 = vpack.c.b16 %v1624, %v1616
    %v2097 = vpack.c.b16 %v1625, %v1617
    %v2098 = vpack.c.b16 %v1626, %v1618
    %v2099 = vpack.c.b16 %v1627, %v1619
    %v2100 = vpack.c.b16 %v1636, %v1628
    %v2101 = vpack.c.b16 %v1637, %v1629
    %v2102 = vpack.c.b16 %v1638, %v1630
    %v2103 = vpack.c.b16 %v1639, %v1631
    %v2104 = vpack.c.b16 %v1640, %v1632
    %v2105 = vpack.c.b16 %v1641, %v1633
    %v2106 = vpack.c.b16 %v1642, %v1634
    %v2107 = vpack.c.b16 %v1643, %v1635
    %v2108 = vpack.c.b16 %v1652, %v1644
    %v2109 = vpack.c.b16 %v1653, %v1645
    %v2110 = vpack.c.b16 %v1654, %v1646
    %v2111 = vpack.c.b16 %v1655, %v1647
    %v2112 = vpack.c.b16 %v1656, %v1648
    %v2113 = vpack.c.b16 %v1657, %v1649
    %v2114 = vpack.c.b16 %v1658, %v1650
    %v2115 = vpack.c.b16 %v1659, %v1651
    %v2116 = vpack.c.b16 %v1668, %v1660
    %v2117 = vpack.c.b16 %v1669, %v1661
    %v2118 = vpack.c.b16 %v1670, %v1662
    %v2119 = vpack.c.b16 %v1671, %v1663
    %v2120 = vpack.c.b16 %v1672, %v1664
    %v2121 = vpack.c.b16 %v1673, %v1665
    %v2122 = vpack.c.b16 %v1674, %v1666
    %v2123 = vpack.c.b16 %v1675, %v1667
    %v2124 = vpack.c.b16 %v1684, %v1676
    %v2125 = vpack.c.b16 %v1685, %v1677
    %v2126 = vpack.c.b16 %v1686, %v1678
    %v2127 = vpack.c.b16 %v1687, %v1679
    %v2128 = vpack.c.b16 %v1688, %v1680
    %v2129 = vpack.c.b16 %v1689, %v1681
    %v2130 = vpack.c.b16 %v1690, %v1682
    %v2131 = vpack.c.b16 %v1691, %v1683
    %v2132 = vpack.c.b16 %v1700, %v1692
    %v2133 = vpack.c.b16 %v1701, %v1693
    %v2134 = vpack.c.b16 %v1702, %v1694
    %v2135 = vpack.c.b16 %v1703, %v1695
    %v2136 = vpack.c.b16 %v1704, %v1696
    %v2137 = vpack.c.b16 %v1705, %v1697
    %v2138 = vpack.c.b16 %v1706, %v1698
    %v2139 = vpack.c.b16 %v1707, %v1699
    %v2140 = vpack.c.b16 %v1716, %v1708
    %v2141 = vpack.c.b16 %v1717, %v1709
    %v2142 = vpack.c.b16 %v1718, %v1710
    %v2143 = vpack.c.b16 %v1719, %v1711
    %v2144 = vpack.c.b16 %v1720, %v1712
    %v2145 = vpack.c.b16 %v1721, %v1713
    %v2146 = vpack.c.b16 %v1722, %v1714
    %v2147 = vpack.c.b16 %v1723, %v1715
    %v2148 = vpack.c.b16 %v1732, %v1724
    %v2149 = vpack.c.b16 %v1733, %v1725
    %v2150 = vpack.c.b16 %v1734, %v1726
    %v2151 = vpack.c.b16 %v1735, %v1727
    %v2152 = vpack.c.b16 %v1736, %v1728
    %v2153 = vpack.c.b16 %v1737, %v1729
    %v2154 = vpack.c.b16 %v1738, %v1730
    %v2155 = vpack.c.b16 %v1739, %v1731
    %v2156 = vpack.c.b16 %v1748, %v1740
    %v2157 = vpack.c.b16 %v1749, %v1741
    %v2158 = vpack.c.b16 %v1750, %v1742
    %v2159 = vpack.c.b16 %v1751, %v1743
    %v2160 = vpack.c.b16 %v1752, %v1744
    %v2161 = vpack.c.b16 %v1753, %v1745
    %v2162 = vpack.c.b16 %v1754, %v1746
    %v2163 = vpack.c.b16 %v1755, %v1747
    %v2164 = vpack.c.b16 %v1764, %v1756
    %v2165 = vpack.c.b16 %v1765, %v1757
    %v2166 = vpack.c.b16 %v1766, %v1758
    %v2167 = vpack.c.b16 %v1767, %v1759
    %v2168 = vpack.c.b16 %v1768, %v1760
    %v2169 = vpack.c.b16 %v1769, %v1761
    %v2170 = vpack.c.b16 %v1770, %v1762
    %v2171 = vpack.c.b16 %v1771, %v1763
    %v2172 = vpack.c.b16 %v1780, %v1772
    %v2173 = vpack.c.b16 %v1781, %v1773
    %v2174 = vpack.c.b16 %v1782, %v1774
    %v2175 = vpack.c.b16 %v1783, %v1775
    %v2176 = vpack.c.b16 %v1784, %v1776
    %v2177 = vpack.c.b16 %v1785, %v1777
    %v2178 = vpack.c.b16 %v1786, %v1778
    %v2179 = vpack.c.b16 %v1787, %v1779
    %v2180 = vpack.c.b16 %v1796, %v1788
    %v2181 = vpack.c.b16 %v1797, %v1789
    %v2182 = vpack.c.b16 %v1798, %v1790
    %v2183 = vpack.c.b16 %v1799, %v1791
    %v2184 = vpack.c.b16 %v1800, %v1792
    %v2185 = vpack.c.b16 %v1801, %v1793
    %v2186 = vpack.c.b16 %v1802, %v1794
    %v2187 = vpack.c.b16 %v1803, %v1795
    %v2188 = vpack.c.b16 %v1812, %v1804
    %v2189 = vpack.c.b16 %v1813, %v1805
    %v2190 = vpack.c.b16 %v1814, %v1806
    %v2191 = vpack.c.b16 %v1815, %v1807
    %v2192 = vpack.c.b16 %v1816, %v1808
    %v2193 = vpack.c.b16 %v1817, %v1809
    %v2194 = vpack.c.b16 %v1818, %v1810
    %v2195 = vpack.c.b16 %v1819, %v1811
    %v2196 = vpack.c.b16 %v1828, %v1820
    %v2197 = vpack.c.b16 %v1829, %v1821
    %v2198 = vpack.c.b16 %v1830, %v1822
    %v2199 = vpack.c.b16 %v1831, %v1823
    %v2200 = vpack.c.b16 %v1832, %v1824
    %v2201 = vpack.c.b16 %v1833, %v1825
    %v2202 = vpack.c.b16 %v1834, %v1826
    %v2203 = vpack.c.b16 %v1835, %v1827
    %v2204 = vpack.c.b16 %v1844, %v1836
    %v2205 = vpack.c.b16 %v1845, %v1837
    %v2206 = vpack.c.b16 %v1846, %v1838
    %v2207 = vpack.c.b16 %v1847, %v1839
    %v2208 = vpack.c.b16 %v1848, %v1840
    %v2209 = vpack.c.b16 %v1849, %v1841
    %v2210 = vpack.c.b16 %v1850, %v1842
    %v2211 = vpack.c.b16 %v1851, %v1843
    %v2212 = vpack.c.b16 %v1860, %v1852
    %v2213 = vpack.c.b16 %v1861, %v1853
    %v2214 = vpack.c.b16 %v1862, %v1854
    %v2215 = vpack.c.b16 %v1863, %v1855
    %v2216 = vpack.c.b16 %v1864, %v1856
    %v2217 = vpack.c.b16 %v1865, %v1857
    %v2218 = vpack.c.b16 %v1866, %v1858
    %v2219 = vpack.c.b16 %v1867, %v1859
    %v2220 = vpack.c.b16 %v1876, %v1868
    %v2221 = vpack.c.b16 %v1877, %v1869
    %v2222 = vpack.c.b16 %v1878, %v1870
    %v2223 = vpack.c.b16 %v1879, %v1871
    %v2224 = vpack.c.b16 %v1880, %v1872
    %v2225 = vpack.c.b16 %v1881, %v1873
    %v2226 = vpack.c.b16 %v1882, %v1874
    %v2227 = vpack.c.b16 %v1883, %v1875
    %v2228 = vpack.c.b16 %v1892, %v1884
    %v2229 = vpack.c.b16 %v1893, %v1885
    %v2230 = vpack.c.b16 %v1894, %v1886
    %v2231 = vpack.c.b16 %v1895, %v1887
    %v2232 = vpack.c.b16 %v1896, %v1888
    %v2233 = vpack.c.b16 %v1897, %v1889
    %v2234 = vpack.c.b16 %v1898, %v1890
    %v2235 = vpack.c.b16 %v1899, %v1891
    %v2236 = vpack.c.b16 %v1908, %v1900
    %v2237 = vpack.c.b16 %v1909, %v1901
    %v2238 = vpack.c.b16 %v1910, %v1902
    %v2239 = vpack.c.b16 %v1911, %v1903
    %v2240 = vpack.c.b16 %v1912, %v1904
    %v2241 = vpack.c.b16 %v1913, %v1905
    %v2242 = vpack.c.b16 %v1914, %v1906
    %v2243 = vpack.c.b16 %v1915, %v1907
    %v2244 = vpack.c.b16 %v1924, %v1916
    %v2245 = vpack.c.b16 %v1925, %v1917
    %v2246 = vpack.c.b16 %v1926, %v1918
    %v2247 = vpack.c.b16 %v1927, %v1919
    %v2248 = vpack.c.b16 %v1928, %v1920
    %v2249 = vpack.c.b16 %v1929, %v1921
    %v2250 = vpack.c.b16 %v1930, %v1922
    %v2251 = vpack.c.b16 %v1931, %v1923
    %v2252 = vpack.c.b16 %v1940, %v1932
    %v2253 = vpack.c.b16 %v1941, %v1933
    %v2254 = vpack.c.b16 %v1942, %v1934
    %v2255 = vpack.c.b16 %v1943, %v1935
    %v2256 = vpack.c.b16 %v1944, %v1936
    %v2257 = vpack.c.b16 %v1945, %v1937
    %v2258 = vpack.c.b16 %v1946, %v1938
    %v2259 = vpack.c.b16 %v1947, %v1939
    %v2260 = vpack.c.b16 %v1956, %v1948
    %v2261 = vpack.c.b16 %v1957, %v1949
    %v2262 = vpack.c.b16 %v1958, %v1950
    %v2263 = vpack.c.b16 %v1959, %v1951
    %v2264 = vpack.c.b16 %v1960, %v1952
    %v2265 = vpack.c.b16 %v1961, %v1953
    %v2266 = vpack.c.b16 %v1962, %v1954
    %v2267 = vpack.c.b16 %v1963, %v1955
    %v2268 = vpack.c.b16 %v1972, %v1964
    %v2269 = vpack.c.b16 %v1973, %v1965
    %v2270 = vpack.c.b16 %v1974, %v1966
    %v2271 = vpack.c.b16 %v1975, %v1967
    %v2272 = vpack.c.b16 %v1976, %v1968
    %v2273 = vpack.c.b16 %v1977, %v1969
    %v2274 = vpack.c.b16 %v1978, %v1970
    %v2275 = vpack.c.b16 %v1979, %v1971
    %v2276 = vpack.c.b16 %v1988, %v1980
    %v2277 = vpack.c.b16 %v1989, %v1981
    %v2278 = vpack.c.b16 %v1990, %v1982
    %v2279 = vpack.c.b16 %v1991, %v1983
    %v2280 = vpack.c.b16 %v1992, %v1984
    %v2281 = vpack.c.b16 %v1993, %v1985
    %v2282 = vpack.c.b16 %v1994, %v1986
    %v2283 = vpack.c.b16 %v1995, %v1987
    %v2284 = vpack.c.b16 %v2004, %v1996
    %v2285 = vpack.c.b16 %v2005, %v1997
    %v2286 = vpack.c.b16 %v2006, %v1998
    %v2287 = vpack.c.b16 %v2007, %v1999
    %v2288 = vpack.c.b16 %v2008, %v2000
    %v2289 = vpack.c.b16 %v2009, %v2001
    %v2290 = vpack.c.b16 %v2010, %v2002
    %v2291 = vpack.c.b16 %v2011, %v2003
    %v2292 = vpack.c.b16 %v2020, %v2012
    %v2293 = vpack.c.b16 %v2021, %v2013
    %v2294 = vpack.c.b16 %v2022, %v2014
    %v2295 = vpack.c.b16 %v2023, %v2015
    %v2296 = vpack.c.b16 %v2024, %v2016
    %v2297 = vpack.c.b16 %v2025, %v2017
    %v2298 = vpack.c.b16 %v2026, %v2018
    %v2299 = vpack.c.b16 %v2027, %v2019
    %v2300 = vpack.c.b16 %v2036, %v2028
    %v2301 = vpack.c.b16 %v2037, %v2029
    %v2302 = vpack.c.b16 %v2038, %v2030
    %v2303 = vpack.c.b16 %v2039, %v2031
    %v2304 = vpack.c.b16 %v2040, %v2032
    %v2305 = vpack.c.b16 %v2041, %v2033
    %v2306 = vpack.c.b16 %v2042, %v2034
    %v2307 = vpack.c.b16 %v2043, %v2035
    %v2308 = vpack.c.b16 %v2052, %v2044
    %v2309 = vpack.c.b16 %v2053, %v2045
    %v2310 = vpack.c.b16 %v2054, %v2046
    %v2311 = vpack.c.b16 %v2055, %v2047
    %v2312 = vpack.c.b16 %v2056, %v2048
    %v2313 = vpack.c.b16 %v2057, %v2049
    %v2314 = vpack.c.b16 %v2058, %v2050
    %v2315 = vpack.c.b16 %v2059, %v2051
    %2572 = vmatprep.subr.bf16.mxu0 %v2117
    %2573 = vmatpush1.bf16.msra.mxu0 %v2116
    %2574 = vmatprep.subr.bf16.mxu0 %v2109
    %2575 = vmatpush1.bf16.msra.mxu0 %v2108
    %2576 = vmatprep.subr.bf16.mxu0 %v2101
    %2577 = vmatpush1.bf16.msra.mxu0 %v2100
    %2578 = vmatprep.subr.bf16.mxu0 %v2093
    %2579 = vmatpush1.bf16.msra.mxu0 %v2092
    %2580 = vmatprep.subr.bf16.mxu0 %v2085
    %2581 = vmatpush1.bf16.msra.mxu0 %v2084
    %2582 = vmatprep.subr.bf16.mxu0 %v2077
    %2583 = vmatpush1.bf16.msra.mxu0 %v2076
    %2584 = vmatprep.subr.bf16.mxu0 %v2069
    %2585 = vmatpush1.bf16.msra.mxu0 %v2068
    %2586 = vmatprep.subr.bf16.mxu0 %v2061
    %2587 = vmatpush1.bf16.msra.mxu0 %v2060
    %2588 = vmatprep.subr.bf16.mxu0 %v2181
    %2589 = vmatpush2.bf16.msra.mxu0 %v2180
    %2590 = vmatprep.subr.bf16.mxu0 %v2173
    %2591 = vmatpush2.bf16.msra.mxu0 %v2172
    %2592 = vmatprep.subr.bf16.mxu0 %v2165
    %2593 = vmatpush2.bf16.msra.mxu0 %v2164
    %2594 = vmatprep.subr.bf16.mxu0 %v2157
    %2595 = vmatpush2.bf16.msra.mxu0 %v2156
    %2596 = vmatprep.subr.bf16.mxu0 %v2149
    %2597 = vmatpush2.bf16.msra.mxu0 %v2148
    %2598 = vmatprep.subr.bf16.mxu0 %v2141
    %2599 = vmatpush2.bf16.msra.mxu0 %v2140
    %2600 = vmatprep.subr.bf16.mxu0 %v2133
    %2601 = vmatpush2.bf16.msra.mxu0 %v2132
    %2602 = vmatprep.subr.bf16.mxu0 %v2125
    %2603 = vmatpush2.bf16.msra.mxu0 %v2124
    %2604 = vmatprep.mubr.bf16.mxu0 %v1033
    %2605 = vmatmul.mubr.bf16.gmra.mxu0 %v1032
    %v2606 = vpop.f32.mrf.mxu0
    %v2607 = vadd.f32 0.0, %v2606
    %v2608 = vpop.f32.mrf.mxu0
    %v2609 = vadd.f32 0.0, %v2608
    %v2610 = vpop.f32.mrf.mxu0
    %v2611 = vadd.f32 0.0, %v2610
    %v2612 = vpop.f32.mrf.mxu0
    %v2613 = vadd.f32 0.0, %v2612
    %2614 = vdwg.mxu0
    %2615 = vmatprep.subr.bf16.mxu0 %v2245
    %2616 = vmatpush1.bf16.msra.mxu0 %v2244
    %2617 = vmatprep.subr.bf16.mxu0 %v2237
    %2618 = vmatpush1.bf16.msra.mxu0 %v2236
    %2619 = vmatprep.subr.bf16.mxu0 %v2229
    %2620 = vmatpush1.bf16.msra.mxu0 %v2228
    %2621 = vmatprep.subr.bf16.mxu0 %v2221
    %2622 = vmatpush1.bf16.msra.mxu0 %v2220
    %2623 = vmatprep.subr.bf16.mxu0 %v2213
    %2624 = vmatpush1.bf16.msra.mxu0 %v2212
    %2625 = vmatprep.subr.bf16.mxu0 %v2205
    %2626 = vmatpush1.bf16.msra.mxu0 %v2204
    %2627 = vmatprep.subr.bf16.mxu0 %v2197
    %2628 = vmatpush1.bf16.msra.mxu0 %v2196
    %2629 = vmatprep.subr.bf16.mxu0 %v2189
    %2630 = vmatpush1.bf16.msra.mxu0 %v2188
    %2631 = vmatprep.subr.bf16.mxu0 %v2309
    %2632 = vmatpush2.bf16.msra.mxu0 %v2308
    %2633 = vmatprep.subr.bf16.mxu0 %v2301
    %2634 = vmatpush2.bf16.msra.mxu0 %v2300
    %2635 = vmatprep.subr.bf16.mxu0 %v2293
    %2636 = vmatpush2.bf16.msra.mxu0 %v2292
    %2637 = vmatprep.subr.bf16.mxu0 %v2285
    %2638 = vmatpush2.bf16.msra.mxu0 %v2284
    %2639 = vmatprep.subr.bf16.mxu0 %v2277
    %2640 = vmatpush2.bf16.msra.mxu0 %v2276
    %2641 = vmatprep.subr.bf16.mxu0 %v2269
    %2642 = vmatpush2.bf16.msra.mxu0 %v2268
    %2643 = vmatprep.subr.bf16.mxu0 %v2261
    %2644 = vmatpush2.bf16.msra.mxu0 %v2260
    %2645 = vmatprep.subr.bf16.mxu0 %v2253
    %2646 = vmatpush2.bf16.msra.mxu0 %v2252
    %2647 = vmatprep.mubr.bf16.mxu0 %v1035
    %2648 = vmatmul.mubr.bf16.gmra.mxu0 %v1034
    %v2649 = vpop.f32.mrf.mxu0
    %v2650 = vadd.f32 %v2607, %v2649
    %v2651 = vpop.f32.mrf.mxu0
    %v2652 = vadd.f32 %v2609, %v2651
    %v2653 = vpop.f32.mrf.mxu0
    %v2654 = vadd.f32 %v2611, %v2653
    %v2655 = vpop.f32.mrf.mxu0
    %v2656 = vadd.f32 %v2613, %v2655
    %2657 = vdwg.mxu0
    %2658 = vmatprep.subr.bf16.mxu0 %v2119
    %2659 = vmatpush1.bf16.msra.mxu0 %v2118
    %2660 = vmatprep.subr.bf16.mxu0 %v2111
    %2661 = vmatpush1.bf16.msra.mxu0 %v2110
    %2662 = vmatprep.subr.bf16.mxu0 %v2103
    %2663 = vmatpush1.bf16.msra.mxu0 %v2102
    %2664 = vmatprep.subr.bf16.mxu0 %v2095
    %2665 = vmatpush1.bf16.msra.mxu0 %v2094
    %2666 = vmatprep.subr.bf16.mxu0 %v2087
    %2667 = vmatpush1.bf16.msra.mxu0 %v2086
    %2668 = vmatprep.subr.bf16.mxu0 %v2079
    %2669 = vmatpush1.bf16.msra.mxu0 %v2078
    %2670 = vmatprep.subr.bf16.mxu0 %v2071
    %2671 = vmatpush1.bf16.msra.mxu0 %v2070
    %2672 = vmatprep.subr.bf16.mxu0 %v2063
    %2673 = vmatpush1.bf16.msra.mxu0 %v2062
    %2674 = vmatprep.subr.bf16.mxu0 %v2183
    %2675 = vmatpush2.bf16.msra.mxu0 %v2182
    %2676 = vmatprep.subr.bf16.mxu0 %v2175
    %2677 = vmatpush2.bf16.msra.mxu0 %v2174
    %2678 = vmatprep.subr.bf16.mxu0 %v2167
    %2679 = vmatpush2.bf16.msra.mxu0 %v2166
    %2680 = vmatprep.subr.bf16.mxu0 %v2159
    %2681 = vmatpush2.bf16.msra.mxu0 %v2158
    %2682 = vmatprep.subr.bf16.mxu0 %v2151
    %2683 = vmatpush2.bf16.msra.mxu0 %v2150
    %2684 = vmatprep.subr.bf16.mxu0 %v2143
    %2685 = vmatpush2.bf16.msra.mxu0 %v2142
    %2686 = vmatprep.subr.bf16.mxu0 %v2135
    %2687 = vmatpush2.bf16.msra.mxu0 %v2134
    %2688 = vmatprep.subr.bf16.mxu0 %v2127
    %2689 = vmatpush2.bf16.msra.mxu0 %v2126
    %2690 = vmatprep.mubr.bf16.mxu0 %v1033
    %2691 = vmatmul.mubr.bf16.gmra.mxu0 %v1032
    %v2692 = vpop.f32.mrf.mxu0
    %v2693 = vadd.f32 0.0, %v2692
    %v2694 = vpop.f32.mrf.mxu0
    %v2695 = vadd.f32 0.0, %v2694
    %v2696 = vpop.f32.mrf.mxu0
    %v2697 = vadd.f32 0.0, %v2696
    %v2698 = vpop.f32.mrf.mxu0
    %v2699 = vadd.f32 0.0, %v2698
    %2700 = vdwg.mxu0
    %2701 = vmatprep.subr.bf16.mxu0 %v2247
    %2702 = vmatpush1.bf16.msra.mxu0 %v2246
    %2703 = vmatprep.subr.bf16.mxu0 %v2239
    %2704 = vmatpush1.bf16.msra.mxu0 %v2238
    %2705 = vmatprep.subr.bf16.mxu0 %v2231
    %2706 = vmatpush1.bf16.msra.mxu0 %v2230
    %2707 = vmatprep.subr.bf16.mxu0 %v2223
    %2708 = vmatpush1.bf16.msra.mxu0 %v2222
    %2709 = vmatprep.subr.bf16.mxu0 %v2215
    %2710 = vmatpush1.bf16.msra.mxu0 %v2214
    %2711 = vmatprep.subr.bf16.mxu0 %v2207
    %2712 = vmatpush1.bf16.msra.mxu0 %v2206
    %2713 = vmatprep.subr.bf16.mxu0 %v2199
    %2714 = vmatpush1.bf16.msra.mxu0 %v2198
    %2715 = vmatprep.subr.bf16.mxu0 %v2191
    %2716 = vmatpush1.bf16.msra.mxu0 %v2190
    %2717 = vmatprep.subr.bf16.mxu0 %v2311
    %2718 = vmatpush2.bf16.msra.mxu0 %v2310
    %2719 = vmatprep.subr.bf16.mxu0 %v2303
    %2720 = vmatpush2.bf16.msra.mxu0 %v2302
    %2721 = vmatprep.subr.bf16.mxu0 %v2295
    %2722 = vmatpush2.bf16.msra.mxu0 %v2294
    %2723 = vmatprep.subr.bf16.mxu0 %v2287
    %2724 = vmatpush2.bf16.msra.mxu0 %v2286
    %2725 = vmatprep.subr.bf16.mxu0 %v2279
    %2726 = vmatpush2.bf16.msra.mxu0 %v2278
    %2727 = vmatprep.subr.bf16.mxu0 %v2271
    %2728 = vmatpush2.bf16.msra.mxu0 %v2270
    %2729 = vmatprep.subr.bf16.mxu0 %v2263
    %2730 = vmatpush2.bf16.msra.mxu0 %v2262
    %2731 = vmatprep.subr.bf16.mxu0 %v2255
    %2732 = vmatpush2.bf16.msra.mxu0 %v2254
    %2733 = vmatprep.mubr.bf16.mxu0 %v1035
    %2734 = vmatmul.mubr.bf16.gmra.mxu0 %v1034
    %v2735 = vpop.f32.mrf.mxu0
    %v2736 = vadd.f32 %v2693, %v2735
    %v2737 = vpop.f32.mrf.mxu0
    %v2738 = vadd.f32 %v2695, %v2737
    %v2739 = vpop.f32.mrf.mxu0
    %v2740 = vadd.f32 %v2697, %v2739
    %v2741 = vpop.f32.mrf.mxu0
    %v2742 = vadd.f32 %v2699, %v2741
    %2743 = vdwg.mxu0
    %2744 = vmatprep.subr.bf16.mxu0 %v2121
    %2745 = vmatpush1.bf16.msra.mxu0 %v2120
    %2746 = vmatprep.subr.bf16.mxu0 %v2113
    %2747 = vmatpush1.bf16.msra.mxu0 %v2112
    %2748 = vmatprep.subr.bf16.mxu0 %v2105
    %2749 = vmatpush1.bf16.msra.mxu0 %v2104
    %2750 = vmatprep.subr.bf16.mxu0 %v2097
    %2751 = vmatpush1.bf16.msra.mxu0 %v2096
    %2752 = vmatprep.subr.bf16.mxu0 %v2089
    %2753 = vmatpush1.bf16.msra.mxu0 %v2088
    %2754 = vmatprep.subr.bf16.mxu0 %v2081
    %2755 = vmatpush1.bf16.msra.mxu0 %v2080
    %2756 = vmatprep.subr.bf16.mxu0 %v2073
    %2757 = vmatpush1.bf16.msra.mxu0 %v2072
    %2758 = vmatprep.subr.bf16.mxu0 %v2065
    %2759 = vmatpush1.bf16.msra.mxu0 %v2064
    %2760 = vmatprep.subr.bf16.mxu0 %v2185
    %2761 = vmatpush2.bf16.msra.mxu0 %v2184
    %2762 = vmatprep.subr.bf16.mxu0 %v2177
    %2763 = vmatpush2.bf16.msra.mxu0 %v2176
    %2764 = vmatprep.subr.bf16.mxu0 %v2169
    %2765 = vmatpush2.bf16.msra.mxu0 %v2168
    %2766 = vmatprep.subr.bf16.mxu0 %v2161
    %2767 = vmatpush2.bf16.msra.mxu0 %v2160
    %2768 = vmatprep.subr.bf16.mxu0 %v2153
    %2769 = vmatpush2.bf16.msra.mxu0 %v2152
    %2770 = vmatprep.subr.bf16.mxu0 %v2145
    %2771 = vmatpush2.bf16.msra.mxu0 %v2144
    %2772 = vmatprep.subr.bf16.mxu0 %v2137
    %2773 = vmatpush2.bf16.msra.mxu0 %v2136
    %2774 = vmatprep.subr.bf16.mxu0 %v2129
    %2775 = vmatpush2.bf16.msra.mxu0 %v2128
    %2776 = vmatprep.mubr.bf16.mxu0 %v1033
    %2777 = vmatmul.mubr.bf16.gmra.mxu0 %v1032
    %v2778 = vpop.f32.mrf.mxu0
    %v2779 = vadd.f32 0.0, %v2778
    %v2780 = vpop.f32.mrf.mxu0
    %v2781 = vadd.f32 0.0, %v2780
    %v2782 = vpop.f32.mrf.mxu0
    %v2783 = vadd.f32 0.0, %v2782
    %v2784 = vpop.f32.mrf.mxu0
    %v2785 = vadd.f32 0.0, %v2784
    %2786 = vdwg.mxu0
    %2787 = vmatprep.subr.bf16.mxu0 %v2249
    %2788 = vmatpush1.bf16.msra.mxu0 %v2248
    %2789 = vmatprep.subr.bf16.mxu0 %v2241
    %2790 = vmatpush1.bf16.msra.mxu0 %v2240
    %2791 = vmatprep.subr.bf16.mxu0 %v2233
    %2792 = vmatpush1.bf16.msra.mxu0 %v2232
    %2793 = vmatprep.subr.bf16.mxu0 %v2225
    %2794 = vmatpush1.bf16.msra.mxu0 %v2224
    %2795 = vmatprep.subr.bf16.mxu0 %v2217
    %2796 = vmatpush1.bf16.msra.mxu0 %v2216
    %2797 = vmatprep.subr.bf16.mxu0 %v2209
    %2798 = vmatpush1.bf16.msra.mxu0 %v2208
    %2799 = vmatprep.subr.bf16.mxu0 %v2201
    %2800 = vmatpush1.bf16.msra.mxu0 %v2200
    %2801 = vmatprep.subr.bf16.mxu0 %v2193
    %2802 = vmatpush1.bf16.msra.mxu0 %v2192
    %2803 = vmatprep.subr.bf16.mxu0 %v2313
    %2804 = vmatpush2.bf16.msra.mxu0 %v2312
    %2805 = vmatprep.subr.bf16.mxu0 %v2305
    %2806 = vmatpush2.bf16.msra.mxu0 %v2304
    %2807 = vmatprep.subr.bf16.mxu0 %v2297
    %2808 = vmatpush2.bf16.msra.mxu0 %v2296
    %2809 = vmatprep.subr.bf16.mxu0 %v2289
    %2810 = vmatpush2.bf16.msra.mxu0 %v2288
    %2811 = vmatprep.subr.bf16.mxu0 %v2281
    %2812 = vmatpush2.bf16.msra.mxu0 %v2280
    %2813 = vmatprep.subr.bf16.mxu0 %v2273
    %2814 = vmatpush2.bf16.msra.mxu0 %v2272
    %2815 = vmatprep.subr.bf16.mxu0 %v2265
    %2816 = vmatpush2.bf16.msra.mxu0 %v2264
    %2817 = vmatprep.subr.bf16.mxu0 %v2257
    %2818 = vmatpush2.bf16.msra.mxu0 %v2256
    %2819 = vmatprep.mubr.bf16.mxu0 %v1035
    %2820 = vmatmul.mubr.bf16.gmra.mxu0 %v1034
    %v2821 = vpop.f32.mrf.mxu0
    %v2822 = vadd.f32 %v2779, %v2821
    %v2823 = vpop.f32.mrf.mxu0
    %v2824 = vadd.f32 %v2781, %v2823
    %v2825 = vpop.f32.mrf.mxu0
    %v2826 = vadd.f32 %v2783, %v2825
    %v2827 = vpop.f32.mrf.mxu0
    %v2828 = vadd.f32 %v2785, %v2827
    %2829 = vdwg.mxu0
    %2830 = vmatprep.subr.bf16.mxu0 %v2123
    %2831 = vmatpush1.bf16.msra.mxu0 %v2122
    %2832 = vmatprep.subr.bf16.mxu0 %v2115
    %2833 = vmatpush1.bf16.msra.mxu0 %v2114
    %2834 = vmatprep.subr.bf16.mxu0 %v2107
    %2835 = vmatpush1.bf16.msra.mxu0 %v2106
    %2836 = vmatprep.subr.bf16.mxu0 %v2099
    %2837 = vmatpush1.bf16.msra.mxu0 %v2098
    %2838 = vmatprep.subr.bf16.mxu0 %v2091
    %2839 = vmatpush1.bf16.msra.mxu0 %v2090
    %2840 = vmatprep.subr.bf16.mxu0 %v2083
    %2841 = vmatpush1.bf16.msra.mxu0 %v2082
    %2842 = vmatprep.subr.bf16.mxu0 %v2075
    %2843 = vmatpush1.bf16.msra.mxu0 %v2074
    %2844 = vmatprep.subr.bf16.mxu0 %v2067
    %2845 = vmatpush1.bf16.msra.mxu0 %v2066
    %2846 = vmatprep.subr.bf16.mxu0 %v2187
    %2847 = vmatpush2.bf16.msra.mxu0 %v2186
    %2848 = vmatprep.subr.bf16.mxu0 %v2179
    %2849 = vmatpush2.bf16.msra.mxu0 %v2178
    %2850 = vmatprep.subr.bf16.mxu0 %v2171
    %2851 = vmatpush2.bf16.msra.mxu0 %v2170
    %2852 = vmatprep.subr.bf16.mxu0 %v2163
    %2853 = vmatpush2.bf16.msra.mxu0 %v2162
    %2854 = vmatprep.subr.bf16.mxu0 %v2155
    %2855 = vmatpush2.bf16.msra.mxu0 %v2154
    %2856 = vmatprep.subr.bf16.mxu0 %v2147
    %2857 = vmatpush2.bf16.msra.mxu0 %v2146
    %2858 = vmatprep.subr.bf16.mxu0 %v2139
    %2859 = vmatpush2.bf16.msra.mxu0 %v2138
    %2860 = vmatprep.subr.bf16.mxu0 %v2131
    %2861 = vmatpush2.bf16.msra.mxu0 %v2130
    %2862 = vmatprep.mubr.bf16.mxu0 %v1033
    %2863 = vmatmul.mubr.bf16.gmra.mxu0 %v1032
    %v2864 = vpop.f32.mrf.mxu0
    %v2865 = vadd.f32 0.0, %v2864
    %v2866 = vpop.f32.mrf.mxu0
    %v2867 = vadd.f32 0.0, %v2866
    %v2868 = vpop.f32.mrf.mxu0
    %v2869 = vadd.f32 0.0, %v2868
    %v2870 = vpop.f32.mrf.mxu0
    %v2871 = vadd.f32 0.0, %v2870
    %2872 = vdwg.mxu0
    %2873 = vmatprep.subr.bf16.mxu0 %v2251
    %2874 = vmatpush1.bf16.msra.mxu0 %v2250
    %2875 = vmatprep.subr.bf16.mxu0 %v2243
    %2876 = vmatpush1.bf16.msra.mxu0 %v2242
    %2877 = vmatprep.subr.bf16.mxu0 %v2235
    %2878 = vmatpush1.bf16.msra.mxu0 %v2234
    %2879 = vmatprep.subr.bf16.mxu0 %v2227
    %2880 = vmatpush1.bf16.msra.mxu0 %v2226
    %2881 = vmatprep.subr.bf16.mxu0 %v2219
    %2882 = vmatpush1.bf16.msra.mxu0 %v2218
    %2883 = vmatprep.subr.bf16.mxu0 %v2211
    %2884 = vmatpush1.bf16.msra.mxu0 %v2210
    %2885 = vmatprep.subr.bf16.mxu0 %v2203
    %2886 = vmatpush1.bf16.msra.mxu0 %v2202
    %2887 = vmatprep.subr.bf16.mxu0 %v2195
    %2888 = vmatpush1.bf16.msra.mxu0 %v2194
    %2889 = vmatprep.subr.bf16.mxu0 %v2315
    %2890 = vmatpush2.bf16.msra.mxu0 %v2314
    %2891 = vmatprep.subr.bf16.mxu0 %v2307
    %2892 = vmatpush2.bf16.msra.mxu0 %v2306
    %2893 = vmatprep.subr.bf16.mxu0 %v2299
    %2894 = vmatpush2.bf16.msra.mxu0 %v2298
    %2895 = vmatprep.subr.bf16.mxu0 %v2291
    %2896 = vmatpush2.bf16.msra.mxu0 %v2290
    %2897 = vmatprep.subr.bf16.mxu0 %v2283
    %2898 = vmatpush2.bf16.msra.mxu0 %v2282
    %2899 = vmatprep.subr.bf16.mxu0 %v2275
    %2900 = vmatpush2.bf16.msra.mxu0 %v2274
    %2901 = vmatprep.subr.bf16.mxu0 %v2267
    %2902 = vmatpush2.bf16.msra.mxu0 %v2266
    %2903 = vmatprep.subr.bf16.mxu0 %v2259
    %2904 = vmatpush2.bf16.msra.mxu0 %v2258
    %2905 = vmatprep.mubr.bf16.mxu0 %v1035
    %2906 = vmatmul.mubr.bf16.gmra.mxu0 %v1034
    %v2907 = vpop.f32.mrf.mxu0
    %v2908 = vadd.f32 %v2865, %v2907
    %v2909 = vpop.f32.mrf.mxu0
    %v2910 = vadd.f32 %v2867, %v2909
    %v2911 = vpop.f32.mrf.mxu0
    %v2912 = vadd.f32 %v2869, %v2911
    %v2913 = vpop.f32.mrf.mxu0
    %v2914 = vadd.f32 %v2871, %v2913
    %2915 = vdwg.mxu0
    %v2916 = vld [vmem:[#allocation17] sm:$0xff]
    %v2918 = vlaneseq
    %v2919 = vshrl.u32 %v2918, 7
    %v2920 = vsub.s32 0, %v2919
    %v2921 = vrot.slane %v2916, %v2920
    %v2922 = vlaneseq
    %v2923 = vshrl.u32 %v2922, 7
    %v2924 = vsub.s32 1, %v2923
    %v2925 = vrot.slane %v2916, %v2924
    %v2926 = vlaneseq
    %v2927 = vshrl.u32 %v2926, 7
    %v2928 = vsub.s32 2, %v2927
    %v2929 = vrot.slane %v2916, %v2928
    %v2930 = vlaneseq
    %v2931 = vshrl.u32 %v2930, 7
    %v2932 = vsub.s32 3, %v2931
    %v2933 = vrot.slane %v2916, %v2932
    %v2934 = vlaneseq
    %v2935 = vshrl.u32 %v2934, 7
    %v2936 = vsub.s32 4, %v2935
    %v2937 = vrot.slane %v2916, %v2936
    %v2938 = vlaneseq
    %v2939 = vshrl.u32 %v2938, 7
    %v2940 = vsub.s32 5, %v2939
    %v2941 = vrot.slane %v2916, %v2940
    %v2942 = vlaneseq
    %v2943 = vshrl.u32 %v2942, 7
    %v2944 = vsub.s32 6, %v2943
    %v2945 = vrot.slane %v2916, %v2944
    %v2946 = vlaneseq
    %v2947 = vshrl.u32 %v2946, 7
    %v2948 = vsub.s32 7, %v2947
    %v2949 = vrot.slane %v2916, %v2948
    %v2958 = vmul.f32 %v2650, %v2921
    %v2959 = vmul.f32 %v2652, %v2925
    %v2960 = vmul.f32 %v2736, %v2929
    %v2961 = vmul.f32 %v2738, %v2933
    %v2962 = vmul.f32 %v2822, %v2937
    %v2963 = vmul.f32 %v2824, %v2941
    %v2964 = vmul.f32 %v2908, %v2945
    %v2965 = vmul.f32 %v2910, %v2949
    %v2966 = vmul.f32 %v2654, %v2921
    %v2967 = vmul.f32 %v2656, %v2925
    %v2968 = vmul.f32 %v2740, %v2929
    %v2969 = vmul.f32 %v2742, %v2933
    %v2970 = vmul.f32 %v2826, %v2937
    %v2971 = vmul.f32 %v2828, %v2941
    %v2972 = vmul.f32 %v2912, %v2945
    %v2973 = vmul.f32 %v2914, %v2949
    %v2974 = vld [vmem:[#allocation19] sm:$0xff]
    %v2976 = vlaneseq
    %v2977 = vshrl.u32 %v2976, 7
    %v2978 = vsub.s32 0, %v2977
    %v2979 = vrot.slane %v2974, %v2978
    %v2980 = vlaneseq
    %v2981 = vshrl.u32 %v2980, 7
    %v2982 = vsub.s32 1, %v2981
    %v2983 = vrot.slane %v2974, %v2982
    %v2984 = vlaneseq
    %v2985 = vshrl.u32 %v2984, 7
    %v2986 = vsub.s32 2, %v2985
    %v2987 = vrot.slane %v2974, %v2986
    %v2988 = vlaneseq
    %v2989 = vshrl.u32 %v2988, 7
    %v2990 = vsub.s32 3, %v2989
    %v2991 = vrot.slane %v2974, %v2990
    %v2992 = vlaneseq
    %v2993 = vshrl.u32 %v2992, 7
    %v2994 = vsub.s32 4, %v2993
    %v2995 = vrot.slane %v2974, %v2994
    %v2996 = vlaneseq
    %v2997 = vshrl.u32 %v2996, 7
    %v2998 = vsub.s32 5, %v2997
    %v2999 = vrot.slane %v2974, %v2998
    %v3000 = vlaneseq
    %v3001 = vshrl.u32 %v3000, 7
    %v3002 = vsub.s32 6, %v3001
    %v3003 = vrot.slane %v2974, %v3002
    %v3004 = vlaneseq
    %v3005 = vshrl.u32 %v3004, 7
    %v3006 = vsub.s32 7, %v3005
    %v3007 = vrot.slane %v2974, %v3006
    %v3016 = vadd.f32 %v2958, %v2979
    %v3017 = vadd.f32 %v2959, %v2983
    %v3018 = vadd.f32 %v2960, %v2987
    %v3019 = vadd.f32 %v2961, %v2991
    %v3020 = vadd.f32 %v2962, %v2995
    %v3021 = vadd.f32 %v2963, %v2999
    %v3022 = vadd.f32 %v2964, %v3003
    %v3023 = vadd.f32 %v2965, %v3007
    %v3024 = vadd.f32 %v2966, %v2979
    %v3025 = vadd.f32 %v2967, %v2983
    %v3026 = vadd.f32 %v2968, %v2987
    %v3027 = vadd.f32 %v2969, %v2991
    %v3028 = vadd.f32 %v2970, %v2995
    %v3029 = vadd.f32 %v2971, %v2999
    %v3030 = vadd.f32 %v2972, %v3003
    %v3031 = vadd.f32 %v2973, %v3007
    %v3032 = vmul.f32 %v3016, 0.2
    %v3033 = vmul.f32 %v3017, 0.2
    %v3034 = vmul.f32 %v3018, 0.2
    %v3035 = vmul.f32 %v3019, 0.2
    %v3036 = vmul.f32 %v3020, 0.2
    %v3037 = vmul.f32 %v3021, 0.2
    %v3038 = vmul.f32 %v3022, 0.2
    %v3039 = vmul.f32 %v3023, 0.2
    %v3040 = vmul.f32 %v3024, 0.2
    %v3041 = vmul.f32 %v3025, 0.2
    %v3042 = vmul.f32 %v3026, 0.2
    %v3043 = vmul.f32 %v3027, 0.2
    %v3044 = vmul.f32 %v3028, 0.2
    %v3045 = vmul.f32 %v3029, 0.2
    %v3046 = vmul.f32 %v3030, 0.2
    %v3047 = vmul.f32 %v3031, 0.2
    %v3048 = vmax.f32 %v3016, %v3032
    %v3049 = vmax.f32 %v3017, %v3033
    %v3050 = vmax.f32 %v3018, %v3034
    %v3051 = vmax.f32 %v3019, %v3035
    %v3052 = vmax.f32 %v3020, %v3036
    %v3053 = vmax.f32 %v3021, %v3037
    %v3054 = vmax.f32 %v3022, %v3038
    %v3055 = vmax.f32 %v3023, %v3039
    %v3056 = vmax.f32 %v3024, %v3040
    %v3057 = vmax.f32 %v3025, %v3041
    %v3058 = vmax.f32 %v3026, %v3042
    %v3059 = vmax.f32 %v3027, %v3043
    %v3060 = vmax.f32 %v3028, %v3044
    %v3061 = vmax.f32 %v3029, %v3045
    %v3062 = vmax.f32 %v3030, %v3046
    %v3063 = vmax.f32 %v3031, %v3047
    %v3064 = vpack.c.bf16 %v3056, %v3048
    %v3065 = vpack.c.bf16 %v3057, %v3049
    %v3066 = vpack.c.bf16 %v3058, %v3050
    %v3067 = vpack.c.bf16 %v3059, %v3051
    %v3068 = vpack.c.bf16 %v3060, %v3052
    %v3069 = vpack.c.bf16 %v3061, %v3053
    %v3070 = vpack.c.bf16 %v3062, %v3054
    %v3071 = vpack.c.bf16 %v3063, %v3055
    %v3072 = vld [vmem:[#allocation20] sm:$0xff]
    %v3073 = vld [vmem:[#allocation20 + $0x8] sm:$0xff]
    %v3074 = vld [vmem:[#allocation20 + $0x10] sm:$0xff]
    %v3075 = vld [vmem:[#allocation20 + $0x18] sm:$0xf]
    %v3076 = vld [vmem:[#allocation20 + $0x1c] sm:$0xff]
    %v3077 = vld [vmem:[#allocation20 + $0x24] sm:$0xff]
    %v3078 = vld [vmem:[#allocation20 + $0x2c] sm:$0xff]
    %v3079 = vld [vmem:[#allocation20 + $0x34] sm:$0xf]
    %v3080 = vld [vmem:[#allocation20 + $0x38] sm:$0xff]
    %v3081 = vld [vmem:[#allocation20 + $0x40] sm:$0xff]
    %v3082 = vld [vmem:[#allocation20 + $0x48] sm:$0xff]
    %v3083 = vld [vmem:[#allocation20 + $0x50] sm:$0xf]
    %v3084 = vld [vmem:[#allocation20 + $0x54] sm:$0xff]
    %v3085 = vld [vmem:[#allocation20 + $0x5c] sm:$0xff]
    %v3086 = vld [vmem:[#allocation20 + $0x64] sm:$0xff]
    %v3087 = vld [vmem:[#allocation20 + $0x6c] sm:$0xf]
    %v3088 = vld [vmem:[#allocation20 + $0x70] sm:$0xff]
    %v3089 = vld [vmem:[#allocation20 + $0x78] sm:$0xff]
    %v3090 = vld [vmem:[#allocation20 + $0x80] sm:$0xff]
    %v3091 = vld [vmem:[#allocation20 + $0x88] sm:$0xf]
    %v3092 = vld [vmem:[#allocation20 + $0x8c] sm:$0xff]
    %v3093 = vld [vmem:[#allocation20 + $0x94] sm:$0xff]
    %v3094 = vld [vmem:[#allocation20 + $0x9c] sm:$0xff]
    %v3095 = vld [vmem:[#allocation20 + $0xa4] sm:$0xf]
    %v3096 = vld [vmem:[#allocation20 + $0xa8] sm:$0xff]
    %v3097 = vld [vmem:[#allocation20 + $0xb0] sm:$0xff]
    %v3098 = vld [vmem:[#allocation20 + $0xb8] sm:$0xff]
    %v3099 = vld [vmem:[#allocation20 + $0xc0] sm:$0xf]
    %v3100 = vld [vmem:[#allocation20 + $0xc4] sm:$0xff]
    %v3101 = vld [vmem:[#allocation20 + $0xcc] sm:$0xff]
    %v3102 = vld [vmem:[#allocation20 + $0xd4] sm:$0xff]
    %v3103 = vld [vmem:[#allocation20 + $0xdc] sm:$0xf]
    %v3104 = vld [vmem:[#allocation20 + $0xe0] sm:$0xff]
    %v3105 = vld [vmem:[#allocation20 + $0xe8] sm:$0xff]
    %v3106 = vld [vmem:[#allocation20 + $0xf0] sm:$0xff]
    %v3107 = vld [vmem:[#allocation20 + $0xf8] sm:$0xf]
    %v3108 = vld [vmem:[#allocation20 + $0xfc] sm:$0xff]
    %v3109 = vld [vmem:[#allocation20 + $0x104] sm:$0xff]
    %v3110 = vld [vmem:[#allocation20 + $0x10c] sm:$0xff]
    %v3111 = vld [vmem:[#allocation20 + $0x114] sm:$0xf]
    %v3112 = vld [vmem:[#allocation20 + $0x118] sm:$0xff]
    %v3113 = vld [vmem:[#allocation20 + $0x120] sm:$0xff]
    %v3114 = vld [vmem:[#allocation20 + $0x128] sm:$0xff]
    %v3115 = vld [vmem:[#allocation20 + $0x130] sm:$0xf]
    %v3116 = vld [vmem:[#allocation20 + $0x134] sm:$0xff]
    %v3117 = vld [vmem:[#allocation20 + $0x13c] sm:$0xff]
    %v3118 = vld [vmem:[#allocation20 + $0x144] sm:$0xff]
    %v3119 = vld [vmem:[#allocation20 + $0x14c] sm:$0xf]
    %v3120 = vld [vmem:[#allocation20 + $0x150] sm:$0xff]
    %v3121 = vld [vmem:[#allocation20 + $0x158] sm:$0xff]
    %v3122 = vld [vmem:[#allocation20 + $0x160] sm:$0xff]
    %v3123 = vld [vmem:[#allocation20 + $0x168] sm:$0xf]
    %v3124 = vld [vmem:[#allocation20 + $0x16c] sm:$0xff]
    %v3125 = vld [vmem:[#allocation20 + $0x174] sm:$0xff]
    %v3126 = vld [vmem:[#allocation20 + $0x17c] sm:$0xff]
    %v3127 = vld [vmem:[#allocation20 + $0x184] sm:$0xf]
    %v3128 = vld [vmem:[#allocation20 + $0x188] sm:$0xff]
    %v3129 = vld [vmem:[#allocation20 + $0x190] sm:$0xff]
    %v3130 = vld [vmem:[#allocation20 + $0x198] sm:$0xff]
    %v3131 = vld [vmem:[#allocation20 + $0x1a0] sm:$0xf]
    %v3132 = vld [vmem:[#allocation20 + $0x1a4] sm:$0xff]
    %v3133 = vld [vmem:[#allocation20 + $0x1ac] sm:$0xff]
    %v3134 = vld [vmem:[#allocation20 + $0x1b4] sm:$0xff]
    %v3135 = vld [vmem:[#allocation20 + $0x1bc] sm:$0xf]
    %v3136 = vld [vmem:[#allocation20 + $0x1c0] sm:$0xff]
    %v3137 = vld [vmem:[#allocation20 + $0x1c8] sm:$0xff]
    %v3138 = vld [vmem:[#allocation20 + $0x1d0] sm:$0xff]
    %v3139 = vld [vmem:[#allocation20 + $0x1d8] sm:$0xf]
    %v3140 = vld [vmem:[#allocation20 + $0x1dc] sm:$0xff]
    %v3141 = vld [vmem:[#allocation20 + $0x1e4] sm:$0xff]
    %v3142 = vld [vmem:[#allocation20 + $0x1ec] sm:$0xff]
    %v3143 = vld [vmem:[#allocation20 + $0x1f4] sm:$0xf]
    %v3144 = vld [vmem:[#allocation20 + $0x1f8] sm:$0xff]
    %v3145 = vld [vmem:[#allocation20 + $0x200] sm:$0xff]
    %v3146 = vld [vmem:[#allocation20 + $0x208] sm:$0xff]
    %v3147 = vld [vmem:[#allocation20 + $0x210] sm:$0xf]
    %v3148 = vld [vmem:[#allocation20 + $0x214] sm:$0xff]
    %v3149 = vld [vmem:[#allocation20 + $0x21c] sm:$0xff]
    %v3150 = vld [vmem:[#allocation20 + $0x224] sm:$0xff]
    %v3151 = vld [vmem:[#allocation20 + $0x22c] sm:$0xf]
    %v3152 = vld [vmem:[#allocation20 + $0x230] sm:$0xff]
    %v3153 = vld [vmem:[#allocation20 + $0x238] sm:$0xff]
    %v3154 = vld [vmem:[#allocation20 + $0x240] sm:$0xff]
    %v3155 = vld [vmem:[#allocation20 + $0x248] sm:$0xf]
    %v3156 = vld [vmem:[#allocation20 + $0x24c] sm:$0xff]
    %v3157 = vld [vmem:[#allocation20 + $0x254] sm:$0xff]
    %v3158 = vld [vmem:[#allocation20 + $0x25c] sm:$0xff]
    %v3159 = vld [vmem:[#allocation20 + $0x264] sm:$0xf]
    %v3160 = vld [vmem:[#allocation20 + $0x268] sm:$0xff]
    %v3161 = vld [vmem:[#allocation20 + $0x270] sm:$0xff]
    %v3162 = vld [vmem:[#allocation20 + $0x278] sm:$0xff]
    %v3163 = vld [vmem:[#allocation20 + $0x280] sm:$0xf]
    %v3164 = vld [vmem:[#allocation20 + $0x284] sm:$0xff]
    %v3165 = vld [vmem:[#allocation20 + $0x28c] sm:$0xff]
    %v3166 = vld [vmem:[#allocation20 + $0x294] sm:$0xff]
    %v3167 = vld [vmem:[#allocation20 + $0x29c] sm:$0xf]
    %v3168 = vld [vmem:[#allocation20 + $0x2a0] sm:$0xff]
    %v3169 = vld [vmem:[#allocation20 + $0x2a8] sm:$0xff]
    %v3170 = vld [vmem:[#allocation20 + $0x2b0] sm:$0xff]
    %v3171 = vld [vmem:[#allocation20 + $0x2b8] sm:$0xf]
    %v3172 = vld [vmem:[#allocation20 + $0x2bc] sm:$0xff]
    %v3173 = vld [vmem:[#allocation20 + $0x2c4] sm:$0xff]
    %v3174 = vld [vmem:[#allocation20 + $0x2cc] sm:$0xff]
    %v3175 = vld [vmem:[#allocation20 + $0x2d4] sm:$0xf]
    %v3176 = vld [vmem:[#allocation20 + $0x2d8] sm:$0xff]
    %v3177 = vld [vmem:[#allocation20 + $0x2e0] sm:$0xff]
    %v3178 = vld [vmem:[#allocation20 + $0x2e8] sm:$0xff]
    %v3179 = vld [vmem:[#allocation20 + $0x2f0] sm:$0xf]
    %v3180 = vld [vmem:[#allocation20 + $0x2f4] sm:$0xff]
    %v3181 = vld [vmem:[#allocation20 + $0x2fc] sm:$0xff]
    %v3182 = vld [vmem:[#allocation20 + $0x304] sm:$0xff]
    %v3183 = vld [vmem:[#allocation20 + $0x30c] sm:$0xf]
    %v3184 = vld [vmem:[#allocation20 + $0x310] sm:$0xff]
    %v3185 = vld [vmem:[#allocation20 + $0x318] sm:$0xff]
    %v3186 = vld [vmem:[#allocation20 + $0x320] sm:$0xff]
    %v3187 = vld [vmem:[#allocation20 + $0x328] sm:$0xf]
    %v3188 = vld [vmem:[#allocation20 + $0x32c] sm:$0xff]
    %v3189 = vld [vmem:[#allocation20 + $0x334] sm:$0xff]
    %v3190 = vld [vmem:[#allocation20 + $0x33c] sm:$0xff]
    %v3191 = vld [vmem:[#allocation20 + $0x344] sm:$0xf]
    %v3192 = vld [vmem:[#allocation20 + $0x348] sm:$0xff]
    %v3193 = vld [vmem:[#allocation20 + $0x350] sm:$0xff]
    %v3194 = vld [vmem:[#allocation20 + $0x358] sm:$0xff]
    %v3195 = vld [vmem:[#allocation20 + $0x360] sm:$0xf]
    %v3196 = vld [vmem:[#allocation20 + $0x364] sm:$0xff]
    %v3197 = vld [vmem:[#allocation20 + $0x36c] sm:$0xff]
    %v3198 = vld [vmem:[#allocation20 + $0x374] sm:$0xff]
    %v3199 = vld [vmem:[#allocation20 + $0x37c] sm:$0xf]
    %v3200 = vld [vmem:[#allocation20 + $0x380] sm:$0xff]
    %v3201 = vld [vmem:[#allocation20 + $0x388] sm:$0xff]
    %v3202 = vld [vmem:[#allocation20 + $0x390] sm:$0xff]
    %v3203 = vld [vmem:[#allocation20 + $0x398] sm:$0xf]
    %v3204 = vld [vmem:[#allocation20 + $0x39c] sm:$0xff]
    %v3205 = vld [vmem:[#allocation20 + $0x3a4] sm:$0xff]
    %v3206 = vld [vmem:[#allocation20 + $0x3ac] sm:$0xff]
    %v3207 = vld [vmem:[#allocation20 + $0x3b4] sm:$0xf]
    %v3208 = vld [vmem:[#allocation20 + $0x3b8] sm:$0xff]
    %v3209 = vld [vmem:[#allocation20 + $0x3c0] sm:$0xff]
    %v3210 = vld [vmem:[#allocation20 + $0x3c8] sm:$0xff]
    %v3211 = vld [vmem:[#allocation20 + $0x3d0] sm:$0xf]
    %v3212 = vld [vmem:[#allocation20 + $0x3d4] sm:$0xff]
    %v3213 = vld [vmem:[#allocation20 + $0x3dc] sm:$0xff]
    %v3214 = vld [vmem:[#allocation20 + $0x3e4] sm:$0xff]
    %v3215 = vld [vmem:[#allocation20 + $0x3ec] sm:$0xf]
    %v3216 = vld [vmem:[#allocation20 + $0x3f0] sm:$0xff]
    %v3217 = vld [vmem:[#allocation20 + $0x3f8] sm:$0xff]
    %v3218 = vld [vmem:[#allocation20 + $0x400] sm:$0xff]
    %v3219 = vld [vmem:[#allocation20 + $0x408] sm:$0xf]
    %v3220 = vld [vmem:[#allocation20 + $0x40c] sm:$0xff]
    %v3221 = vld [vmem:[#allocation20 + $0x414] sm:$0xff]
    %v3222 = vld [vmem:[#allocation20 + $0x41c] sm:$0xff]
    %v3223 = vld [vmem:[#allocation20 + $0x424] sm:$0xf]
    %v3224 = vld [vmem:[#allocation20 + $0x428] sm:$0xff]
    %v3225 = vld [vmem:[#allocation20 + $0x430] sm:$0xff]
    %v3226 = vld [vmem:[#allocation20 + $0x438] sm:$0xff]
    %v3227 = vld [vmem:[#allocation20 + $0x440] sm:$0xf]
    %v3228 = vld [vmem:[#allocation20 + $0x444] sm:$0xff]
    %v3229 = vld [vmem:[#allocation20 + $0x44c] sm:$0xff]
    %v3230 = vld [vmem:[#allocation20 + $0x454] sm:$0xff]
    %v3231 = vld [vmem:[#allocation20 + $0x45c] sm:$0xf]
    %v3232 = vld [vmem:[#allocation20 + $0x460] sm:$0xff]
    %v3233 = vld [vmem:[#allocation20 + $0x468] sm:$0xff]
    %v3234 = vld [vmem:[#allocation20 + $0x470] sm:$0xff]
    %v3235 = vld [vmem:[#allocation20 + $0x478] sm:$0xf]
    %v3236 = vld [vmem:[#allocation20 + $0x47c] sm:$0xff]
    %v3237 = vld [vmem:[#allocation20 + $0x484] sm:$0xff]
    %v3238 = vld [vmem:[#allocation20 + $0x48c] sm:$0xff]
    %v3239 = vld [vmem:[#allocation20 + $0x494] sm:$0xf]
    %v3240 = vld [vmem:[#allocation20 + $0x498] sm:$0xff]
    %v3241 = vld [vmem:[#allocation20 + $0x4a0] sm:$0xff]
    %v3242 = vld [vmem:[#allocation20 + $0x4a8] sm:$0xff]
    %v3243 = vld [vmem:[#allocation20 + $0x4b0] sm:$0xf]
    %v3244 = vld [vmem:[#allocation20 + $0x4b4] sm:$0xff]
    %v3245 = vld [vmem:[#allocation20 + $0x4bc] sm:$0xff]
    %v3246 = vld [vmem:[#allocation20 + $0x4c4] sm:$0xff]
    %v3247 = vld [vmem:[#allocation20 + $0x4cc] sm:$0xf]
    %v3248 = vld [vmem:[#allocation20 + $0x4d0] sm:$0xff]
    %v3249 = vld [vmem:[#allocation20 + $0x4d8] sm:$0xff]
    %v3250 = vld [vmem:[#allocation20 + $0x4e0] sm:$0xff]
    %v3251 = vld [vmem:[#allocation20 + $0x4e8] sm:$0xf]
    %v3252 = vld [vmem:[#allocation20 + $0x4ec] sm:$0xff]
    %v3253 = vld [vmem:[#allocation20 + $0x4f4] sm:$0xff]
    %v3254 = vld [vmem:[#allocation20 + $0x4fc] sm:$0xff]
    %v3255 = vld [vmem:[#allocation20 + $0x504] sm:$0xf]
    %v3256 = vld [vmem:[#allocation20 + $0x508] sm:$0xff]
    %v3257 = vld [vmem:[#allocation20 + $0x510] sm:$0xff]
    %v3258 = vld [vmem:[#allocation20 + $0x518] sm:$0xff]
    %v3259 = vld [vmem:[#allocation20 + $0x520] sm:$0xf]
    %v3260 = vld [vmem:[#allocation20 + $0x524] sm:$0xff]
    %v3261 = vld [vmem:[#allocation20 + $0x52c] sm:$0xff]
    %v3262 = vld [vmem:[#allocation20 + $0x534] sm:$0xff]
    %v3263 = vld [vmem:[#allocation20 + $0x53c] sm:$0xf]
    %v3264 = vld [vmem:[#allocation20 + $0x540] sm:$0xff]
    %v3265 = vld [vmem:[#allocation20 + $0x548] sm:$0xff]
    %v3266 = vld [vmem:[#allocation20 + $0x550] sm:$0xff]
    %v3267 = vld [vmem:[#allocation20 + $0x558] sm:$0xf]
    %v3268 = vld [vmem:[#allocation20 + $0x55c] sm:$0xff]
    %v3269 = vld [vmem:[#allocation20 + $0x564] sm:$0xff]
    %v3270 = vld [vmem:[#allocation20 + $0x56c] sm:$0xff]
    %v3271 = vld [vmem:[#allocation20 + $0x574] sm:$0xf]
    %v3272 = vld [vmem:[#allocation20 + $0x578] sm:$0xff]
    %v3273 = vld [vmem:[#allocation20 + $0x580] sm:$0xff]
    %v3274 = vld [vmem:[#allocation20 + $0x588] sm:$0xff]
    %v3275 = vld [vmem:[#allocation20 + $0x590] sm:$0xf]
    %v3276 = vld [vmem:[#allocation20 + $0x594] sm:$0xff]
    %v3277 = vld [vmem:[#allocation20 + $0x59c] sm:$0xff]
    %v3278 = vld [vmem:[#allocation20 + $0x5a4] sm:$0xff]
    %v3279 = vld [vmem:[#allocation20 + $0x5ac] sm:$0xf]
    %v3280 = vld [vmem:[#allocation20 + $0x5b0] sm:$0xff]
    %v3281 = vld [vmem:[#allocation20 + $0x5b8] sm:$0xff]
    %v3282 = vld [vmem:[#allocation20 + $0x5c0] sm:$0xff]
    %v3283 = vld [vmem:[#allocation20 + $0x5c8] sm:$0xf]
    %v3284 = vld [vmem:[#allocation20 + $0x5cc] sm:$0xff]
    %v3285 = vld [vmem:[#allocation20 + $0x5d4] sm:$0xff]
    %v3286 = vld [vmem:[#allocation20 + $0x5dc] sm:$0xff]
    %v3287 = vld [vmem:[#allocation20 + $0x5e4] sm:$0xf]
    %v3288 = vld [vmem:[#allocation20 + $0x5e8] sm:$0xff]
    %v3289 = vld [vmem:[#allocation20 + $0x5f0] sm:$0xff]
    %v3290 = vld [vmem:[#allocation20 + $0x5f8] sm:$0xff]
    %v3291 = vld [vmem:[#allocation20 + $0x600] sm:$0xf]
    %v3292 = vld [vmem:[#allocation20 + $0x604] sm:$0xff]
    %v3293 = vld [vmem:[#allocation20 + $0x60c] sm:$0xff]
    %v3294 = vld [vmem:[#allocation20 + $0x614] sm:$0xff]
    %v3295 = vld [vmem:[#allocation20 + $0x61c] sm:$0xf]
    %v3296 = vld [vmem:[#allocation20 + $0x620] sm:$0xff]
    %v3297 = vld [vmem:[#allocation20 + $0x628] sm:$0xff]
    %v3298 = vld [vmem:[#allocation20 + $0x630] sm:$0xff]
    %v3299 = vld [vmem:[#allocation20 + $0x638] sm:$0xf]
    %v3300 = vld [vmem:[#allocation20 + $0x63c] sm:$0xff]
    %v3301 = vld [vmem:[#allocation20 + $0x644] sm:$0xff]
    %v3302 = vld [vmem:[#allocation20 + $0x64c] sm:$0xff]
    %v3303 = vld [vmem:[#allocation20 + $0x654] sm:$0xf]
    %v3304 = vld [vmem:[#allocation20 + $0x658] sm:$0xff]
    %v3305 = vld [vmem:[#allocation20 + $0x660] sm:$0xff]
    %v3306 = vld [vmem:[#allocation20 + $0x668] sm:$0xff]
    %v3307 = vld [vmem:[#allocation20 + $0x670] sm:$0xf]
    %v3308 = vld [vmem:[#allocation20 + $0x674] sm:$0xff]
    %v3309 = vld [vmem:[#allocation20 + $0x67c] sm:$0xff]
    %v3310 = vld [vmem:[#allocation20 + $0x684] sm:$0xff]
    %v3311 = vld [vmem:[#allocation20 + $0x68c] sm:$0xf]
    %v3312 = vld [vmem:[#allocation20 + $0x690] sm:$0xff]
    %v3313 = vld [vmem:[#allocation20 + $0x698] sm:$0xff]
    %v3314 = vld [vmem:[#allocation20 + $0x6a0] sm:$0xff]
    %v3315 = vld [vmem:[#allocation20 + $0x6a8] sm:$0xf]
    %v3316 = vld [vmem:[#allocation20 + $0x6ac] sm:$0xff]
    %v3317 = vld [vmem:[#allocation20 + $0x6b4] sm:$0xff]
    %v3318 = vld [vmem:[#allocation20 + $0x6bc] sm:$0xff]
    %v3319 = vld [vmem:[#allocation20 + $0x6c4] sm:$0xf]
    %v3320 = vld [vmem:[#allocation20 + $0x6c8] sm:$0xff]
    %v3321 = vld [vmem:[#allocation20 + $0x6d0] sm:$0xff]
    %v3322 = vld [vmem:[#allocation20 + $0x6d8] sm:$0xff]
    %v3323 = vld [vmem:[#allocation20 + $0x6e0] sm:$0xf]
    %v3324 = vld [vmem:[#allocation20 + $0x6e4] sm:$0xff]
    %v3325 = vld [vmem:[#allocation20 + $0x6ec] sm:$0xff]
    %v3326 = vld [vmem:[#allocation20 + $0x6f4] sm:$0xff]
    %v3327 = vld [vmem:[#allocation20 + $0x6fc] sm:$0xf]
    %v3328 = vld [vmem:[#allocation20 + $0x700] sm:$0xff]
    %v3329 = vld [vmem:[#allocation20 + $0x708] sm:$0xff]
    %v3330 = vld [vmem:[#allocation20 + $0x710] sm:$0xff]
    %v3331 = vld [vmem:[#allocation20 + $0x718] sm:$0xf]
    %v3332 = vld [vmem:[#allocation20 + $0x71c] sm:$0xff]
    %v3333 = vld [vmem:[#allocation20 + $0x724] sm:$0xff]
    %v3334 = vld [vmem:[#allocation20 + $0x72c] sm:$0xff]
    %v3335 = vld [vmem:[#allocation20 + $0x734] sm:$0xf]
    %v3336 = vld [vmem:[#allocation20 + $0x738] sm:$0xff]
    %v3337 = vld [vmem:[#allocation20 + $0x740] sm:$0xff]
    %v3338 = vld [vmem:[#allocation20 + $0x748] sm:$0xff]
    %v3339 = vld [vmem:[#allocation20 + $0x750] sm:$0xf]
    %v3340 = vld [vmem:[#allocation20 + $0x754] sm:$0xff]
    %v3341 = vld [vmem:[#allocation20 + $0x75c] sm:$0xff]
    %v3342 = vld [vmem:[#allocation20 + $0x764] sm:$0xff]
    %v3343 = vld [vmem:[#allocation20 + $0x76c] sm:$0xf]
    %v3344 = vld [vmem:[#allocation20 + $0x770] sm:$0xff]
    %v3345 = vld [vmem:[#allocation20 + $0x778] sm:$0xff]
    %v3346 = vld [vmem:[#allocation20 + $0x780] sm:$0xff]
    %v3347 = vld [vmem:[#allocation20 + $0x788] sm:$0xf]
    %v3348 = vld [vmem:[#allocation20 + $0x78c] sm:$0xff]
    %v3349 = vld [vmem:[#allocation20 + $0x794] sm:$0xff]
    %v3350 = vld [vmem:[#allocation20 + $0x79c] sm:$0xff]
    %v3351 = vld [vmem:[#allocation20 + $0x7a4] sm:$0xf]
    %v3352 = vld [vmem:[#allocation20 + $0x7a8] sm:$0xff]
    %v3353 = vld [vmem:[#allocation20 + $0x7b0] sm:$0xff]
    %v3354 = vld [vmem:[#allocation20 + $0x7b8] sm:$0xff]
    %v3355 = vld [vmem:[#allocation20 + $0x7c0] sm:$0xf]
    %v3356 = vld [vmem:[#allocation20 + $0x7c4] sm:$0xff]
    %v3357 = vld [vmem:[#allocation20 + $0x7cc] sm:$0xff]
    %v3358 = vld [vmem:[#allocation20 + $0x7d4] sm:$0xff]
    %v3359 = vld [vmem:[#allocation20 + $0x7dc] sm:$0xf]
    %v3360 = vld [vmem:[#allocation20 + $0x7e0] sm:$0xff]
    %v3361 = vld [vmem:[#allocation20 + $0x7e8] sm:$0xff]
    %v3362 = vld [vmem:[#allocation20 + $0x7f0] sm:$0xff]
    %v3363 = vld [vmem:[#allocation20 + $0x7f8] sm:$0xf]
    %v3364 = vld [vmem:[#allocation20 + $0x7fc] sm:$0xff]
    %v3365 = vld [vmem:[#allocation20 + $0x804] sm:$0xff]
    %v3366 = vld [vmem:[#allocation20 + $0x80c] sm:$0xff]
    %v3367 = vld [vmem:[#allocation20 + $0x814] sm:$0xf]
    %v3368 = vld [vmem:[#allocation20 + $0x818] sm:$0xff]
    %v3369 = vld [vmem:[#allocation20 + $0x820] sm:$0xff]
    %v3370 = vld [vmem:[#allocation20 + $0x828] sm:$0xff]
    %v3371 = vld [vmem:[#allocation20 + $0x830] sm:$0xf]
    %v3372 = vld [vmem:[#allocation20 + $0x834] sm:$0xff]
    %v3373 = vld [vmem:[#allocation20 + $0x83c] sm:$0xff]
    %v3374 = vld [vmem:[#allocation20 + $0x844] sm:$0xff]
    %v3375 = vld [vmem:[#allocation20 + $0x84c] sm:$0xf]
    %v3376 = vld [vmem:[#allocation20 + $0x850] sm:$0xff]
    %v3377 = vld [vmem:[#allocation20 + $0x858] sm:$0xff]
    %v3378 = vld [vmem:[#allocation20 + $0x860] sm:$0xff]
    %v3379 = vld [vmem:[#allocation20 + $0x868] sm:$0xf]
    %v3380 = vld [vmem:[#allocation20 + $0x86c] sm:$0xff]
    %v3381 = vld [vmem:[#allocation20 + $0x874] sm:$0xff]
    %v3382 = vld [vmem:[#allocation20 + $0x87c] sm:$0xff]
    %v3383 = vld [vmem:[#allocation20 + $0x884] sm:$0xf]
    %v3384 = vld [vmem:[#allocation20 + $0x888] sm:$0xff]
    %v3385 = vld [vmem:[#allocation20 + $0x890] sm:$0xff]
    %v3386 = vld [vmem:[#allocation20 + $0x898] sm:$0xff]
    %v3387 = vld [vmem:[#allocation20 + $0x8a0] sm:$0xf]
    %v3388 = vld [vmem:[#allocation20 + $0x8a4] sm:$0xff]
    %v3389 = vld [vmem:[#allocation20 + $0x8ac] sm:$0xff]
    %v3390 = vld [vmem:[#allocation20 + $0x8b4] sm:$0xff]
    %v3391 = vld [vmem:[#allocation20 + $0x8bc] sm:$0xf]
    %v3392 = vld [vmem:[#allocation20 + $0x8c0] sm:$0xff]
    %v3393 = vld [vmem:[#allocation20 + $0x8c8] sm:$0xff]
    %v3394 = vld [vmem:[#allocation20 + $0x8d0] sm:$0xff]
    %v3395 = vld [vmem:[#allocation20 + $0x8d8] sm:$0xf]
    %v3396 = vld [vmem:[#allocation20 + $0x8dc] sm:$0xff]
    %v3397 = vld [vmem:[#allocation20 + $0x8e4] sm:$0xff]
    %v3398 = vld [vmem:[#allocation20 + $0x8ec] sm:$0xff]
    %v3399 = vld [vmem:[#allocation20 + $0x8f4] sm:$0xf]
    %v3400 = vld [vmem:[#allocation20 + $0x8f8] sm:$0xff]
    %v3401 = vld [vmem:[#allocation20 + $0x900] sm:$0xff]
    %v3402 = vld [vmem:[#allocation20 + $0x908] sm:$0xff]
    %v3403 = vld [vmem:[#allocation20 + $0x910] sm:$0xf]
    %v3404 = vld [vmem:[#allocation20 + $0x914] sm:$0xff]
    %v3405 = vld [vmem:[#allocation20 + $0x91c] sm:$0xff]
    %v3406 = vld [vmem:[#allocation20 + $0x924] sm:$0xff]
    %v3407 = vld [vmem:[#allocation20 + $0x92c] sm:$0xf]
    %v3408 = vld [vmem:[#allocation20 + $0x930] sm:$0xff]
    %v3409 = vld [vmem:[#allocation20 + $0x938] sm:$0xff]
    %v3410 = vld [vmem:[#allocation20 + $0x940] sm:$0xff]
    %v3411 = vld [vmem:[#allocation20 + $0x948] sm:$0xf]
    %v3412 = vld [vmem:[#allocation20 + $0x94c] sm:$0xff]
    %v3413 = vld [vmem:[#allocation20 + $0x954] sm:$0xff]
    %v3414 = vld [vmem:[#allocation20 + $0x95c] sm:$0xff]
    %v3415 = vld [vmem:[#allocation20 + $0x964] sm:$0xf]
    %v3416 = vld [vmem:[#allocation20 + $0x968] sm:$0xff]
    %v3417 = vld [vmem:[#allocation20 + $0x970] sm:$0xff]
    %v3418 = vld [vmem:[#allocation20 + $0x978] sm:$0xff]
    %v3419 = vld [vmem:[#allocation20 + $0x980] sm:$0xf]
    %v3420 = vld [vmem:[#allocation20 + $0x984] sm:$0xff]
    %v3421 = vld [vmem:[#allocation20 + $0x98c] sm:$0xff]
    %v3422 = vld [vmem:[#allocation20 + $0x994] sm:$0xff]
    %v3423 = vld [vmem:[#allocation20 + $0x99c] sm:$0xf]
    %v3424 = vld [vmem:[#allocation20 + $0x9a0] sm:$0xff]
    %v3425 = vld [vmem:[#allocation20 + $0x9a8] sm:$0xff]
    %v3426 = vld [vmem:[#allocation20 + $0x9b0] sm:$0xff]
    %v3427 = vld [vmem:[#allocation20 + $0x9b8] sm:$0xf]
    %v3428 = vld [vmem:[#allocation20 + $0x9bc] sm:$0xff]
    %v3429 = vld [vmem:[#allocation20 + $0x9c4] sm:$0xff]
    %v3430 = vld [vmem:[#allocation20 + $0x9cc] sm:$0xff]
    %v3431 = vld [vmem:[#allocation20 + $0x9d4] sm:$0xf]
    %v3432 = vld [vmem:[#allocation20 + $0x9d8] sm:$0xff]
    %v3433 = vld [vmem:[#allocation20 + $0x9e0] sm:$0xff]
    %v3434 = vld [vmem:[#allocation20 + $0x9e8] sm:$0xff]
    %v3435 = vld [vmem:[#allocation20 + $0x9f0] sm:$0xf]
    %v3436 = vld [vmem:[#allocation20 + $0x9f4] sm:$0xff]
    %v3437 = vld [vmem:[#allocation20 + $0x9fc] sm:$0xff]
    %v3438 = vld [vmem:[#allocation20 + $0xa04] sm:$0xff]
    %v3439 = vld [vmem:[#allocation20 + $0xa0c] sm:$0xf]
    %v3440 = vld [vmem:[#allocation20 + $0xa10] sm:$0xff]
    %v3441 = vld [vmem:[#allocation20 + $0xa18] sm:$0xff]
    %v3442 = vld [vmem:[#allocation20 + $0xa20] sm:$0xff]
    %v3443 = vld [vmem:[#allocation20 + $0xa28] sm:$0xf]
    %v3444 = vld [vmem:[#allocation20 + $0xa2c] sm:$0xff]
    %v3445 = vld [vmem:[#allocation20 + $0xa34] sm:$0xff]
    %v3446 = vld [vmem:[#allocation20 + $0xa3c] sm:$0xff]
    %v3447 = vld [vmem:[#allocation20 + $0xa44] sm:$0xf]
    %v3448 = vld [vmem:[#allocation20 + $0xa48] sm:$0xff]
    %v3449 = vld [vmem:[#allocation20 + $0xa50] sm:$0xff]
    %v3450 = vld [vmem:[#allocation20 + $0xa58] sm:$0xff]
    %v3451 = vld [vmem:[#allocation20 + $0xa60] sm:$0xf]
    %v3452 = vld [vmem:[#allocation20 + $0xa64] sm:$0xff]
    %v3453 = vld [vmem:[#allocation20 + $0xa6c] sm:$0xff]
    %v3454 = vld [vmem:[#allocation20 + $0xa74] sm:$0xff]
    %v3455 = vld [vmem:[#allocation20 + $0xa7c] sm:$0xf]
    %v3456 = vld [vmem:[#allocation20 + $0xa80] sm:$0xff]
    %v3457 = vld [vmem:[#allocation20 + $0xa88] sm:$0xff]
    %v3458 = vld [vmem:[#allocation20 + $0xa90] sm:$0xff]
    %v3459 = vld [vmem:[#allocation20 + $0xa98] sm:$0xf]
    %v3460 = vld [vmem:[#allocation20 + $0xa9c] sm:$0xff]
    %v3461 = vld [vmem:[#allocation20 + $0xaa4] sm:$0xff]
    %v3462 = vld [vmem:[#allocation20 + $0xaac] sm:$0xff]
    %v3463 = vld [vmem:[#allocation20 + $0xab4] sm:$0xf]
    %v3464 = vld [vmem:[#allocation20 + $0xab8] sm:$0xff]
    %v3465 = vld [vmem:[#allocation20 + $0xac0] sm:$0xff]
    %v3466 = vld [vmem:[#allocation20 + $0xac8] sm:$0xff]
    %v3467 = vld [vmem:[#allocation20 + $0xad0] sm:$0xf]
    %v3468 = vld [vmem:[#allocation20 + $0xad4] sm:$0xff]
    %v3469 = vld [vmem:[#allocation20 + $0xadc] sm:$0xff]
    %v3470 = vld [vmem:[#allocation20 + $0xae4] sm:$0xff]
    %v3471 = vld [vmem:[#allocation20 + $0xaec] sm:$0xf]
    %v3472 = vld [vmem:[#allocation20 + $0xaf0] sm:$0xff]
    %v3473 = vld [vmem:[#allocation20 + $0xaf8] sm:$0xff]
    %v3474 = vld [vmem:[#allocation20 + $0xb00] sm:$0xff]
    %v3475 = vld [vmem:[#allocation20 + $0xb08] sm:$0xf]
    %v3476 = vld [vmem:[#allocation20 + $0xb0c] sm:$0xff]
    %v3477 = vld [vmem:[#allocation20 + $0xb14] sm:$0xff]
    %v3478 = vld [vmem:[#allocation20 + $0xb1c] sm:$0xff]
    %v3479 = vld [vmem:[#allocation20 + $0xb24] sm:$0xf]
    %v3480 = vld [vmem:[#allocation20 + $0xb28] sm:$0xff]
    %v3481 = vld [vmem:[#allocation20 + $0xb30] sm:$0xff]
    %v3482 = vld [vmem:[#allocation20 + $0xb38] sm:$0xff]
    %v3483 = vld [vmem:[#allocation20 + $0xb40] sm:$0xf]
    %v3484 = vld [vmem:[#allocation20 + $0xb44] sm:$0xff]
    %v3485 = vld [vmem:[#allocation20 + $0xb4c] sm:$0xff]
    %v3486 = vld [vmem:[#allocation20 + $0xb54] sm:$0xff]
    %v3487 = vld [vmem:[#allocation20 + $0xb5c] sm:$0xf]
    %v3488 = vld [vmem:[#allocation20 + $0xb60] sm:$0xff]
    %v3489 = vld [vmem:[#allocation20 + $0xb68] sm:$0xff]
    %v3490 = vld [vmem:[#allocation20 + $0xb70] sm:$0xff]
    %v3491 = vld [vmem:[#allocation20 + $0xb78] sm:$0xf]
    %v3492 = vld [vmem:[#allocation20 + $0xb7c] sm:$0xff]
    %v3493 = vld [vmem:[#allocation20 + $0xb84] sm:$0xff]
    %v3494 = vld [vmem:[#allocation20 + $0xb8c] sm:$0xff]
    %v3495 = vld [vmem:[#allocation20 + $0xb94] sm:$0xf]
    %v3496 = vld [vmem:[#allocation20 + $0xb98] sm:$0xff]
    %v3497 = vld [vmem:[#allocation20 + $0xba0] sm:$0xff]
    %v3498 = vld [vmem:[#allocation20 + $0xba8] sm:$0xff]
    %v3499 = vld [vmem:[#allocation20 + $0xbb0] sm:$0xf]
    %v3500 = vld [vmem:[#allocation20 + $0xbb4] sm:$0xff]
    %v3501 = vld [vmem:[#allocation20 + $0xbbc] sm:$0xff]
    %v3502 = vld [vmem:[#allocation20 + $0xbc4] sm:$0xff]
    %v3503 = vld [vmem:[#allocation20 + $0xbcc] sm:$0xf]
    %v3504 = vld [vmem:[#allocation20 + $0xbd0] sm:$0xff]
    %v3505 = vld [vmem:[#allocation20 + $0xbd8] sm:$0xff]
    %v3506 = vld [vmem:[#allocation20 + $0xbe0] sm:$0xff]
    %v3507 = vld [vmem:[#allocation20 + $0xbe8] sm:$0xf]
    %v3508 = vld [vmem:[#allocation20 + $0xbec] sm:$0xff]
    %v3509 = vld [vmem:[#allocation20 + $0xbf4] sm:$0xff]
    %v3510 = vld [vmem:[#allocation20 + $0xbfc] sm:$0xff]
    %v3511 = vld [vmem:[#allocation20 + $0xc04] sm:$0xf]
    %v3512 = vld [vmem:[#allocation20 + $0xc08] sm:$0xff]
    %v3513 = vld [vmem:[#allocation20 + $0xc10] sm:$0xff]
    %v3514 = vld [vmem:[#allocation20 + $0xc18] sm:$0xff]
    %v3515 = vld [vmem:[#allocation20 + $0xc20] sm:$0xf]
    %v3516 = vld [vmem:[#allocation20 + $0xc24] sm:$0xff]
    %v3517 = vld [vmem:[#allocation20 + $0xc2c] sm:$0xff]
    %v3518 = vld [vmem:[#allocation20 + $0xc34] sm:$0xff]
    %v3519 = vld [vmem:[#allocation20 + $0xc3c] sm:$0xf]
    %v3520 = vld [vmem:[#allocation20 + $0xc40] sm:$0xff]
    %v3521 = vld [vmem:[#allocation20 + $0xc48] sm:$0xff]
    %v3522 = vld [vmem:[#allocation20 + $0xc50] sm:$0xff]
    %v3523 = vld [vmem:[#allocation20 + $0xc58] sm:$0xf]
    %v3524 = vld [vmem:[#allocation20 + $0xc5c] sm:$0xff]
    %v3525 = vld [vmem:[#allocation20 + $0xc64] sm:$0xff]
    %v3526 = vld [vmem:[#allocation20 + $0xc6c] sm:$0xff]
    %v3527 = vld [vmem:[#allocation20 + $0xc74] sm:$0xf]
    %v3528 = vld [vmem:[#allocation20 + $0xc78] sm:$0xff]
    %v3529 = vld [vmem:[#allocation20 + $0xc80] sm:$0xff]
    %v3530 = vld [vmem:[#allocation20 + $0xc88] sm:$0xff]
    %v3531 = vld [vmem:[#allocation20 + $0xc90] sm:$0xf]
    %v3532 = vld [vmem:[#allocation20 + $0xc94] sm:$0xff]
    %v3533 = vld [vmem:[#allocation20 + $0xc9c] sm:$0xff]
    %v3534 = vld [vmem:[#allocation20 + $0xca4] sm:$0xff]
    %v3535 = vld [vmem:[#allocation20 + $0xcac] sm:$0xf]
    %v3536 = vld [vmem:[#allocation20 + $0xcb0] sm:$0xff]
    %v3537 = vld [vmem:[#allocation20 + $0xcb8] sm:$0xff]
    %v3538 = vld [vmem:[#allocation20 + $0xcc0] sm:$0xff]
    %v3539 = vld [vmem:[#allocation20 + $0xcc8] sm:$0xf]
    %v3540 = vld [vmem:[#allocation20 + $0xccc] sm:$0xff]
    %v3541 = vld [vmem:[#allocation20 + $0xcd4] sm:$0xff]
    %v3542 = vld [vmem:[#allocation20 + $0xcdc] sm:$0xff]
    %v3543 = vld [vmem:[#allocation20 + $0xce4] sm:$0xf]
    %v3544 = vld [vmem:[#allocation20 + $0xce8] sm:$0xff]
    %v3545 = vld [vmem:[#allocation20 + $0xcf0] sm:$0xff]
    %v3546 = vld [vmem:[#allocation20 + $0xcf8] sm:$0xff]
    %v3547 = vld [vmem:[#allocation20 + $0xd00] sm:$0xf]
    %v3548 = vld [vmem:[#allocation20 + $0xd04] sm:$0xff]
    %v3549 = vld [vmem:[#allocation20 + $0xd0c] sm:$0xff]
    %v3550 = vld [vmem:[#allocation20 + $0xd14] sm:$0xff]
    %v3551 = vld [vmem:[#allocation20 + $0xd1c] sm:$0xf]
    %v3552 = vld [vmem:[#allocation20 + $0xd20] sm:$0xff]
    %v3553 = vld [vmem:[#allocation20 + $0xd28] sm:$0xff]
    %v3554 = vld [vmem:[#allocation20 + $0xd30] sm:$0xff]
    %v3555 = vld [vmem:[#allocation20 + $0xd38] sm:$0xf]
    %v3556 = vld [vmem:[#allocation20 + $0xd3c] sm:$0xff]
    %v3557 = vld [vmem:[#allocation20 + $0xd44] sm:$0xff]
    %v3558 = vld [vmem:[#allocation20 + $0xd4c] sm:$0xff]
    %v3559 = vld [vmem:[#allocation20 + $0xd54] sm:$0xf]
    %v3560 = vld [vmem:[#allocation20 + $0xd58] sm:$0xff]
    %v3561 = vld [vmem:[#allocation20 + $0xd60] sm:$0xff]
    %v3562 = vld [vmem:[#allocation20 + $0xd68] sm:$0xff]
    %v3563 = vld [vmem:[#allocation20 + $0xd70] sm:$0xf]
    %v3564 = vld [vmem:[#allocation20 + $0xd74] sm:$0xff]
    %v3565 = vld [vmem:[#allocation20 + $0xd7c] sm:$0xff]
    %v3566 = vld [vmem:[#allocation20 + $0xd84] sm:$0xff]
    %v3567 = vld [vmem:[#allocation20 + $0xd8c] sm:$0xf]
    %v3568 = vld [vmem:[#allocation20 + $0xd90] sm:$0xff]
    %v3569 = vld [vmem:[#allocation20 + $0xd98] sm:$0xff]
    %v3570 = vld [vmem:[#allocation20 + $0xda0] sm:$0xff]
    %v3571 = vld [vmem:[#allocation20 + $0xda8] sm:$0xf]
    %v3572 = vld [vmem:[#allocation20 + $0xdac] sm:$0xff]
    %v3573 = vld [vmem:[#allocation20 + $0xdb4] sm:$0xff]
    %v3574 = vld [vmem:[#allocation20 + $0xdbc] sm:$0xff]
    %v3575 = vld [vmem:[#allocation20 + $0xdc4] sm:$0xf]
    %v3576 = vld [vmem:[#allocation20 + $0xdc8] sm:$0xff]
    %v3577 = vld [vmem:[#allocation20 + $0xdd0] sm:$0xff]
    %v3578 = vld [vmem:[#allocation20 + $0xdd8] sm:$0xff]
    %v3579 = vld [vmem:[#allocation20 + $0xde0] sm:$0xf]
    %v3580 = vld [vmem:[#allocation20 + $0xde4] sm:$0xff]
    %v3581 = vld [vmem:[#allocation20 + $0xdec] sm:$0xff]
    %v3582 = vld [vmem:[#allocation20 + $0xdf4] sm:$0xff]
    %v3583 = vld [vmem:[#allocation20 + $0xdfc] sm:$0xf]
    %v3584 = vld [vmem:[#allocation22] sm:$0xff]
    %v3586 = vlaneseq
    %v3587 = vshrl.u32 %v3586, 7
    %v3588 = vsub.s32 0, %v3587
    %v3589 = vrot.slane %v3584, %v3588
    %v3590 = vlaneseq
    %v3591 = vshrl.u32 %v3590, 7
    %v3592 = vsub.s32 1, %v3591
    %v3593 = vrot.slane %v3584, %v3592
    %v3594 = vlaneseq
    %v3595 = vshrl.u32 %v3594, 7
    %v3596 = vsub.s32 2, %v3595
    %v3597 = vrot.slane %v3584, %v3596
    %v3598 = vlaneseq
    %v3599 = vshrl.u32 %v3598, 7
    %v3600 = vsub.s32 3, %v3599
    %v3601 = vrot.slane %v3584, %v3600
    %v3602 = vlaneseq
    %v3603 = vshrl.u32 %v3602, 7
    %v3604 = vsub.s32 4, %v3603
    %v3605 = vrot.slane %v3584, %v3604
    %v3606 = vlaneseq
    %v3607 = vshrl.u32 %v3606, 7
    %v3608 = vsub.s32 5, %v3607
    %v3609 = vrot.slane %v3584, %v3608
    %v3610 = vlaneseq
    %v3611 = vshrl.u32 %v3610, 7
    %v3612 = vsub.s32 6, %v3611
    %v3613 = vrot.slane %v3584, %v3612
    %v4133 = vunpack.c.l.b16 %v3072
    %v4134 = vunpack.c.h.b16 %v3072
    %v4135 = vunpack.c.l.b16 %v3073
    %v4136 = vunpack.c.h.b16 %v3073
    %v4137 = vunpack.c.l.b16 %v3074
    %v4138 = vunpack.c.h.b16 %v3074
    %v4139 = vunpack.c.l.b16 %v3075
    %v4140 = vunpack.c.l.b16 %v3076
    %v4141 = vunpack.c.h.b16 %v3076
    %v4142 = vunpack.c.l.b16 %v3077
    %v4143 = vunpack.c.h.b16 %v3077
    %v4144 = vunpack.c.l.b16 %v3078
    %v4145 = vunpack.c.h.b16 %v3078
    %v4146 = vunpack.c.l.b16 %v3079
    %v4147 = vunpack.c.l.b16 %v3080
    %v4148 = vunpack.c.h.b16 %v3080
    %v4149 = vunpack.c.l.b16 %v3081
    %v4150 = vunpack.c.h.b16 %v3081
    %v4151 = vunpack.c.l.b16 %v3082
    %v4152 = vunpack.c.h.b16 %v3082
    %v4153 = vunpack.c.l.b16 %v3083
    %v4154 = vunpack.c.l.b16 %v3084
    %v4155 = vunpack.c.h.b16 %v3084
    %v4156 = vunpack.c.l.b16 %v3085
    %v4157 = vunpack.c.h.b16 %v3085
    %v4158 = vunpack.c.l.b16 %v3086
    %v4159 = vunpack.c.h.b16 %v3086
    %v4160 = vunpack.c.l.b16 %v3087
    %v4161 = vunpack.c.l.b16 %v3088
    %v4162 = vunpack.c.h.b16 %v3088
    %v4163 = vunpack.c.l.b16 %v3089
    %v4164 = vunpack.c.h.b16 %v3089
    %v4165 = vunpack.c.l.b16 %v3090
    %v4166 = vunpack.c.h.b16 %v3090
    %v4167 = vunpack.c.l.b16 %v3091
    %v4168 = vunpack.c.l.b16 %v3092
    %v4169 = vunpack.c.h.b16 %v3092
    %v4170 = vunpack.c.l.b16 %v3093
    %v4171 = vunpack.c.h.b16 %v3093
    %v4172 = vunpack.c.l.b16 %v3094
    %v4173 = vunpack.c.h.b16 %v3094
    %v4174 = vunpack.c.l.b16 %v3095
    %v4175 = vunpack.c.l.b16 %v3096
    %v4176 = vunpack.c.h.b16 %v3096
    %v4177 = vunpack.c.l.b16 %v3097
    %v4178 = vunpack.c.h.b16 %v3097
    %v4179 = vunpack.c.l.b16 %v3098
    %v4180 = vunpack.c.h.b16 %v3098
    %v4181 = vunpack.c.l.b16 %v3099
    %v4182 = vunpack.c.l.b16 %v3100
    %v4183 = vunpack.c.h.b16 %v3100
    %v4184 = vunpack.c.l.b16 %v3101
    %v4185 = vunpack.c.h.b16 %v3101
    %v4186 = vunpack.c.l.b16 %v3102
    %v4187 = vunpack.c.h.b16 %v3102
    %v4188 = vunpack.c.l.b16 %v3103
    %v4189 = vunpack.c.l.b16 %v3104
    %v4190 = vunpack.c.h.b16 %v3104
    %v4191 = vunpack.c.l.b16 %v3105
    %v4192 = vunpack.c.h.b16 %v3105
    %v4193 = vunpack.c.l.b16 %v3106
    %v4194 = vunpack.c.h.b16 %v3106
    %v4195 = vunpack.c.l.b16 %v3107
    %v4196 = vunpack.c.l.b16 %v3108
    %v4197 = vunpack.c.h.b16 %v3108
    %v4198 = vunpack.c.l.b16 %v3109
    %v4199 = vunpack.c.h.b16 %v3109
    %v4200 = vunpack.c.l.b16 %v3110
    %v4201 = vunpack.c.h.b16 %v3110
    %v4202 = vunpack.c.l.b16 %v3111
    %v4203 = vunpack.c.l.b16 %v3112
    %v4204 = vunpack.c.h.b16 %v3112
    %v4205 = vunpack.c.l.b16 %v3113
    %v4206 = vunpack.c.h.b16 %v3113
    %v4207 = vunpack.c.l.b16 %v3114
    %v4208 = vunpack.c.h.b16 %v3114
    %v4209 = vunpack.c.l.b16 %v3115
    %v4210 = vunpack.c.l.b16 %v3116
    %v4211 = vunpack.c.h.b16 %v3116
    %v4212 = vunpack.c.l.b16 %v3117
    %v4213 = vunpack.c.h.b16 %v3117
    %v4214 = vunpack.c.l.b16 %v3118
    %v4215 = vunpack.c.h.b16 %v3118
    %v4216 = vunpack.c.l.b16 %v3119
    %v4217 = vunpack.c.l.b16 %v3120
    %v4218 = vunpack.c.h.b16 %v3120
    %v4219 = vunpack.c.l.b16 %v3121
    %v4220 = vunpack.c.h.b16 %v3121
    %v4221 = vunpack.c.l.b16 %v3122
    %v4222 = vunpack.c.h.b16 %v3122
    %v4223 = vunpack.c.l.b16 %v3123
    %v4224 = vunpack.c.l.b16 %v3124
    %v4225 = vunpack.c.h.b16 %v3124
    %v4226 = vunpack.c.l.b16 %v3125
    %v4227 = vunpack.c.h.b16 %v3125
    %v4228 = vunpack.c.l.b16 %v3126
    %v4229 = vunpack.c.h.b16 %v3126
    %v4230 = vunpack.c.l.b16 %v3127
    %v4231 = vunpack.c.l.b16 %v3128
    %v4232 = vunpack.c.h.b16 %v3128
    %v4233 = vunpack.c.l.b16 %v3129
    %v4234 = vunpack.c.h.b16 %v3129
    %v4235 = vunpack.c.l.b16 %v3130
    %v4236 = vunpack.c.h.b16 %v3130
    %v4237 = vunpack.c.l.b16 %v3131
    %v4238 = vunpack.c.l.b16 %v3132
    %v4239 = vunpack.c.h.b16 %v3132
    %v4240 = vunpack.c.l.b16 %v3133
    %v4241 = vunpack.c.h.b16 %v3133
    %v4242 = vunpack.c.l.b16 %v3134
    %v4243 = vunpack.c.h.b16 %v3134
    %v4244 = vunpack.c.l.b16 %v3135
    %v4245 = vunpack.c.l.b16 %v3136
    %v4246 = vunpack.c.h.b16 %v3136
    %v4247 = vunpack.c.l.b16 %v3137
    %v4248 = vunpack.c.h.b16 %v3137
    %v4249 = vunpack.c.l.b16 %v3138
    %v4250 = vunpack.c.h.b16 %v3138
    %v4251 = vunpack.c.l.b16 %v3139
    %v4252 = vunpack.c.l.b16 %v3140
    %v4253 = vunpack.c.h.b16 %v3140
    %v4254 = vunpack.c.l.b16 %v3141
    %v4255 = vunpack.c.h.b16 %v3141
    %v4256 = vunpack.c.l.b16 %v3142
    %v4257 = vunpack.c.h.b16 %v3142
    %v4258 = vunpack.c.l.b16 %v3143
    %v4259 = vunpack.c.l.b16 %v3144
    %v4260 = vunpack.c.h.b16 %v3144
    %v4261 = vunpack.c.l.b16 %v3145
    %v4262 = vunpack.c.h.b16 %v3145
    %v4263 = vunpack.c.l.b16 %v3146
    %v4264 = vunpack.c.h.b16 %v3146
    %v4265 = vunpack.c.l.b16 %v3147
    %v4266 = vunpack.c.l.b16 %v3148
    %v4267 = vunpack.c.h.b16 %v3148
    %v4268 = vunpack.c.l.b16 %v3149
    %v4269 = vunpack.c.h.b16 %v3149
    %v4270 = vunpack.c.l.b16 %v3150
    %v4271 = vunpack.c.h.b16 %v3150
    %v4272 = vunpack.c.l.b16 %v3151
    %v4273 = vunpack.c.l.b16 %v3152
    %v4274 = vunpack.c.h.b16 %v3152
    %v4275 = vunpack.c.l.b16 %v3153
    %v4276 = vunpack.c.h.b16 %v3153
    %v4277 = vunpack.c.l.b16 %v3154
    %v4278 = vunpack.c.h.b16 %v3154
    %v4279 = vunpack.c.l.b16 %v3155
    %v4280 = vunpack.c.l.b16 %v3156
    %v4281 = vunpack.c.h.b16 %v3156
    %v4282 = vunpack.c.l.b16 %v3157
    %v4283 = vunpack.c.h.b16 %v3157
    %v4284 = vunpack.c.l.b16 %v3158
    %v4285 = vunpack.c.h.b16 %v3158
    %v4286 = vunpack.c.l.b16 %v3159
    %v4287 = vunpack.c.l.b16 %v3160
    %v4288 = vunpack.c.h.b16 %v3160
    %v4289 = vunpack.c.l.b16 %v3161
    %v4290 = vunpack.c.h.b16 %v3161
    %v4291 = vunpack.c.l.b16 %v3162
    %v4292 = vunpack.c.h.b16 %v3162
    %v4293 = vunpack.c.l.b16 %v3163
    %v4294 = vunpack.c.l.b16 %v3164
    %v4295 = vunpack.c.h.b16 %v3164
    %v4296 = vunpack.c.l.b16 %v3165
    %v4297 = vunpack.c.h.b16 %v3165
    %v4298 = vunpack.c.l.b16 %v3166
    %v4299 = vunpack.c.h.b16 %v3166
    %v4300 = vunpack.c.l.b16 %v3167
    %v4301 = vunpack.c.l.b16 %v3168
    %v4302 = vunpack.c.h.b16 %v3168
    %v4303 = vunpack.c.l.b16 %v3169
    %v4304 = vunpack.c.h.b16 %v3169
    %v4305 = vunpack.c.l.b16 %v3170
    %v4306 = vunpack.c.h.b16 %v3170
    %v4307 = vunpack.c.l.b16 %v3171
    %v4308 = vunpack.c.l.b16 %v3172
    %v4309 = vunpack.c.h.b16 %v3172
    %v4310 = vunpack.c.l.b16 %v3173
    %v4311 = vunpack.c.h.b16 %v3173
    %v4312 = vunpack.c.l.b16 %v3174
    %v4313 = vunpack.c.h.b16 %v3174
    %v4314 = vunpack.c.l.b16 %v3175
    %v4315 = vunpack.c.l.b16 %v3176
    %v4316 = vunpack.c.h.b16 %v3176
    %v4317 = vunpack.c.l.b16 %v3177
    %v4318 = vunpack.c.h.b16 %v3177
    %v4319 = vunpack.c.l.b16 %v3178
    %v4320 = vunpack.c.h.b16 %v3178
    %v4321 = vunpack.c.l.b16 %v3179
    %v4322 = vunpack.c.l.b16 %v3180
    %v4323 = vunpack.c.h.b16 %v3180
    %v4324 = vunpack.c.l.b16 %v3181
    %v4325 = vunpack.c.h.b16 %v3181
    %v4326 = vunpack.c.l.b16 %v3182
    %v4327 = vunpack.c.h.b16 %v3182
    %v4328 = vunpack.c.l.b16 %v3183
    %v4329 = vunpack.c.l.b16 %v3184
    %v4330 = vunpack.c.h.b16 %v3184
    %v4331 = vunpack.c.l.b16 %v3185
    %v4332 = vunpack.c.h.b16 %v3185
    %v4333 = vunpack.c.l.b16 %v3186
    %v4334 = vunpack.c.h.b16 %v3186
    %v4335 = vunpack.c.l.b16 %v3187
    %v4336 = vunpack.c.l.b16 %v3188
    %v4337 = vunpack.c.h.b16 %v3188
    %v4338 = vunpack.c.l.b16 %v3189
    %v4339 = vunpack.c.h.b16 %v3189
    %v4340 = vunpack.c.l.b16 %v3190
    %v4341 = vunpack.c.h.b16 %v3190
    %v4342 = vunpack.c.l.b16 %v3191
    %v4343 = vunpack.c.l.b16 %v3192
    %v4344 = vunpack.c.h.b16 %v3192
    %v4345 = vunpack.c.l.b16 %v3193
    %v4346 = vunpack.c.h.b16 %v3193
    %v4347 = vunpack.c.l.b16 %v3194
    %v4348 = vunpack.c.h.b16 %v3194
    %v4349 = vunpack.c.l.b16 %v3195
    %v4350 = vunpack.c.l.b16 %v3196
    %v4351 = vunpack.c.h.b16 %v3196
    %v4352 = vunpack.c.l.b16 %v3197
    %v4353 = vunpack.c.h.b16 %v3197
    %v4354 = vunpack.c.l.b16 %v3198
    %v4355 = vunpack.c.h.b16 %v3198
    %v4356 = vunpack.c.l.b16 %v3199
    %v4357 = vunpack.c.l.b16 %v3200
    %v4358 = vunpack.c.h.b16 %v3200
    %v4359 = vunpack.c.l.b16 %v3201
    %v4360 = vunpack.c.h.b16 %v3201
    %v4361 = vunpack.c.l.b16 %v3202
    %v4362 = vunpack.c.h.b16 %v3202
    %v4363 = vunpack.c.l.b16 %v3203
    %v4364 = vunpack.c.l.b16 %v3204
    %v4365 = vunpack.c.h.b16 %v3204
    %v4366 = vunpack.c.l.b16 %v3205
    %v4367 = vunpack.c.h.b16 %v3205
    %v4368 = vunpack.c.l.b16 %v3206
    %v4369 = vunpack.c.h.b16 %v3206
    %v4370 = vunpack.c.l.b16 %v3207
    %v4371 = vunpack.c.l.b16 %v3208
    %v4372 = vunpack.c.h.b16 %v3208
    %v4373 = vunpack.c.l.b16 %v3209
    %v4374 = vunpack.c.h.b16 %v3209
    %v4375 = vunpack.c.l.b16 %v3210
    %v4376 = vunpack.c.h.b16 %v3210
    %v4377 = vunpack.c.l.b16 %v3211
    %v4378 = vunpack.c.l.b16 %v3212
    %v4379 = vunpack.c.h.b16 %v3212
    %v4380 = vunpack.c.l.b16 %v3213
    %v4381 = vunpack.c.h.b16 %v3213
    %v4382 = vunpack.c.l.b16 %v3214
    %v4383 = vunpack.c.h.b16 %v3214
    %v4384 = vunpack.c.l.b16 %v3215
    %v4385 = vunpack.c.l.b16 %v3216
    %v4386 = vunpack.c.h.b16 %v3216
    %v4387 = vunpack.c.l.b16 %v3217
    %v4388 = vunpack.c.h.b16 %v3217
    %v4389 = vunpack.c.l.b16 %v3218
    %v4390 = vunpack.c.h.b16 %v3218
    %v4391 = vunpack.c.l.b16 %v3219
    %v4392 = vunpack.c.l.b16 %v3220
    %v4393 = vunpack.c.h.b16 %v3220
    %v4394 = vunpack.c.l.b16 %v3221
    %v4395 = vunpack.c.h.b16 %v3221
    %v4396 = vunpack.c.l.b16 %v3222
    %v4397 = vunpack.c.h.b16 %v3222
    %v4398 = vunpack.c.l.b16 %v3223
    %v4399 = vunpack.c.l.b16 %v3224
    %v4400 = vunpack.c.h.b16 %v3224
    %v4401 = vunpack.c.l.b16 %v3225
    %v4402 = vunpack.c.h.b16 %v3225
    %v4403 = vunpack.c.l.b16 %v3226
    %v4404 = vunpack.c.h.b16 %v3226
    %v4405 = vunpack.c.l.b16 %v3227
    %v4406 = vunpack.c.l.b16 %v3228
    %v4407 = vunpack.c.h.b16 %v3228
    %v4408 = vunpack.c.l.b16 %v3229
    %v4409 = vunpack.c.h.b16 %v3229
    %v4410 = vunpack.c.l.b16 %v3230
    %v4411 = vunpack.c.h.b16 %v3230
    %v4412 = vunpack.c.l.b16 %v3231
    %v4413 = vunpack.c.l.b16 %v3232
    %v4414 = vunpack.c.h.b16 %v3232
    %v4415 = vunpack.c.l.b16 %v3233
    %v4416 = vunpack.c.h.b16 %v3233
    %v4417 = vunpack.c.l.b16 %v3234
    %v4418 = vunpack.c.h.b16 %v3234
    %v4419 = vunpack.c.l.b16 %v3235
    %v4420 = vunpack.c.l.b16 %v3236
    %v4421 = vunpack.c.h.b16 %v3236
    %v4422 = vunpack.c.l.b16 %v3237
    %v4423 = vunpack.c.h.b16 %v3237
    %v4424 = vunpack.c.l.b16 %v3238
    %v4425 = vunpack.c.h.b16 %v3238
    %v4426 = vunpack.c.l.b16 %v3239
    %v4427 = vunpack.c.l.b16 %v3240
    %v4428 = vunpack.c.h.b16 %v3240
    %v4429 = vunpack.c.l.b16 %v3241
    %v4430 = vunpack.c.h.b16 %v3241
    %v4431 = vunpack.c.l.b16 %v3242
    %v4432 = vunpack.c.h.b16 %v3242
    %v4433 = vunpack.c.l.b16 %v3243
    %v4434 = vunpack.c.l.b16 %v3244
    %v4435 = vunpack.c.h.b16 %v3244
    %v4436 = vunpack.c.l.b16 %v3245
    %v4437 = vunpack.c.h.b16 %v3245
    %v4438 = vunpack.c.l.b16 %v3246
    %v4439 = vunpack.c.h.b16 %v3246
    %v4440 = vunpack.c.l.b16 %v3247
    %v4441 = vunpack.c.l.b16 %v3248
    %v4442 = vunpack.c.h.b16 %v3248
    %v4443 = vunpack.c.l.b16 %v3249
    %v4444 = vunpack.c.h.b16 %v3249
    %v4445 = vunpack.c.l.b16 %v3250
    %v4446 = vunpack.c.h.b16 %v3250
    %v4447 = vunpack.c.l.b16 %v3251
    %v4448 = vunpack.c.l.b16 %v3252
    %v4449 = vunpack.c.h.b16 %v3252
    %v4450 = vunpack.c.l.b16 %v3253
    %v4451 = vunpack.c.h.b16 %v3253
    %v4452 = vunpack.c.l.b16 %v3254
    %v4453 = vunpack.c.h.b16 %v3254
    %v4454 = vunpack.c.l.b16 %v3255
    %v4455 = vunpack.c.l.b16 %v3256
    %v4456 = vunpack.c.h.b16 %v3256
    %v4457 = vunpack.c.l.b16 %v3257
    %v4458 = vunpack.c.h.b16 %v3257
    %v4459 = vunpack.c.l.b16 %v3258
    %v4460 = vunpack.c.h.b16 %v3258
    %v4461 = vunpack.c.l.b16 %v3259
    %v4462 = vunpack.c.l.b16 %v3260
    %v4463 = vunpack.c.h.b16 %v3260
    %v4464 = vunpack.c.l.b16 %v3261
    %v4465 = vunpack.c.h.b16 %v3261
    %v4466 = vunpack.c.l.b16 %v3262
    %v4467 = vunpack.c.h.b16 %v3262
    %v4468 = vunpack.c.l.b16 %v3263
    %v4469 = vunpack.c.l.b16 %v3264
    %v4470 = vunpack.c.h.b16 %v3264
    %v4471 = vunpack.c.l.b16 %v3265
    %v4472 = vunpack.c.h.b16 %v3265
    %v4473 = vunpack.c.l.b16 %v3266
    %v4474 = vunpack.c.h.b16 %v3266
    %v4475 = vunpack.c.l.b16 %v3267
    %v4476 = vunpack.c.l.b16 %v3268
    %v4477 = vunpack.c.h.b16 %v3268
    %v4478 = vunpack.c.l.b16 %v3269
    %v4479 = vunpack.c.h.b16 %v3269
    %v4480 = vunpack.c.l.b16 %v3270
    %v4481 = vunpack.c.h.b16 %v3270
    %v4482 = vunpack.c.l.b16 %v3271
    %v4483 = vunpack.c.l.b16 %v3272
    %v4484 = vunpack.c.h.b16 %v3272
    %v4485 = vunpack.c.l.b16 %v3273
    %v4486 = vunpack.c.h.b16 %v3273
    %v4487 = vunpack.c.l.b16 %v3274
    %v4488 = vunpack.c.h.b16 %v3274
    %v4489 = vunpack.c.l.b16 %v3275
    %v4490 = vunpack.c.l.b16 %v3276
    %v4491 = vunpack.c.h.b16 %v3276
    %v4492 = vunpack.c.l.b16 %v3277
    %v4493 = vunpack.c.h.b16 %v3277
    %v4494 = vunpack.c.l.b16 %v3278
    %v4495 = vunpack.c.h.b16 %v3278
    %v4496 = vunpack.c.l.b16 %v3279
    %v4497 = vunpack.c.l.b16 %v3280
    %v4498 = vunpack.c.h.b16 %v3280
    %v4499 = vunpack.c.l.b16 %v3281
    %v4500 = vunpack.c.h.b16 %v3281
    %v4501 = vunpack.c.l.b16 %v3282
    %v4502 = vunpack.c.h.b16 %v3282
    %v4503 = vunpack.c.l.b16 %v3283
    %v4504 = vunpack.c.l.b16 %v3284
    %v4505 = vunpack.c.h.b16 %v3284
    %v4506 = vunpack.c.l.b16 %v3285
    %v4507 = vunpack.c.h.b16 %v3285
    %v4508 = vunpack.c.l.b16 %v3286
    %v4509 = vunpack.c.h.b16 %v3286
    %v4510 = vunpack.c.l.b16 %v3287
    %v4511 = vunpack.c.l.b16 %v3288
    %v4512 = vunpack.c.h.b16 %v3288
    %v4513 = vunpack.c.l.b16 %v3289
    %v4514 = vunpack.c.h.b16 %v3289
    %v4515 = vunpack.c.l.b16 %v3290
    %v4516 = vunpack.c.h.b16 %v3290
    %v4517 = vunpack.c.l.b16 %v3291
    %v4518 = vunpack.c.l.b16 %v3292
    %v4519 = vunpack.c.h.b16 %v3292
    %v4520 = vunpack.c.l.b16 %v3293
    %v4521 = vunpack.c.h.b16 %v3293
    %v4522 = vunpack.c.l.b16 %v3294
    %v4523 = vunpack.c.h.b16 %v3294
    %v4524 = vunpack.c.l.b16 %v3295
    %v4525 = vunpack.c.l.b16 %v3296
    %v4526 = vunpack.c.h.b16 %v3296
    %v4527 = vunpack.c.l.b16 %v3297
    %v4528 = vunpack.c.h.b16 %v3297
    %v4529 = vunpack.c.l.b16 %v3298
    %v4530 = vunpack.c.h.b16 %v3298
    %v4531 = vunpack.c.l.b16 %v3299
    %v4532 = vunpack.c.l.b16 %v3300
    %v4533 = vunpack.c.h.b16 %v3300
    %v4534 = vunpack.c.l.b16 %v3301
    %v4535 = vunpack.c.h.b16 %v3301
    %v4536 = vunpack.c.l.b16 %v3302
    %v4537 = vunpack.c.h.b16 %v3302
    %v4538 = vunpack.c.l.b16 %v3303
    %v4539 = vunpack.c.l.b16 %v3304
    %v4540 = vunpack.c.h.b16 %v3304
    %v4541 = vunpack.c.l.b16 %v3305
    %v4542 = vunpack.c.h.b16 %v3305
    %v4543 = vunpack.c.l.b16 %v3306
    %v4544 = vunpack.c.h.b16 %v3306
    %v4545 = vunpack.c.l.b16 %v3307
    %v4546 = vunpack.c.l.b16 %v3308
    %v4547 = vunpack.c.h.b16 %v3308
    %v4548 = vunpack.c.l.b16 %v3309
    %v4549 = vunpack.c.h.b16 %v3309
    %v4550 = vunpack.c.l.b16 %v3310
    %v4551 = vunpack.c.h.b16 %v3310
    %v4552 = vunpack.c.l.b16 %v3311
    %v4553 = vunpack.c.l.b16 %v3312
    %v4554 = vunpack.c.h.b16 %v3312
    %v4555 = vunpack.c.l.b16 %v3313
    %v4556 = vunpack.c.h.b16 %v3313
    %v4557 = vunpack.c.l.b16 %v3314
    %v4558 = vunpack.c.h.b16 %v3314
    %v4559 = vunpack.c.l.b16 %v3315
    %v4560 = vunpack.c.l.b16 %v3316
    %v4561 = vunpack.c.h.b16 %v3316
    %v4562 = vunpack.c.l.b16 %v3317
    %v4563 = vunpack.c.h.b16 %v3317
    %v4564 = vunpack.c.l.b16 %v3318
    %v4565 = vunpack.c.h.b16 %v3318
    %v4566 = vunpack.c.l.b16 %v3319
    %v4567 = vunpack.c.l.b16 %v3320
    %v4568 = vunpack.c.h.b16 %v3320
    %v4569 = vunpack.c.l.b16 %v3321
    %v4570 = vunpack.c.h.b16 %v3321
    %v4571 = vunpack.c.l.b16 %v3322
    %v4572 = vunpack.c.h.b16 %v3322
    %v4573 = vunpack.c.l.b16 %v3323
    %v4574 = vunpack.c.l.b16 %v3324
    %v4575 = vunpack.c.h.b16 %v3324
    %v4576 = vunpack.c.l.b16 %v3325
    %v4577 = vunpack.c.h.b16 %v3325
    %v4578 = vunpack.c.l.b16 %v3326
    %v4579 = vunpack.c.h.b16 %v3326
    %v4580 = vunpack.c.l.b16 %v3327
    %v4581 = vunpack.c.l.b16 %v3328
    %v4582 = vunpack.c.h.b16 %v3328
    %v4583 = vunpack.c.l.b16 %v3329
    %v4584 = vunpack.c.h.b16 %v3329
    %v4585 = vunpack.c.l.b16 %v3330
    %v4586 = vunpack.c.h.b16 %v3330
    %v4587 = vunpack.c.l.b16 %v3331
    %v4588 = vunpack.c.l.b16 %v3332
    %v4589 = vunpack.c.h.b16 %v3332
    %v4590 = vunpack.c.l.b16 %v3333
    %v4591 = vunpack.c.h.b16 %v3333
    %v4592 = vunpack.c.l.b16 %v3334
    %v4593 = vunpack.c.h.b16 %v3334
    %v4594 = vunpack.c.l.b16 %v3335
    %v4595 = vunpack.c.l.b16 %v3336
    %v4596 = vunpack.c.h.b16 %v3336
    %v4597 = vunpack.c.l.b16 %v3337
    %v4598 = vunpack.c.h.b16 %v3337
    %v4599 = vunpack.c.l.b16 %v3338
    %v4600 = vunpack.c.h.b16 %v3338
    %v4601 = vunpack.c.l.b16 %v3339
    %v4602 = vunpack.c.l.b16 %v3340
    %v4603 = vunpack.c.h.b16 %v3340
    %v4604 = vunpack.c.l.b16 %v3341
    %v4605 = vunpack.c.h.b16 %v3341
    %v4606 = vunpack.c.l.b16 %v3342
    %v4607 = vunpack.c.h.b16 %v3342
    %v4608 = vunpack.c.l.b16 %v3343
    %v4609 = vunpack.c.l.b16 %v3344
    %v4610 = vunpack.c.h.b16 %v3344
    %v4611 = vunpack.c.l.b16 %v3345
    %v4612 = vunpack.c.h.b16 %v3345
    %v4613 = vunpack.c.l.b16 %v3346
    %v4614 = vunpack.c.h.b16 %v3346
    %v4615 = vunpack.c.l.b16 %v3347
    %v4616 = vunpack.c.l.b16 %v3348
    %v4617 = vunpack.c.h.b16 %v3348
    %v4618 = vunpack.c.l.b16 %v3349
    %v4619 = vunpack.c.h.b16 %v3349
    %v4620 = vunpack.c.l.b16 %v3350
    %v4621 = vunpack.c.h.b16 %v3350
    %v4622 = vunpack.c.l.b16 %v3351
    %v4623 = vunpack.c.l.b16 %v3352
    %v4624 = vunpack.c.h.b16 %v3352
    %v4625 = vunpack.c.l.b16 %v3353
    %v4626 = vunpack.c.h.b16 %v3353
    %v4627 = vunpack.c.l.b16 %v3354
    %v4628 = vunpack.c.h.b16 %v3354
    %v4629 = vunpack.c.l.b16 %v3355
    %v4630 = vunpack.c.l.b16 %v3356
    %v4631 = vunpack.c.h.b16 %v3356
    %v4632 = vunpack.c.l.b16 %v3357
    %v4633 = vunpack.c.h.b16 %v3357
    %v4634 = vunpack.c.l.b16 %v3358
    %v4635 = vunpack.c.h.b16 %v3358
    %v4636 = vunpack.c.l.b16 %v3359
    %v4637 = vunpack.c.l.b16 %v3360
    %v4638 = vunpack.c.h.b16 %v3360
    %v4639 = vunpack.c.l.b16 %v3361
    %v4640 = vunpack.c.h.b16 %v3361
    %v4641 = vunpack.c.l.b16 %v3362
    %v4642 = vunpack.c.h.b16 %v3362
    %v4643 = vunpack.c.l.b16 %v3363
    %v4644 = vunpack.c.l.b16 %v3364
    %v4645 = vunpack.c.h.b16 %v3364
    %v4646 = vunpack.c.l.b16 %v3365
    %v4647 = vunpack.c.h.b16 %v3365
    %v4648 = vunpack.c.l.b16 %v3366
    %v4649 = vunpack.c.h.b16 %v3366
    %v4650 = vunpack.c.l.b16 %v3367
    %v4651 = vunpack.c.l.b16 %v3368
    %v4652 = vunpack.c.h.b16 %v3368
    %v4653 = vunpack.c.l.b16 %v3369
    %v4654 = vunpack.c.h.b16 %v3369
    %v4655 = vunpack.c.l.b16 %v3370
    %v4656 = vunpack.c.h.b16 %v3370
    %v4657 = vunpack.c.l.b16 %v3371
    %v4658 = vunpack.c.l.b16 %v3372
    %v4659 = vunpack.c.h.b16 %v3372
    %v4660 = vunpack.c.l.b16 %v3373
    %v4661 = vunpack.c.h.b16 %v3373
    %v4662 = vunpack.c.l.b16 %v3374
    %v4663 = vunpack.c.h.b16 %v3374
    %v4664 = vunpack.c.l.b16 %v3375
    %v4665 = vunpack.c.l.b16 %v3376
    %v4666 = vunpack.c.h.b16 %v3376
    %v4667 = vunpack.c.l.b16 %v3377
    %v4668 = vunpack.c.h.b16 %v3377
    %v4669 = vunpack.c.l.b16 %v3378
    %v4670 = vunpack.c.h.b16 %v3378
    %v4671 = vunpack.c.l.b16 %v3379
    %v4672 = vunpack.c.l.b16 %v3380
    %v4673 = vunpack.c.h.b16 %v3380
    %v4674 = vunpack.c.l.b16 %v3381
    %v4675 = vunpack.c.h.b16 %v3381
    %v4676 = vunpack.c.l.b16 %v3382
    %v4677 = vunpack.c.h.b16 %v3382
    %v4678 = vunpack.c.l.b16 %v3383
    %v4679 = vunpack.c.l.b16 %v3384
    %v4680 = vunpack.c.h.b16 %v3384
    %v4681 = vunpack.c.l.b16 %v3385
    %v4682 = vunpack.c.h.b16 %v3385
    %v4683 = vunpack.c.l.b16 %v3386
    %v4684 = vunpack.c.h.b16 %v3386
    %v4685 = vunpack.c.l.b16 %v3387
    %v4686 = vunpack.c.l.b16 %v3388
    %v4687 = vunpack.c.h.b16 %v3388
    %v4688 = vunpack.c.l.b16 %v3389
    %v4689 = vunpack.c.h.b16 %v3389
    %v4690 = vunpack.c.l.b16 %v3390
    %v4691 = vunpack.c.h.b16 %v3390
    %v4692 = vunpack.c.l.b16 %v3391
    %v4693 = vunpack.c.l.b16 %v3392
    %v4694 = vunpack.c.h.b16 %v3392
    %v4695 = vunpack.c.l.b16 %v3393
    %v4696 = vunpack.c.h.b16 %v3393
    %v4697 = vunpack.c.l.b16 %v3394
    %v4698 = vunpack.c.h.b16 %v3394
    %v4699 = vunpack.c.l.b16 %v3395
    %v4700 = vunpack.c.l.b16 %v3396
    %v4701 = vunpack.c.h.b16 %v3396
    %v4702 = vunpack.c.l.b16 %v3397
    %v4703 = vunpack.c.h.b16 %v3397
    %v4704 = vunpack.c.l.b16 %v3398
    %v4705 = vunpack.c.h.b16 %v3398
    %v4706 = vunpack.c.l.b16 %v3399
    %v4707 = vunpack.c.l.b16 %v3400
    %v4708 = vunpack.c.h.b16 %v3400
    %v4709 = vunpack.c.l.b16 %v3401
    %v4710 = vunpack.c.h.b16 %v3401
    %v4711 = vunpack.c.l.b16 %v3402
    %v4712 = vunpack.c.h.b16 %v3402
    %v4713 = vunpack.c.l.b16 %v3403
    %v4714 = vunpack.c.l.b16 %v3404
    %v4715 = vunpack.c.h.b16 %v3404
    %v4716 = vunpack.c.l.b16 %v3405
    %v4717 = vunpack.c.h.b16 %v3405
    %v4718 = vunpack.c.l.b16 %v3406
    %v4719 = vunpack.c.h.b16 %v3406
    %v4720 = vunpack.c.l.b16 %v3407
    %v4721 = vunpack.c.l.b16 %v3408
    %v4722 = vunpack.c.h.b16 %v3408
    %v4723 = vunpack.c.l.b16 %v3409
    %v4724 = vunpack.c.h.b16 %v3409
    %v4725 = vunpack.c.l.b16 %v3410
    %v4726 = vunpack.c.h.b16 %v3410
    %v4727 = vunpack.c.l.b16 %v3411
    %v4728 = vunpack.c.l.b16 %v3412
    %v4729 = vunpack.c.h.b16 %v3412
    %v4730 = vunpack.c.l.b16 %v3413
    %v4731 = vunpack.c.h.b16 %v3413
    %v4732 = vunpack.c.l.b16 %v3414
    %v4733 = vunpack.c.h.b16 %v3414
    %v4734 = vunpack.c.l.b16 %v3415
    %v4735 = vunpack.c.l.b16 %v3416
    %v4736 = vunpack.c.h.b16 %v3416
    %v4737 = vunpack.c.l.b16 %v3417
    %v4738 = vunpack.c.h.b16 %v3417
    %v4739 = vunpack.c.l.b16 %v3418
    %v4740 = vunpack.c.h.b16 %v3418
    %v4741 = vunpack.c.l.b16 %v3419
    %v4742 = vunpack.c.l.b16 %v3420
    %v4743 = vunpack.c.h.b16 %v3420
    %v4744 = vunpack.c.l.b16 %v3421
    %v4745 = vunpack.c.h.b16 %v3421
    %v4746 = vunpack.c.l.b16 %v3422
    %v4747 = vunpack.c.h.b16 %v3422
    %v4748 = vunpack.c.l.b16 %v3423
    %v4749 = vunpack.c.l.b16 %v3424
    %v4750 = vunpack.c.h.b16 %v3424
    %v4751 = vunpack.c.l.b16 %v3425
    %v4752 = vunpack.c.h.b16 %v3425
    %v4753 = vunpack.c.l.b16 %v3426
    %v4754 = vunpack.c.h.b16 %v3426
    %v4755 = vunpack.c.l.b16 %v3427
    %v4756 = vunpack.c.l.b16 %v3428
    %v4757 = vunpack.c.h.b16 %v3428
    %v4758 = vunpack.c.l.b16 %v3429
    %v4759 = vunpack.c.h.b16 %v3429
    %v4760 = vunpack.c.l.b16 %v3430
    %v4761 = vunpack.c.h.b16 %v3430
    %v4762 = vunpack.c.l.b16 %v3431
    %v4763 = vunpack.c.l.b16 %v3432
    %v4764 = vunpack.c.h.b16 %v3432
    %v4765 = vunpack.c.l.b16 %v3433
    %v4766 = vunpack.c.h.b16 %v3433
    %v4767 = vunpack.c.l.b16 %v3434
    %v4768 = vunpack.c.h.b16 %v3434
    %v4769 = vunpack.c.l.b16 %v3435
    %v4770 = vunpack.c.l.b16 %v3436
    %v4771 = vunpack.c.h.b16 %v3436
    %v4772 = vunpack.c.l.b16 %v3437
    %v4773 = vunpack.c.h.b16 %v3437
    %v4774 = vunpack.c.l.b16 %v3438
    %v4775 = vunpack.c.h.b16 %v3438
    %v4776 = vunpack.c.l.b16 %v3439
    %v4777 = vunpack.c.l.b16 %v3440
    %v4778 = vunpack.c.h.b16 %v3440
    %v4779 = vunpack.c.l.b16 %v3441
    %v4780 = vunpack.c.h.b16 %v3441
    %v4781 = vunpack.c.l.b16 %v3442
    %v4782 = vunpack.c.h.b16 %v3442
    %v4783 = vunpack.c.l.b16 %v3443
    %v4784 = vunpack.c.l.b16 %v3444
    %v4785 = vunpack.c.h.b16 %v3444
    %v4786 = vunpack.c.l.b16 %v3445
    %v4787 = vunpack.c.h.b16 %v3445
    %v4788 = vunpack.c.l.b16 %v3446
    %v4789 = vunpack.c.h.b16 %v3446
    %v4790 = vunpack.c.l.b16 %v3447
    %v4791 = vunpack.c.l.b16 %v3448
    %v4792 = vunpack.c.h.b16 %v3448
    %v4793 = vunpack.c.l.b16 %v3449
    %v4794 = vunpack.c.h.b16 %v3449
    %v4795 = vunpack.c.l.b16 %v3450
    %v4796 = vunpack.c.h.b16 %v3450
    %v4797 = vunpack.c.l.b16 %v3451
    %v4798 = vunpack.c.l.b16 %v3452
    %v4799 = vunpack.c.h.b16 %v3452
    %v4800 = vunpack.c.l.b16 %v3453
    %v4801 = vunpack.c.h.b16 %v3453
    %v4802 = vunpack.c.l.b16 %v3454
    %v4803 = vunpack.c.h.b16 %v3454
    %v4804 = vunpack.c.l.b16 %v3455
    %v4805 = vunpack.c.l.b16 %v3456
    %v4806 = vunpack.c.h.b16 %v3456
    %v4807 = vunpack.c.l.b16 %v3457
    %v4808 = vunpack.c.h.b16 %v3457
    %v4809 = vunpack.c.l.b16 %v3458
    %v4810 = vunpack.c.h.b16 %v3458
    %v4811 = vunpack.c.l.b16 %v3459
    %v4812 = vunpack.c.l.b16 %v3460
    %v4813 = vunpack.c.h.b16 %v3460
    %v4814 = vunpack.c.l.b16 %v3461
    %v4815 = vunpack.c.h.b16 %v3461
    %v4816 = vunpack.c.l.b16 %v3462
    %v4817 = vunpack.c.h.b16 %v3462
    %v4818 = vunpack.c.l.b16 %v3463
    %v4819 = vunpack.c.l.b16 %v3464
    %v4820 = vunpack.c.h.b16 %v3464
    %v4821 = vunpack.c.l.b16 %v3465
    %v4822 = vunpack.c.h.b16 %v3465
    %v4823 = vunpack.c.l.b16 %v3466
    %v4824 = vunpack.c.h.b16 %v3466
    %v4825 = vunpack.c.l.b16 %v3467
    %v4826 = vunpack.c.l.b16 %v3468
    %v4827 = vunpack.c.h.b16 %v3468
    %v4828 = vunpack.c.l.b16 %v3469
    %v4829 = vunpack.c.h.b16 %v3469
    %v4830 = vunpack.c.l.b16 %v3470
    %v4831 = vunpack.c.h.b16 %v3470
    %v4832 = vunpack.c.l.b16 %v3471
    %v4833 = vunpack.c.l.b16 %v3472
    %v4834 = vunpack.c.h.b16 %v3472
    %v4835 = vunpack.c.l.b16 %v3473
    %v4836 = vunpack.c.h.b16 %v3473
    %v4837 = vunpack.c.l.b16 %v3474
    %v4838 = vunpack.c.h.b16 %v3474
    %v4839 = vunpack.c.l.b16 %v3475
    %v4840 = vunpack.c.l.b16 %v3476
    %v4841 = vunpack.c.h.b16 %v3476
    %v4842 = vunpack.c.l.b16 %v3477
    %v4843 = vunpack.c.h.b16 %v3477
    %v4844 = vunpack.c.l.b16 %v3478
    %v4845 = vunpack.c.h.b16 %v3478
    %v4846 = vunpack.c.l.b16 %v3479
    %v4847 = vunpack.c.l.b16 %v3480
    %v4848 = vunpack.c.h.b16 %v3480
    %v4849 = vunpack.c.l.b16 %v3481
    %v4850 = vunpack.c.h.b16 %v3481
    %v4851 = vunpack.c.l.b16 %v3482
    %v4852 = vunpack.c.h.b16 %v3482
    %v4853 = vunpack.c.l.b16 %v3483
    %v4854 = vunpack.c.l.b16 %v3484
    %v4855 = vunpack.c.h.b16 %v3484
    %v4856 = vunpack.c.l.b16 %v3485
    %v4857 = vunpack.c.h.b16 %v3485
    %v4858 = vunpack.c.l.b16 %v3486
    %v4859 = vunpack.c.h.b16 %v3486
    %v4860 = vunpack.c.l.b16 %v3487
    %v4861 = vunpack.c.l.b16 %v3488
    %v4862 = vunpack.c.h.b16 %v3488
    %v4863 = vunpack.c.l.b16 %v3489
    %v4864 = vunpack.c.h.b16 %v3489
    %v4865 = vunpack.c.l.b16 %v3490
    %v4866 = vunpack.c.h.b16 %v3490
    %v4867 = vunpack.c.l.b16 %v3491
    %v4868 = vunpack.c.l.b16 %v3492
    %v4869 = vunpack.c.h.b16 %v3492
    %v4870 = vunpack.c.l.b16 %v3493
    %v4871 = vunpack.c.h.b16 %v3493
    %v4872 = vunpack.c.l.b16 %v3494
    %v4873 = vunpack.c.h.b16 %v3494
    %v4874 = vunpack.c.l.b16 %v3495
    %v4875 = vunpack.c.l.b16 %v3496
    %v4876 = vunpack.c.h.b16 %v3496
    %v4877 = vunpack.c.l.b16 %v3497
    %v4878 = vunpack.c.h.b16 %v3497
    %v4879 = vunpack.c.l.b16 %v3498
    %v4880 = vunpack.c.h.b16 %v3498
    %v4881 = vunpack.c.l.b16 %v3499
    %v4882 = vunpack.c.l.b16 %v3500
    %v4883 = vunpack.c.h.b16 %v3500
    %v4884 = vunpack.c.l.b16 %v3501
    %v4885 = vunpack.c.h.b16 %v3501
    %v4886 = vunpack.c.l.b16 %v3502
    %v4887 = vunpack.c.h.b16 %v3502
    %v4888 = vunpack.c.l.b16 %v3503
    %v4889 = vunpack.c.l.b16 %v3504
    %v4890 = vunpack.c.h.b16 %v3504
    %v4891 = vunpack.c.l.b16 %v3505
    %v4892 = vunpack.c.h.b16 %v3505
    %v4893 = vunpack.c.l.b16 %v3506
    %v4894 = vunpack.c.h.b16 %v3506
    %v4895 = vunpack.c.l.b16 %v3507
    %v4896 = vunpack.c.l.b16 %v3508
    %v4897 = vunpack.c.h.b16 %v3508
    %v4898 = vunpack.c.l.b16 %v3509
    %v4899 = vunpack.c.h.b16 %v3509
    %v4900 = vunpack.c.l.b16 %v3510
    %v4901 = vunpack.c.h.b16 %v3510
    %v4902 = vunpack.c.l.b16 %v3511
    %v4903 = vunpack.c.l.b16 %v3512
    %v4904 = vunpack.c.h.b16 %v3512
    %v4905 = vunpack.c.l.b16 %v3513
    %v4906 = vunpack.c.h.b16 %v3513
    %v4907 = vunpack.c.l.b16 %v3514
    %v4908 = vunpack.c.h.b16 %v3514
    %v4909 = vunpack.c.l.b16 %v3515
    %v4910 = vunpack.c.l.b16 %v3516
    %v4911 = vunpack.c.h.b16 %v3516
    %v4912 = vunpack.c.l.b16 %v3517
    %v4913 = vunpack.c.h.b16 %v3517
    %v4914 = vunpack.c.l.b16 %v3518
    %v4915 = vunpack.c.h.b16 %v3518
    %v4916 = vunpack.c.l.b16 %v3519
    %v4917 = vunpack.c.l.b16 %v3520
    %v4918 = vunpack.c.h.b16 %v3520
    %v4919 = vunpack.c.l.b16 %v3521
    %v4920 = vunpack.c.h.b16 %v3521
    %v4921 = vunpack.c.l.b16 %v3522
    %v4922 = vunpack.c.h.b16 %v3522
    %v4923 = vunpack.c.l.b16 %v3523
    %v4924 = vunpack.c.l.b16 %v3524
    %v4925 = vunpack.c.h.b16 %v3524
    %v4926 = vunpack.c.l.b16 %v3525
    %v4927 = vunpack.c.h.b16 %v3525
    %v4928 = vunpack.c.l.b16 %v3526
    %v4929 = vunpack.c.h.b16 %v3526
    %v4930 = vunpack.c.l.b16 %v3527
    %v4931 = vunpack.c.l.b16 %v3528
    %v4932 = vunpack.c.h.b16 %v3528
    %v4933 = vunpack.c.l.b16 %v3529
    %v4934 = vunpack.c.h.b16 %v3529
    %v4935 = vunpack.c.l.b16 %v3530
    %v4936 = vunpack.c.h.b16 %v3530
    %v4937 = vunpack.c.l.b16 %v3531
    %v4938 = vunpack.c.l.b16 %v3532
    %v4939 = vunpack.c.h.b16 %v3532
    %v4940 = vunpack.c.l.b16 %v3533
    %v4941 = vunpack.c.h.b16 %v3533
    %v4942 = vunpack.c.l.b16 %v3534
    %v4943 = vunpack.c.h.b16 %v3534
    %v4944 = vunpack.c.l.b16 %v3535
    %v4945 = vunpack.c.l.b16 %v3536
    %v4946 = vunpack.c.h.b16 %v3536
    %v4947 = vunpack.c.l.b16 %v3537
    %v4948 = vunpack.c.h.b16 %v3537
    %v4949 = vunpack.c.l.b16 %v3538
    %v4950 = vunpack.c.h.b16 %v3538
    %v4951 = vunpack.c.l.b16 %v3539
    %v4952 = vunpack.c.l.b16 %v3540
    %v4953 = vunpack.c.h.b16 %v3540
    %v4954 = vunpack.c.l.b16 %v3541
    %v4955 = vunpack.c.h.b16 %v3541
    %v4956 = vunpack.c.l.b16 %v3542
    %v4957 = vunpack.c.h.b16 %v3542
    %v4958 = vunpack.c.l.b16 %v3543
    %v4959 = vunpack.c.l.b16 %v3544
    %v4960 = vunpack.c.h.b16 %v3544
    %v4961 = vunpack.c.l.b16 %v3545
    %v4962 = vunpack.c.h.b16 %v3545
    %v4963 = vunpack.c.l.b16 %v3546
    %v4964 = vunpack.c.h.b16 %v3546
    %v4965 = vunpack.c.l.b16 %v3547
    %v4966 = vunpack.c.l.b16 %v3548
    %v4967 = vunpack.c.h.b16 %v3548
    %v4968 = vunpack.c.l.b16 %v3549
    %v4969 = vunpack.c.h.b16 %v3549
    %v4970 = vunpack.c.l.b16 %v3550
    %v4971 = vunpack.c.h.b16 %v3550
    %v4972 = vunpack.c.l.b16 %v3551
    %v4973 = vunpack.c.l.b16 %v3552
    %v4974 = vunpack.c.h.b16 %v3552
    %v4975 = vunpack.c.l.b16 %v3553
    %v4976 = vunpack.c.h.b16 %v3553
    %v4977 = vunpack.c.l.b16 %v3554
    %v4978 = vunpack.c.h.b16 %v3554
    %v4979 = vunpack.c.l.b16 %v3555
    %v4980 = vunpack.c.l.b16 %v3556
    %v4981 = vunpack.c.h.b16 %v3556
    %v4982 = vunpack.c.l.b16 %v3557
    %v4983 = vunpack.c.h.b16 %v3557
    %v4984 = vunpack.c.l.b16 %v3558
    %v4985 = vunpack.c.h.b16 %v3558
    %v4986 = vunpack.c.l.b16 %v3559
    %v4987 = vunpack.c.l.b16 %v3560
    %v4988 = vunpack.c.h.b16 %v3560
    %v4989 = vunpack.c.l.b16 %v3561
    %v4990 = vunpack.c.h.b16 %v3561
    %v4991 = vunpack.c.l.b16 %v3562
    %v4992 = vunpack.c.h.b16 %v3562
    %v4993 = vunpack.c.l.b16 %v3563
    %v4994 = vunpack.c.l.b16 %v3564
    %v4995 = vunpack.c.h.b16 %v3564
    %v4996 = vunpack.c.l.b16 %v3565
    %v4997 = vunpack.c.h.b16 %v3565
    %v4998 = vunpack.c.l.b16 %v3566
    %v4999 = vunpack.c.h.b16 %v3566
    %v5000 = vunpack.c.l.b16 %v3567
    %v5001 = vunpack.c.l.b16 %v3568
    %v5002 = vunpack.c.h.b16 %v3568
    %v5003 = vunpack.c.l.b16 %v3569
    %v5004 = vunpack.c.h.b16 %v3569
    %v5005 = vunpack.c.l.b16 %v3570
    %v5006 = vunpack.c.h.b16 %v3570
    %v5007 = vunpack.c.l.b16 %v3571
    %v5008 = vunpack.c.l.b16 %v3572
    %v5009 = vunpack.c.h.b16 %v3572
    %v5010 = vunpack.c.l.b16 %v3573
    %v5011 = vunpack.c.h.b16 %v3573
    %v5012 = vunpack.c.l.b16 %v3574
    %v5013 = vunpack.c.h.b16 %v3574
    %v5014 = vunpack.c.l.b16 %v3575
    %v5015 = vunpack.c.l.b16 %v3576
    %v5016 = vunpack.c.h.b16 %v3576
    %v5017 = vunpack.c.l.b16 %v3577
    %v5018 = vunpack.c.h.b16 %v3577
    %v5019 = vunpack.c.l.b16 %v3578
    %v5020 = vunpack.c.h.b16 %v3578
    %v5021 = vunpack.c.l.b16 %v3579
    %v5022 = vunpack.c.l.b16 %v3580
    %v5023 = vunpack.c.h.b16 %v3580
    %v5024 = vunpack.c.l.b16 %v3581
    %v5025 = vunpack.c.h.b16 %v3581
    %v5026 = vunpack.c.l.b16 %v3582
    %v5027 = vunpack.c.h.b16 %v3582
    %v5028 = vunpack.c.l.b16 %v3583
    %v5029 = vpack.c.b16 %v4140, %v4133
    %v5030 = vpack.c.b16 %v4141, %v4134
    %v5031 = vpack.c.b16 %v4142, %v4135
    %v5032 = vpack.c.b16 %v4143, %v4136
    %v5033 = vpack.c.b16 %v4144, %v4137
    %v5034 = vpack.c.b16 %v4145, %v4138
    %v5035 = vpack.c.b16 %v4146, %v4139
    %v5036 = vpack.c.b16 %v4154, %v4147
    %v5037 = vpack.c.b16 %v4155, %v4148
    %v5038 = vpack.c.b16 %v4156, %v4149
    %v5039 = vpack.c.b16 %v4157, %v4150
    %v5040 = vpack.c.b16 %v4158, %v4151
    %v5041 = vpack.c.b16 %v4159, %v4152
    %v5042 = vpack.c.b16 %v4160, %v4153
    %v5043 = vpack.c.b16 %v4168, %v4161
    %v5044 = vpack.c.b16 %v4169, %v4162
    %v5045 = vpack.c.b16 %v4170, %v4163
    %v5046 = vpack.c.b16 %v4171, %v4164
    %v5047 = vpack.c.b16 %v4172, %v4165
    %v5048 = vpack.c.b16 %v4173, %v4166
    %v5049 = vpack.c.b16 %v4174, %v4167
    %v5050 = vpack.c.b16 %v4182, %v4175
    %v5051 = vpack.c.b16 %v4183, %v4176
    %v5052 = vpack.c.b16 %v4184, %v4177
    %v5053 = vpack.c.b16 %v4185, %v4178
    %v5054 = vpack.c.b16 %v4186, %v4179
    %v5055 = vpack.c.b16 %v4187, %v4180
    %v5056 = vpack.c.b16 %v4188, %v4181
    %v5057 = vpack.c.b16 %v4196, %v4189
    %v5058 = vpack.c.b16 %v4197, %v4190
    %v5059 = vpack.c.b16 %v4198, %v4191
    %v5060 = vpack.c.b16 %v4199, %v4192
    %v5061 = vpack.c.b16 %v4200, %v4193
    %v5062 = vpack.c.b16 %v4201, %v4194
    %v5063 = vpack.c.b16 %v4202, %v4195
    %v5064 = vpack.c.b16 %v4210, %v4203
    %v5065 = vpack.c.b16 %v4211, %v4204
    %v5066 = vpack.c.b16 %v4212, %v4205
    %v5067 = vpack.c.b16 %v4213, %v4206
    %v5068 = vpack.c.b16 %v4214, %v4207
    %v5069 = vpack.c.b16 %v4215, %v4208
    %v5070 = vpack.c.b16 %v4216, %v4209
    %v5071 = vpack.c.b16 %v4224, %v4217
    %v5072 = vpack.c.b16 %v4225, %v4218
    %v5073 = vpack.c.b16 %v4226, %v4219
    %v5074 = vpack.c.b16 %v4227, %v4220
    %v5075 = vpack.c.b16 %v4228, %v4221
    %v5076 = vpack.c.b16 %v4229, %v4222
    %v5077 = vpack.c.b16 %v4230, %v4223
    %v5078 = vpack.c.b16 %v4238, %v4231
    %v5079 = vpack.c.b16 %v4239, %v4232
    %v5080 = vpack.c.b16 %v4240, %v4233
    %v5081 = vpack.c.b16 %v4241, %v4234
    %v5082 = vpack.c.b16 %v4242, %v4235
    %v5083 = vpack.c.b16 %v4243, %v4236
    %v5084 = vpack.c.b16 %v4244, %v4237
    %v5085 = vpack.c.b16 %v4252, %v4245
    %v5086 = vpack.c.b16 %v4253, %v4246
    %v5087 = vpack.c.b16 %v4254, %v4247
    %v5088 = vpack.c.b16 %v4255, %v4248
    %v5089 = vpack.c.b16 %v4256, %v4249
    %v5090 = vpack.c.b16 %v4257, %v4250
    %v5091 = vpack.c.b16 %v4258, %v4251
    %v5092 = vpack.c.b16 %v4266, %v4259
    %v5093 = vpack.c.b16 %v4267, %v4260
    %v5094 = vpack.c.b16 %v4268, %v4261
    %v5095 = vpack.c.b16 %v4269, %v4262
    %v5096 = vpack.c.b16 %v4270, %v4263
    %v5097 = vpack.c.b16 %v4271, %v4264
    %v5098 = vpack.c.b16 %v4272, %v4265
    %v5099 = vpack.c.b16 %v4280, %v4273
    %v5100 = vpack.c.b16 %v4281, %v4274
    %v5101 = vpack.c.b16 %v4282, %v4275
    %v5102 = vpack.c.b16 %v4283, %v4276
    %v5103 = vpack.c.b16 %v4284, %v4277
    %v5104 = vpack.c.b16 %v4285, %v4278
    %v5105 = vpack.c.b16 %v4286, %v4279
    %v5106 = vpack.c.b16 %v4294, %v4287
    %v5107 = vpack.c.b16 %v4295, %v4288
    %v5108 = vpack.c.b16 %v4296, %v4289
    %v5109 = vpack.c.b16 %v4297, %v4290
    %v5110 = vpack.c.b16 %v4298, %v4291
    %v5111 = vpack.c.b16 %v4299, %v4292
    %v5112 = vpack.c.b16 %v4300, %v4293
    %v5113 = vpack.c.b16 %v4308, %v4301
    %v5114 = vpack.c.b16 %v4309, %v4302
    %v5115 = vpack.c.b16 %v4310, %v4303
    %v5116 = vpack.c.b16 %v4311, %v4304
    %v5117 = vpack.c.b16 %v4312, %v4305
    %v5118 = vpack.c.b16 %v4313, %v4306
    %v5119 = vpack.c.b16 %v4314, %v4307
    %v5120 = vpack.c.b16 %v4322, %v4315
    %v5121 = vpack.c.b16 %v4323, %v4316
    %v5122 = vpack.c.b16 %v4324, %v4317
    %v5123 = vpack.c.b16 %v4325, %v4318
    %v5124 = vpack.c.b16 %v4326, %v4319
    %v5125 = vpack.c.b16 %v4327, %v4320
    %v5126 = vpack.c.b16 %v4328, %v4321
    %v5127 = vpack.c.b16 %v4336, %v4329
    %v5128 = vpack.c.b16 %v4337, %v4330
    %v5129 = vpack.c.b16 %v4338, %v4331
    %v5130 = vpack.c.b16 %v4339, %v4332
    %v5131 = vpack.c.b16 %v4340, %v4333
    %v5132 = vpack.c.b16 %v4341, %v4334
    %v5133 = vpack.c.b16 %v4342, %v4335
    %v5134 = vpack.c.b16 %v4350, %v4343
    %v5135 = vpack.c.b16 %v4351, %v4344
    %v5136 = vpack.c.b16 %v4352, %v4345
    %v5137 = vpack.c.b16 %v4353, %v4346
    %v5138 = vpack.c.b16 %v4354, %v4347
    %v5139 = vpack.c.b16 %v4355, %v4348
    %v5140 = vpack.c.b16 %v4356, %v4349
    %v5141 = vpack.c.b16 %v4364, %v4357
    %v5142 = vpack.c.b16 %v4365, %v4358
    %v5143 = vpack.c.b16 %v4366, %v4359
    %v5144 = vpack.c.b16 %v4367, %v4360
    %v5145 = vpack.c.b16 %v4368, %v4361
    %v5146 = vpack.c.b16 %v4369, %v4362
    %v5147 = vpack.c.b16 %v4370, %v4363
    %v5148 = vpack.c.b16 %v4378, %v4371
    %v5149 = vpack.c.b16 %v4379, %v4372
    %v5150 = vpack.c.b16 %v4380, %v4373
    %v5151 = vpack.c.b16 %v4381, %v4374
    %v5152 = vpack.c.b16 %v4382, %v4375
    %v5153 = vpack.c.b16 %v4383, %v4376
    %v5154 = vpack.c.b16 %v4384, %v4377
    %v5155 = vpack.c.b16 %v4392, %v4385
    %v5156 = vpack.c.b16 %v4393, %v4386
    %v5157 = vpack.c.b16 %v4394, %v4387
    %v5158 = vpack.c.b16 %v4395, %v4388
    %v5159 = vpack.c.b16 %v4396, %v4389
    %v5160 = vpack.c.b16 %v4397, %v4390
    %v5161 = vpack.c.b16 %v4398, %v4391
    %v5162 = vpack.c.b16 %v4406, %v4399
    %v5163 = vpack.c.b16 %v4407, %v4400
    %v5164 = vpack.c.b16 %v4408, %v4401
    %v5165 = vpack.c.b16 %v4409, %v4402
    %v5166 = vpack.c.b16 %v4410, %v4403
    %v5167 = vpack.c.b16 %v4411, %v4404
    %v5168 = vpack.c.b16 %v4412, %v4405
    %v5169 = vpack.c.b16 %v4420, %v4413
    %v5170 = vpack.c.b16 %v4421, %v4414
    %v5171 = vpack.c.b16 %v4422, %v4415
    %v5172 = vpack.c.b16 %v4423, %v4416
    %v5173 = vpack.c.b16 %v4424, %v4417
    %v5174 = vpack.c.b16 %v4425, %v4418
    %v5175 = vpack.c.b16 %v4426, %v4419
    %v5176 = vpack.c.b16 %v4434, %v4427
    %v5177 = vpack.c.b16 %v4435, %v4428
    %v5178 = vpack.c.b16 %v4436, %v4429
    %v5179 = vpack.c.b16 %v4437, %v4430
    %v5180 = vpack.c.b16 %v4438, %v4431
    %v5181 = vpack.c.b16 %v4439, %v4432
    %v5182 = vpack.c.b16 %v4440, %v4433
    %v5183 = vpack.c.b16 %v4448, %v4441
    %v5184 = vpack.c.b16 %v4449, %v4442
    %v5185 = vpack.c.b16 %v4450, %v4443
    %v5186 = vpack.c.b16 %v4451, %v4444
    %v5187 = vpack.c.b16 %v4452, %v4445
    %v5188 = vpack.c.b16 %v4453, %v4446
    %v5189 = vpack.c.b16 %v4454, %v4447
    %v5190 = vpack.c.b16 %v4462, %v4455
    %v5191 = vpack.c.b16 %v4463, %v4456
    %v5192 = vpack.c.b16 %v4464, %v4457
    %v5193 = vpack.c.b16 %v4465, %v4458
    %v5194 = vpack.c.b16 %v4466, %v4459
    %v5195 = vpack.c.b16 %v4467, %v4460
    %v5196 = vpack.c.b16 %v4468, %v4461
    %v5197 = vpack.c.b16 %v4476, %v4469
    %v5198 = vpack.c.b16 %v4477, %v4470
    %v5199 = vpack.c.b16 %v4478, %v4471
    %v5200 = vpack.c.b16 %v4479, %v4472
    %v5201 = vpack.c.b16 %v4480, %v4473
    %v5202 = vpack.c.b16 %v4481, %v4474
    %v5203 = vpack.c.b16 %v4482, %v4475
    %v5204 = vpack.c.b16 %v4490, %v4483
    %v5205 = vpack.c.b16 %v4491, %v4484
    %v5206 = vpack.c.b16 %v4492, %v4485
    %v5207 = vpack.c.b16 %v4493, %v4486
    %v5208 = vpack.c.b16 %v4494, %v4487
    %v5209 = vpack.c.b16 %v4495, %v4488
    %v5210 = vpack.c.b16 %v4496, %v4489
    %v5211 = vpack.c.b16 %v4504, %v4497
    %v5212 = vpack.c.b16 %v4505, %v4498
    %v5213 = vpack.c.b16 %v4506, %v4499
    %v5214 = vpack.c.b16 %v4507, %v4500
    %v5215 = vpack.c.b16 %v4508, %v4501
    %v5216 = vpack.c.b16 %v4509, %v4502
    %v5217 = vpack.c.b16 %v4510, %v4503
    %v5218 = vpack.c.b16 %v4518, %v4511
    %v5219 = vpack.c.b16 %v4519, %v4512
    %v5220 = vpack.c.b16 %v4520, %v4513
    %v5221 = vpack.c.b16 %v4521, %v4514
    %v5222 = vpack.c.b16 %v4522, %v4515
    %v5223 = vpack.c.b16 %v4523, %v4516
    %v5224 = vpack.c.b16 %v4524, %v4517
    %v5225 = vpack.c.b16 %v4532, %v4525
    %v5226 = vpack.c.b16 %v4533, %v4526
    %v5227 = vpack.c.b16 %v4534, %v4527
    %v5228 = vpack.c.b16 %v4535, %v4528
    %v5229 = vpack.c.b16 %v4536, %v4529
    %v5230 = vpack.c.b16 %v4537, %v4530
    %v5231 = vpack.c.b16 %v4538, %v4531
    %v5232 = vpack.c.b16 %v4546, %v4539
    %v5233 = vpack.c.b16 %v4547, %v4540
    %v5234 = vpack.c.b16 %v4548, %v4541
    %v5235 = vpack.c.b16 %v4549, %v4542
    %v5236 = vpack.c.b16 %v4550, %v4543
    %v5237 = vpack.c.b16 %v4551, %v4544
    %v5238 = vpack.c.b16 %v4552, %v4545
    %v5239 = vpack.c.b16 %v4560, %v4553
    %v5240 = vpack.c.b16 %v4561, %v4554
    %v5241 = vpack.c.b16 %v4562, %v4555
    %v5242 = vpack.c.b16 %v4563, %v4556
    %v5243 = vpack.c.b16 %v4564, %v4557
    %v5244 = vpack.c.b16 %v4565, %v4558
    %v5245 = vpack.c.b16 %v4566, %v4559
    %v5246 = vpack.c.b16 %v4574, %v4567
    %v5247 = vpack.c.b16 %v4575, %v4568
    %v5248 = vpack.c.b16 %v4576, %v4569
    %v5249 = vpack.c.b16 %v4577, %v4570
    %v5250 = vpack.c.b16 %v4578, %v4571
    %v5251 = vpack.c.b16 %v4579, %v4572
    %v5252 = vpack.c.b16 %v4580, %v4573
    %v5253 = vpack.c.b16 %v4588, %v4581
    %v5254 = vpack.c.b16 %v4589, %v4582
    %v5255 = vpack.c.b16 %v4590, %v4583
    %v5256 = vpack.c.b16 %v4591, %v4584
    %v5257 = vpack.c.b16 %v4592, %v4585
    %v5258 = vpack.c.b16 %v4593, %v4586
    %v5259 = vpack.c.b16 %v4594, %v4587
    %v5260 = vpack.c.b16 %v4602, %v4595
    %v5261 = vpack.c.b16 %v4603, %v4596
    %v5262 = vpack.c.b16 %v4604, %v4597
    %v5263 = vpack.c.b16 %v4605, %v4598
    %v5264 = vpack.c.b16 %v4606, %v4599
    %v5265 = vpack.c.b16 %v4607, %v4600
    %v5266 = vpack.c.b16 %v4608, %v4601
    %v5267 = vpack.c.b16 %v4616, %v4609
    %v5268 = vpack.c.b16 %v4617, %v4610
    %v5269 = vpack.c.b16 %v4618, %v4611
    %v5270 = vpack.c.b16 %v4619, %v4612
    %v5271 = vpack.c.b16 %v4620, %v4613
    %v5272 = vpack.c.b16 %v4621, %v4614
    %v5273 = vpack.c.b16 %v4622, %v4615
    %v5274 = vpack.c.b16 %v4630, %v4623
    %v5275 = vpack.c.b16 %v4631, %v4624
    %v5276 = vpack.c.b16 %v4632, %v4625
    %v5277 = vpack.c.b16 %v4633, %v4626
    %v5278 = vpack.c.b16 %v4634, %v4627
    %v5279 = vpack.c.b16 %v4635, %v4628
    %v5280 = vpack.c.b16 %v4636, %v4629
    %v5281 = vpack.c.b16 %v4644, %v4637
    %v5282 = vpack.c.b16 %v4645, %v4638
    %v5283 = vpack.c.b16 %v4646, %v4639
    %v5284 = vpack.c.b16 %v4647, %v4640
    %v5285 = vpack.c.b16 %v4648, %v4641
    %v5286 = vpack.c.b16 %v4649, %v4642
    %v5287 = vpack.c.b16 %v4650, %v4643
    %v5288 = vpack.c.b16 %v4658, %v4651
    %v5289 = vpack.c.b16 %v4659, %v4652
    %v5290 = vpack.c.b16 %v4660, %v4653
    %v5291 = vpack.c.b16 %v4661, %v4654
    %v5292 = vpack.c.b16 %v4662, %v4655
    %v5293 = vpack.c.b16 %v4663, %v4656
    %v5294 = vpack.c.b16 %v4664, %v4657
    %v5295 = vpack.c.b16 %v4672, %v4665
    %v5296 = vpack.c.b16 %v4673, %v4666
    %v5297 = vpack.c.b16 %v4674, %v4667
    %v5298 = vpack.c.b16 %v4675, %v4668
    %v5299 = vpack.c.b16 %v4676, %v4669
    %v5300 = vpack.c.b16 %v4677, %v4670
    %v5301 = vpack.c.b16 %v4678, %v4671
    %v5302 = vpack.c.b16 %v4686, %v4679
    %v5303 = vpack.c.b16 %v4687, %v4680
    %v5304 = vpack.c.b16 %v4688, %v4681
    %v5305 = vpack.c.b16 %v4689, %v4682
    %v5306 = vpack.c.b16 %v4690, %v4683
    %v5307 = vpack.c.b16 %v4691, %v4684
    %v5308 = vpack.c.b16 %v4692, %v4685
    %v5309 = vpack.c.b16 %v4700, %v4693
    %v5310 = vpack.c.b16 %v4701, %v4694
    %v5311 = vpack.c.b16 %v4702, %v4695
    %v5312 = vpack.c.b16 %v4703, %v4696
    %v5313 = vpack.c.b16 %v4704, %v4697
    %v5314 = vpack.c.b16 %v4705, %v4698
    %v5315 = vpack.c.b16 %v4706, %v4699
    %v5316 = vpack.c.b16 %v4714, %v4707
    %v5317 = vpack.c.b16 %v4715, %v4708
    %v5318 = vpack.c.b16 %v4716, %v4709
    %v5319 = vpack.c.b16 %v4717, %v4710
    %v5320 = vpack.c.b16 %v4718, %v4711
    %v5321 = vpack.c.b16 %v4719, %v4712
    %v5322 = vpack.c.b16 %v4720, %v4713
    %v5323 = vpack.c.b16 %v4728, %v4721
    %v5324 = vpack.c.b16 %v4729, %v4722
    %v5325 = vpack.c.b16 %v4730, %v4723
    %v5326 = vpack.c.b16 %v4731, %v4724
    %v5327 = vpack.c.b16 %v4732, %v4725
    %v5328 = vpack.c.b16 %v4733, %v4726
    %v5329 = vpack.c.b16 %v4734, %v4727
    %v5330 = vpack.c.b16 %v4742, %v4735
    %v5331 = vpack.c.b16 %v4743, %v4736
    %v5332 = vpack.c.b16 %v4744, %v4737
    %v5333 = vpack.c.b16 %v4745, %v4738
    %v5334 = vpack.c.b16 %v4746, %v4739
    %v5335 = vpack.c.b16 %v4747, %v4740
    %v5336 = vpack.c.b16 %v4748, %v4741
    %v5337 = vpack.c.b16 %v4756, %v4749
    %v5338 = vpack.c.b16 %v4757, %v4750
    %v5339 = vpack.c.b16 %v4758, %v4751
    %v5340 = vpack.c.b16 %v4759, %v4752
    %v5341 = vpack.c.b16 %v4760, %v4753
    %v5342 = vpack.c.b16 %v4761, %v4754
    %v5343 = vpack.c.b16 %v4762, %v4755
    %v5344 = vpack.c.b16 %v4770, %v4763
    %v5345 = vpack.c.b16 %v4771, %v4764
    %v5346 = vpack.c.b16 %v4772, %v4765
    %v5347 = vpack.c.b16 %v4773, %v4766
    %v5348 = vpack.c.b16 %v4774, %v4767
    %v5349 = vpack.c.b16 %v4775, %v4768
    %v5350 = vpack.c.b16 %v4776, %v4769
    %v5351 = vpack.c.b16 %v4784, %v4777
    %v5352 = vpack.c.b16 %v4785, %v4778
    %v5353 = vpack.c.b16 %v4786, %v4779
    %v5354 = vpack.c.b16 %v4787, %v4780
    %v5355 = vpack.c.b16 %v4788, %v4781
    %v5356 = vpack.c.b16 %v4789, %v4782
    %v5357 = vpack.c.b16 %v4790, %v4783
    %v5358 = vpack.c.b16 %v4798, %v4791
    %v5359 = vpack.c.b16 %v4799, %v4792
    %v5360 = vpack.c.b16 %v4800, %v4793
    %v5361 = vpack.c.b16 %v4801, %v4794
    %v5362 = vpack.c.b16 %v4802, %v4795
    %v5363 = vpack.c.b16 %v4803, %v4796
    %v5364 = vpack.c.b16 %v4804, %v4797
    %v5365 = vpack.c.b16 %v4812, %v4805
    %v5366 = vpack.c.b16 %v4813, %v4806
    %v5367 = vpack.c.b16 %v4814, %v4807
    %v5368 = vpack.c.b16 %v4815, %v4808
    %v5369 = vpack.c.b16 %v4816, %v4809
    %v5370 = vpack.c.b16 %v4817, %v4810
    %v5371 = vpack.c.b16 %v4818, %v4811
    %v5372 = vpack.c.b16 %v4826, %v4819
    %v5373 = vpack.c.b16 %v4827, %v4820
    %v5374 = vpack.c.b16 %v4828, %v4821
    %v5375 = vpack.c.b16 %v4829, %v4822
    %v5376 = vpack.c.b16 %v4830, %v4823
    %v5377 = vpack.c.b16 %v4831, %v4824
    %v5378 = vpack.c.b16 %v4832, %v4825
    %v5379 = vpack.c.b16 %v4840, %v4833
    %v5380 = vpack.c.b16 %v4841, %v4834
    %v5381 = vpack.c.b16 %v4842, %v4835
    %v5382 = vpack.c.b16 %v4843, %v4836
    %v5383 = vpack.c.b16 %v4844, %v4837
    %v5384 = vpack.c.b16 %v4845, %v4838
    %v5385 = vpack.c.b16 %v4846, %v4839
    %v5386 = vpack.c.b16 %v4854, %v4847
    %v5387 = vpack.c.b16 %v4855, %v4848
    %v5388 = vpack.c.b16 %v4856, %v4849
    %v5389 = vpack.c.b16 %v4857, %v4850
    %v5390 = vpack.c.b16 %v4858, %v4851
    %v5391 = vpack.c.b16 %v4859, %v4852
    %v5392 = vpack.c.b16 %v4860, %v4853
    %v5393 = vpack.c.b16 %v4868, %v4861
    %v5394 = vpack.c.b16 %v4869, %v4862
    %v5395 = vpack.c.b16 %v4870, %v4863
    %v5396 = vpack.c.b16 %v4871, %v4864
    %v5397 = vpack.c.b16 %v4872, %v4865
    %v5398 = vpack.c.b16 %v4873, %v4866
    %v5399 = vpack.c.b16 %v4874, %v4867
    %v5400 = vpack.c.b16 %v4882, %v4875
    %v5401 = vpack.c.b16 %v4883, %v4876
    %v5402 = vpack.c.b16 %v4884, %v4877
    %v5403 = vpack.c.b16 %v4885, %v4878
    %v5404 = vpack.c.b16 %v4886, %v4879
    %v5405 = vpack.c.b16 %v4887, %v4880
    %v5406 = vpack.c.b16 %v4888, %v4881
    %v5407 = vpack.c.b16 %v4896, %v4889
    %v5408 = vpack.c.b16 %v4897, %v4890
    %v5409 = vpack.c.b16 %v4898, %v4891
    %v5410 = vpack.c.b16 %v4899, %v4892
    %v5411 = vpack.c.b16 %v4900, %v4893
    %v5412 = vpack.c.b16 %v4901, %v4894
    %v5413 = vpack.c.b16 %v4902, %v4895
    %v5414 = vpack.c.b16 %v4910, %v4903
    %v5415 = vpack.c.b16 %v4911, %v4904
    %v5416 = vpack.c.b16 %v4912, %v4905
    %v5417 = vpack.c.b16 %v4913, %v4906
    %v5418 = vpack.c.b16 %v4914, %v4907
    %v5419 = vpack.c.b16 %v4915, %v4908
    %v5420 = vpack.c.b16 %v4916, %v4909
    %v5421 = vpack.c.b16 %v4924, %v4917
    %v5422 = vpack.c.b16 %v4925, %v4918
    %v5423 = vpack.c.b16 %v4926, %v4919
    %v5424 = vpack.c.b16 %v4927, %v4920
    %v5425 = vpack.c.b16 %v4928, %v4921
    %v5426 = vpack.c.b16 %v4929, %v4922
    %v5427 = vpack.c.b16 %v4930, %v4923
    %v5428 = vpack.c.b16 %v4938, %v4931
    %v5429 = vpack.c.b16 %v4939, %v4932
    %v5430 = vpack.c.b16 %v4940, %v4933
    %v5431 = vpack.c.b16 %v4941, %v4934
    %v5432 = vpack.c.b16 %v4942, %v4935
    %v5433 = vpack.c.b16 %v4943, %v4936
    %v5434 = vpack.c.b16 %v4944, %v4937
    %v5435 = vpack.c.b16 %v4952, %v4945
    %v5436 = vpack.c.b16 %v4953, %v4946
    %v5437 = vpack.c.b16 %v4954, %v4947
    %v5438 = vpack.c.b16 %v4955, %v4948
    %v5439 = vpack.c.b16 %v4956, %v4949
    %v5440 = vpack.c.b16 %v4957, %v4950
    %v5441 = vpack.c.b16 %v4958, %v4951
    %v5442 = vpack.c.b16 %v4966, %v4959
    %v5443 = vpack.c.b16 %v4967, %v4960
    %v5444 = vpack.c.b16 %v4968, %v4961
    %v5445 = vpack.c.b16 %v4969, %v4962
    %v5446 = vpack.c.b16 %v4970, %v4963
    %v5447 = vpack.c.b16 %v4971, %v4964
    %v5448 = vpack.c.b16 %v4972, %v4965
    %v5449 = vpack.c.b16 %v4980, %v4973
    %v5450 = vpack.c.b16 %v4981, %v4974
    %v5451 = vpack.c.b16 %v4982, %v4975
    %v5452 = vpack.c.b16 %v4983, %v4976
    %v5453 = vpack.c.b16 %v4984, %v4977
    %v5454 = vpack.c.b16 %v4985, %v4978
    %v5455 = vpack.c.b16 %v4986, %v4979
    %v5456 = vpack.c.b16 %v4994, %v4987
    %v5457 = vpack.c.b16 %v4995, %v4988
    %v5458 = vpack.c.b16 %v4996, %v4989
    %v5459 = vpack.c.b16 %v4997, %v4990
    %v5460 = vpack.c.b16 %v4998, %v4991
    %v5461 = vpack.c.b16 %v4999, %v4992
    %v5462 = vpack.c.b16 %v5000, %v4993
    %v5463 = vpack.c.b16 %v5008, %v5001
    %v5464 = vpack.c.b16 %v5009, %v5002
    %v5465 = vpack.c.b16 %v5010, %v5003
    %v5466 = vpack.c.b16 %v5011, %v5004
    %v5467 = vpack.c.b16 %v5012, %v5005
    %v5468 = vpack.c.b16 %v5013, %v5006
    %v5469 = vpack.c.b16 %v5014, %v5007
    %v5470 = vpack.c.b16 %v5022, %v5015
    %v5471 = vpack.c.b16 %v5023, %v5016
    %v5472 = vpack.c.b16 %v5024, %v5017
    %v5473 = vpack.c.b16 %v5025, %v5018
    %v5474 = vpack.c.b16 %v5026, %v5019
    %v5475 = vpack.c.b16 %v5027, %v5020
    %v5476 = vpack.c.b16 %v5028, %v5021
    %5925 = vmatprep.subr.bf16.mxu0 %v5079
    %5926 = vmatpush1.bf16.msra.mxu0 %v5078
    %5927 = vmatprep.subr.bf16.mxu0 %v5072
    %5928 = vmatpush1.bf16.msra.mxu0 %v5071
    %5929 = vmatprep.subr.bf16.mxu0 %v5065
    %5930 = vmatpush1.bf16.msra.mxu0 %v5064
    %5931 = vmatprep.subr.bf16.mxu0 %v5058
    %5932 = vmatpush1.bf16.msra.mxu0 %v5057
    %5933 = vmatprep.subr.bf16.mxu0 %v5051
    %5934 = vmatpush1.bf16.msra.mxu0 %v5050
    %5935 = vmatprep.subr.bf16.mxu0 %v5044
    %5936 = vmatpush1.bf16.msra.mxu0 %v5043
    %5937 = vmatprep.subr.bf16.mxu0 %v5037
    %5938 = vmatpush1.bf16.msra.mxu0 %v5036
    %5939 = vmatprep.subr.bf16.mxu0 %v5030
    %5940 = vmatpush1.bf16.msra.mxu0 %v5029
    %5941 = vmatprep.subr.bf16.mxu0 %v5135
    %5942 = vmatpush2.bf16.msra.mxu0 %v5134
    %5943 = vmatprep.subr.bf16.mxu0 %v5128
    %5944 = vmatpush2.bf16.msra.mxu0 %v5127
    %5945 = vmatprep.subr.bf16.mxu0 %v5121
    %5946 = vmatpush2.bf16.msra.mxu0 %v5120
    %5947 = vmatprep.subr.bf16.mxu0 %v5114
    %5948 = vmatpush2.bf16.msra.mxu0 %v5113
    %5949 = vmatprep.subr.bf16.mxu0 %v5107
    %5950 = vmatpush2.bf16.msra.mxu0 %v5106
    %5951 = vmatprep.subr.bf16.mxu0 %v5100
    %5952 = vmatpush2.bf16.msra.mxu0 %v5099
    %5953 = vmatprep.subr.bf16.mxu0 %v5093
    %5954 = vmatpush2.bf16.msra.mxu0 %v5092
    %5955 = vmatprep.subr.bf16.mxu0 %v5086
    %5956 = vmatpush2.bf16.msra.mxu0 %v5085
    %5957 = vmatprep.mubr.bf16.mxu0 %v3065
    %5958 = vmatmul.mubr.bf16.gmra.mxu0 %v3064
    %v5959 = vpop.f32.mrf.mxu0
    %v5960 = vadd.f32 %v3589, %v5959
    %v5961 = vpop.f32.mrf.mxu0
    %v5962 = vadd.f32 %v3593, %v5961
    %v5963 = vpop.f32.mrf.mxu0
    %v5964 = vadd.f32 %v3589, %v5963
    %v5965 = vpop.f32.mrf.mxu0
    %v5966 = vadd.f32 %v3593, %v5965
    %5967 = vdwg.mxu0
    %5968 = vmatprep.subr.bf16.mxu0 %v5191
    %5969 = vmatpush1.bf16.msra.mxu0 %v5190
    %5970 = vmatprep.subr.bf16.mxu0 %v5184
    %5971 = vmatpush1.bf16.msra.mxu0 %v5183
    %5972 = vmatprep.subr.bf16.mxu0 %v5177
    %5973 = vmatpush1.bf16.msra.mxu0 %v5176
    %5974 = vmatprep.subr.bf16.mxu0 %v5170
    %5975 = vmatpush1.bf16.msra.mxu0 %v5169
    %5976 = vmatprep.subr.bf16.mxu0 %v5163
    %5977 = vmatpush1.bf16.msra.mxu0 %v5162
    %5978 = vmatprep.subr.bf16.mxu0 %v5156
    %5979 = vmatpush1.bf16.msra.mxu0 %v5155
    %5980 = vmatprep.subr.bf16.mxu0 %v5149
    %5981 = vmatpush1.bf16.msra.mxu0 %v5148
    %5982 = vmatprep.subr.bf16.mxu0 %v5142
    %5983 = vmatpush1.bf16.msra.mxu0 %v5141
    %5984 = vmatprep.subr.bf16.mxu0 %v5247
    %5985 = vmatpush2.bf16.msra.mxu0 %v5246
    %5986 = vmatprep.subr.bf16.mxu0 %v5240
    %5987 = vmatpush2.bf16.msra.mxu0 %v5239
    %5988 = vmatprep.subr.bf16.mxu0 %v5233
    %5989 = vmatpush2.bf16.msra.mxu0 %v5232
    %5990 = vmatprep.subr.bf16.mxu0 %v5226
    %5991 = vmatpush2.bf16.msra.mxu0 %v5225
    %5992 = vmatprep.subr.bf16.mxu0 %v5219
    %5993 = vmatpush2.bf16.msra.mxu0 %v5218
    %5994 = vmatprep.subr.bf16.mxu0 %v5212
    %5995 = vmatpush2.bf16.msra.mxu0 %v5211
    %5996 = vmatprep.subr.bf16.mxu0 %v5205
    %5997 = vmatpush2.bf16.msra.mxu0 %v5204
    %5998 = vmatprep.subr.bf16.mxu0 %v5198
    %5999 = vmatpush2.bf16.msra.mxu0 %v5197
    %6000 = vmatprep.mubr.bf16.mxu0 %v3067
    %6001 = vmatmul.mubr.bf16.gmra.mxu0 %v3066
    %v6002 = vpop.f32.mrf.mxu0
    %v6003 = vadd.f32 %v5960, %v6002
    %v6004 = vpop.f32.mrf.mxu0
    %v6005 = vadd.f32 %v5962, %v6004
    %v6006 = vpop.f32.mrf.mxu0
    %v6007 = vadd.f32 %v5964, %v6006
    %v6008 = vpop.f32.mrf.mxu0
    %v6009 = vadd.f32 %v5966, %v6008
    %6010 = vdwg.mxu0
    %6011 = vmatprep.subr.bf16.mxu0 %v5303
    %6012 = vmatpush1.bf16.msra.mxu0 %v5302
    %6013 = vmatprep.subr.bf16.mxu0 %v5296
    %6014 = vmatpush1.bf16.msra.mxu0 %v5295
    %6015 = vmatprep.subr.bf16.mxu0 %v5289
    %6016 = vmatpush1.bf16.msra.mxu0 %v5288
    %6017 = vmatprep.subr.bf16.mxu0 %v5282
    %6018 = vmatpush1.bf16.msra.mxu0 %v5281
    %6019 = vmatprep.subr.bf16.mxu0 %v5275
    %6020 = vmatpush1.bf16.msra.mxu0 %v5274
    %6021 = vmatprep.subr.bf16.mxu0 %v5268
    %6022 = vmatpush1.bf16.msra.mxu0 %v5267
    %6023 = vmatprep.subr.bf16.mxu0 %v5261
    %6024 = vmatpush1.bf16.msra.mxu0 %v5260
    %6025 = vmatprep.subr.bf16.mxu0 %v5254
    %6026 = vmatpush1.bf16.msra.mxu0 %v5253
    %6027 = vmatprep.subr.bf16.mxu0 %v5359
    %6028 = vmatpush2.bf16.msra.mxu0 %v5358
    %6029 = vmatprep.subr.bf16.mxu0 %v5352
    %6030 = vmatpush2.bf16.msra.mxu0 %v5351
    %6031 = vmatprep.subr.bf16.mxu0 %v5345
    %6032 = vmatpush2.bf16.msra.mxu0 %v5344
    %6033 = vmatprep.subr.bf16.mxu0 %v5338
    %6034 = vmatpush2.bf16.msra.mxu0 %v5337
    %6035 = vmatprep.subr.bf16.mxu0 %v5331
    %6036 = vmatpush2.bf16.msra.mxu0 %v5330
    %6037 = vmatprep.subr.bf16.mxu0 %v5324
    %6038 = vmatpush2.bf16.msra.mxu0 %v5323
    %6039 = vmatprep.subr.bf16.mxu0 %v5317
    %6040 = vmatpush2.bf16.msra.mxu0 %v5316
    %6041 = vmatprep.subr.bf16.mxu0 %v5310
    %6042 = vmatpush2.bf16.msra.mxu0 %v5309
    %6043 = vmatprep.mubr.bf16.mxu0 %v3069
    %6044 = vmatmul.mubr.bf16.gmra.mxu0 %v3068
    %v6045 = vpop.f32.mrf.mxu0
    %v6046 = vadd.f32 %v6003, %v6045
    %v6047 = vpop.f32.mrf.mxu0
    %v6048 = vadd.f32 %v6005, %v6047
    %v6049 = vpop.f32.mrf.mxu0
    %v6050 = vadd.f32 %v6007, %v6049
    %v6051 = vpop.f32.mrf.mxu0
    %v6052 = vadd.f32 %v6009, %v6051
    %6053 = vdwg.mxu0
    %6054 = vmatprep.subr.bf16.mxu0 %v5415
    %6055 = vmatpush1.bf16.msra.mxu0 %v5414
    %6056 = vmatprep.subr.bf16.mxu0 %v5408
    %6057 = vmatpush1.bf16.msra.mxu0 %v5407
    %6058 = vmatprep.subr.bf16.mxu0 %v5401
    %6059 = vmatpush1.bf16.msra.mxu0 %v5400
    %6060 = vmatprep.subr.bf16.mxu0 %v5394
    %6061 = vmatpush1.bf16.msra.mxu0 %v5393
    %6062 = vmatprep.subr.bf16.mxu0 %v5387
    %6063 = vmatpush1.bf16.msra.mxu0 %v5386
    %6064 = vmatprep.subr.bf16.mxu0 %v5380
    %6065 = vmatpush1.bf16.msra.mxu0 %v5379
    %6066 = vmatprep.subr.bf16.mxu0 %v5373
    %6067 = vmatpush1.bf16.msra.mxu0 %v5372
    %6068 = vmatprep.subr.bf16.mxu0 %v5366
    %6069 = vmatpush1.bf16.msra.mxu0 %v5365
    %6070 = vmatprep.subr.bf16.mxu0 %v5471
    %6071 = vmatpush2.bf16.msra.mxu0 %v5470
    %6072 = vmatprep.subr.bf16.mxu0 %v5464
    %6073 = vmatpush2.bf16.msra.mxu0 %v5463
    %6074 = vmatprep.subr.bf16.mxu0 %v5457
    %6075 = vmatpush2.bf16.msra.mxu0 %v5456
    %6076 = vmatprep.subr.bf16.mxu0 %v5450
    %6077 = vmatpush2.bf16.msra.mxu0 %v5449
    %6078 = vmatprep.subr.bf16.mxu0 %v5443
    %6079 = vmatpush2.bf16.msra.mxu0 %v5442
    %6080 = vmatprep.subr.bf16.mxu0 %v5436
    %6081 = vmatpush2.bf16.msra.mxu0 %v5435
    %6082 = vmatprep.subr.bf16.mxu0 %v5429
    %6083 = vmatpush2.bf16.msra.mxu0 %v5428
    %6084 = vmatprep.subr.bf16.mxu0 %v5422
    %6085 = vmatpush2.bf16.msra.mxu0 %v5421
    %6086 = vmatprep.mubr.bf16.mxu0 %v3071
    %6087 = vmatmul.mubr.bf16.gmra.mxu0 %v3070
    %v6088 = vpop.f32.mrf.mxu0
    %v6089 = vadd.f32 %v6046, %v6088
    %v6090 = vpop.f32.mrf.mxu0
    %v6091 = vadd.f32 %v6048, %v6090
    %v6092 = vpop.f32.mrf.mxu0
    %v6093 = vadd.f32 %v6050, %v6092
    %v6094 = vpop.f32.mrf.mxu0
    %v6095 = vadd.f32 %v6052, %v6094
    %6096 = vdwg.mxu0
    %6097 = vmatprep.subr.bf16.mxu0 %v5081
    %6098 = vmatpush1.bf16.msra.mxu0 %v5080
    %6099 = vmatprep.subr.bf16.mxu0 %v5074
    %6100 = vmatpush1.bf16.msra.mxu0 %v5073
    %6101 = vmatprep.subr.bf16.mxu0 %v5067
    %6102 = vmatpush1.bf16.msra.mxu0 %v5066
    %6103 = vmatprep.subr.bf16.mxu0 %v5060
    %6104 = vmatpush1.bf16.msra.mxu0 %v5059
    %6105 = vmatprep.subr.bf16.mxu0 %v5053
    %6106 = vmatpush1.bf16.msra.mxu0 %v5052
    %6107 = vmatprep.subr.bf16.mxu0 %v5046
    %6108 = vmatpush1.bf16.msra.mxu0 %v5045
    %6109 = vmatprep.subr.bf16.mxu0 %v5039
    %6110 = vmatpush1.bf16.msra.mxu0 %v5038
    %6111 = vmatprep.subr.bf16.mxu0 %v5032
    %6112 = vmatpush1.bf16.msra.mxu0 %v5031
    %6113 = vmatprep.subr.bf16.mxu0 %v5137
    %6114 = vmatpush2.bf16.msra.mxu0 %v5136
    %6115 = vmatprep.subr.bf16.mxu0 %v5130
    %6116 = vmatpush2.bf16.msra.mxu0 %v5129
    %6117 = vmatprep.subr.bf16.mxu0 %v5123
    %6118 = vmatpush2.bf16.msra.mxu0 %v5122
    %6119 = vmatprep.subr.bf16.mxu0 %v5116
    %6120 = vmatpush2.bf16.msra.mxu0 %v5115
    %6121 = vmatprep.subr.bf16.mxu0 %v5109
    %6122 = vmatpush2.bf16.msra.mxu0 %v5108
    %6123 = vmatprep.subr.bf16.mxu0 %v5102
    %6124 = vmatpush2.bf16.msra.mxu0 %v5101
    %6125 = vmatprep.subr.bf16.mxu0 %v5095
    %6126 = vmatpush2.bf16.msra.mxu0 %v5094
    %6127 = vmatprep.subr.bf16.mxu0 %v5088
    %6128 = vmatpush2.bf16.msra.mxu0 %v5087
    %6129 = vmatprep.mubr.bf16.mxu0 %v3065
    %6130 = vmatmul.mubr.bf16.gmra.mxu0 %v3064
    %v6131 = vpop.f32.mrf.mxu0
    %v6132 = vadd.f32 %v3597, %v6131
    %v6133 = vpop.f32.mrf.mxu0
    %v6134 = vadd.f32 %v3601, %v6133
    %v6135 = vpop.f32.mrf.mxu0
    %v6136 = vadd.f32 %v3597, %v6135
    %v6137 = vpop.f32.mrf.mxu0
    %v6138 = vadd.f32 %v3601, %v6137
    %6139 = vdwg.mxu0
    %6140 = vmatprep.subr.bf16.mxu0 %v5193
    %6141 = vmatpush1.bf16.msra.mxu0 %v5192
    %6142 = vmatprep.subr.bf16.mxu0 %v5186
    %6143 = vmatpush1.bf16.msra.mxu0 %v5185
    %6144 = vmatprep.subr.bf16.mxu0 %v5179
    %6145 = vmatpush1.bf16.msra.mxu0 %v5178
    %6146 = vmatprep.subr.bf16.mxu0 %v5172
    %6147 = vmatpush1.bf16.msra.mxu0 %v5171
    %6148 = vmatprep.subr.bf16.mxu0 %v5165
    %6149 = vmatpush1.bf16.msra.mxu0 %v5164
    %6150 = vmatprep.subr.bf16.mxu0 %v5158
    %6151 = vmatpush1.bf16.msra.mxu0 %v5157
    %6152 = vmatprep.subr.bf16.mxu0 %v5151
    %6153 = vmatpush1.bf16.msra.mxu0 %v5150
    %6154 = vmatprep.subr.bf16.mxu0 %v5144
    %6155 = vmatpush1.bf16.msra.mxu0 %v5143
    %6156 = vmatprep.subr.bf16.mxu0 %v5249
    %6157 = vmatpush2.bf16.msra.mxu0 %v5248
    %6158 = vmatprep.subr.bf16.mxu0 %v5242
    %6159 = vmatpush2.bf16.msra.mxu0 %v5241
    %6160 = vmatprep.subr.bf16.mxu0 %v5235
    %6161 = vmatpush2.bf16.msra.mxu0 %v5234
    %6162 = vmatprep.subr.bf16.mxu0 %v5228
    %6163 = vmatpush2.bf16.msra.mxu0 %v5227
    %6164 = vmatprep.subr.bf16.mxu0 %v5221
    %6165 = vmatpush2.bf16.msra.mxu0 %v5220
    %6166 = vmatprep.subr.bf16.mxu0 %v5214
    %6167 = vmatpush2.bf16.msra.mxu0 %v5213
    %6168 = vmatprep.subr.bf16.mxu0 %v5207
    %6169 = vmatpush2.bf16.msra.mxu0 %v5206
    %6170 = vmatprep.subr.bf16.mxu0 %v5200
    %6171 = vmatpush2.bf16.msra.mxu0 %v5199
    %6172 = vmatprep.mubr.bf16.mxu0 %v3067
    %6173 = vmatmul.mubr.bf16.gmra.mxu0 %v3066
    %v6174 = vpop.f32.mrf.mxu0
    %v6175 = vadd.f32 %v6132, %v6174
    %v6176 = vpop.f32.mrf.mxu0
    %v6177 = vadd.f32 %v6134, %v6176
    %v6178 = vpop.f32.mrf.mxu0
    %v6179 = vadd.f32 %v6136, %v6178
    %v6180 = vpop.f32.mrf.mxu0
    %v6181 = vadd.f32 %v6138, %v6180
    %6182 = vdwg.mxu0
    %6183 = vmatprep.subr.bf16.mxu0 %v5305
    %6184 = vmatpush1.bf16.msra.mxu0 %v5304
    %6185 = vmatprep.subr.bf16.mxu0 %v5298
    %6186 = vmatpush1.bf16.msra.mxu0 %v5297
    %6187 = vmatprep.subr.bf16.mxu0 %v5291
    %6188 = vmatpush1.bf16.msra.mxu0 %v5290
    %6189 = vmatprep.subr.bf16.mxu0 %v5284
    %6190 = vmatpush1.bf16.msra.mxu0 %v5283
    %6191 = vmatprep.subr.bf16.mxu0 %v5277
    %6192 = vmatpush1.bf16.msra.mxu0 %v5276
    %6193 = vmatprep.subr.bf16.mxu0 %v5270
    %6194 = vmatpush1.bf16.msra.mxu0 %v5269
    %6195 = vmatprep.subr.bf16.mxu0 %v5263
    %6196 = vmatpush1.bf16.msra.mxu0 %v5262
    %6197 = vmatprep.subr.bf16.mxu0 %v5256
    %6198 = vmatpush1.bf16.msra.mxu0 %v5255
    %6199 = vmatprep.subr.bf16.mxu0 %v5361
    %6200 = vmatpush2.bf16.msra.mxu0 %v5360
    %6201 = vmatprep.subr.bf16.mxu0 %v5354
    %6202 = vmatpush2.bf16.msra.mxu0 %v5353
    %6203 = vmatprep.subr.bf16.mxu0 %v5347
    %6204 = vmatpush2.bf16.msra.mxu0 %v5346
    %6205 = vmatprep.subr.bf16.mxu0 %v5340
    %6206 = vmatpush2.bf16.msra.mxu0 %v5339
    %6207 = vmatprep.subr.bf16.mxu0 %v5333
    %6208 = vmatpush2.bf16.msra.mxu0 %v5332
    %6209 = vmatprep.subr.bf16.mxu0 %v5326
    %6210 = vmatpush2.bf16.msra.mxu0 %v5325
    %6211 = vmatprep.subr.bf16.mxu0 %v5319
    %6212 = vmatpush2.bf16.msra.mxu0 %v5318
    %6213 = vmatprep.subr.bf16.mxu0 %v5312
    %6214 = vmatpush2.bf16.msra.mxu0 %v5311
    %6215 = vmatprep.mubr.bf16.mxu0 %v3069
    %6216 = vmatmul.mubr.bf16.gmra.mxu0 %v3068
    %v6217 = vpop.f32.mrf.mxu0
    %v6218 = vadd.f32 %v6175, %v6217
    %v6219 = vpop.f32.mrf.mxu0
    %v6220 = vadd.f32 %v6177, %v6219
    %v6221 = vpop.f32.mrf.mxu0
    %v6222 = vadd.f32 %v6179, %v6221
    %v6223 = vpop.f32.mrf.mxu0
    %v6224 = vadd.f32 %v6181, %v6223
    %6225 = vdwg.mxu0
    %6226 = vmatprep.subr.bf16.mxu0 %v5417
    %6227 = vmatpush1.bf16.msra.mxu0 %v5416
    %6228 = vmatprep.subr.bf16.mxu0 %v5410
    %6229 = vmatpush1.bf16.msra.mxu0 %v5409
    %6230 = vmatprep.subr.bf16.mxu0 %v5403
    %6231 = vmatpush1.bf16.msra.mxu0 %v5402
    %6232 = vmatprep.subr.bf16.mxu0 %v5396
    %6233 = vmatpush1.bf16.msra.mxu0 %v5395
    %6234 = vmatprep.subr.bf16.mxu0 %v5389
    %6235 = vmatpush1.bf16.msra.mxu0 %v5388
    %6236 = vmatprep.subr.bf16.mxu0 %v5382
    %6237 = vmatpush1.bf16.msra.mxu0 %v5381
    %6238 = vmatprep.subr.bf16.mxu0 %v5375
    %6239 = vmatpush1.bf16.msra.mxu0 %v5374
    %6240 = vmatprep.subr.bf16.mxu0 %v5368
    %6241 = vmatpush1.bf16.msra.mxu0 %v5367
    %6242 = vmatprep.subr.bf16.mxu0 %v5473
    %6243 = vmatpush2.bf16.msra.mxu0 %v5472
    %6244 = vmatprep.subr.bf16.mxu0 %v5466
    %6245 = vmatpush2.bf16.msra.mxu0 %v5465
    %6246 = vmatprep.subr.bf16.mxu0 %v5459
    %6247 = vmatpush2.bf16.msra.mxu0 %v5458
    %6248 = vmatprep.subr.bf16.mxu0 %v5452
    %6249 = vmatpush2.bf16.msra.mxu0 %v5451
    %6250 = vmatprep.subr.bf16.mxu0 %v5445
    %6251 = vmatpush2.bf16.msra.mxu0 %v5444
    %6252 = vmatprep.subr.bf16.mxu0 %v5438
    %6253 = vmatpush2.bf16.msra.mxu0 %v5437
    %6254 = vmatprep.subr.bf16.mxu0 %v5431
    %6255 = vmatpush2.bf16.msra.mxu0 %v5430
    %6256 = vmatprep.subr.bf16.mxu0 %v5424
    %6257 = vmatpush2.bf16.msra.mxu0 %v5423
    %6258 = vmatprep.mubr.bf16.mxu0 %v3071
    %6259 = vmatmul.mubr.bf16.gmra.mxu0 %v3070
    %v6260 = vpop.f32.mrf.mxu0
    %v6261 = vadd.f32 %v6218, %v6260
    %v6262 = vpop.f32.mrf.mxu0
    %v6263 = vadd.f32 %v6220, %v6262
    %v6264 = vpop.f32.mrf.mxu0
    %v6265 = vadd.f32 %v6222, %v6264
    %v6266 = vpop.f32.mrf.mxu0
    %v6267 = vadd.f32 %v6224, %v6266
    %6268 = vdwg.mxu0
    %6269 = vmatprep.subr.bf16.mxu0 %v5083
    %6270 = vmatpush1.bf16.msra.mxu0 %v5082
    %6271 = vmatprep.subr.bf16.mxu0 %v5076
    %6272 = vmatpush1.bf16.msra.mxu0 %v5075
    %6273 = vmatprep.subr.bf16.mxu0 %v5069
    %6274 = vmatpush1.bf16.msra.mxu0 %v5068
    %6275 = vmatprep.subr.bf16.mxu0 %v5062
    %6276 = vmatpush1.bf16.msra.mxu0 %v5061
    %6277 = vmatprep.subr.bf16.mxu0 %v5055
    %6278 = vmatpush1.bf16.msra.mxu0 %v5054
    %6279 = vmatprep.subr.bf16.mxu0 %v5048
    %6280 = vmatpush1.bf16.msra.mxu0 %v5047
    %6281 = vmatprep.subr.bf16.mxu0 %v5041
    %6282 = vmatpush1.bf16.msra.mxu0 %v5040
    %6283 = vmatprep.subr.bf16.mxu0 %v5034
    %6284 = vmatpush1.bf16.msra.mxu0 %v5033
    %6285 = vmatprep.subr.bf16.mxu0 %v5139
    %6286 = vmatpush2.bf16.msra.mxu0 %v5138
    %6287 = vmatprep.subr.bf16.mxu0 %v5132
    %6288 = vmatpush2.bf16.msra.mxu0 %v5131
    %6289 = vmatprep.subr.bf16.mxu0 %v5125
    %6290 = vmatpush2.bf16.msra.mxu0 %v5124
    %6291 = vmatprep.subr.bf16.mxu0 %v5118
    %6292 = vmatpush2.bf16.msra.mxu0 %v5117
    %6293 = vmatprep.subr.bf16.mxu0 %v5111
    %6294 = vmatpush2.bf16.msra.mxu0 %v5110
    %6295 = vmatprep.subr.bf16.mxu0 %v5104
    %6296 = vmatpush2.bf16.msra.mxu0 %v5103
    %6297 = vmatprep.subr.bf16.mxu0 %v5097
    %6298 = vmatpush2.bf16.msra.mxu0 %v5096
    %6299 = vmatprep.subr.bf16.mxu0 %v5090
    %6300 = vmatpush2.bf16.msra.mxu0 %v5089
    %6301 = vmatprep.mubr.bf16.mxu0 %v3065
    %6302 = vmatmul.mubr.bf16.gmra.mxu0 %v3064
    %v6303 = vpop.f32.mrf.mxu0
    %v6304 = vadd.f32 %v3605, %v6303
    %v6305 = vpop.f32.mrf.mxu0
    %v6306 = vadd.f32 %v3609, %v6305
    %v6307 = vpop.f32.mrf.mxu0
    %v6308 = vadd.f32 %v3605, %v6307
    %v6309 = vpop.f32.mrf.mxu0
    %v6310 = vadd.f32 %v3609, %v6309
    %6311 = vdwg.mxu0
    %6312 = vmatprep.subr.bf16.mxu0 %v5195
    %6313 = vmatpush1.bf16.msra.mxu0 %v5194
    %6314 = vmatprep.subr.bf16.mxu0 %v5188
    %6315 = vmatpush1.bf16.msra.mxu0 %v5187
    %6316 = vmatprep.subr.bf16.mxu0 %v5181
    %6317 = vmatpush1.bf16.msra.mxu0 %v5180
    %6318 = vmatprep.subr.bf16.mxu0 %v5174
    %6319 = vmatpush1.bf16.msra.mxu0 %v5173
    %6320 = vmatprep.subr.bf16.mxu0 %v5167
    %6321 = vmatpush1.bf16.msra.mxu0 %v5166
    %6322 = vmatprep.subr.bf16.mxu0 %v5160
    %6323 = vmatpush1.bf16.msra.mxu0 %v5159
    %6324 = vmatprep.subr.bf16.mxu0 %v5153
    %6325 = vmatpush1.bf16.msra.mxu0 %v5152
    %6326 = vmatprep.subr.bf16.mxu0 %v5146
    %6327 = vmatpush1.bf16.msra.mxu0 %v5145
    %6328 = vmatprep.subr.bf16.mxu0 %v5251
    %6329 = vmatpush2.bf16.msra.mxu0 %v5250
    %6330 = vmatprep.subr.bf16.mxu0 %v5244
    %6331 = vmatpush2.bf16.msra.mxu0 %v5243
    %6332 = vmatprep.subr.bf16.mxu0 %v5237
    %6333 = vmatpush2.bf16.msra.mxu0 %v5236
    %6334 = vmatprep.subr.bf16.mxu0 %v5230
    %6335 = vmatpush2.bf16.msra.mxu0 %v5229
    %6336 = vmatprep.subr.bf16.mxu0 %v5223
    %6337 = vmatpush2.bf16.msra.mxu0 %v5222
    %6338 = vmatprep.subr.bf16.mxu0 %v5216
    %6339 = vmatpush2.bf16.msra.mxu0 %v5215
    %6340 = vmatprep.subr.bf16.mxu0 %v5209
    %6341 = vmatpush2.bf16.msra.mxu0 %v5208
    %6342 = vmatprep.subr.bf16.mxu0 %v5202
    %6343 = vmatpush2.bf16.msra.mxu0 %v5201
    %6344 = vmatprep.mubr.bf16.mxu0 %v3067
    %6345 = vmatmul.mubr.bf16.gmra.mxu0 %v3066
    %v6346 = vpop.f32.mrf.mxu0
    %v6347 = vadd.f32 %v6304, %v6346
    %v6348 = vpop.f32.mrf.mxu0
    %v6349 = vadd.f32 %v6306, %v6348
    %v6350 = vpop.f32.mrf.mxu0
    %v6351 = vadd.f32 %v6308, %v6350
    %v6352 = vpop.f32.mrf.mxu0
    %v6353 = vadd.f32 %v6310, %v6352
    %6354 = vdwg.mxu0
    %6355 = vmatprep.subr.bf16.mxu0 %v5307
    %6356 = vmatpush1.bf16.msra.mxu0 %v5306
    %6357 = vmatprep.subr.bf16.mxu0 %v5300
    %6358 = vmatpush1.bf16.msra.mxu0 %v5299
    %6359 = vmatprep.subr.bf16.mxu0 %v5293
    %6360 = vmatpush1.bf16.msra.mxu0 %v5292
    %6361 = vmatprep.subr.bf16.mxu0 %v5286
    %6362 = vmatpush1.bf16.msra.mxu0 %v5285
    %6363 = vmatprep.subr.bf16.mxu0 %v5279
    %6364 = vmatpush1.bf16.msra.mxu0 %v5278
    %6365 = vmatprep.subr.bf16.mxu0 %v5272
    %6366 = vmatpush1.bf16.msra.mxu0 %v5271
    %6367 = vmatprep.subr.bf16.mxu0 %v5265
    %6368 = vmatpush1.bf16.msra.mxu0 %v5264
    %6369 = vmatprep.subr.bf16.mxu0 %v5258
    %6370 = vmatpush1.bf16.msra.mxu0 %v5257
    %6371 = vmatprep.subr.bf16.mxu0 %v5363
    %6372 = vmatpush2.bf16.msra.mxu0 %v5362
    %6373 = vmatprep.subr.bf16.mxu0 %v5356
    %6374 = vmatpush2.bf16.msra.mxu0 %v5355
    %6375 = vmatprep.subr.bf16.mxu0 %v5349
    %6376 = vmatpush2.bf16.msra.mxu0 %v5348
    %6377 = vmatprep.subr.bf16.mxu0 %v5342
    %6378 = vmatpush2.bf16.msra.mxu0 %v5341
    %6379 = vmatprep.subr.bf16.mxu0 %v5335
    %6380 = vmatpush2.bf16.msra.mxu0 %v5334
    %6381 = vmatprep.subr.bf16.mxu0 %v5328
    %6382 = vmatpush2.bf16.msra.mxu0 %v5327
    %6383 = vmatprep.subr.bf16.mxu0 %v5321
    %6384 = vmatpush2.bf16.msra.mxu0 %v5320
    %6385 = vmatprep.subr.bf16.mxu0 %v5314
    %6386 = vmatpush2.bf16.msra.mxu0 %v5313
    %6387 = vmatprep.mubr.bf16.mxu0 %v3069
    %6388 = vmatmul.mubr.bf16.gmra.mxu0 %v3068
    %v6389 = vpop.f32.mrf.mxu0
    %v6390 = vadd.f32 %v6347, %v6389
    %v6391 = vpop.f32.mrf.mxu0
    %v6392 = vadd.f32 %v6349, %v6391
    %v6393 = vpop.f32.mrf.mxu0
    %v6394 = vadd.f32 %v6351, %v6393
    %v6395 = vpop.f32.mrf.mxu0
    %v6396 = vadd.f32 %v6353, %v6395
    %6397 = vdwg.mxu0
    %6398 = vmatprep.subr.bf16.mxu0 %v5419
    %6399 = vmatpush1.bf16.msra.mxu0 %v5418
    %6400 = vmatprep.subr.bf16.mxu0 %v5412
    %6401 = vmatpush1.bf16.msra.mxu0 %v5411
    %6402 = vmatprep.subr.bf16.mxu0 %v5405
    %6403 = vmatpush1.bf16.msra.mxu0 %v5404
    %6404 = vmatprep.subr.bf16.mxu0 %v5398
    %6405 = vmatpush1.bf16.msra.mxu0 %v5397
    %6406 = vmatprep.subr.bf16.mxu0 %v5391
    %6407 = vmatpush1.bf16.msra.mxu0 %v5390
    %6408 = vmatprep.subr.bf16.mxu0 %v5384
    %6409 = vmatpush1.bf16.msra.mxu0 %v5383
    %6410 = vmatprep.subr.bf16.mxu0 %v5377
    %6411 = vmatpush1.bf16.msra.mxu0 %v5376
    %6412 = vmatprep.subr.bf16.mxu0 %v5370
    %6413 = vmatpush1.bf16.msra.mxu0 %v5369
    %6414 = vmatprep.subr.bf16.mxu0 %v5475
    %6415 = vmatpush2.bf16.msra.mxu0 %v5474
    %6416 = vmatprep.subr.bf16.mxu0 %v5468
    %6417 = vmatpush2.bf16.msra.mxu0 %v5467
    %6418 = vmatprep.subr.bf16.mxu0 %v5461
    %6419 = vmatpush2.bf16.msra.mxu0 %v5460
    %6420 = vmatprep.subr.bf16.mxu0 %v5454
    %6421 = vmatpush2.bf16.msra.mxu0 %v5453
    %6422 = vmatprep.subr.bf16.mxu0 %v5447
    %6423 = vmatpush2.bf16.msra.mxu0 %v5446
    %6424 = vmatprep.subr.bf16.mxu0 %v5440
    %6425 = vmatpush2.bf16.msra.mxu0 %v5439
    %6426 = vmatprep.subr.bf16.mxu0 %v5433
    %6427 = vmatpush2.bf16.msra.mxu0 %v5432
    %6428 = vmatprep.subr.bf16.mxu0 %v5426
    %6429 = vmatpush2.bf16.msra.mxu0 %v5425
    %6430 = vmatprep.mubr.bf16.mxu0 %v3071
    %6431 = vmatmul.mubr.bf16.gmra.mxu0 %v3070
    %v6432 = vpop.f32.mrf.mxu0
    %v6433 = vadd.f32 %v6390, %v6432
    %v6434 = vpop.f32.mrf.mxu0
    %v6435 = vadd.f32 %v6392, %v6434
    %v6436 = vpop.f32.mrf.mxu0
    %v6437 = vadd.f32 %v6394, %v6436
    %v6438 = vpop.f32.mrf.mxu0
    %v6439 = vadd.f32 %v6396, %v6438
    %6440 = vdwg.mxu0
    %6441 = vmatprep.subr.bf16.mxu0 0
    %6442 = vmatpush1.bf16.msra.mxu0 %v5084
    %6443 = vmatprep.subr.bf16.mxu0 0
    %6444 = vmatpush1.bf16.msra.mxu0 %v5077
    %6445 = vmatprep.subr.bf16.mxu0 0
    %6446 = vmatpush1.bf16.msra.mxu0 %v5070
    %6447 = vmatprep.subr.bf16.mxu0 0
    %6448 = vmatpush1.bf16.msra.mxu0 %v5063
    %6449 = vmatprep.subr.bf16.mxu0 0
    %6450 = vmatpush1.bf16.msra.mxu0 %v5056
    %6451 = vmatprep.subr.bf16.mxu0 0
    %6452 = vmatpush1.bf16.msra.mxu0 %v5049
    %6453 = vmatprep.subr.bf16.mxu0 0
    %6454 = vmatpush1.bf16.msra.mxu0 %v5042
    %6455 = vmatprep.subr.bf16.mxu0 0
    %6456 = vmatpush1.bf16.msra.mxu0 %v5035
    %6457 = vmatprep.subr.bf16.mxu0 0
    %6458 = vmatpush2.bf16.msra.mxu0 %v5140
    %6459 = vmatprep.subr.bf16.mxu0 0
    %6460 = vmatpush2.bf16.msra.mxu0 %v5133
    %6461 = vmatprep.subr.bf16.mxu0 0
    %6462 = vmatpush2.bf16.msra.mxu0 %v5126
    %6463 = vmatprep.subr.bf16.mxu0 0
    %6464 = vmatpush2.bf16.msra.mxu0 %v5119
    %6465 = vmatprep.subr.bf16.mxu0 0
    %6466 = vmatpush2.bf16.msra.mxu0 %v5112
    %6467 = vmatprep.subr.bf16.mxu0 0
    %6468 = vmatpush2.bf16.msra.mxu0 %v5105
    %6469 = vmatprep.subr.bf16.mxu0 0
    %6470 = vmatpush2.bf16.msra.mxu0 %v5098
    %6471 = vmatprep.subr.bf16.mxu0 0
    %6472 = vmatpush2.bf16.msra.mxu0 %v5091
    %6473 = vmatprep.mubr.bf16.mxu0 %v3065
    %6474 = vmatmul.mubr.bf16.gmra.mxu0 %v3064
    %v6475 = vpop.f32.mrf.mxu0
    %v6476 = vadd.f32 %v3613, %v6475
    %v6477 = vpop.f32.mrf.mxu0
    %v6478 = vpop.f32.mrf.mxu0
    %v6479 = vadd.f32 %v3613, %v6478
    %v6480 = vpop.f32.mrf.mxu0
    %6481 = vdwg.mxu0
    %6482 = vmatprep.subr.bf16.mxu0 0
    %6483 = vmatpush1.bf16.msra.mxu0 %v5196
    %6484 = vmatprep.subr.bf16.mxu0 0
    %6485 = vmatpush1.bf16.msra.mxu0 %v5189
    %6486 = vmatprep.subr.bf16.mxu0 0
    %6487 = vmatpush1.bf16.msra.mxu0 %v5182
    %6488 = vmatprep.subr.bf16.mxu0 0
    %6489 = vmatpush1.bf16.msra.mxu0 %v5175
    %6490 = vmatprep.subr.bf16.mxu0 0
    %6491 = vmatpush1.bf16.msra.mxu0 %v5168
    %6492 = vmatprep.subr.bf16.mxu0 0
    %6493 = vmatpush1.bf16.msra.mxu0 %v5161
    %6494 = vmatprep.subr.bf16.mxu0 0
    %6495 = vmatpush1.bf16.msra.mxu0 %v5154
    %6496 = vmatprep.subr.bf16.mxu0 0
    %6497 = vmatpush1.bf16.msra.mxu0 %v5147
    %6498 = vmatprep.subr.bf16.mxu0 0
    %6499 = vmatpush2.bf16.msra.mxu0 %v5252
    %6500 = vmatprep.subr.bf16.mxu0 0
    %6501 = vmatpush2.bf16.msra.mxu0 %v5245
    %6502 = vmatprep.subr.bf16.mxu0 0
    %6503 = vmatpush2.bf16.msra.mxu0 %v5238
    %6504 = vmatprep.subr.bf16.mxu0 0
    %6505 = vmatpush2.bf16.msra.mxu0 %v5231
    %6506 = vmatprep.subr.bf16.mxu0 0
    %6507 = vmatpush2.bf16.msra.mxu0 %v5224
    %6508 = vmatprep.subr.bf16.mxu0 0
    %6509 = vmatpush2.bf16.msra.mxu0 %v5217
    %6510 = vmatprep.subr.bf16.mxu0 0
    %6511 = vmatpush2.bf16.msra.mxu0 %v5210
    %6512 = vmatprep.subr.bf16.mxu0 0
    %6513 = vmatpush2.bf16.msra.mxu0 %v5203
    %6514 = vmatprep.mubr.bf16.mxu0 %v3067
    %6515 = vmatmul.mubr.bf16.gmra.mxu0 %v3066
    %v6516 = vpop.f32.mrf.mxu0
    %v6517 = vadd.f32 %v6476, %v6516
    %v6518 = vpop.f32.mrf.mxu0
    %v6519 = vpop.f32.mrf.mxu0
    %v6520 = vadd.f32 %v6479, %v6519
    %v6521 = vpop.f32.mrf.mxu0
    %6522 = vdwg.mxu0
    %6523 = vmatprep.subr.bf16.mxu0 0
    %6524 = vmatpush1.bf16.msra.mxu0 %v5308
    %6525 = vmatprep.subr.bf16.mxu0 0
    %6526 = vmatpush1.bf16.msra.mxu0 %v5301
    %6527 = vmatprep.subr.bf16.mxu0 0
    %6528 = vmatpush1.bf16.msra.mxu0 %v5294
    %6529 = vmatprep.subr.bf16.mxu0 0
    %6530 = vmatpush1.bf16.msra.mxu0 %v5287
    %6531 = vmatprep.subr.bf16.mxu0 0
    %6532 = vmatpush1.bf16.msra.mxu0 %v5280
    %6533 = vmatprep.subr.bf16.mxu0 0
    %6534 = vmatpush1.bf16.msra.mxu0 %v5273
    %6535 = vmatprep.subr.bf16.mxu0 0
    %6536 = vmatpush1.bf16.msra.mxu0 %v5266
    %6537 = vmatprep.subr.bf16.mxu0 0
    %6538 = vmatpush1.bf16.msra.mxu0 %v5259
    %6539 = vmatprep.subr.bf16.mxu0 0
    %6540 = vmatpush2.bf16.msra.mxu0 %v5364
    %6541 = vmatprep.subr.bf16.mxu0 0
    %6542 = vmatpush2.bf16.msra.mxu0 %v5357
    %6543 = vmatprep.subr.bf16.mxu0 0
    %6544 = vmatpush2.bf16.msra.mxu0 %v5350
    %6545 = vmatprep.subr.bf16.mxu0 0
    %6546 = vmatpush2.bf16.msra.mxu0 %v5343
    %6547 = vmatprep.subr.bf16.mxu0 0
    %6548 = vmatpush2.bf16.msra.mxu0 %v5336
    %6549 = vmatprep.subr.bf16.mxu0 0
    %6550 = vmatpush2.bf16.msra.mxu0 %v5329
    %6551 = vmatprep.subr.bf16.mxu0 0
    %6552 = vmatpush2.bf16.msra.mxu0 %v5322
    %6553 = vmatprep.subr.bf16.mxu0 0
    %6554 = vmatpush2.bf16.msra.mxu0 %v5315
    %6555 = vmatprep.mubr.bf16.mxu0 %v3069
    %6556 = vmatmul.mubr.bf16.gmra.mxu0 %v3068
    %v6557 = vpop.f32.mrf.mxu0
    %v6558 = vadd.f32 %v6517, %v6557
    %v6559 = vpop.f32.mrf.mxu0
    %v6560 = vpop.f32.mrf.mxu0
    %v6561 = vadd.f32 %v6520, %v6560
    %v6562 = vpop.f32.mrf.mxu0
    %6563 = vdwg.mxu0
    %6564 = vmatprep.subr.bf16.mxu0 0
    %6565 = vmatpush1.bf16.msra.mxu0 %v5420
    %6566 = vmatprep.subr.bf16.mxu0 0
    %6567 = vmatpush1.bf16.msra.mxu0 %v5413
    %6568 = vmatprep.subr.bf16.mxu0 0
    %6569 = vmatpush1.bf16.msra.mxu0 %v5406
    %6570 = vmatprep.subr.bf16.mxu0 0
    %6571 = vmatpush1.bf16.msra.mxu0 %v5399
    %6572 = vmatprep.subr.bf16.mxu0 0
    %6573 = vmatpush1.bf16.msra.mxu0 %v5392
    %6574 = vmatprep.subr.bf16.mxu0 0
    %6575 = vmatpush1.bf16.msra.mxu0 %v5385
    %6576 = vmatprep.subr.bf16.mxu0 0
    %6577 = vmatpush1.bf16.msra.mxu0 %v5378
    %6578 = vmatprep.subr.bf16.mxu0 0
    %6579 = vmatpush1.bf16.msra.mxu0 %v5371
    %6580 = vmatprep.subr.bf16.mxu0 0
    %6581 = vmatpush2.bf16.msra.mxu0 %v5476
    %6582 = vmatprep.subr.bf16.mxu0 0
    %6583 = vmatpush2.bf16.msra.mxu0 %v5469
    %6584 = vmatprep.subr.bf16.mxu0 0
    %6585 = vmatpush2.bf16.msra.mxu0 %v5462
    %6586 = vmatprep.subr.bf16.mxu0 0
    %6587 = vmatpush2.bf16.msra.mxu0 %v5455
    %6588 = vmatprep.subr.bf16.mxu0 0
    %6589 = vmatpush2.bf16.msra.mxu0 %v5448
    %6590 = vmatprep.subr.bf16.mxu0 0
    %6591 = vmatpush2.bf16.msra.mxu0 %v5441
    %6592 = vmatprep.subr.bf16.mxu0 0
    %6593 = vmatpush2.bf16.msra.mxu0 %v5434
    %6594 = vmatprep.subr.bf16.mxu0 0
    %6595 = vmatpush2.bf16.msra.mxu0 %v5427
    %6596 = vmatprep.mubr.bf16.mxu0 %v3071
    %6597 = vmatmul.mubr.bf16.gmra.mxu0 %v3070
    %v6598 = vpop.f32.mrf.mxu0
    %v6599 = vadd.f32 %v6558, %v6598
    %v6600 = vpop.f32.mrf.mxu0
    %v6601 = vpop.f32.mrf.mxu0
    %v6602 = vadd.f32 %v6561, %v6601
    %v6603 = vpop.f32.mrf.mxu0
    %6604 = vdwg.mxu0
    %v6605 = vtanh.pop %v6089
    %v6606 = vtanh.pop %v6091
    %v6607 = vtanh.pop %v6261
    %v6608 = vtanh.pop %v6263
    %v6609 = vtanh.pop %v6433
    %v6610 = vtanh.pop %v6435
    %v6611 = vtanh.pop %v6599
    %v6612 = vtanh.pop %v6093
    %v6613 = vtanh.pop %v6095
    %v6614 = vtanh.pop %v6265
    %v6615 = vtanh.pop %v6267
    %v6616 = vtanh.pop %v6437
    %v6617 = vtanh.pop %v6439
    %v6618 = vtanh.pop %v6602
    %v6619 = vpack.c.bf16 %v6612, %v6605
    %v6620 = vpack.c.bf16 %v6613, %v6606
    %v6621 = vpack.c.bf16 %v6614, %v6607
    %v6622 = vpack.c.bf16 %v6615, %v6608
    %v6623 = vpack.c.bf16 %v6616, %v6609
    %v6624 = vpack.c.bf16 %v6617, %v6610
    %v6625 = vpack.c.bf16 %v6618, %v6611
    %v6633 = vunpack.c.l.b16 %v6619
    %v6634 = vunpack.c.l.b16 %v6620
    %v6635 = vunpack.c.l.b16 %v6621
    %v6636 = vunpack.c.l.b16 %v6622
    %v6637 = vunpack.c.l.b16 %v6623
    %v6638 = vunpack.c.l.b16 %v6624
    %v6639 = vunpack.c.l.b16 %v6625
    %v6640 = vunpack.c.h.b16 %v6619
    %v6641 = vunpack.c.h.b16 %v6620
    %v6642 = vunpack.c.h.b16 %v6621
    %v6643 = vunpack.c.h.b16 %v6622
    %v6644 = vunpack.c.h.b16 %v6623
    %v6645 = vunpack.c.h.b16 %v6624
    %v6646 = vunpack.c.h.b16 %v6625
    %v6647 = vpack.c.b16 %v6634, %v6633
    %v6648 = vpack.c.b16 %v6636, %v6635
    %v6649 = vpack.c.b16 %v6638, %v6637
    %v6650 = vpack.c.b16 %v6639, %v6639
    %v6651 = vpack.c.b16 %v6641, %v6640
    %v6652 = vpack.c.b16 %v6643, %v6642
    %v6653 = vpack.c.b16 %v6645, %v6644
    %v6654 = vpack.c.b16 %v6646, %v6646
    %6663 = vst [vmem:[#allocation23] sm:$0xff] %v6647
    %6664 = vst [vmem:[#allocation23 + $0x8] sm:$0xff] %v6648
    %6665 = vst [vmem:[#allocation23 + $0x10] sm:$0xff] %v6649
    %6666 = vst [vmem:[#allocation23 + $0x18] sm:$0xf] %v6650
    %6667 = vst [vmem:[#allocation23 + $0x1c] sm:$0xff] %v6651
    %6668 = vst [vmem:[#allocation23 + $0x24] sm:$0xff] %v6652
    %6669 = vst [vmem:[#allocation23 + $0x2c] sm:$0xff] %v6653
    %6670 = vst [vmem:[#allocation23 + $0x34] sm:$0xf] %v6654
    // Predicated region
    $region110: #{generator_forward.1} parent=1 // pred_check
      _
    $region111: #{generator_forward.1} parent=1 // pred_check_branch
      %6672 = sbr.rel (0) target = $region113
    $region112: #{generator_forward.1} parent=1 // pred_region
      %s6674 = ssub.s32 896, 896
      %6675 = vsyncadd [#allocation4], %s6674
      %s6676 = sshll.u32 [#allocation23], 4
      %s6677 = int_to_ptr.vmem [resolvable:$true] %s6676
      %6682 = dma.vmem_to_hbm [thread:$0]  %s6677, 896, %s14, [#allocation4], 448, 448, 28
    $region113: #{generator_forward.1} parent=1 // pred_fallthru
      _
    // Predicated region
    $region114: #{generator_forward.1} parent=1 // pred_check
      _
    $region115: #{generator_forward.1} parent=1 // pred_check_branch
      %6684 = sbr.rel (0) target = $region117
    $region116: #{generator_forward.1} parent=1 // pred_region
      %6685 = dma.done [#allocation4], 896
    $region117: #{generator_forward.1} parent=1 // pred_fallthru
      _
    %6686 = vsyncpa [#allocation3], 1
    %6687 = vsyncpa [#allocation6], 1
    %6688 = vsyncpa [#allocation9], 1
    %6689 = vsyncpa [#allocation12], 1
    %6690 = vsyncpa [#allocation15], 1
    %6691 = vsyncpa [#allocation18], 1
    %6692 = vsyncpa [#allocation21], 1
    %6693 = vsyncpa [#allocation4], 1

</llo_original>
